<compile_context>
chip_gen: v6e
topology: v6e:2x2x1
jax: 0.10.0
libtpu: 0.0.40
codegen_flags: <defaults>
</compile_context>

<pallas_src>
import functools

import jax
import jax.numpy as jnp
from jax import lax
from jax.experimental import pallas as pl
from jax.experimental.pallas import tpu as pltpu

K = 7          # SAM conv kernel size
P = 3          # SAM conv padding
KK = K * K


def _cam_mlp(v, w1, b1, w2, b2):
    """Shared MLP: relu(v @ w1.T + b1) @ w2.T + b2.  v: (TB, C) f32."""
    C = v.shape[-1]
    if C >= 128:
        # MXU path for large channel counts (MXU is otherwise idle in this kernel).
        h = jnp.maximum(
            lax.dot_general(v, w1, (((1,), (1,)), ((), ())),
                            preferred_element_type=jnp.float32) + b1, 0.0)
        return lax.dot_general(h, w2, (((1,), (1,)), ((), ())),
                               preferred_element_type=jnp.float32) + b2
    # VPU path (tiny C/R: far below MXU-efficient sizes).
    h = jnp.maximum(jnp.sum(v[:, None, :] * w1[None, :, :], axis=-1) + b1, 0.0)
    return jnp.sum(h[:, None, :] * w2[None, :, :], axis=-1) + b2


def _cam_sigmoid(x, w1, b1, w2, b2):
    """Channel-attention sigmoid weights. x: (TB, C, HW) f32 -> (TB, C)."""
    hw = x.shape[-1]
    q_max = jnp.max(x, axis=-1)                         # (TB, C) lane reduce
    q_avg = jnp.sum(x, axis=-1) * (1.0 / hw)            # (TB, C)
    cw = _cam_mlp(q_max, w1, b1, w2, b2) + _cam_mlp(q_avg, w1, b1, w2, b2)
    return jax.nn.sigmoid(cw)


def frm_kernel(rgb_ref, d_ref,
               rw1_ref, rb1_ref, rw2_ref, rb2_ref,
               dw1_ref, db1_ref, dw2_ref, db2_ref,
               wconv_ref,
               out_ref, pad_ref, *, tb, H, W, HPp, WP):
    HW = H * W
    x_rgb = rgb_ref[...].astype(jnp.float32)            # (TB, C, HW)
    x_d = d_ref[...].astype(jnp.float32)
    C = x_rgb.shape[1]

    # ---- CAM (channel attention) for both modalities ----
    s_rgb = _cam_sigmoid(x_rgb, rw1_ref[...], rb1_ref[...], rw2_ref[...], rb2_ref[...])
    s_d = _cam_sigmoid(x_d, dw1_ref[...], db1_ref[...], dw2_ref[...], db2_ref[...])
    y_rgb = x_rgb * s_rgb[:, :, None]                    # (TB, C, HW)
    y_d = x_d * s_d[:, :, None]

    # ---- SAM channel pooling (lane-dense) -> padded 2-D scratch ----
    inv_c = 1.0 / C
    pooled = (jnp.max(y_rgb, axis=1), jnp.sum(y_rgb, axis=1) * inv_c,
              jnp.max(y_d, axis=1), jnp.sum(y_d, axis=1) * inv_c)    # each (TB, HW)

    # One full-lane-width store per pooled group: interior at lane 0, zeros to its right.
    zero_right = jnp.zeros((tb, H, WP - W), jnp.float32)
    for g in range(4):
        m = pooled[g].reshape(tb, H, W)                  # single reshape (no per-row scatter)
        pad_ref[g, :, P:P + H, :] = jnp.concatenate([m, zero_right], axis=-1)
    # Halo rows zeroed every step (v7x: each TensorCore has its own scratch, so no
    # program_id==0 trick); these are only P + (HPp-P-H) rows.
    pad_ref[:, :, 0:P, :] = jnp.zeros((4, tb, P, WP), jnp.float32)
    pad_ref[:, :, P + H:HPp, :] = jnp.zeros((4, tb, HPp - P - H, WP), jnp.float32)

    # ---- 7x7 conv: 7 full-width band loads per group + lane rolls (XLU) per tap,
    #      SMEM scalar weights splatted into the MACs, 2 independent accumulators ----
    def conv_group(g):
        acc0 = jnp.zeros((tb, H, WP), jnp.float32)
        acc1 = jnp.zeros((tb, H, WP), jnp.float32)
        t = 0
        for ki in range(K):
            band = pad_ref[g, :, ki:ki + H, :]           # (TB, H, WP) full-width load
            for kj in range(K):
                w = wconv_ref[g, t]                      # scalar from SMEM (no vreg cost)
                if kj == P:
                    win = band
                else:
                    win = pltpu.roll(band, (P - kj) % WP, axis=2)
                if t % 2 == 0:
                    acc0 = acc0 + w * win
                else:
                    acc1 = acc1 + w * win
                t += 1
        return acc0 + acc1

    conv_r = conv_group(0) + conv_group(1)               # (TB, H, WP): rgb max + mean channels
    conv_d = conv_group(2) + conv_group(3)

    # Slice the interior lanes, back to the flat lane-dense layout with one reshape each.
    sr = jax.nn.sigmoid(conv_r[:, :, :W]).reshape(tb, 1, HW)
    sd = jax.nn.sigmoid(conv_d[:, :, :W]).reshape(tb, 1, HW)

    out = sr * y_rgb + sd * y_d
    out_ref[...] = out.astype(out_ref.dtype)


def _vmem_capacity_bytes():
    try:
        return int(pltpu.get_tpu_info().vmem_capacity_bytes)
    except Exception:
        return 64 * 1024 * 1024            # conservative fallback (v7x per-TC)


def frm_pallas(rgb, d, rgb_p, d_p):
    B, C, H, W = rgb.shape
    HW = H * W
    R = rgb_p["w1"].shape[0]

    HPp = -(-(H + 2 * P) // 8) * 8             # sublane-aligned padded rows (>= H + 2P)
    WP = -(-(W + 2 * P) // 128) * 128          # lane-aligned padded cols  (>= W + 2P)

    # ---- generation-aware VMEM budgeting ----
    cap = _vmem_capacity_bytes()
    if cap <= 64 * 1024 * 1024:                # v7x: 64 MiB per TensorCore
        budget = 20 * 1024 * 1024
        limit_cap = 40 * 1024 * 1024
    else:                                      # v5e / v6e: 128 MiB
        budget = 56 * 1024 * 1024
        limit_cap = 96 * 1024 * 1024

    isz = jnp.dtype(rgb.dtype).itemsize
    io_bytes = 3 * C * HW * isz                                  # rgb + d + out blocks
    per_b = (2 * io_bytes                                        # double-buffered IO
             + 5 * C * HW * 4                                    # f32 casts, y_rgb/y_d, out temp
             + 4 * HPp * WP * 4                                  # padded conv scratch
             + 10 * H * WP * 4                                   # bands / rolls / accumulators
             + 8 * HW * 4)                                       # pooled maps, sr/sd

    # Largest divisor of B within budget, keeping >= 2 grid steps so both v7x TCs work
    # and the pipeline always has an i+1 block to prefetch.
    min_steps = 2 if B >= 2 else 1
    TB = 1
    for cand in range(B, 0, -1):
        if B % cand != 0:
            continue
        if B // cand < min_steps:
            continue
        if cand * per_b <= budget:
            TB = cand
            break
    vmem_limit = int(min(limit_cap, max(16 * 1024 * 1024, 2 * TB * per_b)))

    rgb_f = rgb.reshape(B, C, HW)              # free for contiguous NCHW
    d_f = d.reshape(B, C, HW)

    def prep(pp):
        return (pp["w1"].astype(jnp.float32),
                pp["b1"].reshape(1, R).astype(jnp.float32),
                pp["w2"].astype(jnp.float32),
                pp["b2"].reshape(1, C).astype(jnp.float32))

    r_w1, r_b1, r_w2, r_b2 = prep(rgb_p)
    d_w1, d_b1, d_w2, d_b2 = prep(d_p)

    # Per-tap conv weights as SMEM scalars; row order matches the pooled-map groups
    # [rgb_max, rgb_mean, d_max, d_mean], tap order ki*K + kj (row-major).
    rcw = rgb_p["conv_w"].reshape(2, KK).astype(jnp.float32)
    dcw = d_p["conv_w"].reshape(2, KK).astype(jnp.float32)
    w_conv = jnp.concatenate([rcw, dcw], axis=0)                 # (4, KK)

    def resident(shape):
        return pl.BlockSpec(shape, lambda b: (0,) * len(shape))

    io_spec = pl.BlockSpec((TB, C, HW), lambda b: (b, 0, 0))
    smem_spec = pl.BlockSpec(memory_space=pltpu.MemorySpace.SMEM)
    kernel = functools.partial(frm_kernel, tb=TB, H=H, W=W, HPp=HPp, WP=WP)

    out_flat = pl.pallas_call(
        kernel,
        out_shape=jax.ShapeDtypeStruct((B, C, HW), rgb.dtype),
        grid=(B // TB,),
        in_specs=[io_spec, io_spec,
                  resident((R, C)), resident((1, R)),
                  resident((C, R)), resident((1, C)),
                  resident((R, C)), resident((1, R)),
                  resident((C, R)), resident((1, C)),
                  smem_spec],
        out_specs=io_spec,
        scratch_shapes=[pltpu.VMEM((4, TB, HPp, WP), jnp.float32)],
        compiler_params=pltpu.CompilerParams(
            dimension_semantics=("parallel",),
            vmem_limit_bytes=vmem_limit),
    )(rgb_f, d_f,
      r_w1, r_b1, r_w2, r_b2,
      d_w1, d_b1, d_w2, d_b2,
      w_conv)

    return out_flat.reshape(B, C, H, W)


# ---------------- pure-JAX reference (for correctness check) ----------------
def cbam_ref(x, pp):
    q_max = jnp.max(x, axis=(2, 3))
    q_avg = jnp.mean(x, axis=(2, 3))

    def mlp(v):
        h = jax.nn.relu(v @ pp["w1"].T + pp["b1"])
        return h @ pp["w2"].T + pp["b2"]

    cw = mlp(q_max) + mlp(q_avg)
    y = x * jax.nn.sigmoid(cw)[:, :, None, None]
    mx = jnp.max(y, axis=1, keepdims=True)
    av = jnp.mean(y, axis=1, keepdims=True)
    cat = jnp.concatenate([mx, av], axis=1)
    conv = lax.conv_general_dilated(cat, pp["conv_w"], window_strides=(1, 1),
                                    padding=[(P, P), (P, P)],
                                    dimension_numbers=("NCHW", "OIHW", "NCHW"))
    return jax.nn.sigmoid(conv) * y


def frm_ref(rgb, d, rgb_p, d_p):
    return cbam_ref(rgb, rgb_p) + cbam_ref(d, d_p)


if __name__ == "__main__":
    B, C, H, W = 2, 16, 16, 16
    reduction_ratio = 8
    R = C // reduction_ratio
    if R < 1:
        R = C

    key = jax.random.PRNGKey(0)
    krgb, kd, kx, ky = jax.random.split(key, 4)

    def make_params(k):
        k1, k2, k3, k4, k5 = jax.random.split(k, 5)
        return {
            "w1": jax.random.normal(k1, (R, C), jnp.float32) * 0.2,   # Linear(C -> R).weight
            "b1": jax.random.normal(k2, (R,), jnp.float32) * 0.1,     # Linear(C -> R).bias
            "w2": jax.random.normal(k3, (C, R), jnp.float32) * 0.2,   # Linear(R -> C).weight
            "b2": jax.random.normal(k4, (C,), jnp.float32) * 0.1,     # Linear(R -> C).bias
            "conv_w": jax.random.normal(k5, (1, 2, K, K), jnp.float32) * 0.1,  # SAM conv (no bias)
        }

    rgb_p = make_params(krgb)
    d_p = make_params(kd)
    rgb_feat = jax.random.normal(kx, (B, C, H, W), jnp.float32)
    d_feat = jax.random.normal(ky, (B, C, H, W), jnp.float32)

    out = frm_pallas(rgb_feat, d_feat, rgb_p, d_p)
    out = jax.block_until_ready(out)

    ref = frm_ref(rgb_feat, d_feat, rgb_p, d_p)
    err = float(jnp.max(jnp.abs(out - ref)))
    assert err < 1e-3, f"Pallas/ref mismatch: max abs err = {err}"
    print("KERNEL_OK")
</pallas_src>

<mosaic_0001>
module attributes {stable_mosaic.version = 11 : i64} {
  func.func @frm_kernel(%arg0: i32, %arg1: memref<1x16x256xf32, #tpu.memory_space<vmem>>, %arg2: memref<1x16x256xf32, #tpu.memory_space<vmem>>, %arg3: memref<2x16xf32, #tpu.memory_space<vmem>>, %arg4: memref<1x2xf32, #tpu.memory_space<vmem>>, %arg5: memref<16x2xf32, #tpu.memory_space<vmem>>, %arg6: memref<1x16xf32, #tpu.memory_space<vmem>>, %arg7: memref<2x16xf32, #tpu.memory_space<vmem>>, %arg8: memref<1x2xf32, #tpu.memory_space<vmem>>, %arg9: memref<16x2xf32, #tpu.memory_space<vmem>>, %arg10: memref<1x16xf32, #tpu.memory_space<vmem>>, %arg11: memref<4x49xf32, #tpu.memory_space<smem>>, %arg12: memref<1x16x256xf32, #tpu.memory_space<vmem>>, %arg13: memref<4x1x24x128xf32, #tpu.memory_space<vmem>>) attributes {dimension_semantics = [#tpu.dimension_semantics<parallel>], iteration_bounds = array<i64: 2>, scalar_prefetch = 0 : i64, scratch_operands = 1 : i64, tpu.core_type = #tpu.core_type<tc>, window_params = [{transform_indices = @transform_0, window_bounds = array<i64: 1, 16, 256>}, {transform_indices = @transform_1, window_bounds = array<i64: 1, 16, 256>}, {pipeline_mode = #tpu.pipeline_mode<synchronous>, transform_indices = @transform_2, window_bounds = array<i64: 2, 16>}, {pipeline_mode = #tpu.pipeline_mode<synchronous>, transform_indices = @transform_3, window_bounds = array<i64: 1, 2>}, {pipeline_mode = #tpu.pipeline_mode<synchronous>, transform_indices = @transform_4, window_bounds = array<i64: 16, 2>}, {pipeline_mode = #tpu.pipeline_mode<synchronous>, transform_indices = @transform_5, window_bounds = array<i64: 1, 16>}, {pipeline_mode = #tpu.pipeline_mode<synchronous>, transform_indices = @transform_6, window_bounds = array<i64: 2, 16>}, {pipeline_mode = #tpu.pipeline_mode<synchronous>, transform_indices = @transform_7, window_bounds = array<i64: 1, 2>}, {pipeline_mode = #tpu.pipeline_mode<synchronous>, transform_indices = @transform_8, window_bounds = array<i64: 16, 2>}, {pipeline_mode = #tpu.pipeline_mode<synchronous>, transform_indices = @transform_9, window_bounds = array<i64: 1, 16>}, {transform_indices = @transform_10, window_bounds = array<i64: 4, 49>}, {transform_indices = @transform_11, window_bounds = array<i64: 1, 16, 256>}]} {
    %c0 = arith.constant 0 : index
    %c0_0 = arith.constant 0 : index
    %c0_1 = arith.constant 0 : index
    %0 = vector.load %arg1[%c0, %c0_0, %c0_1] : memref<1x16x256xf32, #tpu.memory_space<vmem>>, vector<1x16x256xf32>
    %c0_2 = arith.constant 0 : index
    %c0_3 = arith.constant 0 : index
    %c0_4 = arith.constant 0 : index
    %1 = vector.load %arg2[%c0_2, %c0_3, %c0_4] : memref<1x16x256xf32, #tpu.memory_space<vmem>>, vector<1x16x256xf32>
    %c0_5 = arith.constant 0 : index
    %c0_6 = arith.constant 0 : index
    %2 = vector.load %arg3[%c0_5, %c0_6] : memref<2x16xf32, #tpu.memory_space<vmem>>, vector<2x16xf32>
    %c0_7 = arith.constant 0 : index
    %c0_8 = arith.constant 0 : index
    %3 = vector.load %arg4[%c0_7, %c0_8] : memref<1x2xf32, #tpu.memory_space<vmem>>, vector<1x2xf32>
    %c0_9 = arith.constant 0 : index
    %c0_10 = arith.constant 0 : index
    %4 = vector.load %arg5[%c0_9, %c0_10] : memref<16x2xf32, #tpu.memory_space<vmem>>, vector<16x2xf32>
    %c0_11 = arith.constant 0 : index
    %c0_12 = arith.constant 0 : index
    %5 = vector.load %arg6[%c0_11, %c0_12] : memref<1x16xf32, #tpu.memory_space<vmem>>, vector<1x16xf32>
    %cst = arith.constant dense<0xFF800000> : vector<1x16xf32>
    %6 = vector.multi_reduction <maximumf>, %0, %cst [2] : vector<1x16x256xf32> to vector<1x16xf32>
    %cst_13 = arith.constant dense<0.000000e+00> : vector<1x16xf32>
    %7 = vector.multi_reduction <add>, %0, %cst_13 [2] : vector<1x16x256xf32> to vector<1x16xf32>
    %cst_14 = arith.constant 3.906250e-03 : f32
    %8 = vector.broadcast %cst_14 : f32 to vector<1x16xf32>
    %9 = arith.mulf %7, %8 : vector<1x16xf32>
    %10 = vector.shape_cast %6 : vector<1x16xf32> to vector<1x1x16xf32>
    %11 = vector.shape_cast %2 : vector<2x16xf32> to vector<1x2x16xf32>
    %12 = vector.broadcast %10 : vector<1x1x16xf32> to vector<1x2x16xf32>
    %13 = arith.mulf %12, %11 : vector<1x2x16xf32>
    %cst_15 = arith.constant dense<0.000000e+00> : vector<1x2xf32>
    %14 = vector.multi_reduction <add>, %13, %cst_15 [2] : vector<1x2x16xf32> to vector<1x2xf32>
    %15 = arith.addf %14, %3 : vector<1x2xf32>
    %cst_16 = arith.constant 0.000000e+00 : f32
    %16 = vector.broadcast %cst_16 : f32 to vector<1x2xf32>
    %17 = arith.maximumf %15, %16 : vector<1x2xf32>
    %18 = vector.shape_cast %17 : vector<1x2xf32> to vector<1x1x2xf32>
    %19 = vector.shape_cast %4 : vector<16x2xf32> to vector<1x16x2xf32>
    %20 = vector.broadcast %18 : vector<1x1x2xf32> to vector<1x16x2xf32>
    %21 = arith.mulf %20, %19 : vector<1x16x2xf32>
    %cst_17 = arith.constant dense<0.000000e+00> : vector<1x16xf32>
    %22 = vector.multi_reduction <add>, %21, %cst_17 [2] : vector<1x16x2xf32> to vector<1x16xf32>
    %23 = arith.addf %22, %5 : vector<1x16xf32>
    %24 = vector.shape_cast %9 : vector<1x16xf32> to vector<1x1x16xf32>
    %25 = vector.shape_cast %2 : vector<2x16xf32> to vector<1x2x16xf32>
    %26 = vector.broadcast %24 : vector<1x1x16xf32> to vector<1x2x16xf32>
    %27 = arith.mulf %26, %25 : vector<1x2x16xf32>
    %cst_18 = arith.constant dense<0.000000e+00> : vector<1x2xf32>
    %28 = vector.multi_reduction <add>, %27, %cst_18 [2] : vector<1x2x16xf32> to vector<1x2xf32>
    %29 = arith.addf %28, %3 : vector<1x2xf32>
    %cst_19 = arith.constant 0.000000e+00 : f32
    %30 = vector.broadcast %cst_19 : f32 to vector<1x2xf32>
    %31 = arith.maximumf %29, %30 : vector<1x2xf32>
    %32 = vector.shape_cast %31 : vector<1x2xf32> to vector<1x1x2xf32>
    %33 = vector.shape_cast %4 : vector<16x2xf32> to vector<1x16x2xf32>
    %34 = vector.broadcast %32 : vector<1x1x2xf32> to vector<1x16x2xf32>
    %35 = arith.mulf %34, %33 : vector<1x16x2xf32>
    %cst_20 = arith.constant dense<0.000000e+00> : vector<1x16xf32>
    %36 = vector.multi_reduction <add>, %35, %cst_20 [2] : vector<1x16x2xf32> to vector<1x16xf32>
    %37 = arith.addf %36, %5 : vector<1x16xf32>
    %38 = arith.addf %23, %37 : vector<1x16xf32>
    %39 = arith.negf %38 : vector<1x16xf32>
    %40 = math.exp %39 : vector<1x16xf32>
    %cst_21 = arith.constant 1.000000e+00 : f32
    %41 = vector.broadcast %cst_21 : f32 to vector<1x16xf32>
    %42 = arith.addf %41, %40 : vector<1x16xf32>
    %43 = arith.divf %41, %42 : vector<1x16xf32>
    %c0_22 = arith.constant 0 : index
    %c0_23 = arith.constant 0 : index
    %44 = vector.load %arg7[%c0_22, %c0_23] : memref<2x16xf32, #tpu.memory_space<vmem>>, vector<2x16xf32>
    %c0_24 = arith.constant 0 : index
    %c0_25 = arith.constant 0 : index
    %45 = vector.load %arg8[%c0_24, %c0_25] : memref<1x2xf32, #tpu.memory_space<vmem>>, vector<1x2xf32>
    %c0_26 = arith.constant 0 : index
    %c0_27 = arith.constant 0 : index
    %46 = vector.load %arg9[%c0_26, %c0_27] : memref<16x2xf32, #tpu.memory_space<vmem>>, vector<16x2xf32>
    %c0_28 = arith.constant 0 : index
    %c0_29 = arith.constant 0 : index
    %47 = vector.load %arg10[%c0_28, %c0_29] : memref<1x16xf32, #tpu.memory_space<vmem>>, vector<1x16xf32>
    %cst_30 = arith.constant dense<0xFF800000> : vector<1x16xf32>
    %48 = vector.multi_reduction <maximumf>, %1, %cst_30 [2] : vector<1x16x256xf32> to vector<1x16xf32>
    %cst_31 = arith.constant dense<0.000000e+00> : vector<1x16xf32>
    %49 = vector.multi_reduction <add>, %1, %cst_31 [2] : vector<1x16x256xf32> to vector<1x16xf32>
    %cst_32 = arith.constant 3.906250e-03 : f32
    %50 = vector.broadcast %cst_32 : f32 to vector<1x16xf32>
    %51 = arith.mulf %49, %50 : vector<1x16xf32>
    %52 = vector.shape_cast %48 : vector<1x16xf32> to vector<1x1x16xf32>
    %53 = vector.shape_cast %44 : vector<2x16xf32> to vector<1x2x16xf32>
    %54 = vector.broadcast %52 : vector<1x1x16xf32> to vector<1x2x16xf32>
    %55 = arith.mulf %54, %53 : vector<1x2x16xf32>
    %cst_33 = arith.constant dense<0.000000e+00> : vector<1x2xf32>
    %56 = vector.multi_reduction <add>, %55, %cst_33 [2] : vector<1x2x16xf32> to vector<1x2xf32>
    %57 = arith.addf %56, %45 : vector<1x2xf32>
    %cst_34 = arith.constant 0.000000e+00 : f32
    %58 = vector.broadcast %cst_34 : f32 to vector<1x2xf32>
    %59 = arith.maximumf %57, %58 : vector<1x2xf32>
    %60 = vector.shape_cast %59 : vector<1x2xf32> to vector<1x1x2xf32>
    %61 = vector.shape_cast %46 : vector<16x2xf32> to vector<1x16x2xf32>
    %62 = vector.broadcast %60 : vector<1x1x2xf32> to vector<1x16x2xf32>
    %63 = arith.mulf %62, %61 : vector<1x16x2xf32>
    %cst_35 = arith.constant dense<0.000000e+00> : vector<1x16xf32>
    %64 = vector.multi_reduction <add>, %63, %cst_35 [2] : vector<1x16x2xf32> to vector<1x16xf32>
    %65 = arith.addf %64, %47 : vector<1x16xf32>
    %66 = vector.shape_cast %51 : vector<1x16xf32> to vector<1x1x16xf32>
    %67 = vector.shape_cast %44 : vector<2x16xf32> to vector<1x2x16xf32>
    %68 = vector.broadcast %66 : vector<1x1x16xf32> to vector<1x2x16xf32>
    %69 = arith.mulf %68, %67 : vector<1x2x16xf32>
    %cst_36 = arith.constant dense<0.000000e+00> : vector<1x2xf32>
    %70 = vector.multi_reduction <add>, %69, %cst_36 [2] : vector<1x2x16xf32> to vector<1x2xf32>
    %71 = arith.addf %70, %45 : vector<1x2xf32>
    %cst_37 = arith.constant 0.000000e+00 : f32
    %72 = vector.broadcast %cst_37 : f32 to vector<1x2xf32>
    %73 = arith.maximumf %71, %72 : vector<1x2xf32>
    %74 = vector.shape_cast %73 : vector<1x2xf32> to vector<1x1x2xf32>
    %75 = vector.shape_cast %46 : vector<16x2xf32> to vector<1x16x2xf32>
    %76 = vector.broadcast %74 : vector<1x1x2xf32> to vector<1x16x2xf32>
    %77 = arith.mulf %76, %75 : vector<1x16x2xf32>
    %cst_38 = arith.constant dense<0.000000e+00> : vector<1x16xf32>
    %78 = vector.multi_reduction <add>, %77, %cst_38 [2] : vector<1x16x2xf32> to vector<1x16xf32>
    %79 = arith.addf %78, %47 : vector<1x16xf32>
    %80 = arith.addf %65, %79 : vector<1x16xf32>
    %81 = arith.negf %80 : vector<1x16xf32>
    %82 = math.exp %81 : vector<1x16xf32>
    %cst_39 = arith.constant 1.000000e+00 : f32
    %83 = vector.broadcast %cst_39 : f32 to vector<1x16xf32>
    %84 = arith.addf %83, %82 : vector<1x16xf32>
    %85 = arith.divf %83, %84 : vector<1x16xf32>
    %86 = vector.shape_cast %43 : vector<1x16xf32> to vector<1x16x1xf32>
    %87 = vector.broadcast %86 : vector<1x16x1xf32> to vector<1x16x256xf32>
    %88 = arith.mulf %0, %87 : vector<1x16x256xf32>
    %89 = vector.shape_cast %85 : vector<1x16xf32> to vector<1x16x1xf32>
    %90 = vector.broadcast %89 : vector<1x16x1xf32> to vector<1x16x256xf32>
    %91 = arith.mulf %1, %90 : vector<1x16x256xf32>
    %cst_40 = arith.constant dense<0xFF800000> : vector<1x256xf32>
    %92 = vector.multi_reduction <maximumf>, %88, %cst_40 [1] : vector<1x16x256xf32> to vector<1x256xf32>
    %cst_41 = arith.constant dense<0.000000e+00> : vector<1x256xf32>
    %93 = vector.multi_reduction <add>, %88, %cst_41 [1] : vector<1x16x256xf32> to vector<1x256xf32>
    %cst_42 = arith.constant 6.250000e-02 : f32
    %94 = vector.broadcast %cst_42 : f32 to vector<1x256xf32>
    %95 = arith.mulf %93, %94 : vector<1x256xf32>
    %cst_43 = arith.constant dense<0xFF800000> : vector<1x256xf32>
    %96 = vector.multi_reduction <maximumf>, %91, %cst_43 [1] : vector<1x16x256xf32> to vector<1x256xf32>
    %cst_44 = arith.constant dense<0.000000e+00> : vector<1x256xf32>
    %97 = vector.multi_reduction <add>, %91, %cst_44 [1] : vector<1x16x256xf32> to vector<1x256xf32>
    %cst_45 = arith.constant 6.250000e-02 : f32
    %98 = vector.broadcast %cst_45 : f32 to vector<1x256xf32>
    %99 = arith.mulf %97, %98 : vector<1x256xf32>
    %cst_46 = arith.constant 0.000000e+00 : f32
    %100 = vector.broadcast %cst_46 : f32 to vector<1x16x112xf32>
    %101 = vector.shape_cast %92 : vector<1x256xf32> to vector<1x16x16xf32>
    %102 = tpu.concatenate %101, %100 in 2 : vector<1x16x16xf32>, vector<1x16x112xf32> -> vector<1x16x128xf32>
    %c0_47 = arith.constant 0 : index
    %c0_48 = arith.constant 0 : index
    %c3 = arith.constant 3 : index
    %c0_49 = arith.constant 0 : index
    %103 = vector.load %arg13[%c0_47, %c0_48, %c3, %c0_49] : memref<4x1x24x128xf32, #tpu.memory_space<vmem>>, vector<1x1x16x128xf32>
    %104 = vector.shape_cast %103 : vector<1x1x16x128xf32> to vector<1x16x128xf32>
    %105 = vector.shape_cast %102 : vector<1x16x128xf32> to vector<1x1x16x128xf32>
    tpu.vector_store %arg13[%c0_47, %c0_48, %c3, %c0_49], %105 {strides = array<i32>} : memref<4x1x24x128xf32, #tpu.memory_space<vmem>>, vector<1x1x16x128xf32>,
    %106 = vector.shape_cast %95 : vector<1x256xf32> to vector<1x16x16xf32>
    %107 = tpu.concatenate %106, %100 in 2 : vector<1x16x16xf32>, vector<1x16x112xf32> -> vector<1x16x128xf32>
    %c1 = arith.constant 1 : index
    %c0_50 = arith.constant 0 : index
    %c3_51 = arith.constant 3 : index
    %c0_52 = arith.constant 0 : index
    %108 = vector.load %arg13[%c1, %c0_50, %c3_51, %c0_52] : memref<4x1x24x128xf32, #tpu.memory_space<vmem>>, vector<1x1x16x128xf32>
    %109 = vector.shape_cast %108 : vector<1x1x16x128xf32> to vector<1x16x128xf32>
    %110 = vector.shape_cast %107 : vector<1x16x128xf32> to vector<1x1x16x128xf32>
    tpu.vector_store %arg13[%c1, %c0_50, %c3_51, %c0_52], %110 {strides = array<i32>} : memref<4x1x24x128xf32, #tpu.memory_space<vmem>>, vector<1x1x16x128xf32>,
    %111 = vector.shape_cast %96 : vector<1x256xf32> to vector<1x16x16xf32>
    %112 = tpu.concatenate %111, %100 in 2 : vector<1x16x16xf32>, vector<1x16x112xf32> -> vector<1x16x128xf32>
    %c2 = arith.constant 2 : index
    %c0_53 = arith.constant 0 : index
    %c3_54 = arith.constant 3 : index
    %c0_55 = arith.constant 0 : index
    %113 = vector.load %arg13[%c2, %c0_53, %c3_54, %c0_55] : memref<4x1x24x128xf32, #tpu.memory_space<vmem>>, vector<1x1x16x128xf32>
    %114 = vector.shape_cast %113 : vector<1x1x16x128xf32> to vector<1x16x128xf32>
    %115 = vector.shape_cast %112 : vector<1x16x128xf32> to vector<1x1x16x128xf32>
    tpu.vector_store %arg13[%c2, %c0_53, %c3_54, %c0_55], %115 {strides = array<i32>} : memref<4x1x24x128xf32, #tpu.memory_space<vmem>>, vector<1x1x16x128xf32>,
    %116 = vector.shape_cast %99 : vector<1x256xf32> to vector<1x16x16xf32>
    %117 = tpu.concatenate %116, %100 in 2 : vector<1x16x16xf32>, vector<1x16x112xf32> -> vector<1x16x128xf32>
    %c3_56 = arith.constant 3 : index
    %c0_57 = arith.constant 0 : index
    %c3_58 = arith.constant 3 : index
    %c0_59 = arith.constant 0 : index
    %118 = vector.load %arg13[%c3_56, %c0_57, %c3_58, %c0_59] : memref<4x1x24x128xf32, #tpu.memory_space<vmem>>, vector<1x1x16x128xf32>
    %119 = vector.shape_cast %118 : vector<1x1x16x128xf32> to vector<1x16x128xf32>
    %120 = vector.shape_cast %117 : vector<1x16x128xf32> to vector<1x1x16x128xf32>
    tpu.vector_store %arg13[%c3_56, %c0_57, %c3_58, %c0_59], %120 {strides = array<i32>} : memref<4x1x24x128xf32, #tpu.memory_space<vmem>>, vector<1x1x16x128xf32>,
    %cst_60 = arith.constant 0.000000e+00 : f32
    %121 = vector.broadcast %cst_60 : f32 to vector<4x1x3x128xf32>
    %c0_61 = arith.constant 0 : index
    %c0_62 = arith.constant 0 : index
    %c0_63 = arith.constant 0 : index
    %c0_64 = arith.constant 0 : index
    %122 = vector.load %arg13[%c0_61, %c0_62, %c0_63, %c0_64] : memref<4x1x24x128xf32, #tpu.memory_space<vmem>>, vector<4x1x3x128xf32>
    tpu.vector_store %arg13[%c0_61, %c0_62, %c0_63, %c0_64], %121 {strides = array<i32>} : memref<4x1x24x128xf32, #tpu.memory_space<vmem>>, vector<4x1x3x128xf32>,
    %cst_65 = arith.constant 0.000000e+00 : f32
    %123 = vector.broadcast %cst_65 : f32 to vector<4x1x5x128xf32>
    %c0_66 = arith.constant 0 : index
    %c0_67 = arith.constant 0 : index
    %c19 = arith.constant 19 : index
    %c0_68 = arith.constant 0 : index
    %124 = vector.load %arg13[%c0_66, %c0_67, %c19, %c0_68] : memref<4x1x24x128xf32, #tpu.memory_space<vmem>>, vector<4x1x5x128xf32>
    tpu.vector_store %arg13[%c0_66, %c0_67, %c19, %c0_68], %123 {strides = array<i32>} : memref<4x1x24x128xf32, #tpu.memory_space<vmem>>, vector<4x1x5x128xf32>,
    %cst_69 = arith.constant 0.000000e+00 : f32
    %125 = vector.broadcast %cst_69 : f32 to vector<1x16x128xf32>
    %cst_70 = arith.constant 0.000000e+00 : f32
    %126 = vector.broadcast %cst_70 : f32 to vector<1x16x128xf32>
    %c0_71 = arith.constant 0 : index
    %c0_72 = arith.constant 0 : index
    %c0_73 = arith.constant 0 : index
    %c0_74 = arith.constant 0 : index
    %127 = vector.load %arg13[%c0_71, %c0_72, %c0_73, %c0_74] : memref<4x1x24x128xf32, #tpu.memory_space<vmem>>, vector<1x1x16x128xf32>
    %128 = vector.shape_cast %127 : vector<1x1x16x128xf32> to vector<1x16x128xf32>
    %c0_75 = arith.constant 0 : index
    %c0_76 = arith.constant 0 : index
    %129 = memref.load %arg11[%c0_75, %c0_76] : memref<4x49xf32, #tpu.memory_space<smem>>
    %c3_i32 = arith.constant 3 : i32
    %130 = tpu.dynamic_rotate %128 by %c3_i32 dim 2 : vector<1x16x128xf32>, i32 -> vector<1x16x128xf32>
    %131 = vector.broadcast %129 : f32 to vector<1x16x128xf32>
    %132 = arith.mulf %131, %130 : vector<1x16x128xf32>
    %133 = arith.addf %125, %132 : vector<1x16x128xf32>
    %c0_77 = arith.constant 0 : index
    %c1_78 = arith.constant 1 : index
    %134 = memref.load %arg11[%c0_77, %c1_78] : memref<4x49xf32, #tpu.memory_space<smem>>
    %c2_i32 = arith.constant 2 : i32
    %135 = tpu.dynamic_rotate %128 by %c2_i32 dim 2 : vector<1x16x128xf32>, i32 -> vector<1x16x128xf32>
    %136 = vector.broadcast %134 : f32 to vector<1x16x128xf32>
    %137 = arith.mulf %136, %135 : vector<1x16x128xf32>
    %138 = arith.addf %126, %137 : vector<1x16x128xf32>
    %c0_79 = arith.constant 0 : index
    %c2_80 = arith.constant 2 : index
    %139 = memref.load %arg11[%c0_79, %c2_80] : memref<4x49xf32, #tpu.memory_space<smem>>
    %c1_i32 = arith.constant 1 : i32
    %140 = tpu.dynamic_rotate %128 by %c1_i32 dim 2 : vector<1x16x128xf32>, i32 -> vector<1x16x128xf32>
    %141 = vector.broadcast %139 : f32 to vector<1x16x128xf32>
    %142 = arith.mulf %141, %140 : vector<1x16x128xf32>
    %143 = arith.addf %133, %142 : vector<1x16x128xf32>
    %c0_81 = arith.constant 0 : index
    %c3_82 = arith.constant 3 : index
    %144 = memref.load %arg11[%c0_81, %c3_82] : memref<4x49xf32, #tpu.memory_space<smem>>
    %145 = vector.broadcast %144 : f32 to vector<1x16x128xf32>
    %146 = arith.mulf %145, %128 : vector<1x16x128xf32>
    %147 = arith.addf %138, %146 : vector<1x16x128xf32>
    %c0_83 = arith.constant 0 : index
    %c4 = arith.constant 4 : index
    %148 = memref.load %arg11[%c0_83, %c4] : memref<4x49xf32, #tpu.memory_space<smem>>
    %c127_i32 = arith.constant 127 : i32
    %149 = tpu.dynamic_rotate %128 by %c127_i32 dim 2 : vector<1x16x128xf32>, i32 -> vector<1x16x128xf32>
    %150 = vector.broadcast %148 : f32 to vector<1x16x128xf32>
    %151 = arith.mulf %150, %149 : vector<1x16x128xf32>
    %152 = arith.addf %143, %151 : vector<1x16x128xf32>
    %c0_84 = arith.constant 0 : index
    %c5 = arith.constant 5 : index
    %153 = memref.load %arg11[%c0_84, %c5] : memref<4x49xf32, #tpu.memory_space<smem>>
    %c126_i32 = arith.constant 126 : i32
    %154 = tpu.dynamic_rotate %128 by %c126_i32 dim 2 : vector<1x16x128xf32>, i32 -> vector<1x16x128xf32>
    %155 = vector.broadcast %153 : f32 to vector<1x16x128xf32>
    %156 = arith.mulf %155, %154 : vector<1x16x128xf32>
    %157 = arith.addf %147, %156 : vector<1x16x128xf32>
    %c0_85 = arith.constant 0 : index
    %c6 = arith.constant 6 : index
    %158 = memref.load %arg11[%c0_85, %c6] : memref<4x49xf32, #tpu.memory_space<smem>>
    %c125_i32 = arith.constant 125 : i32
    %159 = tpu.dynamic_rotate %128 by %c125_i32 dim 2 : vector<1x16x128xf32>, i32 -> vector<1x16x128xf32>
    %160 = vector.broadcast %158 : f32 to vector<1x16x128xf32>
    %161 = arith.mulf %160, %159 : vector<1x16x128xf32>
    %162 = arith.addf %152, %161 : vector<1x16x128xf32>
    %c0_86 = arith.constant 0 : index
    %c0_87 = arith.constant 0 : index
    %c1_88 = arith.constant 1 : index
    %c0_89 = arith.constant 0 : index
    %163 = vector.load %arg13[%c0_86, %c0_87, %c1_88, %c0_89] : memref<4x1x24x128xf32, #tpu.memory_space<vmem>>, vector<1x1x16x128xf32>
    %164 = vector.shape_cast %163 : vector<1x1x16x128xf32> to vector<1x16x128xf32>
    %c0_90 = arith.constant 0 : index
    %c7 = arith.constant 7 : index
    %165 = memref.load %arg11[%c0_90, %c7] : memref<4x49xf32, #tpu.memory_space<smem>>
    %c3_i32_91 = arith.constant 3 : i32
    %166 = tpu.dynamic_rotate %164 by %c3_i32_91 dim 2 : vector<1x16x128xf32>, i32 -> vector<1x16x128xf32>
    %167 = vector.broadcast %165 : f32 to vector<1x16x128xf32>
    %168 = arith.mulf %167, %166 : vector<1x16x128xf32>
    %169 = arith.addf %157, %168 : vector<1x16x128xf32>
    %c0_92 = arith.constant 0 : index
    %c8 = arith.constant 8 : index
    %170 = memref.load %arg11[%c0_92, %c8] : memref<4x49xf32, #tpu.memory_space<smem>>
    %c2_i32_93 = arith.constant 2 : i32
    %171 = tpu.dynamic_rotate %164 by %c2_i32_93 dim 2 : vector<1x16x128xf32>, i32 -> vector<1x16x128xf32>
    %172 = vector.broadcast %170 : f32 to vector<1x16x128xf32>
    %173 = arith.mulf %172, %171 : vector<1x16x128xf32>
    %174 = arith.addf %162, %173 : vector<1x16x128xf32>
    %c0_94 = arith.constant 0 : index
    %c9 = arith.constant 9 : index
    %175 = memref.load %arg11[%c0_94, %c9] : memref<4x49xf32, #tpu.memory_space<smem>>
    %c1_i32_95 = arith.constant 1 : i32
    %176 = tpu.dynamic_rotate %164 by %c1_i32_95 dim 2 : vector<1x16x128xf32>, i32 -> vector<1x16x128xf32>
    %177 = vector.broadcast %175 : f32 to vector<1x16x128xf32>
    %178 = arith.mulf %177, %176 : vector<1x16x128xf32>
    %179 = arith.addf %169, %178 : vector<1x16x128xf32>
    %c0_96 = arith.constant 0 : index
    %c10 = arith.constant 10 : index
    %180 = memref.load %arg11[%c0_96, %c10] : memref<4x49xf32, #tpu.memory_space<smem>>
    %181 = vector.broadcast %180 : f32 to vector<1x16x128xf32>
    %182 = arith.mulf %181, %164 : vector<1x16x128xf32>
    %183 = arith.addf %174, %182 : vector<1x16x128xf32>
    %c0_97 = arith.constant 0 : index
    %c11 = arith.constant 11 : index
    %184 = memref.load %arg11[%c0_97, %c11] : memref<4x49xf32, #tpu.memory_space<smem>>
    %c127_i32_98 = arith.constant 127 : i32
    %185 = tpu.dynamic_rotate %164 by %c127_i32_98 dim 2 : vector<1x16x128xf32>, i32 -> vector<1x16x128xf32>
    %186 = vector.broadcast %184 : f32 to vector<1x16x128xf32>
    %187 = arith.mulf %186, %185 : vector<1x16x128xf32>
    %188 = arith.addf %179, %187 : vector<1x16x128xf32>
    %c0_99 = arith.constant 0 : index
    %c12 = arith.constant 12 : index
    %189 = memref.load %arg11[%c0_99, %c12] : memref<4x49xf32, #tpu.memory_space<smem>>
    %c126_i32_100 = arith.constant 126 : i32
    %190 = tpu.dynamic_rotate %164 by %c126_i32_100 dim 2 : vector<1x16x128xf32>, i32 -> vector<1x16x128xf32>
    %191 = vector.broadcast %189 : f32 to vector<1x16x128xf32>
    %192 = arith.mulf %191, %190 : vector<1x16x128xf32>
    %193 = arith.addf %183, %192 : vector<1x16x128xf32>
    %c0_101 = arith.constant 0 : index
    %c13 = arith.constant 13 : index
    %194 = memref.load %arg11[%c0_101, %c13] : memref<4x49xf32, #tpu.memory_space<smem>>
    %c125_i32_102 = arith.constant 125 : i32
    %195 = tpu.dynamic_rotate %164 by %c125_i32_102 dim 2 : vector<1x16x128xf32>, i32 -> vector<1x16x128xf32>
    %196 = vector.broadcast %194 : f32 to vector<1x16x128xf32>
    %197 = arith.mulf %196, %195 : vector<1x16x128xf32>
    %198 = arith.addf %188, %197 : vector<1x16x128xf32>
    %c0_103 = arith.constant 0 : index
    %c0_104 = arith.constant 0 : index
    %c2_105 = arith.constant 2 : index
    %c0_106 = arith.constant 0 : index
    %199 = vector.load %arg13[%c0_103, %c0_104, %c2_105, %c0_106] : memref<4x1x24x128xf32, #tpu.memory_space<vmem>>, vector<1x1x16x128xf32>
    %200 = vector.shape_cast %199 : vector<1x1x16x128xf32> to vector<1x16x128xf32>
    %c0_107 = arith.constant 0 : index
    %c14 = arith.constant 14 : index
    %201 = memref.load %arg11[%c0_107, %c14] : memref<4x49xf32, #tpu.memory_space<smem>>
    %c3_i32_108 = arith.constant 3 : i32
    %202 = tpu.dynamic_rotate %200 by %c3_i32_108 dim 2 : vector<1x16x128xf32>, i32 -> vector<1x16x128xf32>
    %203 = vector.broadcast %201 : f32 to vector<1x16x128xf32>
    %204 = arith.mulf %203, %202 : vector<1x16x128xf32>
    %205 = arith.addf %193, %204 : vector<1x16x128xf32>
    %c0_109 = arith.constant 0 : index
    %c15 = arith.constant 15 : index
    %206 = memref.load %arg11[%c0_109, %c15] : memref<4x49xf32, #tpu.memory_space<smem>>
    %c2_i32_110 = arith.constant 2 : i32
    %207 = tpu.dynamic_rotate %200 by %c2_i32_110 dim 2 : vector<1x16x128xf32>, i32 -> vector<1x16x128xf32>
    %208 = vector.broadcast %206 : f32 to vector<1x16x128xf32>
    %209 = arith.mulf %208, %207 : vector<1x16x128xf32>
    %210 = arith.addf %198, %209 : vector<1x16x128xf32>
    %c0_111 = arith.constant 0 : index
    %c16 = arith.constant 16 : index
    %211 = memref.load %arg11[%c0_111, %c16] : memref<4x49xf32, #tpu.memory_space<smem>>
    %c1_i32_112 = arith.constant 1 : i32
    %212 = tpu.dynamic_rotate %200 by %c1_i32_112 dim 2 : vector<1x16x128xf32>, i32 -> vector<1x16x128xf32>
    %213 = vector.broadcast %211 : f32 to vector<1x16x128xf32>
    %214 = arith.mulf %213, %212 : vector<1x16x128xf32>
    %215 = arith.addf %205, %214 : vector<1x16x128xf32>
    %c0_113 = arith.constant 0 : index
    %c17 = arith.constant 17 : index
    %216 = memref.load %arg11[%c0_113, %c17] : memref<4x49xf32, #tpu.memory_space<smem>>
    %217 = vector.broadcast %216 : f32 to vector<1x16x128xf32>
    %218 = arith.mulf %217, %200 : vector<1x16x128xf32>
    %219 = arith.addf %210, %218 : vector<1x16x128xf32>
    %c0_114 = arith.constant 0 : index
    %c18 = arith.constant 18 : index
    %220 = memref.load %arg11[%c0_114, %c18] : memref<4x49xf32, #tpu.memory_space<smem>>
    %c127_i32_115 = arith.constant 127 : i32
    %221 = tpu.dynamic_rotate %200 by %c127_i32_115 dim 2 : vector<1x16x128xf32>, i32 -> vector<1x16x128xf32>
    %222 = vector.broadcast %220 : f32 to vector<1x16x128xf32>
    %223 = arith.mulf %222, %221 : vector<1x16x128xf32>
    %224 = arith.addf %215, %223 : vector<1x16x128xf32>
    %c0_116 = arith.constant 0 : index
    %c19_117 = arith.constant 19 : index
    %225 = memref.load %arg11[%c0_116, %c19_117] : memref<4x49xf32, #tpu.memory_space<smem>>
    %c126_i32_118 = arith.constant 126 : i32
    %226 = tpu.dynamic_rotate %200 by %c126_i32_118 dim 2 : vector<1x16x128xf32>, i32 -> vector<1x16x128xf32>
    %227 = vector.broadcast %225 : f32 to vector<1x16x128xf32>
    %228 = arith.mulf %227, %226 : vector<1x16x128xf32>
    %229 = arith.addf %219, %228 : vector<1x16x128xf32>
    %c0_119 = arith.constant 0 : index
    %c20 = arith.constant 20 : index
    %230 = memref.load %arg11[%c0_119, %c20] : memref<4x49xf32, #tpu.memory_space<smem>>
    %c125_i32_120 = arith.constant 125 : i32
    %231 = tpu.dynamic_rotate %200 by %c125_i32_120 dim 2 : vector<1x16x128xf32>, i32 -> vector<1x16x128xf32>
    %232 = vector.broadcast %230 : f32 to vector<1x16x128xf32>
    %233 = arith.mulf %232, %231 : vector<1x16x128xf32>
    %234 = arith.addf %224, %233 : vector<1x16x128xf32>
    %c0_121 = arith.constant 0 : index
    %c0_122 = arith.constant 0 : index
    %c3_123 = arith.constant 3 : index
    %c0_124 = arith.constant 0 : index
    %235 = vector.load %arg13[%c0_121, %c0_122, %c3_123, %c0_124] : memref<4x1x24x128xf32, #tpu.memory_space<vmem>>, vector<1x1x16x128xf32>
    %236 = vector.shape_cast %235 : vector<1x1x16x128xf32> to vector<1x16x128xf32>
    %c0_125 = arith.constant 0 : index
    %c21 = arith.constant 21 : index
    %237 = memref.load %arg11[%c0_125, %c21] : memref<4x49xf32, #tpu.memory_space<smem>>
    %c3_i32_126 = arith.constant 3 : i32
    %238 = tpu.dynamic_rotate %236 by %c3_i32_126 dim 2 : vector<1x16x128xf32>, i32 -> vector<1x16x128xf32>
    %239 = vector.broadcast %237 : f32 to vector<1x16x128xf32>
    %240 = arith.mulf %239, %238 : vector<1x16x128xf32>
    %241 = arith.addf %229, %240 : vector<1x16x128xf32>
    %c0_127 = arith.constant 0 : index
    %c22 = arith.constant 22 : index
    %242 = memref.load %arg11[%c0_127, %c22] : memref<4x49xf32, #tpu.memory_space<smem>>
    %c2_i32_128 = arith.constant 2 : i32
    %243 = tpu.dynamic_rotate %236 by %c2_i32_128 dim 2 : vector<1x16x128xf32>, i32 -> vector<1x16x128xf32>
    %244 = vector.broadcast %242 : f32 to vector<1x16x128xf32>
    %245 = arith.mulf %244, %243 : vector<1x16x128xf32>
    %246 = arith.addf %234, %245 : vector<1x16x128xf32>
    %c0_129 = arith.constant 0 : index
    %c23 = arith.constant 23 : index
    %247 = memref.load %arg11[%c0_129, %c23] : memref<4x49xf32, #tpu.memory_space<smem>>
    %c1_i32_130 = arith.constant 1 : i32
    %248 = tpu.dynamic_rotate %236 by %c1_i32_130 dim 2 : vector<1x16x128xf32>, i32 -> vector<1x16x128xf32>
    %249 = vector.broadcast %247 : f32 to vector<1x16x128xf32>
    %250 = arith.mulf %249, %248 : vector<1x16x128xf32>
    %251 = arith.addf %241, %250 : vector<1x16x128xf32>
    %c0_131 = arith.constant 0 : index
    %c24 = arith.constant 24 : index
    %252 = memref.load %arg11[%c0_131, %c24] : memref<4x49xf32, #tpu.memory_space<smem>>
    %253 = vector.broadcast %252 : f32 to vector<1x16x128xf32>
    %254 = arith.mulf %253, %236 : vector<1x16x128xf32>
    %255 = arith.addf %246, %254 : vector<1x16x128xf32>
    %c0_132 = arith.constant 0 : index
    %c25 = arith.constant 25 : index
    %256 = memref.load %arg11[%c0_132, %c25] : memref<4x49xf32, #tpu.memory_space<smem>>
    %c127_i32_133 = arith.constant 127 : i32
    %257 = tpu.dynamic_rotate %236 by %c127_i32_133 dim 2 : vector<1x16x128xf32>, i32 -> vector<1x16x128xf32>
    %258 = vector.broadcast %256 : f32 to vector<1x16x128xf32>
    %259 = arith.mulf %258, %257 : vector<1x16x128xf32>
    %260 = arith.addf %251, %259 : vector<1x16x128xf32>
    %c0_134 = arith.constant 0 : index
    %c26 = arith.constant 26 : index
    %261 = memref.load %arg11[%c0_134, %c26] : memref<4x49xf32, #tpu.memory_space<smem>>
    %c126_i32_135 = arith.constant 126 : i32
    %262 = tpu.dynamic_rotate %236 by %c126_i32_135 dim 2 : vector<1x16x128xf32>, i32 -> vector<1x16x128xf32>
    %263 = vector.broadcast %261 : f32 to vector<1x16x128xf32>
    %264 = arith.mulf %263, %262 : vector<1x16x128xf32>
    %265 = arith.addf %255, %264 : vector<1x16x128xf32>
    %c0_136 = arith.constant 0 : index
    %c27 = arith.constant 27 : index
    %266 = memref.load %arg11[%c0_136, %c27] : memref<4x49xf32, #tpu.memory_space<smem>>
    %c125_i32_137 = arith.constant 125 : i32
    %267 = tpu.dynamic_rotate %236 by %c125_i32_137 dim 2 : vector<1x16x128xf32>, i32 -> vector<1x16x128xf32>
    %268 = vector.broadcast %266 : f32 to vector<1x16x128xf32>
    %269 = arith.mulf %268, %267 : vector<1x16x128xf32>
    %270 = arith.addf %260, %269 : vector<1x16x128xf32>
    %c0_138 = arith.constant 0 : index
    %c0_139 = arith.constant 0 : index
    %c4_140 = arith.constant 4 : index
    %c0_141 = arith.constant 0 : index
    %271 = vector.load %arg13[%c0_138, %c0_139, %c4_140, %c0_141] : memref<4x1x24x128xf32, #tpu.memory_space<vmem>>, vector<1x1x16x128xf32>
    %272 = vector.shape_cast %271 : vector<1x1x16x128xf32> to vector<1x16x128xf32>
    %c0_142 = arith.constant 0 : index
    %c28 = arith.constant 28 : index
    %273 = memref.load %arg11[%c0_142, %c28] : memref<4x49xf32, #tpu.memory_space<smem>>
    %c3_i32_143 = arith.constant 3 : i32
    %274 = tpu.dynamic_rotate %272 by %c3_i32_143 dim 2 : vector<1x16x128xf32>, i32 -> vector<1x16x128xf32>
    %275 = vector.broadcast %273 : f32 to vector<1x16x128xf32>
    %276 = arith.mulf %275, %274 : vector<1x16x128xf32>
    %277 = arith.addf %265, %276 : vector<1x16x128xf32>
    %c0_144 = arith.constant 0 : index
    %c29 = arith.constant 29 : index
    %278 = memref.load %arg11[%c0_144, %c29] : memref<4x49xf32, #tpu.memory_space<smem>>
    %c2_i32_145 = arith.constant 2 : i32
    %279 = tpu.dynamic_rotate %272 by %c2_i32_145 dim 2 : vector<1x16x128xf32>, i32 -> vector<1x16x128xf32>
    %280 = vector.broadcast %278 : f32 to vector<1x16x128xf32>
    %281 = arith.mulf %280, %279 : vector<1x16x128xf32>
    %282 = arith.addf %270, %281 : vector<1x16x128xf32>
    %c0_146 = arith.constant 0 : index
    %c30 = arith.constant 30 : index
    %283 = memref.load %arg11[%c0_146, %c30] : memref<4x49xf32, #tpu.memory_space<smem>>
    %c1_i32_147 = arith.constant 1 : i32
    %284 = tpu.dynamic_rotate %272 by %c1_i32_147 dim 2 : vector<1x16x128xf32>, i32 -> vector<1x16x128xf32>
    %285 = vector.broadcast %283 : f32 to vector<1x16x128xf32>
    %286 = arith.mulf %285, %284 : vector<1x16x128xf32>
    %287 = arith.addf %277, %286 : vector<1x16x128xf32>
    %c0_148 = arith.constant 0 : index
    %c31 = arith.constant 31 : index
    %288 = memref.load %arg11[%c0_148, %c31] : memref<4x49xf32, #tpu.memory_space<smem>>
    %289 = vector.broadcast %288 : f32 to vector<1x16x128xf32>
    %290 = arith.mulf %289, %272 : vector<1x16x128xf32>
    %291 = arith.addf %282, %290 : vector<1x16x128xf32>
    %c0_149 = arith.constant 0 : index
    %c32 = arith.constant 32 : index
    %292 = memref.load %arg11[%c0_149, %c32] : memref<4x49xf32, #tpu.memory_space<smem>>
    %c127_i32_150 = arith.constant 127 : i32
    %293 = tpu.dynamic_rotate %272 by %c127_i32_150 dim 2 : vector<1x16x128xf32>, i32 -> vector<1x16x128xf32>
    %294 = vector.broadcast %292 : f32 to vector<1x16x128xf32>
    %295 = arith.mulf %294, %293 : vector<1x16x128xf32>
    %296 = arith.addf %287, %295 : vector<1x16x128xf32>
    %c0_151 = arith.constant 0 : index
    %c33 = arith.constant 33 : index
    %297 = memref.load %arg11[%c0_151, %c33] : memref<4x49xf32, #tpu.memory_space<smem>>
    %c126_i32_152 = arith.constant 126 : i32
    %298 = tpu.dynamic_rotate %272 by %c126_i32_152 dim 2 : vector<1x16x128xf32>, i32 -> vector<1x16x128xf32>
    %299 = vector.broadcast %297 : f32 to vector<1x16x128xf32>
    %300 = arith.mulf %299, %298 : vector<1x16x128xf32>
    %301 = arith.addf %291, %300 : vector<1x16x128xf32>
    %c0_153 = arith.constant 0 : index
    %c34 = arith.constant 34 : index
    %302 = memref.load %arg11[%c0_153, %c34] : memref<4x49xf32, #tpu.memory_space<smem>>
    %c125_i32_154 = arith.constant 125 : i32
    %303 = tpu.dynamic_rotate %272 by %c125_i32_154 dim 2 : vector<1x16x128xf32>, i32 -> vector<1x16x128xf32>
    %304 = vector.broadcast %302 : f32 to vector<1x16x128xf32>
    %305 = arith.mulf %304, %303 : vector<1x16x128xf32>
    %306 = arith.addf %296, %305 : vector<1x16x128xf32>
    %c0_155 = arith.constant 0 : index
    %c0_156 = arith.constant 0 : index
    %c5_157 = arith.constant 5 : index
    %c0_158 = arith.constant 0 : index
    %307 = vector.load %arg13[%c0_155, %c0_156, %c5_157, %c0_158] : memref<4x1x24x128xf32, #tpu.memory_space<vmem>>, vector<1x1x16x128xf32>
    %308 = vector.shape_cast %307 : vector<1x1x16x128xf32> to vector<1x16x128xf32>
    %c0_159 = arith.constant 0 : index
    %c35 = arith.constant 35 : index
    %309 = memref.load %arg11[%c0_159, %c35] : memref<4x49xf32, #tpu.memory_space<smem>>
    %c3_i32_160 = arith.constant 3 : i32
    %310 = tpu.dynamic_rotate %308 by %c3_i32_160 dim 2 : vector<1x16x128xf32>, i32 -> vector<1x16x128xf32>
    %311 = vector.broadcast %309 : f32 to vector<1x16x128xf32>
    %312 = arith.mulf %311, %310 : vector<1x16x128xf32>
    %313 = arith.addf %301, %312 : vector<1x16x128xf32>
    %c0_161 = arith.constant 0 : index
    %c36 = arith.constant 36 : index
    %314 = memref.load %arg11[%c0_161, %c36] : memref<4x49xf32, #tpu.memory_space<smem>>
    %c2_i32_162 = arith.constant 2 : i32
    %315 = tpu.dynamic_rotate %308 by %c2_i32_162 dim 2 : vector<1x16x128xf32>, i32 -> vector<1x16x128xf32>
    %316 = vector.broadcast %314 : f32 to vector<1x16x128xf32>
    %317 = arith.mulf %316, %315 : vector<1x16x128xf32>
    %318 = arith.addf %306, %317 : vector<1x16x128xf32>
    %c0_163 = arith.constant 0 : index
    %c37 = arith.constant 37 : index
    %319 = memref.load %arg11[%c0_163, %c37] : memref<4x49xf32, #tpu.memory_space<smem>>
    %c1_i32_164 = arith.constant 1 : i32
    %320 = tpu.dynamic_rotate %308 by %c1_i32_164 dim 2 : vector<1x16x128xf32>, i32 -> vector<1x16x128xf32>
    %321 = vector.broadcast %319 : f32 to vector<1x16x128xf32>
    %322 = arith.mulf %321, %320 : vector<1x16x128xf32>
    %323 = arith.addf %313, %322 : vector<1x16x128xf32>
    %c0_165 = arith.constant 0 : index
    %c38 = arith.constant 38 : index
    %324 = memref.load %arg11[%c0_165, %c38] : memref<4x49xf32, #tpu.memory_space<smem>>
    %325 = vector.broadcast %324 : f32 to vector<1x16x128xf32>
    %326 = arith.mulf %325, %308 : vector<1x16x128xf32>
    %327 = arith.addf %318, %326 : vector<1x16x128xf32>
    %c0_166 = arith.constant 0 : index
    %c39 = arith.constant 39 : index
    %328 = memref.load %arg11[%c0_166, %c39] : memref<4x49xf32, #tpu.memory_space<smem>>
    %c127_i32_167 = arith.constant 127 : i32
    %329 = tpu.dynamic_rotate %308 by %c127_i32_167 dim 2 : vector<1x16x128xf32>, i32 -> vector<1x16x128xf32>
    %330 = vector.broadcast %328 : f32 to vector<1x16x128xf32>
    %331 = arith.mulf %330, %329 : vector<1x16x128xf32>
    %332 = arith.addf %323, %331 : vector<1x16x128xf32>
    %c0_168 = arith.constant 0 : index
    %c40 = arith.constant 40 : index
    %333 = memref.load %arg11[%c0_168, %c40] : memref<4x49xf32, #tpu.memory_space<smem>>
    %c126_i32_169 = arith.constant 126 : i32
    %334 = tpu.dynamic_rotate %308 by %c126_i32_169 dim 2 : vector<1x16x128xf32>, i32 -> vector<1x16x128xf32>
    %335 = vector.broadcast %333 : f32 to vector<1x16x128xf32>
    %336 = arith.mulf %335, %334 : vector<1x16x128xf32>
    %337 = arith.addf %327, %336 : vector<1x16x128xf32>
    %c0_170 = arith.constant 0 : index
    %c41 = arith.constant 41 : index
    %338 = memref.load %arg11[%c0_170, %c41] : memref<4x49xf32, #tpu.memory_space<smem>>
    %c125_i32_171 = arith.constant 125 : i32
    %339 = tpu.dynamic_rotate %308 by %c125_i32_171 dim 2 : vector<1x16x128xf32>, i32 -> vector<1x16x128xf32>
    %340 = vector.broadcast %338 : f32 to vector<1x16x128xf32>
    %341 = arith.mulf %340, %339 : vector<1x16x128xf32>
    %342 = arith.addf %332, %341 : vector<1x16x128xf32>
    %c0_172 = arith.constant 0 : index
    %c0_173 = arith.constant 0 : index
    %c6_174 = arith.constant 6 : index
    %c0_175 = arith.constant 0 : index
    %343 = vector.load %arg13[%c0_172, %c0_173, %c6_174, %c0_175] : memref<4x1x24x128xf32, #tpu.memory_space<vmem>>, vector<1x1x16x128xf32>
    %344 = vector.shape_cast %343 : vector<1x1x16x128xf32> to vector<1x16x128xf32>
    %c0_176 = arith.constant 0 : index
    %c42 = arith.constant 42 : index
    %345 = memref.load %arg11[%c0_176, %c42] : memref<4x49xf32, #tpu.memory_space<smem>>
    %c3_i32_177 = arith.constant 3 : i32
    %346 = tpu.dynamic_rotate %344 by %c3_i32_177 dim 2 : vector<1x16x128xf32>, i32 -> vector<1x16x128xf32>
    %347 = vector.broadcast %345 : f32 to vector<1x16x128xf32>
    %348 = arith.mulf %347, %346 : vector<1x16x128xf32>
    %349 = arith.addf %337, %348 : vector<1x16x128xf32>
    %c0_178 = arith.constant 0 : index
    %c43 = arith.constant 43 : index
    %350 = memref.load %arg11[%c0_178, %c43] : memref<4x49xf32, #tpu.memory_space<smem>>
    %c2_i32_179 = arith.constant 2 : i32
    %351 = tpu.dynamic_rotate %344 by %c2_i32_179 dim 2 : vector<1x16x128xf32>, i32 -> vector<1x16x128xf32>
    %352 = vector.broadcast %350 : f32 to vector<1x16x128xf32>
    %353 = arith.mulf %352, %351 : vector<1x16x128xf32>
    %354 = arith.addf %342, %353 : vector<1x16x128xf32>
    %c0_180 = arith.constant 0 : index
    %c44 = arith.constant 44 : index
    %355 = memref.load %arg11[%c0_180, %c44] : memref<4x49xf32, #tpu.memory_space<smem>>
    %c1_i32_181 = arith.constant 1 : i32
    %356 = tpu.dynamic_rotate %344 by %c1_i32_181 dim 2 : vector<1x16x128xf32>, i32 -> vector<1x16x128xf32>
    %357 = vector.broadcast %355 : f32 to vector<1x16x128xf32>
    %358 = arith.mulf %357, %356 : vector<1x16x128xf32>
    %359 = arith.addf %349, %358 : vector<1x16x128xf32>
    %c0_182 = arith.constant 0 : index
    %c45 = arith.constant 45 : index
    %360 = memref.load %arg11[%c0_182, %c45] : memref<4x49xf32, #tpu.memory_space<smem>>
    %361 = vector.broadcast %360 : f32 to vector<1x16x128xf32>
    %362 = arith.mulf %361, %344 : vector<1x16x128xf32>
    %363 = arith.addf %354, %362 : vector<1x16x128xf32>
    %c0_183 = arith.constant 0 : index
    %c46 = arith.constant 46 : index
    %364 = memref.load %arg11[%c0_183, %c46] : memref<4x49xf32, #tpu.memory_space<smem>>
    %c127_i32_184 = arith.constant 127 : i32
    %365 = tpu.dynamic_rotate %344 by %c127_i32_184 dim 2 : vector<1x16x128xf32>, i32 -> vector<1x16x128xf32>
    %366 = vector.broadcast %364 : f32 to vector<1x16x128xf32>
    %367 = arith.mulf %366, %365 : vector<1x16x128xf32>
    %368 = arith.addf %359, %367 : vector<1x16x128xf32>
    %c0_185 = arith.constant 0 : index
    %c47 = arith.constant 47 : index
    %369 = memref.load %arg11[%c0_185, %c47] : memref<4x49xf32, #tpu.memory_space<smem>>
    %c126_i32_186 = arith.constant 126 : i32
    %370 = tpu.dynamic_rotate %344 by %c126_i32_186 dim 2 : vector<1x16x128xf32>, i32 -> vector<1x16x128xf32>
    %371 = vector.broadcast %369 : f32 to vector<1x16x128xf32>
    %372 = arith.mulf %371, %370 : vector<1x16x128xf32>
    %373 = arith.addf %363, %372 : vector<1x16x128xf32>
    %c0_187 = arith.constant 0 : index
    %c48 = arith.constant 48 : index
    %374 = memref.load %arg11[%c0_187, %c48] : memref<4x49xf32, #tpu.memory_space<smem>>
    %c125_i32_188 = arith.constant 125 : i32
    %375 = tpu.dynamic_rotate %344 by %c125_i32_188 dim 2 : vector<1x16x128xf32>, i32 -> vector<1x16x128xf32>
    %376 = vector.broadcast %374 : f32 to vector<1x16x128xf32>
    %377 = arith.mulf %376, %375 : vector<1x16x128xf32>
    %378 = arith.addf %368, %377 : vector<1x16x128xf32>
    %379 = arith.addf %378, %373 : vector<1x16x128xf32>
    %cst_189 = arith.constant 0.000000e+00 : f32
    %380 = vector.broadcast %cst_189 : f32 to vector<1x16x128xf32>
    %cst_190 = arith.constant 0.000000e+00 : f32
    %381 = vector.broadcast %cst_190 : f32 to vector<1x16x128xf32>
    %c1_191 = arith.constant 1 : index
    %c0_192 = arith.constant 0 : index
    %c0_193 = arith.constant 0 : index
    %c0_194 = arith.constant 0 : index
    %382 = vector.load %arg13[%c1_191, %c0_192, %c0_193, %c0_194] : memref<4x1x24x128xf32, #tpu.memory_space<vmem>>, vector<1x1x16x128xf32>
    %383 = vector.shape_cast %382 : vector<1x1x16x128xf32> to vector<1x16x128xf32>
    %c1_195 = arith.constant 1 : index
    %c0_196 = arith.constant 0 : index
    %384 = memref.load %arg11[%c1_195, %c0_196] : memref<4x49xf32, #tpu.memory_space<smem>>
    %c3_i32_197 = arith.constant 3 : i32
    %385 = tpu.dynamic_rotate %383 by %c3_i32_197 dim 2 : vector<1x16x128xf32>, i32 -> vector<1x16x128xf32>
    %386 = vector.broadcast %384 : f32 to vector<1x16x128xf32>
    %387 = arith.mulf %386, %385 : vector<1x16x128xf32>
    %388 = arith.addf %380, %387 : vector<1x16x128xf32>
    %c1_198 = arith.constant 1 : index
    %c1_199 = arith.constant 1 : index
    %389 = memref.load %arg11[%c1_198, %c1_199] : memref<4x49xf32, #tpu.memory_space<smem>>
    %c2_i32_200 = arith.constant 2 : i32
    %390 = tpu.dynamic_rotate %383 by %c2_i32_200 dim 2 : vector<1x16x128xf32>, i32 -> vector<1x16x128xf32>
    %391 = vector.broadcast %389 : f32 to vector<1x16x128xf32>
    %392 = arith.mulf %391, %390 : vector<1x16x128xf32>
    %393 = arith.addf %381, %392 : vector<1x16x128xf32>
    %c1_201 = arith.constant 1 : index
    %c2_202 = arith.constant 2 : index
    %394 = memref.load %arg11[%c1_201, %c2_202] : memref<4x49xf32, #tpu.memory_space<smem>>
    %c1_i32_203 = arith.constant 1 : i32
    %395 = tpu.dynamic_rotate %383 by %c1_i32_203 dim 2 : vector<1x16x128xf32>, i32 -> vector<1x16x128xf32>
    %396 = vector.broadcast %394 : f32 to vector<1x16x128xf32>
    %397 = arith.mulf %396, %395 : vector<1x16x128xf32>
    %398 = arith.addf %388, %397 : vector<1x16x128xf32>
    %c1_204 = arith.constant 1 : index
    %c3_205 = arith.constant 3 : index
    %399 = memref.load %arg11[%c1_204, %c3_205] : memref<4x49xf32, #tpu.memory_space<smem>>
    %400 = vector.broadcast %399 : f32 to vector<1x16x128xf32>
    %401 = arith.mulf %400, %383 : vector<1x16x128xf32>
    %402 = arith.addf %393, %401 : vector<1x16x128xf32>
    %c1_206 = arith.constant 1 : index
    %c4_207 = arith.constant 4 : index
    %403 = memref.load %arg11[%c1_206, %c4_207] : memref<4x49xf32, #tpu.memory_space<smem>>
    %c127_i32_208 = arith.constant 127 : i32
    %404 = tpu.dynamic_rotate %383 by %c127_i32_208 dim 2 : vector<1x16x128xf32>, i32 -> vector<1x16x128xf32>
    %405 = vector.broadcast %403 : f32 to vector<1x16x128xf32>
    %406 = arith.mulf %405, %404 : vector<1x16x128xf32>
    %407 = arith.addf %398, %406 : vector<1x16x128xf32>
    %c1_209 = arith.constant 1 : index
    %c5_210 = arith.constant 5 : index
    %408 = memref.load %arg11[%c1_209, %c5_210] : memref<4x49xf32, #tpu.memory_space<smem>>
    %c126_i32_211 = arith.constant 126 : i32
    %409 = tpu.dynamic_rotate %383 by %c126_i32_211 dim 2 : vector<1x16x128xf32>, i32 -> vector<1x16x128xf32>
    %410 = vector.broadcast %408 : f32 to vector<1x16x128xf32>
    %411 = arith.mulf %410, %409 : vector<1x16x128xf32>
    %412 = arith.addf %402, %411 : vector<1x16x128xf32>
    %c1_212 = arith.constant 1 : index
    %c6_213 = arith.constant 6 : index
    %413 = memref.load %arg11[%c1_212, %c6_213] : memref<4x49xf32, #tpu.memory_space<smem>>
    %c125_i32_214 = arith.constant 125 : i32
    %414 = tpu.dynamic_rotate %383 by %c125_i32_214 dim 2 : vector<1x16x128xf32>, i32 -> vector<1x16x128xf32>
    %415 = vector.broadcast %413 : f32 to vector<1x16x128xf32>
    %416 = arith.mulf %415, %414 : vector<1x16x128xf32>
    %417 = arith.addf %407, %416 : vector<1x16x128xf32>
    %c1_215 = arith.constant 1 : index
    %c0_216 = arith.constant 0 : index
    %c1_217 = arith.constant 1 : index
    %c0_218 = arith.constant 0 : index
    %418 = vector.load %arg13[%c1_215, %c0_216, %c1_217, %c0_218] : memref<4x1x24x128xf32, #tpu.memory_space<vmem>>, vector<1x1x16x128xf32>
    %419 = vector.shape_cast %418 : vector<1x1x16x128xf32> to vector<1x16x128xf32>
    %c1_219 = arith.constant 1 : index
    %c7_220 = arith.constant 7 : index
    %420 = memref.load %arg11[%c1_219, %c7_220] : memref<4x49xf32, #tpu.memory_space<smem>>
    %c3_i32_221 = arith.constant 3 : i32
    %421 = tpu.dynamic_rotate %419 by %c3_i32_221 dim 2 : vector<1x16x128xf32>, i32 -> vector<1x16x128xf32>
    %422 = vector.broadcast %420 : f32 to vector<1x16x128xf32>
    %423 = arith.mulf %422, %421 : vector<1x16x128xf32>
    %424 = arith.addf %412, %423 : vector<1x16x128xf32>
    %c1_222 = arith.constant 1 : index
    %c8_223 = arith.constant 8 : index
    %425 = memref.load %arg11[%c1_222, %c8_223] : memref<4x49xf32, #tpu.memory_space<smem>>
    %c2_i32_224 = arith.constant 2 : i32
    %426 = tpu.dynamic_rotate %419 by %c2_i32_224 dim 2 : vector<1x16x128xf32>, i32 -> vector<1x16x128xf32>
    %427 = vector.broadcast %425 : f32 to vector<1x16x128xf32>
    %428 = arith.mulf %427, %426 : vector<1x16x128xf32>
    %429 = arith.addf %417, %428 : vector<1x16x128xf32>
    %c1_225 = arith.constant 1 : index
    %c9_226 = arith.constant 9 : index
    %430 = memref.load %arg11[%c1_225, %c9_226] : memref<4x49xf32, #tpu.memory_space<smem>>
    %c1_i32_227 = arith.constant 1 : i32
    %431 = tpu.dynamic_rotate %419 by %c1_i32_227 dim 2 : vector<1x16x128xf32>, i32 -> vector<1x16x128xf32>
    %432 = vector.broadcast %430 : f32 to vector<1x16x128xf32>
    %433 = arith.mulf %432, %431 : vector<1x16x128xf32>
    %434 = arith.addf %424, %433 : vector<1x16x128xf32>
    %c1_228 = arith.constant 1 : index
    %c10_229 = arith.constant 10 : index
    %435 = memref.load %arg11[%c1_228, %c10_229] : memref<4x49xf32, #tpu.memory_space<smem>>
    %436 = vector.broadcast %435 : f32 to vector<1x16x128xf32>
    %437 = arith.mulf %436, %419 : vector<1x16x128xf32>
    %438 = arith.addf %429, %437 : vector<1x16x128xf32>
    %c1_230 = arith.constant 1 : index
    %c11_231 = arith.constant 11 : index
    %439 = memref.load %arg11[%c1_230, %c11_231] : memref<4x49xf32, #tpu.memory_space<smem>>
    %c127_i32_232 = arith.constant 127 : i32
    %440 = tpu.dynamic_rotate %419 by %c127_i32_232 dim 2 : vector<1x16x128xf32>, i32 -> vector<1x16x128xf32>
    %441 = vector.broadcast %439 : f32 to vector<1x16x128xf32>
    %442 = arith.mulf %441, %440 : vector<1x16x128xf32>
    %443 = arith.addf %434, %442 : vector<1x16x128xf32>
    %c1_233 = arith.constant 1 : index
    %c12_234 = arith.constant 12 : index
    %444 = memref.load %arg11[%c1_233, %c12_234] : memref<4x49xf32, #tpu.memory_space<smem>>
    %c126_i32_235 = arith.constant 126 : i32
    %445 = tpu.dynamic_rotate %419 by %c126_i32_235 dim 2 : vector<1x16x128xf32>, i32 -> vector<1x16x128xf32>
    %446 = vector.broadcast %444 : f32 to vector<1x16x128xf32>
    %447 = arith.mulf %446, %445 : vector<1x16x128xf32>
    %448 = arith.addf %438, %447 : vector<1x16x128xf32>
    %c1_236 = arith.constant 1 : index
    %c13_237 = arith.constant 13 : index
    %449 = memref.load %arg11[%c1_236, %c13_237] : memref<4x49xf32, #tpu.memory_space<smem>>
    %c125_i32_238 = arith.constant 125 : i32
    %450 = tpu.dynamic_rotate %419 by %c125_i32_238 dim 2 : vector<1x16x128xf32>, i32 -> vector<1x16x128xf32>
    %451 = vector.broadcast %449 : f32 to vector<1x16x128xf32>
    %452 = arith.mulf %451, %450 : vector<1x16x128xf32>
    %453 = arith.addf %443, %452 : vector<1x16x128xf32>
    %c1_239 = arith.constant 1 : index
    %c0_240 = arith.constant 0 : index
    %c2_241 = arith.constant 2 : index
    %c0_242 = arith.constant 0 : index
    %454 = vector.load %arg13[%c1_239, %c0_240, %c2_241, %c0_242] : memref<4x1x24x128xf32, #tpu.memory_space<vmem>>, vector<1x1x16x128xf32>
    %455 = vector.shape_cast %454 : vector<1x1x16x128xf32> to vector<1x16x128xf32>
    %c1_243 = arith.constant 1 : index
    %c14_244 = arith.constant 14 : index
    %456 = memref.load %arg11[%c1_243, %c14_244] : memref<4x49xf32, #tpu.memory_space<smem>>
    %c3_i32_245 = arith.constant 3 : i32
    %457 = tpu.dynamic_rotate %455 by %c3_i32_245 dim 2 : vector<1x16x128xf32>, i32 -> vector<1x16x128xf32>
    %458 = vector.broadcast %456 : f32 to vector<1x16x128xf32>
    %459 = arith.mulf %458, %457 : vector<1x16x128xf32>
    %460 = arith.addf %448, %459 : vector<1x16x128xf32>
    %c1_246 = arith.constant 1 : index
    %c15_247 = arith.constant 15 : index
    %461 = memref.load %arg11[%c1_246, %c15_247] : memref<4x49xf32, #tpu.memory_space<smem>>
    %c2_i32_248 = arith.constant 2 : i32
    %462 = tpu.dynamic_rotate %455 by %c2_i32_248 dim 2 : vector<1x16x128xf32>, i32 -> vector<1x16x128xf32>
    %463 = vector.broadcast %461 : f32 to vector<1x16x128xf32>
    %464 = arith.mulf %463, %462 : vector<1x16x128xf32>
    %465 = arith.addf %453, %464 : vector<1x16x128xf32>
    %c1_249 = arith.constant 1 : index
    %c16_250 = arith.constant 16 : index
    %466 = memref.load %arg11[%c1_249, %c16_250] : memref<4x49xf32, #tpu.memory_space<smem>>
    %c1_i32_251 = arith.constant 1 : i32
    %467 = tpu.dynamic_rotate %455 by %c1_i32_251 dim 2 : vector<1x16x128xf32>, i32 -> vector<1x16x128xf32>
    %468 = vector.broadcast %466 : f32 to vector<1x16x128xf32>
    %469 = arith.mulf %468, %467 : vector<1x16x128xf32>
    %470 = arith.addf %460, %469 : vector<1x16x128xf32>
    %c1_252 = arith.constant 1 : index
    %c17_253 = arith.constant 17 : index
    %471 = memref.load %arg11[%c1_252, %c17_253] : memref<4x49xf32, #tpu.memory_space<smem>>
    %472 = vector.broadcast %471 : f32 to vector<1x16x128xf32>
    %473 = arith.mulf %472, %455 : vector<1x16x128xf32>
    %474 = arith.addf %465, %473 : vector<1x16x128xf32>
    %c1_254 = arith.constant 1 : index
    %c18_255 = arith.constant 18 : index
    %475 = memref.load %arg11[%c1_254, %c18_255] : memref<4x49xf32, #tpu.memory_space<smem>>
    %c127_i32_256 = arith.constant 127 : i32
    %476 = tpu.dynamic_rotate %455 by %c127_i32_256 dim 2 : vector<1x16x128xf32>, i32 -> vector<1x16x128xf32>
    %477 = vector.broadcast %475 : f32 to vector<1x16x128xf32>
    %478 = arith.mulf %477, %476 : vector<1x16x128xf32>
    %479 = arith.addf %470, %478 : vector<1x16x128xf32>
    %c1_257 = arith.constant 1 : index
    %c19_258 = arith.constant 19 : index
    %480 = memref.load %arg11[%c1_257, %c19_258] : memref<4x49xf32, #tpu.memory_space<smem>>
    %c126_i32_259 = arith.constant 126 : i32
    %481 = tpu.dynamic_rotate %455 by %c126_i32_259 dim 2 : vector<1x16x128xf32>, i32 -> vector<1x16x128xf32>
    %482 = vector.broadcast %480 : f32 to vector<1x16x128xf32>
    %483 = arith.mulf %482, %481 : vector<1x16x128xf32>
    %484 = arith.addf %474, %483 : vector<1x16x128xf32>
    %c1_260 = arith.constant 1 : index
    %c20_261 = arith.constant 20 : index
    %485 = memref.load %arg11[%c1_260, %c20_261] : memref<4x49xf32, #tpu.memory_space<smem>>
    %c125_i32_262 = arith.constant 125 : i32
    %486 = tpu.dynamic_rotate %455 by %c125_i32_262 dim 2 : vector<1x16x128xf32>, i32 -> vector<1x16x128xf32>
    %487 = vector.broadcast %485 : f32 to vector<1x16x128xf32>
    %488 = arith.mulf %487, %486 : vector<1x16x128xf32>
    %489 = arith.addf %479, %488 : vector<1x16x128xf32>
    %c1_263 = arith.constant 1 : index
    %c0_264 = arith.constant 0 : index
    %c3_265 = arith.constant 3 : index
    %c0_266 = arith.constant 0 : index
    %490 = vector.load %arg13[%c1_263, %c0_264, %c3_265, %c0_266] : memref<4x1x24x128xf32, #tpu.memory_space<vmem>>, vector<1x1x16x128xf32>
    %491 = vector.shape_cast %490 : vector<1x1x16x128xf32> to vector<1x16x128xf32>
    %c1_267 = arith.constant 1 : index
    %c21_268 = arith.constant 21 : index
    %492 = memref.load %arg11[%c1_267, %c21_268] : memref<4x49xf32, #tpu.memory_space<smem>>
    %c3_i32_269 = arith.constant 3 : i32
    %493 = tpu.dynamic_rotate %491 by %c3_i32_269 dim 2 : vector<1x16x128xf32>, i32 -> vector<1x16x128xf32>
    %494 = vector.broadcast %492 : f32 to vector<1x16x128xf32>
    %495 = arith.mulf %494, %493 : vector<1x16x128xf32>
    %496 = arith.addf %484, %495 : vector<1x16x128xf32>
    %c1_270 = arith.constant 1 : index
    %c22_271 = arith.constant 22 : index
    %497 = memref.load %arg11[%c1_270, %c22_271] : memref<4x49xf32, #tpu.memory_space<smem>>
    %c2_i32_272 = arith.constant 2 : i32
    %498 = tpu.dynamic_rotate %491 by %c2_i32_272 dim 2 : vector<1x16x128xf32>, i32 -> vector<1x16x128xf32>
    %499 = vector.broadcast %497 : f32 to vector<1x16x128xf32>
    %500 = arith.mulf %499, %498 : vector<1x16x128xf32>
    %501 = arith.addf %489, %500 : vector<1x16x128xf32>
    %c1_273 = arith.constant 1 : index
    %c23_274 = arith.constant 23 : index
    %502 = memref.load %arg11[%c1_273, %c23_274] : memref<4x49xf32, #tpu.memory_space<smem>>
    %c1_i32_275 = arith.constant 1 : i32
    %503 = tpu.dynamic_rotate %491 by %c1_i32_275 dim 2 : vector<1x16x128xf32>, i32 -> vector<1x16x128xf32>
    %504 = vector.broadcast %502 : f32 to vector<1x16x128xf32>
    %505 = arith.mulf %504, %503 : vector<1x16x128xf32>
    %506 = arith.addf %496, %505 : vector<1x16x128xf32>
    %c1_276 = arith.constant 1 : index
    %c24_277 = arith.constant 24 : index
    %507 = memref.load %arg11[%c1_276, %c24_277] : memref<4x49xf32, #tpu.memory_space<smem>>
    %508 = vector.broadcast %507 : f32 to vector<1x16x128xf32>
    %509 = arith.mulf %508, %491 : vector<1x16x128xf32>
    %510 = arith.addf %501, %509 : vector<1x16x128xf32>
    %c1_278 = arith.constant 1 : index
    %c25_279 = arith.constant 25 : index
    %511 = memref.load %arg11[%c1_278, %c25_279] : memref<4x49xf32, #tpu.memory_space<smem>>
    %c127_i32_280 = arith.constant 127 : i32
    %512 = tpu.dynamic_rotate %491 by %c127_i32_280 dim 2 : vector<1x16x128xf32>, i32 -> vector<1x16x128xf32>
    %513 = vector.broadcast %511 : f32 to vector<1x16x128xf32>
    %514 = arith.mulf %513, %512 : vector<1x16x128xf32>
    %515 = arith.addf %506, %514 : vector<1x16x128xf32>
    %c1_281 = arith.constant 1 : index
    %c26_282 = arith.constant 26 : index
    %516 = memref.load %arg11[%c1_281, %c26_282] : memref<4x49xf32, #tpu.memory_space<smem>>
    %c126_i32_283 = arith.constant 126 : i32
    %517 = tpu.dynamic_rotate %491 by %c126_i32_283 dim 2 : vector<1x16x128xf32>, i32 -> vector<1x16x128xf32>
    %518 = vector.broadcast %516 : f32 to vector<1x16x128xf32>
    %519 = arith.mulf %518, %517 : vector<1x16x128xf32>
    %520 = arith.addf %510, %519 : vector<1x16x128xf32>
    %c1_284 = arith.constant 1 : index
    %c27_285 = arith.constant 27 : index
    %521 = memref.load %arg11[%c1_284, %c27_285] : memref<4x49xf32, #tpu.memory_space<smem>>
    %c125_i32_286 = arith.constant 125 : i32
    %522 = tpu.dynamic_rotate %491 by %c125_i32_286 dim 2 : vector<1x16x128xf32>, i32 -> vector<1x16x128xf32>
    %523 = vector.broadcast %521 : f32 to vector<1x16x128xf32>
    %524 = arith.mulf %523, %522 : vector<1x16x128xf32>
    %525 = arith.addf %515, %524 : vector<1x16x128xf32>
    %c1_287 = arith.constant 1 : index
    %c0_288 = arith.constant 0 : index
    %c4_289 = arith.constant 4 : index
    %c0_290 = arith.constant 0 : index
    %526 = vector.load %arg13[%c1_287, %c0_288, %c4_289, %c0_290] : memref<4x1x24x128xf32, #tpu.memory_space<vmem>>, vector<1x1x16x128xf32>
    %527 = vector.shape_cast %526 : vector<1x1x16x128xf32> to vector<1x16x128xf32>
    %c1_291 = arith.constant 1 : index
    %c28_292 = arith.constant 28 : index
    %528 = memref.load %arg11[%c1_291, %c28_292] : memref<4x49xf32, #tpu.memory_space<smem>>
    %c3_i32_293 = arith.constant 3 : i32
    %529 = tpu.dynamic_rotate %527 by %c3_i32_293 dim 2 : vector<1x16x128xf32>, i32 -> vector<1x16x128xf32>
    %530 = vector.broadcast %528 : f32 to vector<1x16x128xf32>
    %531 = arith.mulf %530, %529 : vector<1x16x128xf32>
    %532 = arith.addf %520, %531 : vector<1x16x128xf32>
    %c1_294 = arith.constant 1 : index
    %c29_295 = arith.constant 29 : index
    %533 = memref.load %arg11[%c1_294, %c29_295] : memref<4x49xf32, #tpu.memory_space<smem>>
    %c2_i32_296 = arith.constant 2 : i32
    %534 = tpu.dynamic_rotate %527 by %c2_i32_296 dim 2 : vector<1x16x128xf32>, i32 -> vector<1x16x128xf32>
    %535 = vector.broadcast %533 : f32 to vector<1x16x128xf32>
    %536 = arith.mulf %535, %534 : vector<1x16x128xf32>
    %537 = arith.addf %525, %536 : vector<1x16x128xf32>
    %c1_297 = arith.constant 1 : index
    %c30_298 = arith.constant 30 : index
    %538 = memref.load %arg11[%c1_297, %c30_298] : memref<4x49xf32, #tpu.memory_space<smem>>
    %c1_i32_299 = arith.constant 1 : i32
    %539 = tpu.dynamic_rotate %527 by %c1_i32_299 dim 2 : vector<1x16x128xf32>, i32 -> vector<1x16x128xf32>
    %540 = vector.broadcast %538 : f32 to vector<1x16x128xf32>
    %541 = arith.mulf %540, %539 : vector<1x16x128xf32>
    %542 = arith.addf %532, %541 : vector<1x16x128xf32>
    %c1_300 = arith.constant 1 : index
    %c31_301 = arith.constant 31 : index
    %543 = memref.load %arg11[%c1_300, %c31_301] : memref<4x49xf32, #tpu.memory_space<smem>>
    %544 = vector.broadcast %543 : f32 to vector<1x16x128xf32>
    %545 = arith.mulf %544, %527 : vector<1x16x128xf32>
    %546 = arith.addf %537, %545 : vector<1x16x128xf32>
    %c1_302 = arith.constant 1 : index
    %c32_303 = arith.constant 32 : index
    %547 = memref.load %arg11[%c1_302, %c32_303] : memref<4x49xf32, #tpu.memory_space<smem>>
    %c127_i32_304 = arith.constant 127 : i32
    %548 = tpu.dynamic_rotate %527 by %c127_i32_304 dim 2 : vector<1x16x128xf32>, i32 -> vector<1x16x128xf32>
    %549 = vector.broadcast %547 : f32 to vector<1x16x128xf32>
    %550 = arith.mulf %549, %548 : vector<1x16x128xf32>
    %551 = arith.addf %542, %550 : vector<1x16x128xf32>
    %c1_305 = arith.constant 1 : index
    %c33_306 = arith.constant 33 : index
    %552 = memref.load %arg11[%c1_305, %c33_306] : memref<4x49xf32, #tpu.memory_space<smem>>
    %c126_i32_307 = arith.constant 126 : i32
    %553 = tpu.dynamic_rotate %527 by %c126_i32_307 dim 2 : vector<1x16x128xf32>, i32 -> vector<1x16x128xf32>
    %554 = vector.broadcast %552 : f32 to vector<1x16x128xf32>
    %555 = arith.mulf %554, %553 : vector<1x16x128xf32>
    %556 = arith.addf %546, %555 : vector<1x16x128xf32>
    %c1_308 = arith.constant 1 : index
    %c34_309 = arith.constant 34 : index
    %557 = memref.load %arg11[%c1_308, %c34_309] : memref<4x49xf32, #tpu.memory_space<smem>>
    %c125_i32_310 = arith.constant 125 : i32
    %558 = tpu.dynamic_rotate %527 by %c125_i32_310 dim 2 : vector<1x16x128xf32>, i32 -> vector<1x16x128xf32>
    %559 = vector.broadcast %557 : f32 to vector<1x16x128xf32>
    %560 = arith.mulf %559, %558 : vector<1x16x128xf32>
    %561 = arith.addf %551, %560 : vector<1x16x128xf32>
    %c1_311 = arith.constant 1 : index
    %c0_312 = arith.constant 0 : index
    %c5_313 = arith.constant 5 : index
    %c0_314 = arith.constant 0 : index
    %562 = vector.load %arg13[%c1_311, %c0_312, %c5_313, %c0_314] : memref<4x1x24x128xf32, #tpu.memory_space<vmem>>, vector<1x1x16x128xf32>
    %563 = vector.shape_cast %562 : vector<1x1x16x128xf32> to vector<1x16x128xf32>
    %c1_315 = arith.constant 1 : index
    %c35_316 = arith.constant 35 : index
    %564 = memref.load %arg11[%c1_315, %c35_316] : memref<4x49xf32, #tpu.memory_space<smem>>
    %c3_i32_317 = arith.constant 3 : i32
    %565 = tpu.dynamic_rotate %563 by %c3_i32_317 dim 2 : vector<1x16x128xf32>, i32 -> vector<1x16x128xf32>
    %566 = vector.broadcast %564 : f32 to vector<1x16x128xf32>
    %567 = arith.mulf %566, %565 : vector<1x16x128xf32>
    %568 = arith.addf %556, %567 : vector<1x16x128xf32>
    %c1_318 = arith.constant 1 : index
    %c36_319 = arith.constant 36 : index
    %569 = memref.load %arg11[%c1_318, %c36_319] : memref<4x49xf32, #tpu.memory_space<smem>>
    %c2_i32_320 = arith.constant 2 : i32
    %570 = tpu.dynamic_rotate %563 by %c2_i32_320 dim 2 : vector<1x16x128xf32>, i32 -> vector<1x16x128xf32>
    %571 = vector.broadcast %569 : f32 to vector<1x16x128xf32>
    %572 = arith.mulf %571, %570 : vector<1x16x128xf32>
    %573 = arith.addf %561, %572 : vector<1x16x128xf32>
    %c1_321 = arith.constant 1 : index
    %c37_322 = arith.constant 37 : index
    %574 = memref.load %arg11[%c1_321, %c37_322] : memref<4x49xf32, #tpu.memory_space<smem>>
    %c1_i32_323 = arith.constant 1 : i32
    %575 = tpu.dynamic_rotate %563 by %c1_i32_323 dim 2 : vector<1x16x128xf32>, i32 -> vector<1x16x128xf32>
    %576 = vector.broadcast %574 : f32 to vector<1x16x128xf32>
    %577 = arith.mulf %576, %575 : vector<1x16x128xf32>
    %578 = arith.addf %568, %577 : vector<1x16x128xf32>
    %c1_324 = arith.constant 1 : index
    %c38_325 = arith.constant 38 : index
    %579 = memref.load %arg11[%c1_324, %c38_325] : memref<4x49xf32, #tpu.memory_space<smem>>
    %580 = vector.broadcast %579 : f32 to vector<1x16x128xf32>
    %581 = arith.mulf %580, %563 : vector<1x16x128xf32>
    %582 = arith.addf %573, %581 : vector<1x16x128xf32>
    %c1_326 = arith.constant 1 : index
    %c39_327 = arith.constant 39 : index
    %583 = memref.load %arg11[%c1_326, %c39_327] : memref<4x49xf32, #tpu.memory_space<smem>>
    %c127_i32_328 = arith.constant 127 : i32
    %584 = tpu.dynamic_rotate %563 by %c127_i32_328 dim 2 : vector<1x16x128xf32>, i32 -> vector<1x16x128xf32>
    %585 = vector.broadcast %583 : f32 to vector<1x16x128xf32>
    %586 = arith.mulf %585, %584 : vector<1x16x128xf32>
    %587 = arith.addf %578, %586 : vector<1x16x128xf32>
    %c1_329 = arith.constant 1 : index
    %c40_330 = arith.constant 40 : index
    %588 = memref.load %arg11[%c1_329, %c40_330] : memref<4x49xf32, #tpu.memory_space<smem>>
    %c126_i32_331 = arith.constant 126 : i32
    %589 = tpu.dynamic_rotate %563 by %c126_i32_331 dim 2 : vector<1x16x128xf32>, i32 -> vector<1x16x128xf32>
    %590 = vector.broadcast %588 : f32 to vector<1x16x128xf32>
    %591 = arith.mulf %590, %589 : vector<1x16x128xf32>
    %592 = arith.addf %582, %591 : vector<1x16x128xf32>
    %c1_332 = arith.constant 1 : index
    %c41_333 = arith.constant 41 : index
    %593 = memref.load %arg11[%c1_332, %c41_333] : memref<4x49xf32, #tpu.memory_space<smem>>
    %c125_i32_334 = arith.constant 125 : i32
    %594 = tpu.dynamic_rotate %563 by %c125_i32_334 dim 2 : vector<1x16x128xf32>, i32 -> vector<1x16x128xf32>
    %595 = vector.broadcast %593 : f32 to vector<1x16x128xf32>
    %596 = arith.mulf %595, %594 : vector<1x16x128xf32>
    %597 = arith.addf %587, %596 : vector<1x16x128xf32>
    %c1_335 = arith.constant 1 : index
    %c0_336 = arith.constant 0 : index
    %c6_337 = arith.constant 6 : index
    %c0_338 = arith.constant 0 : index
    %598 = vector.load %arg13[%c1_335, %c0_336, %c6_337, %c0_338] : memref<4x1x24x128xf32, #tpu.memory_space<vmem>>, vector<1x1x16x128xf32>
    %599 = vector.shape_cast %598 : vector<1x1x16x128xf32> to vector<1x16x128xf32>
    %c1_339 = arith.constant 1 : index
    %c42_340 = arith.constant 42 : index
    %600 = memref.load %arg11[%c1_339, %c42_340] : memref<4x49xf32, #tpu.memory_space<smem>>
    %c3_i32_341 = arith.constant 3 : i32
    %601 = tpu.dynamic_rotate %599 by %c3_i32_341 dim 2 : vector<1x16x128xf32>, i32 -> vector<1x16x128xf32>
    %602 = vector.broadcast %600 : f32 to vector<1x16x128xf32>
    %603 = arith.mulf %602, %601 : vector<1x16x128xf32>
    %604 = arith.addf %592, %603 : vector<1x16x128xf32>
    %c1_342 = arith.constant 1 : index
    %c43_343 = arith.constant 43 : index
    %605 = memref.load %arg11[%c1_342, %c43_343] : memref<4x49xf32, #tpu.memory_space<smem>>
    %c2_i32_344 = arith.constant 2 : i32
    %606 = tpu.dynamic_rotate %599 by %c2_i32_344 dim 2 : vector<1x16x128xf32>, i32 -> vector<1x16x128xf32>
    %607 = vector.broadcast %605 : f32 to vector<1x16x128xf32>
    %608 = arith.mulf %607, %606 : vector<1x16x128xf32>
    %609 = arith.addf %597, %608 : vector<1x16x128xf32>
    %c1_345 = arith.constant 1 : index
    %c44_346 = arith.constant 44 : index
    %610 = memref.load %arg11[%c1_345, %c44_346] : memref<4x49xf32, #tpu.memory_space<smem>>
    %c1_i32_347 = arith.constant 1 : i32
    %611 = tpu.dynamic_rotate %599 by %c1_i32_347 dim 2 : vector<1x16x128xf32>, i32 -> vector<1x16x128xf32>
    %612 = vector.broadcast %610 : f32 to vector<1x16x128xf32>
    %613 = arith.mulf %612, %611 : vector<1x16x128xf32>
    %614 = arith.addf %604, %613 : vector<1x16x128xf32>
    %c1_348 = arith.constant 1 : index
    %c45_349 = arith.constant 45 : index
    %615 = memref.load %arg11[%c1_348, %c45_349] : memref<4x49xf32, #tpu.memory_space<smem>>
    %616 = vector.broadcast %615 : f32 to vector<1x16x128xf32>
    %617 = arith.mulf %616, %599 : vector<1x16x128xf32>
    %618 = arith.addf %609, %617 : vector<1x16x128xf32>
    %c1_350 = arith.constant 1 : index
    %c46_351 = arith.constant 46 : index
    %619 = memref.load %arg11[%c1_350, %c46_351] : memref<4x49xf32, #tpu.memory_space<smem>>
    %c127_i32_352 = arith.constant 127 : i32
    %620 = tpu.dynamic_rotate %599 by %c127_i32_352 dim 2 : vector<1x16x128xf32>, i32 -> vector<1x16x128xf32>
    %621 = vector.broadcast %619 : f32 to vector<1x16x128xf32>
    %622 = arith.mulf %621, %620 : vector<1x16x128xf32>
    %623 = arith.addf %614, %622 : vector<1x16x128xf32>
    %c1_353 = arith.constant 1 : index
    %c47_354 = arith.constant 47 : index
    %624 = memref.load %arg11[%c1_353, %c47_354] : memref<4x49xf32, #tpu.memory_space<smem>>
    %c126_i32_355 = arith.constant 126 : i32
    %625 = tpu.dynamic_rotate %599 by %c126_i32_355 dim 2 : vector<1x16x128xf32>, i32 -> vector<1x16x128xf32>
    %626 = vector.broadcast %624 : f32 to vector<1x16x128xf32>
    %627 = arith.mulf %626, %625 : vector<1x16x128xf32>
    %628 = arith.addf %618, %627 : vector<1x16x128xf32>
    %c1_356 = arith.constant 1 : index
    %c48_357 = arith.constant 48 : index
    %629 = memref.load %arg11[%c1_356, %c48_357] : memref<4x49xf32, #tpu.memory_space<smem>>
    %c125_i32_358 = arith.constant 125 : i32
    %630 = tpu.dynamic_rotate %599 by %c125_i32_358 dim 2 : vector<1x16x128xf32>, i32 -> vector<1x16x128xf32>
    %631 = vector.broadcast %629 : f32 to vector<1x16x128xf32>
    %632 = arith.mulf %631, %630 : vector<1x16x128xf32>
    %633 = arith.addf %623, %632 : vector<1x16x128xf32>
    %634 = arith.addf %633, %628 : vector<1x16x128xf32>
    %635 = arith.addf %379, %634 : vector<1x16x128xf32>
    %cst_359 = arith.constant 0.000000e+00 : f32
    %636 = vector.broadcast %cst_359 : f32 to vector<1x16x128xf32>
    %cst_360 = arith.constant 0.000000e+00 : f32
    %637 = vector.broadcast %cst_360 : f32 to vector<1x16x128xf32>
    %c2_361 = arith.constant 2 : index
    %c0_362 = arith.constant 0 : index
    %c0_363 = arith.constant 0 : index
    %c0_364 = arith.constant 0 : index
    %638 = vector.load %arg13[%c2_361, %c0_362, %c0_363, %c0_364] : memref<4x1x24x128xf32, #tpu.memory_space<vmem>>, vector<1x1x16x128xf32>
    %639 = vector.shape_cast %638 : vector<1x1x16x128xf32> to vector<1x16x128xf32>
    %c2_365 = arith.constant 2 : index
    %c0_366 = arith.constant 0 : index
    %640 = memref.load %arg11[%c2_365, %c0_366] : memref<4x49xf32, #tpu.memory_space<smem>>
    %c3_i32_367 = arith.constant 3 : i32
    %641 = tpu.dynamic_rotate %639 by %c3_i32_367 dim 2 : vector<1x16x128xf32>, i32 -> vector<1x16x128xf32>
    %642 = vector.broadcast %640 : f32 to vector<1x16x128xf32>
    %643 = arith.mulf %642, %641 : vector<1x16x128xf32>
    %644 = arith.addf %636, %643 : vector<1x16x128xf32>
    %c2_368 = arith.constant 2 : index
    %c1_369 = arith.constant 1 : index
    %645 = memref.load %arg11[%c2_368, %c1_369] : memref<4x49xf32, #tpu.memory_space<smem>>
    %c2_i32_370 = arith.constant 2 : i32
    %646 = tpu.dynamic_rotate %639 by %c2_i32_370 dim 2 : vector<1x16x128xf32>, i32 -> vector<1x16x128xf32>
    %647 = vector.broadcast %645 : f32 to vector<1x16x128xf32>
    %648 = arith.mulf %647, %646 : vector<1x16x128xf32>
    %649 = arith.addf %637, %648 : vector<1x16x128xf32>
    %c2_371 = arith.constant 2 : index
    %c2_372 = arith.constant 2 : index
    %650 = memref.load %arg11[%c2_371, %c2_372] : memref<4x49xf32, #tpu.memory_space<smem>>
    %c1_i32_373 = arith.constant 1 : i32
    %651 = tpu.dynamic_rotate %639 by %c1_i32_373 dim 2 : vector<1x16x128xf32>, i32 -> vector<1x16x128xf32>
    %652 = vector.broadcast %650 : f32 to vector<1x16x128xf32>
    %653 = arith.mulf %652, %651 : vector<1x16x128xf32>
    %654 = arith.addf %644, %653 : vector<1x16x128xf32>
    %c2_374 = arith.constant 2 : index
    %c3_375 = arith.constant 3 : index
    %655 = memref.load %arg11[%c2_374, %c3_375] : memref<4x49xf32, #tpu.memory_space<smem>>
    %656 = vector.broadcast %655 : f32 to vector<1x16x128xf32>
    %657 = arith.mulf %656, %639 : vector<1x16x128xf32>
    %658 = arith.addf %649, %657 : vector<1x16x128xf32>
    %c2_376 = arith.constant 2 : index
    %c4_377 = arith.constant 4 : index
    %659 = memref.load %arg11[%c2_376, %c4_377] : memref<4x49xf32, #tpu.memory_space<smem>>
    %c127_i32_378 = arith.constant 127 : i32
    %660 = tpu.dynamic_rotate %639 by %c127_i32_378 dim 2 : vector<1x16x128xf32>, i32 -> vector<1x16x128xf32>
    %661 = vector.broadcast %659 : f32 to vector<1x16x128xf32>
    %662 = arith.mulf %661, %660 : vector<1x16x128xf32>
    %663 = arith.addf %654, %662 : vector<1x16x128xf32>
    %c2_379 = arith.constant 2 : index
    %c5_380 = arith.constant 5 : index
    %664 = memref.load %arg11[%c2_379, %c5_380] : memref<4x49xf32, #tpu.memory_space<smem>>
    %c126_i32_381 = arith.constant 126 : i32
    %665 = tpu.dynamic_rotate %639 by %c126_i32_381 dim 2 : vector<1x16x128xf32>, i32 -> vector<1x16x128xf32>
    %666 = vector.broadcast %664 : f32 to vector<1x16x128xf32>
    %667 = arith.mulf %666, %665 : vector<1x16x128xf32>
    %668 = arith.addf %658, %667 : vector<1x16x128xf32>
    %c2_382 = arith.constant 2 : index
    %c6_383 = arith.constant 6 : index
    %669 = memref.load %arg11[%c2_382, %c6_383] : memref<4x49xf32, #tpu.memory_space<smem>>
    %c125_i32_384 = arith.constant 125 : i32
    %670 = tpu.dynamic_rotate %639 by %c125_i32_384 dim 2 : vector<1x16x128xf32>, i32 -> vector<1x16x128xf32>
    %671 = vector.broadcast %669 : f32 to vector<1x16x128xf32>
    %672 = arith.mulf %671, %670 : vector<1x16x128xf32>
    %673 = arith.addf %663, %672 : vector<1x16x128xf32>
    %c2_385 = arith.constant 2 : index
    %c0_386 = arith.constant 0 : index
    %c1_387 = arith.constant 1 : index
    %c0_388 = arith.constant 0 : index
    %674 = vector.load %arg13[%c2_385, %c0_386, %c1_387, %c0_388] : memref<4x1x24x128xf32, #tpu.memory_space<vmem>>, vector<1x1x16x128xf32>
    %675 = vector.shape_cast %674 : vector<1x1x16x128xf32> to vector<1x16x128xf32>
    %c2_389 = arith.constant 2 : index
    %c7_390 = arith.constant 7 : index
    %676 = memref.load %arg11[%c2_389, %c7_390] : memref<4x49xf32, #tpu.memory_space<smem>>
    %c3_i32_391 = arith.constant 3 : i32
    %677 = tpu.dynamic_rotate %675 by %c3_i32_391 dim 2 : vector<1x16x128xf32>, i32 -> vector<1x16x128xf32>
    %678 = vector.broadcast %676 : f32 to vector<1x16x128xf32>
    %679 = arith.mulf %678, %677 : vector<1x16x128xf32>
    %680 = arith.addf %668, %679 : vector<1x16x128xf32>
    %c2_392 = arith.constant 2 : index
    %c8_393 = arith.constant 8 : index
    %681 = memref.load %arg11[%c2_392, %c8_393] : memref<4x49xf32, #tpu.memory_space<smem>>
    %c2_i32_394 = arith.constant 2 : i32
    %682 = tpu.dynamic_rotate %675 by %c2_i32_394 dim 2 : vector<1x16x128xf32>, i32 -> vector<1x16x128xf32>
    %683 = vector.broadcast %681 : f32 to vector<1x16x128xf32>
    %684 = arith.mulf %683, %682 : vector<1x16x128xf32>
    %685 = arith.addf %673, %684 : vector<1x16x128xf32>
    %c2_395 = arith.constant 2 : index
    %c9_396 = arith.constant 9 : index
    %686 = memref.load %arg11[%c2_395, %c9_396] : memref<4x49xf32, #tpu.memory_space<smem>>
    %c1_i32_397 = arith.constant 1 : i32
    %687 = tpu.dynamic_rotate %675 by %c1_i32_397 dim 2 : vector<1x16x128xf32>, i32 -> vector<1x16x128xf32>
    %688 = vector.broadcast %686 : f32 to vector<1x16x128xf32>
    %689 = arith.mulf %688, %687 : vector<1x16x128xf32>
    %690 = arith.addf %680, %689 : vector<1x16x128xf32>
    %c2_398 = arith.constant 2 : index
    %c10_399 = arith.constant 10 : index
    %691 = memref.load %arg11[%c2_398, %c10_399] : memref<4x49xf32, #tpu.memory_space<smem>>
    %692 = vector.broadcast %691 : f32 to vector<1x16x128xf32>
    %693 = arith.mulf %692, %675 : vector<1x16x128xf32>
    %694 = arith.addf %685, %693 : vector<1x16x128xf32>
    %c2_400 = arith.constant 2 : index
    %c11_401 = arith.constant 11 : index
    %695 = memref.load %arg11[%c2_400, %c11_401] : memref<4x49xf32, #tpu.memory_space<smem>>
    %c127_i32_402 = arith.constant 127 : i32
    %696 = tpu.dynamic_rotate %675 by %c127_i32_402 dim 2 : vector<1x16x128xf32>, i32 -> vector<1x16x128xf32>
    %697 = vector.broadcast %695 : f32 to vector<1x16x128xf32>
    %698 = arith.mulf %697, %696 : vector<1x16x128xf32>
    %699 = arith.addf %690, %698 : vector<1x16x128xf32>
    %c2_403 = arith.constant 2 : index
    %c12_404 = arith.constant 12 : index
    %700 = memref.load %arg11[%c2_403, %c12_404] : memref<4x49xf32, #tpu.memory_space<smem>>
    %c126_i32_405 = arith.constant 126 : i32
    %701 = tpu.dynamic_rotate %675 by %c126_i32_405 dim 2 : vector<1x16x128xf32>, i32 -> vector<1x16x128xf32>
    %702 = vector.broadcast %700 : f32 to vector<1x16x128xf32>
    %703 = arith.mulf %702, %701 : vector<1x16x128xf32>
    %704 = arith.addf %694, %703 : vector<1x16x128xf32>
    %c2_406 = arith.constant 2 : index
    %c13_407 = arith.constant 13 : index
    %705 = memref.load %arg11[%c2_406, %c13_407] : memref<4x49xf32, #tpu.memory_space<smem>>
    %c125_i32_408 = arith.constant 125 : i32
    %706 = tpu.dynamic_rotate %675 by %c125_i32_408 dim 2 : vector<1x16x128xf32>, i32 -> vector<1x16x128xf32>
    %707 = vector.broadcast %705 : f32 to vector<1x16x128xf32>
    %708 = arith.mulf %707, %706 : vector<1x16x128xf32>
    %709 = arith.addf %699, %708 : vector<1x16x128xf32>
    %c2_409 = arith.constant 2 : index
    %c0_410 = arith.constant 0 : index
    %c2_411 = arith.constant 2 : index
    %c0_412 = arith.constant 0 : index
    %710 = vector.load %arg13[%c2_409, %c0_410, %c2_411, %c0_412] : memref<4x1x24x128xf32, #tpu.memory_space<vmem>>, vector<1x1x16x128xf32>
    %711 = vector.shape_cast %710 : vector<1x1x16x128xf32> to vector<1x16x128xf32>
    %c2_413 = arith.constant 2 : index
    %c14_414 = arith.constant 14 : index
    %712 = memref.load %arg11[%c2_413, %c14_414] : memref<4x49xf32, #tpu.memory_space<smem>>
    %c3_i32_415 = arith.constant 3 : i32
    %713 = tpu.dynamic_rotate %711 by %c3_i32_415 dim 2 : vector<1x16x128xf32>, i32 -> vector<1x16x128xf32>
    %714 = vector.broadcast %712 : f32 to vector<1x16x128xf32>
    %715 = arith.mulf %714, %713 : vector<1x16x128xf32>
    %716 = arith.addf %704, %715 : vector<1x16x128xf32>
    %c2_416 = arith.constant 2 : index
    %c15_417 = arith.constant 15 : index
    %717 = memref.load %arg11[%c2_416, %c15_417] : memref<4x49xf32, #tpu.memory_space<smem>>
    %c2_i32_418 = arith.constant 2 : i32
    %718 = tpu.dynamic_rotate %711 by %c2_i32_418 dim 2 : vector<1x16x128xf32>, i32 -> vector<1x16x128xf32>
    %719 = vector.broadcast %717 : f32 to vector<1x16x128xf32>
    %720 = arith.mulf %719, %718 : vector<1x16x128xf32>
    %721 = arith.addf %709, %720 : vector<1x16x128xf32>
    %c2_419 = arith.constant 2 : index
    %c16_420 = arith.constant 16 : index
    %722 = memref.load %arg11[%c2_419, %c16_420] : memref<4x49xf32, #tpu.memory_space<smem>>
    %c1_i32_421 = arith.constant 1 : i32
    %723 = tpu.dynamic_rotate %711 by %c1_i32_421 dim 2 : vector<1x16x128xf32>, i32 -> vector<1x16x128xf32>
    %724 = vector.broadcast %722 : f32 to vector<1x16x128xf32>
    %725 = arith.mulf %724, %723 : vector<1x16x128xf32>
    %726 = arith.addf %716, %725 : vector<1x16x128xf32>
    %c2_422 = arith.constant 2 : index
    %c17_423 = arith.constant 17 : index
    %727 = memref.load %arg11[%c2_422, %c17_423] : memref<4x49xf32, #tpu.memory_space<smem>>
    %728 = vector.broadcast %727 : f32 to vector<1x16x128xf32>
    %729 = arith.mulf %728, %711 : vector<1x16x128xf32>
    %730 = arith.addf %721, %729 : vector<1x16x128xf32>
    %c2_424 = arith.constant 2 : index
    %c18_425 = arith.constant 18 : index
    %731 = memref.load %arg11[%c2_424, %c18_425] : memref<4x49xf32, #tpu.memory_space<smem>>
    %c127_i32_426 = arith.constant 127 : i32
    %732 = tpu.dynamic_rotate %711 by %c127_i32_426 dim 2 : vector<1x16x128xf32>, i32 -> vector<1x16x128xf32>
    %733 = vector.broadcast %731 : f32 to vector<1x16x128xf32>
    %734 = arith.mulf %733, %732 : vector<1x16x128xf32>
    %735 = arith.addf %726, %734 : vector<1x16x128xf32>
    %c2_427 = arith.constant 2 : index
    %c19_428 = arith.constant 19 : index
    %736 = memref.load %arg11[%c2_427, %c19_428] : memref<4x49xf32, #tpu.memory_space<smem>>
    %c126_i32_429 = arith.constant 126 : i32
    %737 = tpu.dynamic_rotate %711 by %c126_i32_429 dim 2 : vector<1x16x128xf32>, i32 -> vector<1x16x128xf32>
    %738 = vector.broadcast %736 : f32 to vector<1x16x128xf32>
    %739 = arith.mulf %738, %737 : vector<1x16x128xf32>
    %740 = arith.addf %730, %739 : vector<1x16x128xf32>
    %c2_430 = arith.constant 2 : index
    %c20_431 = arith.constant 20 : index
    %741 = memref.load %arg11[%c2_430, %c20_431] : memref<4x49xf32, #tpu.memory_space<smem>>
    %c125_i32_432 = arith.constant 125 : i32
    %742 = tpu.dynamic_rotate %711 by %c125_i32_432 dim 2 : vector<1x16x128xf32>, i32 -> vector<1x16x128xf32>
    %743 = vector.broadcast %741 : f32 to vector<1x16x128xf32>
    %744 = arith.mulf %743, %742 : vector<1x16x128xf32>
    %745 = arith.addf %735, %744 : vector<1x16x128xf32>
    %c2_433 = arith.constant 2 : index
    %c0_434 = arith.constant 0 : index
    %c3_435 = arith.constant 3 : index
    %c0_436 = arith.constant 0 : index
    %746 = vector.load %arg13[%c2_433, %c0_434, %c3_435, %c0_436] : memref<4x1x24x128xf32, #tpu.memory_space<vmem>>, vector<1x1x16x128xf32>
    %747 = vector.shape_cast %746 : vector<1x1x16x128xf32> to vector<1x16x128xf32>
    %c2_437 = arith.constant 2 : index
    %c21_438 = arith.constant 21 : index
    %748 = memref.load %arg11[%c2_437, %c21_438] : memref<4x49xf32, #tpu.memory_space<smem>>
    %c3_i32_439 = arith.constant 3 : i32
    %749 = tpu.dynamic_rotate %747 by %c3_i32_439 dim 2 : vector<1x16x128xf32>, i32 -> vector<1x16x128xf32>
    %750 = vector.broadcast %748 : f32 to vector<1x16x128xf32>
    %751 = arith.mulf %750, %749 : vector<1x16x128xf32>
    %752 = arith.addf %740, %751 : vector<1x16x128xf32>
    %c2_440 = arith.constant 2 : index
    %c22_441 = arith.constant 22 : index
    %753 = memref.load %arg11[%c2_440, %c22_441] : memref<4x49xf32, #tpu.memory_space<smem>>
    %c2_i32_442 = arith.constant 2 : i32
    %754 = tpu.dynamic_rotate %747 by %c2_i32_442 dim 2 : vector<1x16x128xf32>, i32 -> vector<1x16x128xf32>
    %755 = vector.broadcast %753 : f32 to vector<1x16x128xf32>
    %756 = arith.mulf %755, %754 : vector<1x16x128xf32>
    %757 = arith.addf %745, %756 : vector<1x16x128xf32>
    %c2_443 = arith.constant 2 : index
    %c23_444 = arith.constant 23 : index
    %758 = memref.load %arg11[%c2_443, %c23_444] : memref<4x49xf32, #tpu.memory_space<smem>>
    %c1_i32_445 = arith.constant 1 : i32
    %759 = tpu.dynamic_rotate %747 by %c1_i32_445 dim 2 : vector<1x16x128xf32>, i32 -> vector<1x16x128xf32>
    %760 = vector.broadcast %758 : f32 to vector<1x16x128xf32>
    %761 = arith.mulf %760, %759 : vector<1x16x128xf32>
    %762 = arith.addf %752, %761 : vector<1x16x128xf32>
    %c2_446 = arith.constant 2 : index
    %c24_447 = arith.constant 24 : index
    %763 = memref.load %arg11[%c2_446, %c24_447] : memref<4x49xf32, #tpu.memory_space<smem>>
    %764 = vector.broadcast %763 : f32 to vector<1x16x128xf32>
    %765 = arith.mulf %764, %747 : vector<1x16x128xf32>
    %766 = arith.addf %757, %765 : vector<1x16x128xf32>
    %c2_448 = arith.constant 2 : index
    %c25_449 = arith.constant 25 : index
    %767 = memref.load %arg11[%c2_448, %c25_449] : memref<4x49xf32, #tpu.memory_space<smem>>
    %c127_i32_450 = arith.constant 127 : i32
    %768 = tpu.dynamic_rotate %747 by %c127_i32_450 dim 2 : vector<1x16x128xf32>, i32 -> vector<1x16x128xf32>
    %769 = vector.broadcast %767 : f32 to vector<1x16x128xf32>
    %770 = arith.mulf %769, %768 : vector<1x16x128xf32>
    %771 = arith.addf %762, %770 : vector<1x16x128xf32>
    %c2_451 = arith.constant 2 : index
    %c26_452 = arith.constant 26 : index
    %772 = memref.load %arg11[%c2_451, %c26_452] : memref<4x49xf32, #tpu.memory_space<smem>>
    %c126_i32_453 = arith.constant 126 : i32
    %773 = tpu.dynamic_rotate %747 by %c126_i32_453 dim 2 : vector<1x16x128xf32>, i32 -> vector<1x16x128xf32>
    %774 = vector.broadcast %772 : f32 to vector<1x16x128xf32>
    %775 = arith.mulf %774, %773 : vector<1x16x128xf32>
    %776 = arith.addf %766, %775 : vector<1x16x128xf32>
    %c2_454 = arith.constant 2 : index
    %c27_455 = arith.constant 27 : index
    %777 = memref.load %arg11[%c2_454, %c27_455] : memref<4x49xf32, #tpu.memory_space<smem>>
    %c125_i32_456 = arith.constant 125 : i32
    %778 = tpu.dynamic_rotate %747 by %c125_i32_456 dim 2 : vector<1x16x128xf32>, i32 -> vector<1x16x128xf32>
    %779 = vector.broadcast %777 : f32 to vector<1x16x128xf32>
    %780 = arith.mulf %779, %778 : vector<1x16x128xf32>
    %781 = arith.addf %771, %780 : vector<1x16x128xf32>
    %c2_457 = arith.constant 2 : index
    %c0_458 = arith.constant 0 : index
    %c4_459 = arith.constant 4 : index
    %c0_460 = arith.constant 0 : index
    %782 = vector.load %arg13[%c2_457, %c0_458, %c4_459, %c0_460] : memref<4x1x24x128xf32, #tpu.memory_space<vmem>>, vector<1x1x16x128xf32>
    %783 = vector.shape_cast %782 : vector<1x1x16x128xf32> to vector<1x16x128xf32>
    %c2_461 = arith.constant 2 : index
    %c28_462 = arith.constant 28 : index
    %784 = memref.load %arg11[%c2_461, %c28_462] : memref<4x49xf32, #tpu.memory_space<smem>>
    %c3_i32_463 = arith.constant 3 : i32
    %785 = tpu.dynamic_rotate %783 by %c3_i32_463 dim 2 : vector<1x16x128xf32>, i32 -> vector<1x16x128xf32>
    %786 = vector.broadcast %784 : f32 to vector<1x16x128xf32>
    %787 = arith.mulf %786, %785 : vector<1x16x128xf32>
    %788 = arith.addf %776, %787 : vector<1x16x128xf32>
    %c2_464 = arith.constant 2 : index
    %c29_465 = arith.constant 29 : index
    %789 = memref.load %arg11[%c2_464, %c29_465] : memref<4x49xf32, #tpu.memory_space<smem>>
    %c2_i32_466 = arith.constant 2 : i32
    %790 = tpu.dynamic_rotate %783 by %c2_i32_466 dim 2 : vector<1x16x128xf32>, i32 -> vector<1x16x128xf32>
    %791 = vector.broadcast %789 : f32 to vector<1x16x128xf32>
    %792 = arith.mulf %791, %790 : vector<1x16x128xf32>
    %793 = arith.addf %781, %792 : vector<1x16x128xf32>
    %c2_467 = arith.constant 2 : index
    %c30_468 = arith.constant 30 : index
    %794 = memref.load %arg11[%c2_467, %c30_468] : memref<4x49xf32, #tpu.memory_space<smem>>
    %c1_i32_469 = arith.constant 1 : i32
    %795 = tpu.dynamic_rotate %783 by %c1_i32_469 dim 2 : vector<1x16x128xf32>, i32 -> vector<1x16x128xf32>
    %796 = vector.broadcast %794 : f32 to vector<1x16x128xf32>
    %797 = arith.mulf %796, %795 : vector<1x16x128xf32>
    %798 = arith.addf %788, %797 : vector<1x16x128xf32>
    %c2_470 = arith.constant 2 : index
    %c31_471 = arith.constant 31 : index
    %799 = memref.load %arg11[%c2_470, %c31_471] : memref<4x49xf32, #tpu.memory_space<smem>>
    %800 = vector.broadcast %799 : f32 to vector<1x16x128xf32>
    %801 = arith.mulf %800, %783 : vector<1x16x128xf32>
    %802 = arith.addf %793, %801 : vector<1x16x128xf32>
    %c2_472 = arith.constant 2 : index
    %c32_473 = arith.constant 32 : index
    %803 = memref.load %arg11[%c2_472, %c32_473] : memref<4x49xf32, #tpu.memory_space<smem>>
    %c127_i32_474 = arith.constant 127 : i32
    %804 = tpu.dynamic_rotate %783 by %c127_i32_474 dim 2 : vector<1x16x128xf32>, i32 -> vector<1x16x128xf32>
    %805 = vector.broadcast %803 : f32 to vector<1x16x128xf32>
    %806 = arith.mulf %805, %804 : vector<1x16x128xf32>
    %807 = arith.addf %798, %806 : vector<1x16x128xf32>
    %c2_475 = arith.constant 2 : index
    %c33_476 = arith.constant 33 : index
    %808 = memref.load %arg11[%c2_475, %c33_476] : memref<4x49xf32, #tpu.memory_space<smem>>
    %c126_i32_477 = arith.constant 126 : i32
    %809 = tpu.dynamic_rotate %783 by %c126_i32_477 dim 2 : vector<1x16x128xf32>, i32 -> vector<1x16x128xf32>
    %810 = vector.broadcast %808 : f32 to vector<1x16x128xf32>
    %811 = arith.mulf %810, %809 : vector<1x16x128xf32>
    %812 = arith.addf %802, %811 : vector<1x16x128xf32>
    %c2_478 = arith.constant 2 : index
    %c34_479 = arith.constant 34 : index
    %813 = memref.load %arg11[%c2_478, %c34_479] : memref<4x49xf32, #tpu.memory_space<smem>>
    %c125_i32_480 = arith.constant 125 : i32
    %814 = tpu.dynamic_rotate %783 by %c125_i32_480 dim 2 : vector<1x16x128xf32>, i32 -> vector<1x16x128xf32>
    %815 = vector.broadcast %813 : f32 to vector<1x16x128xf32>
    %816 = arith.mulf %815, %814 : vector<1x16x128xf32>
    %817 = arith.addf %807, %816 : vector<1x16x128xf32>
    %c2_481 = arith.constant 2 : index
    %c0_482 = arith.constant 0 : index
    %c5_483 = arith.constant 5 : index
    %c0_484 = arith.constant 0 : index
    %818 = vector.load %arg13[%c2_481, %c0_482, %c5_483, %c0_484] : memref<4x1x24x128xf32, #tpu.memory_space<vmem>>, vector<1x1x16x128xf32>
    %819 = vector.shape_cast %818 : vector<1x1x16x128xf32> to vector<1x16x128xf32>
    %c2_485 = arith.constant 2 : index
    %c35_486 = arith.constant 35 : index
    %820 = memref.load %arg11[%c2_485, %c35_486] : memref<4x49xf32, #tpu.memory_space<smem>>
    %c3_i32_487 = arith.constant 3 : i32
    %821 = tpu.dynamic_rotate %819 by %c3_i32_487 dim 2 : vector<1x16x128xf32>, i32 -> vector<1x16x128xf32>
    %822 = vector.broadcast %820 : f32 to vector<1x16x128xf32>
    %823 = arith.mulf %822, %821 : vector<1x16x128xf32>
    %824 = arith.addf %812, %823 : vector<1x16x128xf32>
    %c2_488 = arith.constant 2 : index
    %c36_489 = arith.constant 36 : index
    %825 = memref.load %arg11[%c2_488, %c36_489] : memref<4x49xf32, #tpu.memory_space<smem>>
    %c2_i32_490 = arith.constant 2 : i32
    %826 = tpu.dynamic_rotate %819 by %c2_i32_490 dim 2 : vector<1x16x128xf32>, i32 -> vector<1x16x128xf32>
    %827 = vector.broadcast %825 : f32 to vector<1x16x128xf32>
    %828 = arith.mulf %827, %826 : vector<1x16x128xf32>
    %829 = arith.addf %817, %828 : vector<1x16x128xf32>
    %c2_491 = arith.constant 2 : index
    %c37_492 = arith.constant 37 : index
    %830 = memref.load %arg11[%c2_491, %c37_492] : memref<4x49xf32, #tpu.memory_space<smem>>
    %c1_i32_493 = arith.constant 1 : i32
    %831 = tpu.dynamic_rotate %819 by %c1_i32_493 dim 2 : vector<1x16x128xf32>, i32 -> vector<1x16x128xf32>
    %832 = vector.broadcast %830 : f32 to vector<1x16x128xf32>
    %833 = arith.mulf %832, %831 : vector<1x16x128xf32>
    %834 = arith.addf %824, %833 : vector<1x16x128xf32>
    %c2_494 = arith.constant 2 : index
    %c38_495 = arith.constant 38 : index
    %835 = memref.load %arg11[%c2_494, %c38_495] : memref<4x49xf32, #tpu.memory_space<smem>>
    %836 = vector.broadcast %835 : f32 to vector<1x16x128xf32>
    %837 = arith.mulf %836, %819 : vector<1x16x128xf32>
    %838 = arith.addf %829, %837 : vector<1x16x128xf32>
    %c2_496 = arith.constant 2 : index
    %c39_497 = arith.constant 39 : index
    %839 = memref.load %arg11[%c2_496, %c39_497] : memref<4x49xf32, #tpu.memory_space<smem>>
    %c127_i32_498 = arith.constant 127 : i32
    %840 = tpu.dynamic_rotate %819 by %c127_i32_498 dim 2 : vector<1x16x128xf32>, i32 -> vector<1x16x128xf32>
    %841 = vector.broadcast %839 : f32 to vector<1x16x128xf32>
    %842 = arith.mulf %841, %840 : vector<1x16x128xf32>
    %843 = arith.addf %834, %842 : vector<1x16x128xf32>
    %c2_499 = arith.constant 2 : index
    %c40_500 = arith.constant 40 : index
    %844 = memref.load %arg11[%c2_499, %c40_500] : memref<4x49xf32, #tpu.memory_space<smem>>
    %c126_i32_501 = arith.constant 126 : i32
    %845 = tpu.dynamic_rotate %819 by %c126_i32_501 dim 2 : vector<1x16x128xf32>, i32 -> vector<1x16x128xf32>
    %846 = vector.broadcast %844 : f32 to vector<1x16x128xf32>
    %847 = arith.mulf %846, %845 : vector<1x16x128xf32>
    %848 = arith.addf %838, %847 : vector<1x16x128xf32>
    %c2_502 = arith.constant 2 : index
    %c41_503 = arith.constant 41 : index
    %849 = memref.load %arg11[%c2_502, %c41_503] : memref<4x49xf32, #tpu.memory_space<smem>>
    %c125_i32_504 = arith.constant 125 : i32
    %850 = tpu.dynamic_rotate %819 by %c125_i32_504 dim 2 : vector<1x16x128xf32>, i32 -> vector<1x16x128xf32>
    %851 = vector.broadcast %849 : f32 to vector<1x16x128xf32>
    %852 = arith.mulf %851, %850 : vector<1x16x128xf32>
    %853 = arith.addf %843, %852 : vector<1x16x128xf32>
    %c2_505 = arith.constant 2 : index
    %c0_506 = arith.constant 0 : index
    %c6_507 = arith.constant 6 : index
    %c0_508 = arith.constant 0 : index
    %854 = vector.load %arg13[%c2_505, %c0_506, %c6_507, %c0_508] : memref<4x1x24x128xf32, #tpu.memory_space<vmem>>, vector<1x1x16x128xf32>
    %855 = vector.shape_cast %854 : vector<1x1x16x128xf32> to vector<1x16x128xf32>
    %c2_509 = arith.constant 2 : index
    %c42_510 = arith.constant 42 : index
    %856 = memref.load %arg11[%c2_509, %c42_510] : memref<4x49xf32, #tpu.memory_space<smem>>
    %c3_i32_511 = arith.constant 3 : i32
    %857 = tpu.dynamic_rotate %855 by %c3_i32_511 dim 2 : vector<1x16x128xf32>, i32 -> vector<1x16x128xf32>
    %858 = vector.broadcast %856 : f32 to vector<1x16x128xf32>
    %859 = arith.mulf %858, %857 : vector<1x16x128xf32>
    %860 = arith.addf %848, %859 : vector<1x16x128xf32>
    %c2_512 = arith.constant 2 : index
    %c43_513 = arith.constant 43 : index
    %861 = memref.load %arg11[%c2_512, %c43_513] : memref<4x49xf32, #tpu.memory_space<smem>>
    %c2_i32_514 = arith.constant 2 : i32
    %862 = tpu.dynamic_rotate %855 by %c2_i32_514 dim 2 : vector<1x16x128xf32>, i32 -> vector<1x16x128xf32>
    %863 = vector.broadcast %861 : f32 to vector<1x16x128xf32>
    %864 = arith.mulf %863, %862 : vector<1x16x128xf32>
    %865 = arith.addf %853, %864 : vector<1x16x128xf32>
    %c2_515 = arith.constant 2 : index
    %c44_516 = arith.constant 44 : index
    %866 = memref.load %arg11[%c2_515, %c44_516] : memref<4x49xf32, #tpu.memory_space<smem>>
    %c1_i32_517 = arith.constant 1 : i32
    %867 = tpu.dynamic_rotate %855 by %c1_i32_517 dim 2 : vector<1x16x128xf32>, i32 -> vector<1x16x128xf32>
    %868 = vector.broadcast %866 : f32 to vector<1x16x128xf32>
    %869 = arith.mulf %868, %867 : vector<1x16x128xf32>
    %870 = arith.addf %860, %869 : vector<1x16x128xf32>
    %c2_518 = arith.constant 2 : index
    %c45_519 = arith.constant 45 : index
    %871 = memref.load %arg11[%c2_518, %c45_519] : memref<4x49xf32, #tpu.memory_space<smem>>
    %872 = vector.broadcast %871 : f32 to vector<1x16x128xf32>
    %873 = arith.mulf %872, %855 : vector<1x16x128xf32>
    %874 = arith.addf %865, %873 : vector<1x16x128xf32>
    %c2_520 = arith.constant 2 : index
    %c46_521 = arith.constant 46 : index
    %875 = memref.load %arg11[%c2_520, %c46_521] : memref<4x49xf32, #tpu.memory_space<smem>>
    %c127_i32_522 = arith.constant 127 : i32
    %876 = tpu.dynamic_rotate %855 by %c127_i32_522 dim 2 : vector<1x16x128xf32>, i32 -> vector<1x16x128xf32>
    %877 = vector.broadcast %875 : f32 to vector<1x16x128xf32>
    %878 = arith.mulf %877, %876 : vector<1x16x128xf32>
    %879 = arith.addf %870, %878 : vector<1x16x128xf32>
    %c2_523 = arith.constant 2 : index
    %c47_524 = arith.constant 47 : index
    %880 = memref.load %arg11[%c2_523, %c47_524] : memref<4x49xf32, #tpu.memory_space<smem>>
    %c126_i32_525 = arith.constant 126 : i32
    %881 = tpu.dynamic_rotate %855 by %c126_i32_525 dim 2 : vector<1x16x128xf32>, i32 -> vector<1x16x128xf32>
    %882 = vector.broadcast %880 : f32 to vector<1x16x128xf32>
    %883 = arith.mulf %882, %881 : vector<1x16x128xf32>
    %884 = arith.addf %874, %883 : vector<1x16x128xf32>
    %c2_526 = arith.constant 2 : index
    %c48_527 = arith.constant 48 : index
    %885 = memref.load %arg11[%c2_526, %c48_527] : memref<4x49xf32, #tpu.memory_space<smem>>
    %c125_i32_528 = arith.constant 125 : i32
    %886 = tpu.dynamic_rotate %855 by %c125_i32_528 dim 2 : vector<1x16x128xf32>, i32 -> vector<1x16x128xf32>
    %887 = vector.broadcast %885 : f32 to vector<1x16x128xf32>
    %888 = arith.mulf %887, %886 : vector<1x16x128xf32>
    %889 = arith.addf %879, %888 : vector<1x16x128xf32>
    %890 = arith.addf %889, %884 : vector<1x16x128xf32>
    %cst_529 = arith.constant 0.000000e+00 : f32
    %891 = vector.broadcast %cst_529 : f32 to vector<1x16x128xf32>
    %cst_530 = arith.constant 0.000000e+00 : f32
    %892 = vector.broadcast %cst_530 : f32 to vector<1x16x128xf32>
    %c3_531 = arith.constant 3 : index
    %c0_532 = arith.constant 0 : index
    %c0_533 = arith.constant 0 : index
    %c0_534 = arith.constant 0 : index
    %893 = vector.load %arg13[%c3_531, %c0_532, %c0_533, %c0_534] : memref<4x1x24x128xf32, #tpu.memory_space<vmem>>, vector<1x1x16x128xf32>
    %894 = vector.shape_cast %893 : vector<1x1x16x128xf32> to vector<1x16x128xf32>
    %c3_535 = arith.constant 3 : index
    %c0_536 = arith.constant 0 : index
    %895 = memref.load %arg11[%c3_535, %c0_536] : memref<4x49xf32, #tpu.memory_space<smem>>
    %c3_i32_537 = arith.constant 3 : i32
    %896 = tpu.dynamic_rotate %894 by %c3_i32_537 dim 2 : vector<1x16x128xf32>, i32 -> vector<1x16x128xf32>
    %897 = vector.broadcast %895 : f32 to vector<1x16x128xf32>
    %898 = arith.mulf %897, %896 : vector<1x16x128xf32>
    %899 = arith.addf %891, %898 : vector<1x16x128xf32>
    %c3_538 = arith.constant 3 : index
    %c1_539 = arith.constant 1 : index
    %900 = memref.load %arg11[%c3_538, %c1_539] : memref<4x49xf32, #tpu.memory_space<smem>>
    %c2_i32_540 = arith.constant 2 : i32
    %901 = tpu.dynamic_rotate %894 by %c2_i32_540 dim 2 : vector<1x16x128xf32>, i32 -> vector<1x16x128xf32>
    %902 = vector.broadcast %900 : f32 to vector<1x16x128xf32>
    %903 = arith.mulf %902, %901 : vector<1x16x128xf32>
    %904 = arith.addf %892, %903 : vector<1x16x128xf32>
    %c3_541 = arith.constant 3 : index
    %c2_542 = arith.constant 2 : index
    %905 = memref.load %arg11[%c3_541, %c2_542] : memref<4x49xf32, #tpu.memory_space<smem>>
    %c1_i32_543 = arith.constant 1 : i32
    %906 = tpu.dynamic_rotate %894 by %c1_i32_543 dim 2 : vector<1x16x128xf32>, i32 -> vector<1x16x128xf32>
    %907 = vector.broadcast %905 : f32 to vector<1x16x128xf32>
    %908 = arith.mulf %907, %906 : vector<1x16x128xf32>
    %909 = arith.addf %899, %908 : vector<1x16x128xf32>
    %c3_544 = arith.constant 3 : index
    %c3_545 = arith.constant 3 : index
    %910 = memref.load %arg11[%c3_544, %c3_545] : memref<4x49xf32, #tpu.memory_space<smem>>
    %911 = vector.broadcast %910 : f32 to vector<1x16x128xf32>
    %912 = arith.mulf %911, %894 : vector<1x16x128xf32>
    %913 = arith.addf %904, %912 : vector<1x16x128xf32>
    %c3_546 = arith.constant 3 : index
    %c4_547 = arith.constant 4 : index
    %914 = memref.load %arg11[%c3_546, %c4_547] : memref<4x49xf32, #tpu.memory_space<smem>>
    %c127_i32_548 = arith.constant 127 : i32
    %915 = tpu.dynamic_rotate %894 by %c127_i32_548 dim 2 : vector<1x16x128xf32>, i32 -> vector<1x16x128xf32>
    %916 = vector.broadcast %914 : f32 to vector<1x16x128xf32>
    %917 = arith.mulf %916, %915 : vector<1x16x128xf32>
    %918 = arith.addf %909, %917 : vector<1x16x128xf32>
    %c3_549 = arith.constant 3 : index
    %c5_550 = arith.constant 5 : index
    %919 = memref.load %arg11[%c3_549, %c5_550] : memref<4x49xf32, #tpu.memory_space<smem>>
    %c126_i32_551 = arith.constant 126 : i32
    %920 = tpu.dynamic_rotate %894 by %c126_i32_551 dim 2 : vector<1x16x128xf32>, i32 -> vector<1x16x128xf32>
    %921 = vector.broadcast %919 : f32 to vector<1x16x128xf32>
    %922 = arith.mulf %921, %920 : vector<1x16x128xf32>
    %923 = arith.addf %913, %922 : vector<1x16x128xf32>
    %c3_552 = arith.constant 3 : index
    %c6_553 = arith.constant 6 : index
    %924 = memref.load %arg11[%c3_552, %c6_553] : memref<4x49xf32, #tpu.memory_space<smem>>
    %c125_i32_554 = arith.constant 125 : i32
    %925 = tpu.dynamic_rotate %894 by %c125_i32_554 dim 2 : vector<1x16x128xf32>, i32 -> vector<1x16x128xf32>
    %926 = vector.broadcast %924 : f32 to vector<1x16x128xf32>
    %927 = arith.mulf %926, %925 : vector<1x16x128xf32>
    %928 = arith.addf %918, %927 : vector<1x16x128xf32>
    %c3_555 = arith.constant 3 : index
    %c0_556 = arith.constant 0 : index
    %c1_557 = arith.constant 1 : index
    %c0_558 = arith.constant 0 : index
    %929 = vector.load %arg13[%c3_555, %c0_556, %c1_557, %c0_558] : memref<4x1x24x128xf32, #tpu.memory_space<vmem>>, vector<1x1x16x128xf32>
    %930 = vector.shape_cast %929 : vector<1x1x16x128xf32> to vector<1x16x128xf32>
    %c3_559 = arith.constant 3 : index
    %c7_560 = arith.constant 7 : index
    %931 = memref.load %arg11[%c3_559, %c7_560] : memref<4x49xf32, #tpu.memory_space<smem>>
    %c3_i32_561 = arith.constant 3 : i32
    %932 = tpu.dynamic_rotate %930 by %c3_i32_561 dim 2 : vector<1x16x128xf32>, i32 -> vector<1x16x128xf32>
    %933 = vector.broadcast %931 : f32 to vector<1x16x128xf32>
    %934 = arith.mulf %933, %932 : vector<1x16x128xf32>
    %935 = arith.addf %923, %934 : vector<1x16x128xf32>
    %c3_562 = arith.constant 3 : index
    %c8_563 = arith.constant 8 : index
    %936 = memref.load %arg11[%c3_562, %c8_563] : memref<4x49xf32, #tpu.memory_space<smem>>
    %c2_i32_564 = arith.constant 2 : i32
    %937 = tpu.dynamic_rotate %930 by %c2_i32_564 dim 2 : vector<1x16x128xf32>, i32 -> vector<1x16x128xf32>
    %938 = vector.broadcast %936 : f32 to vector<1x16x128xf32>
    %939 = arith.mulf %938, %937 : vector<1x16x128xf32>
    %940 = arith.addf %928, %939 : vector<1x16x128xf32>
    %c3_565 = arith.constant 3 : index
    %c9_566 = arith.constant 9 : index
    %941 = memref.load %arg11[%c3_565, %c9_566] : memref<4x49xf32, #tpu.memory_space<smem>>
    %c1_i32_567 = arith.constant 1 : i32
    %942 = tpu.dynamic_rotate %930 by %c1_i32_567 dim 2 : vector<1x16x128xf32>, i32 -> vector<1x16x128xf32>
    %943 = vector.broadcast %941 : f32 to vector<1x16x128xf32>
    %944 = arith.mulf %943, %942 : vector<1x16x128xf32>
    %945 = arith.addf %935, %944 : vector<1x16x128xf32>
    %c3_568 = arith.constant 3 : index
    %c10_569 = arith.constant 10 : index
    %946 = memref.load %arg11[%c3_568, %c10_569] : memref<4x49xf32, #tpu.memory_space<smem>>
    %947 = vector.broadcast %946 : f32 to vector<1x16x128xf32>
    %948 = arith.mulf %947, %930 : vector<1x16x128xf32>
    %949 = arith.addf %940, %948 : vector<1x16x128xf32>
    %c3_570 = arith.constant 3 : index
    %c11_571 = arith.constant 11 : index
    %950 = memref.load %arg11[%c3_570, %c11_571] : memref<4x49xf32, #tpu.memory_space<smem>>
    %c127_i32_572 = arith.constant 127 : i32
    %951 = tpu.dynamic_rotate %930 by %c127_i32_572 dim 2 : vector<1x16x128xf32>, i32 -> vector<1x16x128xf32>
    %952 = vector.broadcast %950 : f32 to vector<1x16x128xf32>
    %953 = arith.mulf %952, %951 : vector<1x16x128xf32>
    %954 = arith.addf %945, %953 : vector<1x16x128xf32>
    %c3_573 = arith.constant 3 : index
    %c12_574 = arith.constant 12 : index
    %955 = memref.load %arg11[%c3_573, %c12_574] : memref<4x49xf32, #tpu.memory_space<smem>>
    %c126_i32_575 = arith.constant 126 : i32
    %956 = tpu.dynamic_rotate %930 by %c126_i32_575 dim 2 : vector<1x16x128xf32>, i32 -> vector<1x16x128xf32>
    %957 = vector.broadcast %955 : f32 to vector<1x16x128xf32>
    %958 = arith.mulf %957, %956 : vector<1x16x128xf32>
    %959 = arith.addf %949, %958 : vector<1x16x128xf32>
    %c3_576 = arith.constant 3 : index
    %c13_577 = arith.constant 13 : index
    %960 = memref.load %arg11[%c3_576, %c13_577] : memref<4x49xf32, #tpu.memory_space<smem>>
    %c125_i32_578 = arith.constant 125 : i32
    %961 = tpu.dynamic_rotate %930 by %c125_i32_578 dim 2 : vector<1x16x128xf32>, i32 -> vector<1x16x128xf32>
    %962 = vector.broadcast %960 : f32 to vector<1x16x128xf32>
    %963 = arith.mulf %962, %961 : vector<1x16x128xf32>
    %964 = arith.addf %954, %963 : vector<1x16x128xf32>
    %c3_579 = arith.constant 3 : index
    %c0_580 = arith.constant 0 : index
    %c2_581 = arith.constant 2 : index
    %c0_582 = arith.constant 0 : index
    %965 = vector.load %arg13[%c3_579, %c0_580, %c2_581, %c0_582] : memref<4x1x24x128xf32, #tpu.memory_space<vmem>>, vector<1x1x16x128xf32>
    %966 = vector.shape_cast %965 : vector<1x1x16x128xf32> to vector<1x16x128xf32>
    %c3_583 = arith.constant 3 : index
    %c14_584 = arith.constant 14 : index
    %967 = memref.load %arg11[%c3_583, %c14_584] : memref<4x49xf32, #tpu.memory_space<smem>>
    %c3_i32_585 = arith.constant 3 : i32
    %968 = tpu.dynamic_rotate %966 by %c3_i32_585 dim 2 : vector<1x16x128xf32>, i32 -> vector<1x16x128xf32>
    %969 = vector.broadcast %967 : f32 to vector<1x16x128xf32>
    %970 = arith.mulf %969, %968 : vector<1x16x128xf32>
    %971 = arith.addf %959, %970 : vector<1x16x128xf32>
    %c3_586 = arith.constant 3 : index
    %c15_587 = arith.constant 15 : index
    %972 = memref.load %arg11[%c3_586, %c15_587] : memref<4x49xf32, #tpu.memory_space<smem>>
    %c2_i32_588 = arith.constant 2 : i32
    %973 = tpu.dynamic_rotate %966 by %c2_i32_588 dim 2 : vector<1x16x128xf32>, i32 -> vector<1x16x128xf32>
    %974 = vector.broadcast %972 : f32 to vector<1x16x128xf32>
    %975 = arith.mulf %974, %973 : vector<1x16x128xf32>
    %976 = arith.addf %964, %975 : vector<1x16x128xf32>
    %c3_589 = arith.constant 3 : index
    %c16_590 = arith.constant 16 : index
    %977 = memref.load %arg11[%c3_589, %c16_590] : memref<4x49xf32, #tpu.memory_space<smem>>
    %c1_i32_591 = arith.constant 1 : i32
    %978 = tpu.dynamic_rotate %966 by %c1_i32_591 dim 2 : vector<1x16x128xf32>, i32 -> vector<1x16x128xf32>
    %979 = vector.broadcast %977 : f32 to vector<1x16x128xf32>
    %980 = arith.mulf %979, %978 : vector<1x16x128xf32>
    %981 = arith.addf %971, %980 : vector<1x16x128xf32>
    %c3_592 = arith.constant 3 : index
    %c17_593 = arith.constant 17 : index
    %982 = memref.load %arg11[%c3_592, %c17_593] : memref<4x49xf32, #tpu.memory_space<smem>>
    %983 = vector.broadcast %982 : f32 to vector<1x16x128xf32>
    %984 = arith.mulf %983, %966 : vector<1x16x128xf32>
    %985 = arith.addf %976, %984 : vector<1x16x128xf32>
    %c3_594 = arith.constant 3 : index
    %c18_595 = arith.constant 18 : index
    %986 = memref.load %arg11[%c3_594, %c18_595] : memref<4x49xf32, #tpu.memory_space<smem>>
    %c127_i32_596 = arith.constant 127 : i32
    %987 = tpu.dynamic_rotate %966 by %c127_i32_596 dim 2 : vector<1x16x128xf32>, i32 -> vector<1x16x128xf32>
    %988 = vector.broadcast %986 : f32 to vector<1x16x128xf32>
    %989 = arith.mulf %988, %987 : vector<1x16x128xf32>
    %990 = arith.addf %981, %989 : vector<1x16x128xf32>
    %c3_597 = arith.constant 3 : index
    %c19_598 = arith.constant 19 : index
    %991 = memref.load %arg11[%c3_597, %c19_598] : memref<4x49xf32, #tpu.memory_space<smem>>
    %c126_i32_599 = arith.constant 126 : i32
    %992 = tpu.dynamic_rotate %966 by %c126_i32_599 dim 2 : vector<1x16x128xf32>, i32 -> vector<1x16x128xf32>
    %993 = vector.broadcast %991 : f32 to vector<1x16x128xf32>
    %994 = arith.mulf %993, %992 : vector<1x16x128xf32>
    %995 = arith.addf %985, %994 : vector<1x16x128xf32>
    %c3_600 = arith.constant 3 : index
    %c20_601 = arith.constant 20 : index
    %996 = memref.load %arg11[%c3_600, %c20_601] : memref<4x49xf32, #tpu.memory_space<smem>>
    %c125_i32_602 = arith.constant 125 : i32
    %997 = tpu.dynamic_rotate %966 by %c125_i32_602 dim 2 : vector<1x16x128xf32>, i32 -> vector<1x16x128xf32>
    %998 = vector.broadcast %996 : f32 to vector<1x16x128xf32>
    %999 = arith.mulf %998, %997 : vector<1x16x128xf32>
    %1000 = arith.addf %990, %999 : vector<1x16x128xf32>
    %c3_603 = arith.constant 3 : index
    %c0_604 = arith.constant 0 : index
    %c3_605 = arith.constant 3 : index
    %c0_606 = arith.constant 0 : index
    %1001 = vector.load %arg13[%c3_603, %c0_604, %c3_605, %c0_606] : memref<4x1x24x128xf32, #tpu.memory_space<vmem>>, vector<1x1x16x128xf32>
    %1002 = vector.shape_cast %1001 : vector<1x1x16x128xf32> to vector<1x16x128xf32>
    %c3_607 = arith.constant 3 : index
    %c21_608 = arith.constant 21 : index
    %1003 = memref.load %arg11[%c3_607, %c21_608] : memref<4x49xf32, #tpu.memory_space<smem>>
    %c3_i32_609 = arith.constant 3 : i32
    %1004 = tpu.dynamic_rotate %1002 by %c3_i32_609 dim 2 : vector<1x16x128xf32>, i32 -> vector<1x16x128xf32>
    %1005 = vector.broadcast %1003 : f32 to vector<1x16x128xf32>
    %1006 = arith.mulf %1005, %1004 : vector<1x16x128xf32>
    %1007 = arith.addf %995, %1006 : vector<1x16x128xf32>
    %c3_610 = arith.constant 3 : index
    %c22_611 = arith.constant 22 : index
    %1008 = memref.load %arg11[%c3_610, %c22_611] : memref<4x49xf32, #tpu.memory_space<smem>>
    %c2_i32_612 = arith.constant 2 : i32
    %1009 = tpu.dynamic_rotate %1002 by %c2_i32_612 dim 2 : vector<1x16x128xf32>, i32 -> vector<1x16x128xf32>
    %1010 = vector.broadcast %1008 : f32 to vector<1x16x128xf32>
    %1011 = arith.mulf %1010, %1009 : vector<1x16x128xf32>
    %1012 = arith.addf %1000, %1011 : vector<1x16x128xf32>
    %c3_613 = arith.constant 3 : index
    %c23_614 = arith.constant 23 : index
    %1013 = memref.load %arg11[%c3_613, %c23_614] : memref<4x49xf32, #tpu.memory_space<smem>>
    %c1_i32_615 = arith.constant 1 : i32
    %1014 = tpu.dynamic_rotate %1002 by %c1_i32_615 dim 2 : vector<1x16x128xf32>, i32 -> vector<1x16x128xf32>
    %1015 = vector.broadcast %1013 : f32 to vector<1x16x128xf32>
    %1016 = arith.mulf %1015, %1014 : vector<1x16x128xf32>
    %1017 = arith.addf %1007, %1016 : vector<1x16x128xf32>
    %c3_616 = arith.constant 3 : index
    %c24_617 = arith.constant 24 : index
    %1018 = memref.load %arg11[%c3_616, %c24_617] : memref<4x49xf32, #tpu.memory_space<smem>>
    %1019 = vector.broadcast %1018 : f32 to vector<1x16x128xf32>
    %1020 = arith.mulf %1019, %1002 : vector<1x16x128xf32>
    %1021 = arith.addf %1012, %1020 : vector<1x16x128xf32>
    %c3_618 = arith.constant 3 : index
    %c25_619 = arith.constant 25 : index
    %1022 = memref.load %arg11[%c3_618, %c25_619] : memref<4x49xf32, #tpu.memory_space<smem>>
    %c127_i32_620 = arith.constant 127 : i32
    %1023 = tpu.dynamic_rotate %1002 by %c127_i32_620 dim 2 : vector<1x16x128xf32>, i32 -> vector<1x16x128xf32>
    %1024 = vector.broadcast %1022 : f32 to vector<1x16x128xf32>
    %1025 = arith.mulf %1024, %1023 : vector<1x16x128xf32>
    %1026 = arith.addf %1017, %1025 : vector<1x16x128xf32>
    %c3_621 = arith.constant 3 : index
    %c26_622 = arith.constant 26 : index
    %1027 = memref.load %arg11[%c3_621, %c26_622] : memref<4x49xf32, #tpu.memory_space<smem>>
    %c126_i32_623 = arith.constant 126 : i32
    %1028 = tpu.dynamic_rotate %1002 by %c126_i32_623 dim 2 : vector<1x16x128xf32>, i32 -> vector<1x16x128xf32>
    %1029 = vector.broadcast %1027 : f32 to vector<1x16x128xf32>
    %1030 = arith.mulf %1029, %1028 : vector<1x16x128xf32>
    %1031 = arith.addf %1021, %1030 : vector<1x16x128xf32>
    %c3_624 = arith.constant 3 : index
    %c27_625 = arith.constant 27 : index
    %1032 = memref.load %arg11[%c3_624, %c27_625] : memref<4x49xf32, #tpu.memory_space<smem>>
    %c125_i32_626 = arith.constant 125 : i32
    %1033 = tpu.dynamic_rotate %1002 by %c125_i32_626 dim 2 : vector<1x16x128xf32>, i32 -> vector<1x16x128xf32>
    %1034 = vector.broadcast %1032 : f32 to vector<1x16x128xf32>
    %1035 = arith.mulf %1034, %1033 : vector<1x16x128xf32>
    %1036 = arith.addf %1026, %1035 : vector<1x16x128xf32>
    %c3_627 = arith.constant 3 : index
    %c0_628 = arith.constant 0 : index
    %c4_629 = arith.constant 4 : index
    %c0_630 = arith.constant 0 : index
    %1037 = vector.load %arg13[%c3_627, %c0_628, %c4_629, %c0_630] : memref<4x1x24x128xf32, #tpu.memory_space<vmem>>, vector<1x1x16x128xf32>
    %1038 = vector.shape_cast %1037 : vector<1x1x16x128xf32> to vector<1x16x128xf32>
    %c3_631 = arith.constant 3 : index
    %c28_632 = arith.constant 28 : index
    %1039 = memref.load %arg11[%c3_631, %c28_632] : memref<4x49xf32, #tpu.memory_space<smem>>
    %c3_i32_633 = arith.constant 3 : i32
    %1040 = tpu.dynamic_rotate %1038 by %c3_i32_633 dim 2 : vector<1x16x128xf32>, i32 -> vector<1x16x128xf32>
    %1041 = vector.broadcast %1039 : f32 to vector<1x16x128xf32>
    %1042 = arith.mulf %1041, %1040 : vector<1x16x128xf32>
    %1043 = arith.addf %1031, %1042 : vector<1x16x128xf32>
    %c3_634 = arith.constant 3 : index
    %c29_635 = arith.constant 29 : index
    %1044 = memref.load %arg11[%c3_634, %c29_635] : memref<4x49xf32, #tpu.memory_space<smem>>
    %c2_i32_636 = arith.constant 2 : i32
    %1045 = tpu.dynamic_rotate %1038 by %c2_i32_636 dim 2 : vector<1x16x128xf32>, i32 -> vector<1x16x128xf32>
    %1046 = vector.broadcast %1044 : f32 to vector<1x16x128xf32>
    %1047 = arith.mulf %1046, %1045 : vector<1x16x128xf32>
    %1048 = arith.addf %1036, %1047 : vector<1x16x128xf32>
    %c3_637 = arith.constant 3 : index
    %c30_638 = arith.constant 30 : index
    %1049 = memref.load %arg11[%c3_637, %c30_638] : memref<4x49xf32, #tpu.memory_space<smem>>
    %c1_i32_639 = arith.constant 1 : i32
    %1050 = tpu.dynamic_rotate %1038 by %c1_i32_639 dim 2 : vector<1x16x128xf32>, i32 -> vector<1x16x128xf32>
    %1051 = vector.broadcast %1049 : f32 to vector<1x16x128xf32>
    %1052 = arith.mulf %1051, %1050 : vector<1x16x128xf32>
    %1053 = arith.addf %1043, %1052 : vector<1x16x128xf32>
    %c3_640 = arith.constant 3 : index
    %c31_641 = arith.constant 31 : index
    %1054 = memref.load %arg11[%c3_640, %c31_641] : memref<4x49xf32, #tpu.memory_space<smem>>
    %1055 = vector.broadcast %1054 : f32 to vector<1x16x128xf32>
    %1056 = arith.mulf %1055, %1038 : vector<1x16x128xf32>
    %1057 = arith.addf %1048, %1056 : vector<1x16x128xf32>
    %c3_642 = arith.constant 3 : index
    %c32_643 = arith.constant 32 : index
    %1058 = memref.load %arg11[%c3_642, %c32_643] : memref<4x49xf32, #tpu.memory_space<smem>>
    %c127_i32_644 = arith.constant 127 : i32
    %1059 = tpu.dynamic_rotate %1038 by %c127_i32_644 dim 2 : vector<1x16x128xf32>, i32 -> vector<1x16x128xf32>
    %1060 = vector.broadcast %1058 : f32 to vector<1x16x128xf32>
    %1061 = arith.mulf %1060, %1059 : vector<1x16x128xf32>
    %1062 = arith.addf %1053, %1061 : vector<1x16x128xf32>
    %c3_645 = arith.constant 3 : index
    %c33_646 = arith.constant 33 : index
    %1063 = memref.load %arg11[%c3_645, %c33_646] : memref<4x49xf32, #tpu.memory_space<smem>>
    %c126_i32_647 = arith.constant 126 : i32
    %1064 = tpu.dynamic_rotate %1038 by %c126_i32_647 dim 2 : vector<1x16x128xf32>, i32 -> vector<1x16x128xf32>
    %1065 = vector.broadcast %1063 : f32 to vector<1x16x128xf32>
    %1066 = arith.mulf %1065, %1064 : vector<1x16x128xf32>
    %1067 = arith.addf %1057, %1066 : vector<1x16x128xf32>
    %c3_648 = arith.constant 3 : index
    %c34_649 = arith.constant 34 : index
    %1068 = memref.load %arg11[%c3_648, %c34_649] : memref<4x49xf32, #tpu.memory_space<smem>>
    %c125_i32_650 = arith.constant 125 : i32
    %1069 = tpu.dynamic_rotate %1038 by %c125_i32_650 dim 2 : vector<1x16x128xf32>, i32 -> vector<1x16x128xf32>
    %1070 = vector.broadcast %1068 : f32 to vector<1x16x128xf32>
    %1071 = arith.mulf %1070, %1069 : vector<1x16x128xf32>
    %1072 = arith.addf %1062, %1071 : vector<1x16x128xf32>
    %c3_651 = arith.constant 3 : index
    %c0_652 = arith.constant 0 : index
    %c5_653 = arith.constant 5 : index
    %c0_654 = arith.constant 0 : index
    %1073 = vector.load %arg13[%c3_651, %c0_652, %c5_653, %c0_654] : memref<4x1x24x128xf32, #tpu.memory_space<vmem>>, vector<1x1x16x128xf32>
    %1074 = vector.shape_cast %1073 : vector<1x1x16x128xf32> to vector<1x16x128xf32>
    %c3_655 = arith.constant 3 : index
    %c35_656 = arith.constant 35 : index
    %1075 = memref.load %arg11[%c3_655, %c35_656] : memref<4x49xf32, #tpu.memory_space<smem>>
    %c3_i32_657 = arith.constant 3 : i32
    %1076 = tpu.dynamic_rotate %1074 by %c3_i32_657 dim 2 : vector<1x16x128xf32>, i32 -> vector<1x16x128xf32>
    %1077 = vector.broadcast %1075 : f32 to vector<1x16x128xf32>
    %1078 = arith.mulf %1077, %1076 : vector<1x16x128xf32>
    %1079 = arith.addf %1067, %1078 : vector<1x16x128xf32>
    %c3_658 = arith.constant 3 : index
    %c36_659 = arith.constant 36 : index
    %1080 = memref.load %arg11[%c3_658, %c36_659] : memref<4x49xf32, #tpu.memory_space<smem>>
    %c2_i32_660 = arith.constant 2 : i32
    %1081 = tpu.dynamic_rotate %1074 by %c2_i32_660 dim 2 : vector<1x16x128xf32>, i32 -> vector<1x16x128xf32>
    %1082 = vector.broadcast %1080 : f32 to vector<1x16x128xf32>
    %1083 = arith.mulf %1082, %1081 : vector<1x16x128xf32>
    %1084 = arith.addf %1072, %1083 : vector<1x16x128xf32>
    %c3_661 = arith.constant 3 : index
    %c37_662 = arith.constant 37 : index
    %1085 = memref.load %arg11[%c3_661, %c37_662] : memref<4x49xf32, #tpu.memory_space<smem>>
    %c1_i32_663 = arith.constant 1 : i32
    %1086 = tpu.dynamic_rotate %1074 by %c1_i32_663 dim 2 : vector<1x16x128xf32>, i32 -> vector<1x16x128xf32>
    %1087 = vector.broadcast %1085 : f32 to vector<1x16x128xf32>
    %1088 = arith.mulf %1087, %1086 : vector<1x16x128xf32>
    %1089 = arith.addf %1079, %1088 : vector<1x16x128xf32>
    %c3_664 = arith.constant 3 : index
    %c38_665 = arith.constant 38 : index
    %1090 = memref.load %arg11[%c3_664, %c38_665] : memref<4x49xf32, #tpu.memory_space<smem>>
    %1091 = vector.broadcast %1090 : f32 to vector<1x16x128xf32>
    %1092 = arith.mulf %1091, %1074 : vector<1x16x128xf32>
    %1093 = arith.addf %1084, %1092 : vector<1x16x128xf32>
    %c3_666 = arith.constant 3 : index
    %c39_667 = arith.constant 39 : index
    %1094 = memref.load %arg11[%c3_666, %c39_667] : memref<4x49xf32, #tpu.memory_space<smem>>
    %c127_i32_668 = arith.constant 127 : i32
    %1095 = tpu.dynamic_rotate %1074 by %c127_i32_668 dim 2 : vector<1x16x128xf32>, i32 -> vector<1x16x128xf32>
    %1096 = vector.broadcast %1094 : f32 to vector<1x16x128xf32>
    %1097 = arith.mulf %1096, %1095 : vector<1x16x128xf32>
    %1098 = arith.addf %1089, %1097 : vector<1x16x128xf32>
    %c3_669 = arith.constant 3 : index
    %c40_670 = arith.constant 40 : index
    %1099 = memref.load %arg11[%c3_669, %c40_670] : memref<4x49xf32, #tpu.memory_space<smem>>
    %c126_i32_671 = arith.constant 126 : i32
    %1100 = tpu.dynamic_rotate %1074 by %c126_i32_671 dim 2 : vector<1x16x128xf32>, i32 -> vector<1x16x128xf32>
    %1101 = vector.broadcast %1099 : f32 to vector<1x16x128xf32>
    %1102 = arith.mulf %1101, %1100 : vector<1x16x128xf32>
    %1103 = arith.addf %1093, %1102 : vector<1x16x128xf32>
    %c3_672 = arith.constant 3 : index
    %c41_673 = arith.constant 41 : index
    %1104 = memref.load %arg11[%c3_672, %c41_673] : memref<4x49xf32, #tpu.memory_space<smem>>
    %c125_i32_674 = arith.constant 125 : i32
    %1105 = tpu.dynamic_rotate %1074 by %c125_i32_674 dim 2 : vector<1x16x128xf32>, i32 -> vector<1x16x128xf32>
    %1106 = vector.broadcast %1104 : f32 to vector<1x16x128xf32>
    %1107 = arith.mulf %1106, %1105 : vector<1x16x128xf32>
    %1108 = arith.addf %1098, %1107 : vector<1x16x128xf32>
    %c3_675 = arith.constant 3 : index
    %c0_676 = arith.constant 0 : index
    %c6_677 = arith.constant 6 : index
    %c0_678 = arith.constant 0 : index
    %1109 = vector.load %arg13[%c3_675, %c0_676, %c6_677, %c0_678] : memref<4x1x24x128xf32, #tpu.memory_space<vmem>>, vector<1x1x16x128xf32>
    %1110 = vector.shape_cast %1109 : vector<1x1x16x128xf32> to vector<1x16x128xf32>
    %c3_679 = arith.constant 3 : index
    %c42_680 = arith.constant 42 : index
    %1111 = memref.load %arg11[%c3_679, %c42_680] : memref<4x49xf32, #tpu.memory_space<smem>>
    %c3_i32_681 = arith.constant 3 : i32
    %1112 = tpu.dynamic_rotate %1110 by %c3_i32_681 dim 2 : vector<1x16x128xf32>, i32 -> vector<1x16x128xf32>
    %1113 = vector.broadcast %1111 : f32 to vector<1x16x128xf32>
    %1114 = arith.mulf %1113, %1112 : vector<1x16x128xf32>
    %1115 = arith.addf %1103, %1114 : vector<1x16x128xf32>
    %c3_682 = arith.constant 3 : index
    %c43_683 = arith.constant 43 : index
    %1116 = memref.load %arg11[%c3_682, %c43_683] : memref<4x49xf32, #tpu.memory_space<smem>>
    %c2_i32_684 = arith.constant 2 : i32
    %1117 = tpu.dynamic_rotate %1110 by %c2_i32_684 dim 2 : vector<1x16x128xf32>, i32 -> vector<1x16x128xf32>
    %1118 = vector.broadcast %1116 : f32 to vector<1x16x128xf32>
    %1119 = arith.mulf %1118, %1117 : vector<1x16x128xf32>
    %1120 = arith.addf %1108, %1119 : vector<1x16x128xf32>
    %c3_685 = arith.constant 3 : index
    %c44_686 = arith.constant 44 : index
    %1121 = memref.load %arg11[%c3_685, %c44_686] : memref<4x49xf32, #tpu.memory_space<smem>>
    %c1_i32_687 = arith.constant 1 : i32
    %1122 = tpu.dynamic_rotate %1110 by %c1_i32_687 dim 2 : vector<1x16x128xf32>, i32 -> vector<1x16x128xf32>
    %1123 = vector.broadcast %1121 : f32 to vector<1x16x128xf32>
    %1124 = arith.mulf %1123, %1122 : vector<1x16x128xf32>
    %1125 = arith.addf %1115, %1124 : vector<1x16x128xf32>
    %c3_688 = arith.constant 3 : index
    %c45_689 = arith.constant 45 : index
    %1126 = memref.load %arg11[%c3_688, %c45_689] : memref<4x49xf32, #tpu.memory_space<smem>>
    %1127 = vector.broadcast %1126 : f32 to vector<1x16x128xf32>
    %1128 = arith.mulf %1127, %1110 : vector<1x16x128xf32>
    %1129 = arith.addf %1120, %1128 : vector<1x16x128xf32>
    %c3_690 = arith.constant 3 : index
    %c46_691 = arith.constant 46 : index
    %1130 = memref.load %arg11[%c3_690, %c46_691] : memref<4x49xf32, #tpu.memory_space<smem>>
    %c127_i32_692 = arith.constant 127 : i32
    %1131 = tpu.dynamic_rotate %1110 by %c127_i32_692 dim 2 : vector<1x16x128xf32>, i32 -> vector<1x16x128xf32>
    %1132 = vector.broadcast %1130 : f32 to vector<1x16x128xf32>
    %1133 = arith.mulf %1132, %1131 : vector<1x16x128xf32>
    %1134 = arith.addf %1125, %1133 : vector<1x16x128xf32>
    %c3_693 = arith.constant 3 : index
    %c47_694 = arith.constant 47 : index
    %1135 = memref.load %arg11[%c3_693, %c47_694] : memref<4x49xf32, #tpu.memory_space<smem>>
    %c126_i32_695 = arith.constant 126 : i32
    %1136 = tpu.dynamic_rotate %1110 by %c126_i32_695 dim 2 : vector<1x16x128xf32>, i32 -> vector<1x16x128xf32>
    %1137 = vector.broadcast %1135 : f32 to vector<1x16x128xf32>
    %1138 = arith.mulf %1137, %1136 : vector<1x16x128xf32>
    %1139 = arith.addf %1129, %1138 : vector<1x16x128xf32>
    %c3_696 = arith.constant 3 : index
    %c48_697 = arith.constant 48 : index
    %1140 = memref.load %arg11[%c3_696, %c48_697] : memref<4x49xf32, #tpu.memory_space<smem>>
    %c125_i32_698 = arith.constant 125 : i32
    %1141 = tpu.dynamic_rotate %1110 by %c125_i32_698 dim 2 : vector<1x16x128xf32>, i32 -> vector<1x16x128xf32>
    %1142 = vector.broadcast %1140 : f32 to vector<1x16x128xf32>
    %1143 = arith.mulf %1142, %1141 : vector<1x16x128xf32>
    %1144 = arith.addf %1134, %1143 : vector<1x16x128xf32>
    %1145 = arith.addf %1144, %1139 : vector<1x16x128xf32>
    %1146 = arith.addf %890, %1145 : vector<1x16x128xf32>
    %1147 = vector.extract_strided_slice %635 {offsets = [0, 0, 0], sizes = [1, 16, 16], strides = [1, 1, 1]} : vector<1x16x128xf32> to vector<1x16x16xf32>
    %1148 = arith.negf %1147 : vector<1x16x16xf32>
    %1149 = math.exp %1148 : vector<1x16x16xf32>
    %cst_699 = arith.constant 1.000000e+00 : f32
    %1150 = vector.broadcast %cst_699 : f32 to vector<1x16x16xf32>
    %1151 = arith.addf %1150, %1149 : vector<1x16x16xf32>
    %1152 = arith.divf %1150, %1151 : vector<1x16x16xf32>
    %1153 = vector.shape_cast %1152 : vector<1x16x16xf32> to vector<1x1x256xf32>
    %1154 = vector.extract_strided_slice %1146 {offsets = [0, 0, 0], sizes = [1, 16, 16], strides = [1, 1, 1]} : vector<1x16x128xf32> to vector<1x16x16xf32>
    %1155 = arith.negf %1154 : vector<1x16x16xf32>
    %1156 = math.exp %1155 : vector<1x16x16xf32>
    %cst_700 = arith.constant 1.000000e+00 : f32
    %1157 = vector.broadcast %cst_700 : f32 to vector<1x16x16xf32>
    %1158 = arith.addf %1157, %1156 : vector<1x16x16xf32>
    %1159 = arith.divf %1157, %1158 : vector<1x16x16xf32>
    %1160 = vector.shape_cast %1159 : vector<1x16x16xf32> to vector<1x1x256xf32>
    %1161 = vector.broadcast %1153 : vector<1x1x256xf32> to vector<1x16x256xf32>
    %1162 = arith.mulf %1161, %88 : vector<1x16x256xf32>
    %1163 = vector.broadcast %1160 : vector<1x1x256xf32> to vector<1x16x256xf32>
    %1164 = arith.mulf %1163, %91 : vector<1x16x256xf32>
    %1165 = arith.addf %1162, %1164 : vector<1x16x256xf32>
    %c0_701 = arith.constant 0 : index
    %c0_702 = arith.constant 0 : index
    %c0_703 = arith.constant 0 : index
    %1166 = vector.load %arg12[%c0_701, %c0_702, %c0_703] : memref<1x16x256xf32, #tpu.memory_space<vmem>>, vector<1x16x256xf32>
    tpu.vector_store %arg12[%c0_701, %c0_702, %c0_703], %1165 {strides = array<i32>} : memref<1x16x256xf32, #tpu.memory_space<vmem>>, vector<1x16x256xf32>,
    return
  }
  func.func @transform_0(%arg0: i32) -> (i32, i32, i32) {
    %c0_i32 = arith.constant 0 : i32
    %c0_i32_0 = arith.constant 0 : i32
    %c0_i32_1 = arith.constant 0 : i32
    return %arg0, %c0_i32, %c0_i32_0 : i32, i32, i32
  }
  func.func @transform_1(%arg0: i32) -> (i32, i32, i32) {
    %c0_i32 = arith.constant 0 : i32
    %c0_i32_0 = arith.constant 0 : i32
    %c0_i32_1 = arith.constant 0 : i32
    return %arg0, %c0_i32, %c0_i32_0 : i32, i32, i32
  }
  func.func @transform_2(%arg0: i32) -> (i32, i32) {
    %c0_i32 = arith.constant 0 : i32
    %c0_i32_0 = arith.constant 0 : i32
    %c0_i32_1 = arith.constant 0 : i32
    return %c0_i32, %c0_i32_0 : i32, i32
  }
  func.func @transform_3(%arg0: i32) -> (i32, i32) {
    %c0_i32 = arith.constant 0 : i32
    %c0_i32_0 = arith.constant 0 : i32
    %c0_i32_1 = arith.constant 0 : i32
    return %c0_i32, %c0_i32_0 : i32, i32
  }
  func.func @transform_4(%arg0: i32) -> (i32, i32) {
    %c0_i32 = arith.constant 0 : i32
    %c0_i32_0 = arith.constant 0 : i32
    %c0_i32_1 = arith.constant 0 : i32
    return %c0_i32, %c0_i32_0 : i32, i32
  }
  func.func @transform_5(%arg0: i32) -> (i32, i32) {
    %c0_i32 = arith.constant 0 : i32
    %c0_i32_0 = arith.constant 0 : i32
    %c0_i32_1 = arith.constant 0 : i32
    return %c0_i32, %c0_i32_0 : i32, i32
  }
  func.func @transform_6(%arg0: i32) -> (i32, i32) {
    %c0_i32 = arith.constant 0 : i32
    %c0_i32_0 = arith.constant 0 : i32
    %c0_i32_1 = arith.constant 0 : i32
    return %c0_i32, %c0_i32_0 : i32, i32
  }
  func.func @transform_7(%arg0: i32) -> (i32, i32) {
    %c0_i32 = arith.constant 0 : i32
    %c0_i32_0 = arith.constant 0 : i32
    %c0_i32_1 = arith.constant 0 : i32
    return %c0_i32, %c0_i32_0 : i32, i32
  }
  func.func @transform_8(%arg0: i32) -> (i32, i32) {
    %c0_i32 = arith.constant 0 : i32
    %c0_i32_0 = arith.constant 0 : i32
    %c0_i32_1 = arith.constant 0 : i32
    return %c0_i32, %c0_i32_0 : i32, i32
  }
  func.func @transform_9(%arg0: i32) -> (i32, i32) {
    %c0_i32 = arith.constant 0 : i32
    %c0_i32_0 = arith.constant 0 : i32
    %c0_i32_1 = arith.constant 0 : i32
    return %c0_i32, %c0_i32_0 : i32, i32
  }
  func.func @transform_10(%arg0: i32) -> (i32, i32) {
    %c0_i32 = arith.constant 0 : i32
    %c0_i32_0 = arith.constant 0 : i32
    %c0_i32_1 = arith.constant 0 : i32
    return %c0_i32, %c0_i32_0 : i32, i32
  }
  func.func @transform_11(%arg0: i32) -> (i32, i32, i32) {
    %c0_i32 = arith.constant 0 : i32
    %c0_i32_0 = arith.constant 0 : i32
    %c0_i32_1 = arith.constant 0 : i32
    return %arg0, %c0_i32, %c0_i32_0 : i32, i32, i32
  }
}

</mosaic_0001>

<llo_original>
// kernel: tpu_custom_call.1
$region0: #{tpu_custom_call.1}
  #allocation0 [shape = 'u32[]', space=smem, size = 0x4, offset = 0x4, fixed_abs, tag = 'smem constant byte address 0x4 - core index']
  #allocation1 [shape = 'u32[144,128]{1,0:T(1,128)}', space=vmem, size = 0x12000, scoped, tag = 'internal scratch']
  #allocation2 [shape = 'f32[4,1,24,128]{3,2,1,0:T(8,128)}', space=vmem, size = 0xc000, scoped, tag = 'scratch operand']
  %s0 = inlined_call_operand.hbm [shape: f32[2,16,256], index: 0, kind: input, shape index: {}]
  %s1 = inlined_call_operand.hbm [shape: f32[2,16,256], index: 1, kind: input, shape index: {}]
  %s2 = inlined_call_operand.vmem [shape: f32[2,16], index: 2, kind: input, shape index: {}]
  %s3 = inlined_call_operand.vmem [shape: f32[1,2], index: 3, kind: input, shape index: {}]
  %s4 = inlined_call_operand.vmem [shape: f32[16,2], index: 4, kind: input, shape index: {}]
  %s5 = inlined_call_operand.vmem [shape: f32[1,16], index: 5, kind: input, shape index: {}]
  %s6 = inlined_call_operand.vmem [shape: f32[2,16], index: 6, kind: input, shape index: {}]
  %s7 = inlined_call_operand.vmem [shape: f32[1,2], index: 7, kind: input, shape index: {}]
  %s8 = inlined_call_operand.vmem [shape: f32[16,2], index: 8, kind: input, shape index: {}]
  %s9 = inlined_call_operand.vmem [shape: f32[1,16], index: 9, kind: input, shape index: {}]
  %s10 = inlined_call_operand.vmem [shape: f32[4,49], index: 10, kind: input, shape index: {}]
  %s11 = inlined_call_operand.hbm [shape: f32[2,16,256], index: 11, kind: output, shape index: {}]
  %s12 = sld [smem:[#allocation0]]
  $region89: #{tpu_custom_call.1} parent=0
    _
  %s14 = ssub.s32 1, %s12
  %s15 = scalar_select 0, %s14, %s12
  $region1: #{tpu_custom_call.1} parent=0
    #allocation3 [shape = 'u8[32768]{0}', space=vmem, size = 0x8000, scoped, tag = 'input window, operand 0']
    #allocation4 [shape = 's32[2]{0}', space=sflag, size = 0x8, scoped, tag = 'scoped memory for tpu_custom_call.1']
    #allocation5 [shape = 's32[2]{0}', space=sflag, size = 0x8, scoped, tag = 'scoped memory for tpu_custom_call.1']
    #allocation6 [shape = 's32[2]{0}', space=sflag, size = 0x8, scoped, tag = 'scoped memory for tpu_custom_call.1']
    #allocation7 [shape = 'u8[32768]{0}', space=vmem, size = 0x8000, scoped, tag = 'input window, operand 1']
    #allocation8 [shape = 's32[2]{0}', space=sflag, size = 0x8, scoped, tag = 'scoped memory for tpu_custom_call.1']
    #allocation9 [shape = 'u8[2048]{0}', space=smem, size = 0x800, scoped, tag = 'input window, operand 10, single buffered']
    #allocation10 [shape = 'u8[32768]{0}', space=vmem, size = 0x8000, scoped, tag = 'output window, operand 0']
    %16 = vsyncpa [#allocation4], 0
    %s17 = scalar_lea.sflag [#allocation4], 1
    %18 = vsyncpa %s17, 0
    %19 = vsyncpa [#allocation8], 0
    %s20 = scalar_lea.sflag [#allocation8], 1
    %21 = vsyncpa %s20, 0
    %22 = vsyncpa [#allocation6], 0
    %23 = vsyncpa [#allocation5], 0
    %s24 = scalar_lea.sflag [#allocation5], 1
    %25 = vsyncpa %s24, 0
    loop: start=0, step=1, limit=4
    $region2: #{tpu_custom_call.1} parent=1 // loop_pre_header
      _
    $region3: #{tpu_custom_call.1} parent=1 // loop_header
      %s27 = sphi 0, %s31
      %p28 = scmp.ge.s32.totalorder %s27, 4
      %s37 = sphi 0, %s39
      %s40 = sphi 0, %s37
      %s41 = sphi 0, %s40
      %s57 = sphi 0, %s41
      %s63 = sphi 0, %s65
      %s66 = sphi 0, %s63
      %s67 = sphi 0, %s66
      %s83 = sphi 0, %s67
      %s87 = sphi 0, %s87
      %s89 = sphi 0, %s87
      %s90 = sphi 0, %s89
      %s104 = sphi 0, %s90
      %s108 = sphi 0, %s108
      %s110 = sphi 0, %s108
      %s111 = sphi 0, %s110
      %s125 = sphi 0, %s111
      %s129 = sphi 0, %s129
      %s131 = sphi 0, %s129
      %s132 = sphi 0, %s131
      %s146 = sphi 0, %s132
      %s150 = sphi 0, %s150
      %s152 = sphi 0, %s150
      %s153 = sphi 0, %s152
      %s167 = sphi 0, %s153
      %s171 = sphi 0, %s171
      %s173 = sphi 0, %s171
      %s174 = sphi 0, %s173
      %s188 = sphi 0, %s174
      %s192 = sphi 0, %s192
      %s194 = sphi 0, %s192
      %s195 = sphi 0, %s194
      %s209 = sphi 0, %s195
      %s213 = sphi 0, %s213
      %s215 = sphi 0, %s213
      %s216 = sphi 0, %s215
      %s230 = sphi 0, %s216
      %s234 = sphi 0, %s234
      %s236 = sphi 0, %s234
      %s237 = sphi 0, %s236
      %s251 = sphi 0, %s237
      %s255 = sphi 0, %s255
      %s257 = sphi 0, %s255
      %s258 = sphi 0, %s257
      %s272 = sphi 0, %s258
      %s278 = sphi 0, %s280
      %s281 = sphi 0, %s278
      %s282 = sphi 0, %s281
      %s298 = sphi 0, %s282
    $region4: #{tpu_custom_call.1} parent=1 // loop_header_branch
      %30 = sbr.rel (%p28) target = $region8
    $region5: #{tpu_custom_call.1} parent=1 // loop_body
      %s32 = ssub.s32 %s27, 1
      %s33 = ssub.s32 %s27, 2
      %s34 = sadd.s32 %s27, 1
      %s35 = ssub.s32 %s27, %s34
      %p36 = scmp.eq.s32.totalorder %s35, 0
      %s38 = sadd.s32 %s37, 1
      %s39 = scalar_select %p36, %s37, %s38
      %p42 = pneg %p36
      %p43 = scmp.eq.s32.totalorder %s27, 1
      %p44 = por %p42, %p43
      %p45 = scmp.ne.s32.totalorder %s37, %s40
      %p46 = scmp.eq.s32.totalorder %s27, 0
      %p47 = por %p45, %p46
      %p48 = scmp.ne.s32.totalorder %s37, %s40
      %p49 = scmp.eq.s32.totalorder %s32, 1
      %p50 = por %p48, %p49
      %p51 = scmp.ne.s32.totalorder %s40, %s41
      %p52 = scmp.eq.s32.totalorder %s32, 0
      %p53 = por %p51, %p52
      %p54 = scmp.ne.s32.totalorder %s40, %s41
      %p55 = scmp.eq.s32.totalorder %s33, 1
      %p56 = por %p54, %p55
      %p58 = scmp.ne.s32.totalorder %s41, %s57
      %p59 = scmp.eq.s32.totalorder %s33, 0
      %p60 = por %p58, %p59
      %s61 = ssub.s32 %s27, %s34
      %p62 = scmp.eq.s32.totalorder %s61, 0
      %s64 = sadd.s32 %s63, 1
      %s65 = scalar_select %p62, %s63, %s64
      %p68 = pneg %p62
      %p69 = scmp.eq.s32.totalorder %s27, 1
      %p70 = por %p68, %p69
      %p71 = scmp.ne.s32.totalorder %s63, %s66
      %p72 = scmp.eq.s32.totalorder %s27, 0
      %p73 = por %p71, %p72
      %p74 = scmp.ne.s32.totalorder %s63, %s66
      %p75 = scmp.eq.s32.totalorder %s32, 1
      %p76 = por %p74, %p75
      %p77 = scmp.ne.s32.totalorder %s66, %s67
      %p78 = scmp.eq.s32.totalorder %s32, 0
      %p79 = por %p77, %p78
      %p80 = scmp.ne.s32.totalorder %s66, %s67
      %p81 = scmp.eq.s32.totalorder %s33, 1
      %p82 = por %p80, %p81
      %p84 = scmp.ne.s32.totalorder %s67, %s83
      %p85 = scmp.eq.s32.totalorder %s33, 0
      %p86 = por %p84, %p85
      %s88 = sadd.s32 %s87, 1
      %p91 = scmp.eq.s32.totalorder %s27, 1
      %p92 = scmp.ne.s32.totalorder %s87, %s89
      %p93 = scmp.eq.s32.totalorder %s27, 0
      %p94 = por %p92, %p93
      %p95 = scmp.ne.s32.totalorder %s87, %s89
      %p96 = scmp.eq.s32.totalorder %s32, 1
      %p97 = por %p95, %p96
      %p98 = scmp.ne.s32.totalorder %s89, %s90
      %p99 = scmp.eq.s32.totalorder %s32, 0
      %p100 = por %p98, %p99
      %p101 = scmp.ne.s32.totalorder %s89, %s90
      %p102 = scmp.eq.s32.totalorder %s33, 1
      %p103 = por %p101, %p102
      %p105 = scmp.ne.s32.totalorder %s90, %s104
      %p106 = scmp.eq.s32.totalorder %s33, 0
      %p107 = por %p105, %p106
      %s109 = sadd.s32 %s108, 1
      %p112 = scmp.eq.s32.totalorder %s27, 1
      %p113 = scmp.ne.s32.totalorder %s108, %s110
      %p114 = scmp.eq.s32.totalorder %s27, 0
      %p115 = por %p113, %p114
      %p116 = scmp.ne.s32.totalorder %s108, %s110
      %p117 = scmp.eq.s32.totalorder %s32, 1
      %p118 = por %p116, %p117
      %p119 = scmp.ne.s32.totalorder %s110, %s111
      %p120 = scmp.eq.s32.totalorder %s32, 0
      %p121 = por %p119, %p120
      %p122 = scmp.ne.s32.totalorder %s110, %s111
      %p123 = scmp.eq.s32.totalorder %s33, 1
      %p124 = por %p122, %p123
      %p126 = scmp.ne.s32.totalorder %s111, %s125
      %p127 = scmp.eq.s32.totalorder %s33, 0
      %p128 = por %p126, %p127
      %s130 = sadd.s32 %s129, 1
      %p133 = scmp.eq.s32.totalorder %s27, 1
      %p134 = scmp.ne.s32.totalorder %s129, %s131
      %p135 = scmp.eq.s32.totalorder %s27, 0
      %p136 = por %p134, %p135
      %p137 = scmp.ne.s32.totalorder %s129, %s131
      %p138 = scmp.eq.s32.totalorder %s32, 1
      %p139 = por %p137, %p138
      %p140 = scmp.ne.s32.totalorder %s131, %s132
      %p141 = scmp.eq.s32.totalorder %s32, 0
      %p142 = por %p140, %p141
      %p143 = scmp.ne.s32.totalorder %s131, %s132
      %p144 = scmp.eq.s32.totalorder %s33, 1
      %p145 = por %p143, %p144
      %p147 = scmp.ne.s32.totalorder %s132, %s146
      %p148 = scmp.eq.s32.totalorder %s33, 0
      %p149 = por %p147, %p148
      %s151 = sadd.s32 %s150, 1
      %p154 = scmp.eq.s32.totalorder %s27, 1
      %p155 = scmp.ne.s32.totalorder %s150, %s152
      %p156 = scmp.eq.s32.totalorder %s27, 0
      %p157 = por %p155, %p156
      %p158 = scmp.ne.s32.totalorder %s150, %s152
      %p159 = scmp.eq.s32.totalorder %s32, 1
      %p160 = por %p158, %p159
      %p161 = scmp.ne.s32.totalorder %s152, %s153
      %p162 = scmp.eq.s32.totalorder %s32, 0
      %p163 = por %p161, %p162
      %p164 = scmp.ne.s32.totalorder %s152, %s153
      %p165 = scmp.eq.s32.totalorder %s33, 1
      %p166 = por %p164, %p165
      %p168 = scmp.ne.s32.totalorder %s153, %s167
      %p169 = scmp.eq.s32.totalorder %s33, 0
      %p170 = por %p168, %p169
      %s172 = sadd.s32 %s171, 1
      %p175 = scmp.eq.s32.totalorder %s27, 1
      %p176 = scmp.ne.s32.totalorder %s171, %s173
      %p177 = scmp.eq.s32.totalorder %s27, 0
      %p178 = por %p176, %p177
      %p179 = scmp.ne.s32.totalorder %s171, %s173
      %p180 = scmp.eq.s32.totalorder %s32, 1
      %p181 = por %p179, %p180
      %p182 = scmp.ne.s32.totalorder %s173, %s174
      %p183 = scmp.eq.s32.totalorder %s32, 0
      %p184 = por %p182, %p183
      %p185 = scmp.ne.s32.totalorder %s173, %s174
      %p186 = scmp.eq.s32.totalorder %s33, 1
      %p187 = por %p185, %p186
      %p189 = scmp.ne.s32.totalorder %s174, %s188
      %p190 = scmp.eq.s32.totalorder %s33, 0
      %p191 = por %p189, %p190
      %s193 = sadd.s32 %s192, 1
      %p196 = scmp.eq.s32.totalorder %s27, 1
      %p197 = scmp.ne.s32.totalorder %s192, %s194
      %p198 = scmp.eq.s32.totalorder %s27, 0
      %p199 = por %p197, %p198
      %p200 = scmp.ne.s32.totalorder %s192, %s194
      %p201 = scmp.eq.s32.totalorder %s32, 1
      %p202 = por %p200, %p201
      %p203 = scmp.ne.s32.totalorder %s194, %s195
      %p204 = scmp.eq.s32.totalorder %s32, 0
      %p205 = por %p203, %p204
      %p206 = scmp.ne.s32.totalorder %s194, %s195
      %p207 = scmp.eq.s32.totalorder %s33, 1
      %p208 = por %p206, %p207
      %p210 = scmp.ne.s32.totalorder %s195, %s209
      %p211 = scmp.eq.s32.totalorder %s33, 0
      %p212 = por %p210, %p211
      %s214 = sadd.s32 %s213, 1
      %p217 = scmp.eq.s32.totalorder %s27, 1
      %p218 = scmp.ne.s32.totalorder %s213, %s215
      %p219 = scmp.eq.s32.totalorder %s27, 0
      %p220 = por %p218, %p219
      %p221 = scmp.ne.s32.totalorder %s213, %s215
      %p222 = scmp.eq.s32.totalorder %s32, 1
      %p223 = por %p221, %p222
      %p224 = scmp.ne.s32.totalorder %s215, %s216
      %p225 = scmp.eq.s32.totalorder %s32, 0
      %p226 = por %p224, %p225
      %p227 = scmp.ne.s32.totalorder %s215, %s216
      %p228 = scmp.eq.s32.totalorder %s33, 1
      %p229 = por %p227, %p228
      %p231 = scmp.ne.s32.totalorder %s216, %s230
      %p232 = scmp.eq.s32.totalorder %s33, 0
      %p233 = por %p231, %p232
      %s235 = sadd.s32 %s234, 1
      %p238 = scmp.eq.s32.totalorder %s27, 1
      %p239 = scmp.ne.s32.totalorder %s234, %s236
      %p240 = scmp.eq.s32.totalorder %s27, 0
      %p241 = por %p239, %p240
      %p242 = scmp.ne.s32.totalorder %s234, %s236
      %p243 = scmp.eq.s32.totalorder %s32, 1
      %p244 = por %p242, %p243
      %p245 = scmp.ne.s32.totalorder %s236, %s237
      %p246 = scmp.eq.s32.totalorder %s32, 0
      %p247 = por %p245, %p246
      %p248 = scmp.ne.s32.totalorder %s236, %s237
      %p249 = scmp.eq.s32.totalorder %s33, 1
      %p250 = por %p248, %p249
      %p252 = scmp.ne.s32.totalorder %s237, %s251
      %p253 = scmp.eq.s32.totalorder %s33, 0
      %p254 = por %p252, %p253
      %s256 = sadd.s32 %s255, 1
      %p259 = scmp.eq.s32.totalorder %s27, 1
      %p260 = scmp.ne.s32.totalorder %s255, %s257
      %p261 = scmp.eq.s32.totalorder %s27, 0
      %p262 = por %p260, %p261
      %p263 = scmp.ne.s32.totalorder %s255, %s257
      %p264 = scmp.eq.s32.totalorder %s32, 1
      %p265 = por %p263, %p264
      %p266 = scmp.ne.s32.totalorder %s257, %s258
      %p267 = scmp.eq.s32.totalorder %s32, 0
      %p268 = por %p266, %p267
      %p269 = scmp.ne.s32.totalorder %s257, %s258
      %p270 = scmp.eq.s32.totalorder %s33, 1
      %p271 = por %p269, %p270
      %p273 = scmp.ne.s32.totalorder %s258, %s272
      %p274 = scmp.eq.s32.totalorder %s33, 0
      %p275 = por %p273, %p274
      %s276 = ssub.s32 %s27, %s34
      %p277 = scmp.eq.s32.totalorder %s276, 0
      %s279 = sadd.s32 %s278, 1
      %s280 = scalar_select %p277, %s278, %s279
      %p283 = pneg %p277
      %p284 = scmp.eq.s32.totalorder %s27, 1
      %p285 = por %p283, %p284
      %p286 = scmp.ne.s32.totalorder %s278, %s281
      %p287 = scmp.eq.s32.totalorder %s27, 0
      %p288 = por %p286, %p287
      %p289 = scmp.ne.s32.totalorder %s278, %s281
      %p290 = scmp.eq.s32.totalorder %s32, 1
      %p291 = por %p289, %p290
      %p292 = scmp.ne.s32.totalorder %s281, %s282
      %p293 = scmp.eq.s32.totalorder %s32, 0
      %p294 = por %p292, %p293
      %p295 = scmp.ne.s32.totalorder %s281, %s282
      %p296 = scmp.eq.s32.totalorder %s33, 1
      %p297 = por %p295, %p296
      %p299 = scmp.ne.s32.totalorder %s282, %s298
      %p300 = scmp.eq.s32.totalorder %s33, 0
      %p301 = por %p299, %p300
      %p302 = scmp.le.s32.totalorder 1, %s27
      %p303 = scmp.lt.s32.totalorder %s27, 3
      %p304 = pnand %p302, %p303
      %p305 = pneg %p304
      // Predicated region
      $region9: #{tpu_custom_call.1} parent=5 // pred_check
        _
      $region10: #{tpu_custom_call.1} parent=5 // pred_check_branch
        %307 = sbr.rel (%p304) target = $region12
      $region11: #{tpu_custom_call.1} parent=5 // pred_region
        %s308 = ssub.s32 %s27, 1
        // Predicated region
        $region13: #{tpu_custom_call.1} parent=11 // pred_check
          %p309 = pneg %p100
        $region14: #{tpu_custom_call.1} parent=11 // pred_check_branch
          %311 = sbr.rel (%p309) target = $region16
        $region15: #{tpu_custom_call.1} parent=11 // pred_region
          _
        $region16: #{tpu_custom_call.1} parent=11 // pred_fallthru
          _
        // Predicated region
        $region17: #{tpu_custom_call.1} parent=11 // pred_check
          %p312 = pneg %p121
        $region18: #{tpu_custom_call.1} parent=11 // pred_check_branch
          %314 = sbr.rel (%p312) target = $region20
        $region19: #{tpu_custom_call.1} parent=11 // pred_region
          _
        $region20: #{tpu_custom_call.1} parent=11 // pred_fallthru
          _
        // Predicated region
        $region21: #{tpu_custom_call.1} parent=11 // pred_check
          %p315 = pneg %p142
        $region22: #{tpu_custom_call.1} parent=11 // pred_check_branch
          %317 = sbr.rel (%p315) target = $region24
        $region23: #{tpu_custom_call.1} parent=11 // pred_region
          _
        $region24: #{tpu_custom_call.1} parent=11 // pred_fallthru
          _
        // Predicated region
        $region25: #{tpu_custom_call.1} parent=11 // pred_check
          %p318 = pneg %p163
        $region26: #{tpu_custom_call.1} parent=11 // pred_check_branch
          %320 = sbr.rel (%p318) target = $region28
        $region27: #{tpu_custom_call.1} parent=11 // pred_region
          _
        $region28: #{tpu_custom_call.1} parent=11 // pred_fallthru
          _
        // Predicated region
        $region29: #{tpu_custom_call.1} parent=11 // pred_check
          %p321 = pneg %p184
        $region30: #{tpu_custom_call.1} parent=11 // pred_check_branch
          %323 = sbr.rel (%p321) target = $region32
        $region31: #{tpu_custom_call.1} parent=11 // pred_region
          _
        $region32: #{tpu_custom_call.1} parent=11 // pred_fallthru
          _
        // Predicated region
        $region33: #{tpu_custom_call.1} parent=11 // pred_check
          %p324 = pneg %p205
        $region34: #{tpu_custom_call.1} parent=11 // pred_check_branch
          %326 = sbr.rel (%p324) target = $region36
        $region35: #{tpu_custom_call.1} parent=11 // pred_region
          _
        $region36: #{tpu_custom_call.1} parent=11 // pred_fallthru
          _
        // Predicated region
        $region37: #{tpu_custom_call.1} parent=11 // pred_check
          %p327 = pneg %p226
        $region38: #{tpu_custom_call.1} parent=11 // pred_check_branch
          %329 = sbr.rel (%p327) target = $region40
        $region39: #{tpu_custom_call.1} parent=11 // pred_region
          _
        $region40: #{tpu_custom_call.1} parent=11 // pred_fallthru
          _
        // Predicated region
        $region41: #{tpu_custom_call.1} parent=11 // pred_check
          %p330 = pneg %p247
        $region42: #{tpu_custom_call.1} parent=11 // pred_check_branch
          %332 = sbr.rel (%p330) target = $region44
        $region43: #{tpu_custom_call.1} parent=11 // pred_region
          _
        $region44: #{tpu_custom_call.1} parent=11 // pred_fallthru
          _
        // Predicated region
        $region45: #{tpu_custom_call.1} parent=11 // pred_check
          %p333 = pneg %p268
        $region46: #{tpu_custom_call.1} parent=11 // pred_check_branch
          %335 = sbr.rel (%p333) target = $region48
        $region47: #{tpu_custom_call.1} parent=11 // pred_region
          %s337 = ssub.s32 64, 64
          %338 = vsyncadd [#allocation6], %s337
          %s340 = sshll.u32 %s10, 4
          %s341 = int_to_ptr.vmem [resolvable:$true] %s340
          %343 = dma.vmem_to_smem %s341, 64, [#allocation9], [#allocation6]
        $region48: #{tpu_custom_call.1} parent=11 // pred_fallthru
          _
      $region12: #{tpu_custom_call.1} parent=5 // pred_fallthru
        _
      %p344 = scmp.lt.s32.totalorder %s27, 2
      // Predicated region
      $region49: #{tpu_custom_call.1} parent=5 // pred_check
        %p345 = pneg %p344
      $region50: #{tpu_custom_call.1} parent=5 // pred_check_branch
        %347 = sbr.rel (%p345) target = $region52
      $region51: #{tpu_custom_call.1} parent=5 // pred_region
        // Predicated region
        $region53: #{tpu_custom_call.1} parent=51 // pred_check
          %p348 = pneg %p47
        $region54: #{tpu_custom_call.1} parent=51 // pred_check_branch
          %350 = sbr.rel (%p348) target = $region56
        $region55: #{tpu_custom_call.1} parent=51 // pred_region
          %s351 = sand.u32 %s37, 1
          %s352 = scalar_lea.sflag [#allocation4], %s351
          %s353 = sand.u32 %s37, 1
          %s354 = smul.addr %s353, 32
          %s355 = scalar_lea.vmem [#allocation3], %s354
          %s357 = ssub.s32 512, 512
          %358 = vsyncadd %s352, %s357
          %s359 = smul.addr %s27, 4
          %s360 = smul.addr %s359, 128
          %s361 = scalar_lea.hbm %s0, %s360
          %s362 = sshll.u32 %s355, 4
          %s363 = int_to_ptr.vmem [resolvable:$true] %s362
          %368 = dma.hbm_to_vmem [thread:$0]  %s361, 512, %s363, %s352, 256, 256, 16
        $region56: #{tpu_custom_call.1} parent=51 // pred_fallthru
          _
        // Predicated region
        $region57: #{tpu_custom_call.1} parent=51 // pred_check
          %p369 = pneg %p73
        $region58: #{tpu_custom_call.1} parent=51 // pred_check_branch
          %371 = sbr.rel (%p369) target = $region60
        $region59: #{tpu_custom_call.1} parent=51 // pred_region
          %s372 = sand.u32 %s63, 1
          %s373 = scalar_lea.sflag [#allocation8], %s372
          %s374 = sand.u32 %s63, 1
          %s375 = smul.addr %s374, 32
          %s376 = scalar_lea.vmem [#allocation7], %s375
          %s378 = ssub.s32 512, 512
          %379 = vsyncadd %s373, %s378
          %s380 = smul.addr %s27, 4
          %s381 = smul.addr %s380, 128
          %s382 = scalar_lea.hbm %s1, %s381
          %s383 = sshll.u32 %s376, 4
          %s384 = int_to_ptr.vmem [resolvable:$true] %s383
          %389 = dma.hbm_to_vmem [thread:$0]  %s382, 512, %s384, %s373, 256, 256, 16
        $region60: #{tpu_custom_call.1} parent=51 // pred_fallthru
          _
      $region52: #{tpu_custom_call.1} parent=5 // pred_fallthru
        _
      %p390 = scmp.le.s32.totalorder 1, %s27
      %p391 = scmp.lt.s32.totalorder %s27, 3
      %p392 = pnand %p390, %p391
      %p393 = pneg %p392
      // Predicated region
      $region61: #{tpu_custom_call.1} parent=5 // pred_check
        _
      $region62: #{tpu_custom_call.1} parent=5 // pred_check_branch
        %395 = sbr.rel (%p392) target = $region64
      $region63: #{tpu_custom_call.1} parent=5 // pred_region
        %s396 = ssub.s32 %s27, 1
        %s397 = sand.u32 %s40, 1
        %s398 = scalar_lea.sflag [#allocation4], %s397
        %s399 = sand.u32 %s40, 1
        %s400 = smul.addr %s399, 32
        %s401 = scalar_lea.vmem [#allocation3], %s400
        // Predicated region
        $region65: #{tpu_custom_call.1} parent=63 // pred_check
          %p402 = pneg %p53
        $region66: #{tpu_custom_call.1} parent=63 // pred_check_branch
          %404 = sbr.rel (%p402) target = $region68
        $region67: #{tpu_custom_call.1} parent=63 // pred_region
          %405 = dma.done %s398, 512
        $region68: #{tpu_custom_call.1} parent=63 // pred_fallthru
          _
        %s406 = sand.u32 %s66, 1
        %s407 = scalar_lea.sflag [#allocation8], %s406
        %s408 = sand.u32 %s66, 1
        %s409 = smul.addr %s408, 32
        %s410 = scalar_lea.vmem [#allocation7], %s409
        // Predicated region
        $region69: #{tpu_custom_call.1} parent=63 // pred_check
          %p411 = pneg %p79
        $region70: #{tpu_custom_call.1} parent=63 // pred_check_branch
          %413 = sbr.rel (%p411) target = $region72
        $region71: #{tpu_custom_call.1} parent=63 // pred_region
          %414 = dma.done %s407, 512
        $region72: #{tpu_custom_call.1} parent=63 // pred_fallthru
          _
        // Predicated region
        $region73: #{tpu_custom_call.1} parent=63 // pred_check
          %p415 = pneg %p268
        $region74: #{tpu_custom_call.1} parent=63 // pred_check_branch
          %417 = sbr.rel (%p415) target = $region76
        $region75: #{tpu_custom_call.1} parent=63 // pred_region
          %418 = dma.done [#allocation6], 64
        $region76: #{tpu_custom_call.1} parent=63 // pred_fallthru
          _
        %419 = sfence
        %s420 = sand.u32 %s40, 1
        %s421 = scalar_lea.sflag [#allocation4], %s420
        %s422 = sand.u32 %s40, 1
        %s423 = smul.addr %s422, 32
        %s424 = scalar_lea.vmem [#allocation3], %s423
        %p425 = pneg %p53
        %p426 = pneg %p50
        %s427 = sand.u32 %s66, 1
        %s428 = scalar_lea.sflag [#allocation8], %s427
        %s429 = sand.u32 %s66, 1
        %s430 = smul.addr %s429, 32
        %s431 = scalar_lea.vmem [#allocation7], %s430
        %p432 = pneg %p79
        %p433 = pneg %p76
        %p434 = pneg %p100
        %p435 = pneg %p97
        %p436 = pneg %p121
        %p437 = pneg %p118
        %p438 = pneg %p142
        %p439 = pneg %p139
        %p440 = pneg %p163
        %p441 = pneg %p160
        %p442 = pneg %p184
        %p443 = pneg %p181
        %p444 = pneg %p205
        %p445 = pneg %p202
        %p446 = pneg %p226
        %p447 = pneg %p223
        %p448 = pneg %p247
        %p449 = pneg %p244
        %p450 = pneg %p268
        %p451 = pneg %p265
        %p452 = pneg %p294
        %p453 = pneg %p291
        %s454 = sand.u32 %s281, 1
        %s455 = scalar_lea.sflag [#allocation5], %s454
        %s456 = sand.u32 %s281, 1
        %s457 = smul.addr %s456, 32
        %s458 = scalar_lea.vmem [#allocation10], %s457
        %v459 = vld [vmem:[%s401] sm:$0xff]
        %v460 = vld [vmem:[%s401 + $0x8] sm:$0xff]
        %v461 = vld [vmem:[%s401 + $0x10] sm:$0xff]
        %v462 = vld [vmem:[%s401 + $0x18] sm:$0xff]
        %v463 = vld [vmem:[%s410] sm:$0xff]
        %v464 = vld [vmem:[%s410 + $0x8] sm:$0xff]
        %v465 = vld [vmem:[%s410 + $0x10] sm:$0xff]
        %v466 = vld [vmem:[%s410 + $0x18] sm:$0xff]
        %v467 = vld [vmem:[%s2] sm:$0x3]
        %v468 = vld [vmem:[%s3] sm:$0x1]
        %v469 = vld [vmem:[%s4] sm:$0xff]
        %v470 = vld [vmem:[%s4 + $0x8] sm:$0xff]
        %v471 = vld [vmem:[%s5] sm:$0x1]
        %v472 = vmax.f32 %v459, %v460
        %473 = vmax.xlane.f32.xlu0 %v472
        %v474 = vpop.xlane.xlu0 %473
        %v475 = vmax.f32 %v461, %v462
        %476 = vmax.xlane.f32.xlu0 %v475
        %v477 = vpop.xlane.xlu0 %476
        %v478 = vadd.f32 %v459, %v460
        %479 = vadd.xlane.f32.xlu0 %v478
        %v480 = vpop.xlane.xlu0 %479
        %v481 = vadd.f32 %v461, %v462
        %482 = vadd.xlane.f32.xlu0 %v481
        %v483 = vpop.xlane.xlu0 %482
        %v484 = vmul.f32 %v480, 0.00390625
        %v485 = vmul.f32 %v483, 0.00390625
        %v487 = vlaneseq
        %v488 = vshrl.u32 %v487, 7
        %v489 = vsub.s32 0, %v488
        %v490 = vrot.slane %v467, %v489
        %492 = vbcast.lane.b32.xlu0 %v490, 256
        %v493 = vpop.permute.xlu0 %492
        %s495 = sor.u32 256, 8
        %496 = vbcast.lane.b32.xlu0 %v490, %s495
        %v497 = vpop.permute.xlu0 %496
        %v498 = vlaneseq
        %v499 = vshrl.u32 %v498, 7
        %v500 = vsub.s32 1, %v499
        %v501 = vrot.slane %v467, %v500
        %503 = vbcast.lane.b32.xlu0 %v501, 256
        %v504 = vpop.permute.xlu0 %503
        %s506 = sor.u32 256, 8
        %507 = vbcast.lane.b32.xlu0 %v501, %s506
        %v508 = vpop.permute.xlu0 %507
        %v513 = vmul.f32 %v474, %v493
        %v514 = vmul.f32 %v477, %v497
        %v515 = vmul.f32 %v474, %v504
        %v516 = vmul.f32 %v477, %v508
        %521 = vset.pattern.permute.xlu0 0
        %522 = vperm.xlu0 %521, %v513
        %v523 = vpop.permute.xlu0 %522
        %524 = vset.pattern.permute.xlu0 0
        %525 = vperm.xlu0 %524, %v514
        %v526 = vpop.permute.xlu0 %525
        %527 = vset.pattern.permute.xlu0 0
        %528 = vperm.xlu0 %527, %v515
        %v529 = vpop.permute.xlu0 %528
        %530 = vset.pattern.permute.xlu0 0
        %531 = vperm.xlu0 %530, %v516
        %v532 = vpop.permute.xlu0 %531
        %v533 = vlaneseq
        %v534 = vand.u32 %v533, 127
        %v535 = vlaneseq
        %v536 = vshrl.u32 %v535, 7
        %v537 = vsub.s32 %v534, %v536
        %v538 = vrot.slane %v523, %v537
        %v539 = vadd.s32 %v534, 4294967288
        %v540 = vlaneseq
        %v541 = vshrl.u32 %v540, 7
        %v542 = vsub.s32 %v539, %v541
        %v543 = vrot.slane %v526, %v542
        %vm544 = vcmask 130112
        %v545 = vsel %vm544, %v543, %v538
        %v546 = vlaneseq
        %v547 = vshrl.u32 %v546, 7
        %v548 = vsub.s32 %v534, %v547
        %v549 = vrot.slane %v529, %v548
        %v550 = vlaneseq
        %v551 = vshrl.u32 %v550, 7
        %v552 = vsub.s32 %v539, %v551
        %v553 = vrot.slane %v532, %v552
        %v554 = vsel %vm544, %v553, %v549
        %vm555 = vcmask 1041409
        %v556 = vsel %vm555, %v554, %v545
        %vm558 = vcmask 123904
        %v559 = vsel %vm558, %v556, 0.0
        %560 = vadd.xlane.f32.xlu0 %v559
        %v561 = vpop.xlane.xlu0 %560
        %v563 = vlaneseq
        %v564 = vshrl.u32 %v563, 7
        %v565 = vsub.s32 0, %v564
        %v566 = vrot.slane %v468, %v565
        %568 = vbcast.lane.b32.xlu0 %v566, 256
        %v569 = vpop.permute.xlu0 %568
        %v571 = vadd.f32 %v561, %v569
        %v572 = vmax.f32 %v571, 0.0
        %v575 = vlaneseq
        %v576 = vshrl.u32 %v575, 7
        %v577 = vsub.s32 0, %v576
        %v578 = vrot.slane %v469, %v577
        %580 = vbcast.lane.b32.xlu0 %v578, 256
        %v581 = vpop.permute.xlu0 %580
        %v582 = vlaneseq
        %v583 = vshrl.u32 %v582, 7
        %v584 = vsub.s32 1, %v583
        %v585 = vrot.slane %v469, %v584
        %587 = vbcast.lane.b32.xlu0 %v585, 256
        %v588 = vpop.permute.xlu0 %587
        %v589 = vlaneseq
        %v590 = vshrl.u32 %v589, 7
        %v591 = vsub.s32 2, %v590
        %v592 = vrot.slane %v469, %v591
        %594 = vbcast.lane.b32.xlu0 %v592, 256
        %v595 = vpop.permute.xlu0 %594
        %v596 = vlaneseq
        %v597 = vshrl.u32 %v596, 7
        %v598 = vsub.s32 3, %v597
        %v599 = vrot.slane %v469, %v598
        %601 = vbcast.lane.b32.xlu0 %v599, 256
        %v602 = vpop.permute.xlu0 %601
        %v603 = vlaneseq
        %v604 = vshrl.u32 %v603, 7
        %v605 = vsub.s32 4, %v604
        %v606 = vrot.slane %v469, %v605
        %608 = vbcast.lane.b32.xlu0 %v606, 256
        %v609 = vpop.permute.xlu0 %608
        %v610 = vlaneseq
        %v611 = vshrl.u32 %v610, 7
        %v612 = vsub.s32 5, %v611
        %v613 = vrot.slane %v469, %v612
        %615 = vbcast.lane.b32.xlu0 %v613, 256
        %v616 = vpop.permute.xlu0 %615
        %v617 = vlaneseq
        %v618 = vshrl.u32 %v617, 7
        %v619 = vsub.s32 6, %v618
        %v620 = vrot.slane %v469, %v619
        %622 = vbcast.lane.b32.xlu0 %v620, 256
        %v623 = vpop.permute.xlu0 %622
        %v624 = vlaneseq
        %v625 = vshrl.u32 %v624, 7
        %v626 = vsub.s32 7, %v625
        %v627 = vrot.slane %v469, %v626
        %629 = vbcast.lane.b32.xlu0 %v627, 256
        %v630 = vpop.permute.xlu0 %629
        %v631 = vlaneseq
        %v632 = vshrl.u32 %v631, 7
        %v633 = vsub.s32 0, %v632
        %v634 = vrot.slane %v470, %v633
        %636 = vbcast.lane.b32.xlu0 %v634, 256
        %v637 = vpop.permute.xlu0 %636
        %v638 = vlaneseq
        %v639 = vshrl.u32 %v638, 7
        %v640 = vsub.s32 1, %v639
        %v641 = vrot.slane %v470, %v640
        %643 = vbcast.lane.b32.xlu0 %v641, 256
        %v644 = vpop.permute.xlu0 %643
        %v645 = vlaneseq
        %v646 = vshrl.u32 %v645, 7
        %v647 = vsub.s32 2, %v646
        %v648 = vrot.slane %v470, %v647
        %650 = vbcast.lane.b32.xlu0 %v648, 256
        %v651 = vpop.permute.xlu0 %650
        %v652 = vlaneseq
        %v653 = vshrl.u32 %v652, 7
        %v654 = vsub.s32 3, %v653
        %v655 = vrot.slane %v470, %v654
        %657 = vbcast.lane.b32.xlu0 %v655, 256
        %v658 = vpop.permute.xlu0 %657
        %v659 = vlaneseq
        %v660 = vshrl.u32 %v659, 7
        %v661 = vsub.s32 4, %v660
        %v662 = vrot.slane %v470, %v661
        %664 = vbcast.lane.b32.xlu0 %v662, 256
        %v665 = vpop.permute.xlu0 %664
        %v666 = vlaneseq
        %v667 = vshrl.u32 %v666, 7
        %v668 = vsub.s32 5, %v667
        %v669 = vrot.slane %v470, %v668
        %671 = vbcast.lane.b32.xlu0 %v669, 256
        %v672 = vpop.permute.xlu0 %671
        %v673 = vlaneseq
        %v674 = vshrl.u32 %v673, 7
        %v675 = vsub.s32 6, %v674
        %v676 = vrot.slane %v470, %v675
        %678 = vbcast.lane.b32.xlu0 %v676, 256
        %v679 = vpop.permute.xlu0 %678
        %v680 = vlaneseq
        %v681 = vshrl.u32 %v680, 7
        %v682 = vsub.s32 7, %v681
        %v683 = vrot.slane %v470, %v682
        %685 = vbcast.lane.b32.xlu0 %v683, 256
        %v686 = vpop.permute.xlu0 %685
        %v703 = vmul.f32 %v572, %v581
        %v704 = vmul.f32 %v572, %v588
        %v705 = vmul.f32 %v572, %v595
        %v706 = vmul.f32 %v572, %v602
        %v707 = vmul.f32 %v572, %v609
        %v708 = vmul.f32 %v572, %v616
        %v709 = vmul.f32 %v572, %v623
        %v710 = vmul.f32 %v572, %v630
        %v711 = vmul.f32 %v572, %v637
        %v712 = vmul.f32 %v572, %v644
        %v713 = vmul.f32 %v572, %v651
        %v714 = vmul.f32 %v572, %v658
        %v715 = vmul.f32 %v572, %v665
        %v716 = vmul.f32 %v572, %v672
        %v717 = vmul.f32 %v572, %v679
        %v718 = vmul.f32 %v572, %v686
        %735 = vset.pattern.permute.xlu0 0
        %736 = vperm.xlu0 %735, %v703
        %v737 = vpop.permute.xlu0 %736
        %738 = vset.pattern.permute.xlu0 0
        %739 = vperm.xlu0 %738, %v704
        %v740 = vpop.permute.xlu0 %739
        %741 = vset.pattern.permute.xlu0 0
        %742 = vperm.xlu0 %741, %v705
        %v743 = vpop.permute.xlu0 %742
        %744 = vset.pattern.permute.xlu0 0
        %745 = vperm.xlu0 %744, %v706
        %v746 = vpop.permute.xlu0 %745
        %747 = vset.pattern.permute.xlu0 0
        %748 = vperm.xlu0 %747, %v707
        %v749 = vpop.permute.xlu0 %748
        %750 = vset.pattern.permute.xlu0 0
        %751 = vperm.xlu0 %750, %v708
        %v752 = vpop.permute.xlu0 %751
        %753 = vset.pattern.permute.xlu0 0
        %754 = vperm.xlu0 %753, %v709
        %v755 = vpop.permute.xlu0 %754
        %756 = vset.pattern.permute.xlu0 0
        %757 = vperm.xlu0 %756, %v710
        %v758 = vpop.permute.xlu0 %757
        %759 = vset.pattern.permute.xlu0 0
        %760 = vperm.xlu0 %759, %v711
        %v761 = vpop.permute.xlu0 %760
        %762 = vset.pattern.permute.xlu0 0
        %763 = vperm.xlu0 %762, %v712
        %v764 = vpop.permute.xlu0 %763
        %765 = vset.pattern.permute.xlu0 0
        %766 = vperm.xlu0 %765, %v713
        %v767 = vpop.permute.xlu0 %766
        %768 = vset.pattern.permute.xlu0 0
        %769 = vperm.xlu0 %768, %v714
        %v770 = vpop.permute.xlu0 %769
        %771 = vset.pattern.permute.xlu0 0
        %772 = vperm.xlu0 %771, %v715
        %v773 = vpop.permute.xlu0 %772
        %774 = vset.pattern.permute.xlu0 0
        %775 = vperm.xlu0 %774, %v716
        %v776 = vpop.permute.xlu0 %775
        %777 = vset.pattern.permute.xlu0 0
        %778 = vperm.xlu0 %777, %v717
        %v779 = vpop.permute.xlu0 %778
        %780 = vset.pattern.permute.xlu0 0
        %781 = vperm.xlu0 %780, %v718
        %v782 = vpop.permute.xlu0 %781
        %v783 = vlaneseq
        %v784 = vshrl.u32 %v783, 7
        %v785 = vsub.s32 %v534, %v784
        %v786 = vrot.slane %v737, %v785
        %v787 = vlaneseq
        %v788 = vshrl.u32 %v787, 7
        %v789 = vsub.s32 %v534, %v788
        %v790 = vrot.slane %v740, %v789
        %v791 = vlaneseq
        %v792 = vshrl.u32 %v791, 7
        %v793 = vsub.s32 %v534, %v792
        %v794 = vrot.slane %v743, %v793
        %v795 = vlaneseq
        %v796 = vshrl.u32 %v795, 7
        %v797 = vsub.s32 %v534, %v796
        %v798 = vrot.slane %v746, %v797
        %v799 = vlaneseq
        %v800 = vshrl.u32 %v799, 7
        %v801 = vsub.s32 %v534, %v800
        %v802 = vrot.slane %v749, %v801
        %v803 = vlaneseq
        %v804 = vshrl.u32 %v803, 7
        %v805 = vsub.s32 %v534, %v804
        %v806 = vrot.slane %v752, %v805
        %v807 = vlaneseq
        %v808 = vshrl.u32 %v807, 7
        %v809 = vsub.s32 %v534, %v808
        %v810 = vrot.slane %v755, %v809
        %v811 = vlaneseq
        %v812 = vshrl.u32 %v811, 7
        %v813 = vsub.s32 %v534, %v812
        %v814 = vrot.slane %v758, %v813
        %v815 = vlaneseq
        %v816 = vshrl.u32 %v815, 7
        %v817 = vsub.s32 %v534, %v816
        %v818 = vrot.slane %v761, %v817
        %v819 = vlaneseq
        %v820 = vshrl.u32 %v819, 7
        %v821 = vsub.s32 %v534, %v820
        %v822 = vrot.slane %v764, %v821
        %v823 = vlaneseq
        %v824 = vshrl.u32 %v823, 7
        %v825 = vsub.s32 %v534, %v824
        %v826 = vrot.slane %v767, %v825
        %v827 = vlaneseq
        %v828 = vshrl.u32 %v827, 7
        %v829 = vsub.s32 %v534, %v828
        %v830 = vrot.slane %v770, %v829
        %v831 = vlaneseq
        %v832 = vshrl.u32 %v831, 7
        %v833 = vsub.s32 %v534, %v832
        %v834 = vrot.slane %v773, %v833
        %v835 = vlaneseq
        %v836 = vshrl.u32 %v835, 7
        %v837 = vsub.s32 %v534, %v836
        %v838 = vrot.slane %v776, %v837
        %v839 = vlaneseq
        %v840 = vshrl.u32 %v839, 7
        %v841 = vsub.s32 %v534, %v840
        %v842 = vrot.slane %v779, %v841
        %v843 = vlaneseq
        %v844 = vshrl.u32 %v843, 7
        %v845 = vsub.s32 %v534, %v844
        %v846 = vrot.slane %v782, %v845
        %v847 = vsel %vm555, %v790, %v786
        %vm848 = vcmask 1042434
        %v849 = vsel %vm848, %v794, %v847
        %vm850 = vcmask 1043459
        %v851 = vsel %vm850, %v798, %v849
        %vm852 = vcmask 1044484
        %v853 = vsel %vm852, %v802, %v851
        %vm854 = vcmask 1045509
        %v855 = vsel %vm854, %v806, %v853
        %vm856 = vcmask 1046534
        %v857 = vsel %vm856, %v810, %v855
        %vm858 = vcmask 1047559
        %v859 = vsel %vm858, %v814, %v857
        %v860 = vsel %vm555, %v822, %v818
        %v861 = vsel %vm848, %v826, %v860
        %v862 = vsel %vm850, %v830, %v861
        %v863 = vsel %vm852, %v834, %v862
        %v864 = vsel %vm854, %v838, %v863
        %v865 = vsel %vm856, %v842, %v864
        %v866 = vsel %vm858, %v846, %v865
        %vm869 = vcmask 15360
        %v870 = vsel %vm869, %v859, 0.0
        %871 = vadd.xlane.f32.xlu0 %v870
        %v872 = vpop.xlane.xlu0 %871
        %v873 = vsel %vm869, %v866, 0.0
        %874 = vadd.xlane.f32.xlu0 %v873
        %v875 = vpop.xlane.xlu0 %874
        %v877 = vlaneseq
        %v878 = vshrl.u32 %v877, 7
        %v879 = vsub.s32 0, %v878
        %v880 = vrot.slane %v471, %v879
        %882 = vbcast.lane.b32.xlu0 %v880, 256
        %v883 = vpop.permute.xlu0 %882
        %s885 = sor.u32 256, 8
        %886 = vbcast.lane.b32.xlu0 %v880, %s885
        %v887 = vpop.permute.xlu0 %886
        %v890 = vadd.f32 %v872, %v883
        %v891 = vadd.f32 %v875, %v887
        %v892 = vmul.f32 %v484, %v493
        %v893 = vmul.f32 %v485, %v497
        %v894 = vmul.f32 %v484, %v504
        %v895 = vmul.f32 %v485, %v508
        %900 = vset.pattern.permute.xlu0 0
        %901 = vperm.xlu0 %900, %v892
        %v902 = vpop.permute.xlu0 %901
        %903 = vset.pattern.permute.xlu0 0
        %904 = vperm.xlu0 %903, %v893
        %v905 = vpop.permute.xlu0 %904
        %906 = vset.pattern.permute.xlu0 0
        %907 = vperm.xlu0 %906, %v894
        %v908 = vpop.permute.xlu0 %907
        %909 = vset.pattern.permute.xlu0 0
        %910 = vperm.xlu0 %909, %v895
        %v911 = vpop.permute.xlu0 %910
        %v912 = vlaneseq
        %v913 = vshrl.u32 %v912, 7
        %v914 = vsub.s32 %v534, %v913
        %v915 = vrot.slane %v902, %v914
        %v916 = vlaneseq
        %v917 = vshrl.u32 %v916, 7
        %v918 = vsub.s32 %v539, %v917
        %v919 = vrot.slane %v905, %v918
        %v920 = vsel %vm544, %v919, %v915
        %v921 = vlaneseq
        %v922 = vshrl.u32 %v921, 7
        %v923 = vsub.s32 %v534, %v922
        %v924 = vrot.slane %v908, %v923
        %v925 = vlaneseq
        %v926 = vshrl.u32 %v925, 7
        %v927 = vsub.s32 %v539, %v926
        %v928 = vrot.slane %v911, %v927
        %v929 = vsel %vm544, %v928, %v924
        %v930 = vsel %vm555, %v929, %v920
        %v932 = vsel %vm558, %v930, 0.0
        %933 = vadd.xlane.f32.xlu0 %v932
        %v934 = vpop.xlane.xlu0 %933
        %v935 = vadd.f32 %v934, %v569
        %v936 = vmax.f32 %v935, 0.0
        %v937 = vmul.f32 %v936, %v581
        %v938 = vmul.f32 %v936, %v588
        %v939 = vmul.f32 %v936, %v595
        %v940 = vmul.f32 %v936, %v602
        %v941 = vmul.f32 %v936, %v609
        %v942 = vmul.f32 %v936, %v616
        %v943 = vmul.f32 %v936, %v623
        %v944 = vmul.f32 %v936, %v630
        %v945 = vmul.f32 %v936, %v637
        %v946 = vmul.f32 %v936, %v644
        %v947 = vmul.f32 %v936, %v651
        %v948 = vmul.f32 %v936, %v658
        %v949 = vmul.f32 %v936, %v665
        %v950 = vmul.f32 %v936, %v672
        %v951 = vmul.f32 %v936, %v679
        %v952 = vmul.f32 %v936, %v686
        %969 = vset.pattern.permute.xlu0 0
        %970 = vperm.xlu0 %969, %v937
        %v971 = vpop.permute.xlu0 %970
        %972 = vset.pattern.permute.xlu0 0
        %973 = vperm.xlu0 %972, %v938
        %v974 = vpop.permute.xlu0 %973
        %975 = vset.pattern.permute.xlu0 0
        %976 = vperm.xlu0 %975, %v939
        %v977 = vpop.permute.xlu0 %976
        %978 = vset.pattern.permute.xlu0 0
        %979 = vperm.xlu0 %978, %v940
        %v980 = vpop.permute.xlu0 %979
        %981 = vset.pattern.permute.xlu0 0
        %982 = vperm.xlu0 %981, %v941
        %v983 = vpop.permute.xlu0 %982
        %984 = vset.pattern.permute.xlu0 0
        %985 = vperm.xlu0 %984, %v942
        %v986 = vpop.permute.xlu0 %985
        %987 = vset.pattern.permute.xlu0 0
        %988 = vperm.xlu0 %987, %v943
        %v989 = vpop.permute.xlu0 %988
        %990 = vset.pattern.permute.xlu0 0
        %991 = vperm.xlu0 %990, %v944
        %v992 = vpop.permute.xlu0 %991
        %993 = vset.pattern.permute.xlu0 0
        %994 = vperm.xlu0 %993, %v945
        %v995 = vpop.permute.xlu0 %994
        %996 = vset.pattern.permute.xlu0 0
        %997 = vperm.xlu0 %996, %v946
        %v998 = vpop.permute.xlu0 %997
        %999 = vset.pattern.permute.xlu0 0
        %1000 = vperm.xlu0 %999, %v947
        %v1001 = vpop.permute.xlu0 %1000
        %1002 = vset.pattern.permute.xlu0 0
        %1003 = vperm.xlu0 %1002, %v948
        %v1004 = vpop.permute.xlu0 %1003
        %1005 = vset.pattern.permute.xlu0 0
        %1006 = vperm.xlu0 %1005, %v949
        %v1007 = vpop.permute.xlu0 %1006
        %1008 = vset.pattern.permute.xlu0 0
        %1009 = vperm.xlu0 %1008, %v950
        %v1010 = vpop.permute.xlu0 %1009
        %1011 = vset.pattern.permute.xlu0 0
        %1012 = vperm.xlu0 %1011, %v951
        %v1013 = vpop.permute.xlu0 %1012
        %1014 = vset.pattern.permute.xlu0 0
        %1015 = vperm.xlu0 %1014, %v952
        %v1016 = vpop.permute.xlu0 %1015
        %v1017 = vlaneseq
        %v1018 = vshrl.u32 %v1017, 7
        %v1019 = vsub.s32 %v534, %v1018
        %v1020 = vrot.slane %v971, %v1019
        %v1021 = vlaneseq
        %v1022 = vshrl.u32 %v1021, 7
        %v1023 = vsub.s32 %v534, %v1022
        %v1024 = vrot.slane %v974, %v1023
        %v1025 = vlaneseq
        %v1026 = vshrl.u32 %v1025, 7
        %v1027 = vsub.s32 %v534, %v1026
        %v1028 = vrot.slane %v977, %v1027
        %v1029 = vlaneseq
        %v1030 = vshrl.u32 %v1029, 7
        %v1031 = vsub.s32 %v534, %v1030
        %v1032 = vrot.slane %v980, %v1031
        %v1033 = vlaneseq
        %v1034 = vshrl.u32 %v1033, 7
        %v1035 = vsub.s32 %v534, %v1034
        %v1036 = vrot.slane %v983, %v1035
        %v1037 = vlaneseq
        %v1038 = vshrl.u32 %v1037, 7
        %v1039 = vsub.s32 %v534, %v1038
        %v1040 = vrot.slane %v986, %v1039
        %v1041 = vlaneseq
        %v1042 = vshrl.u32 %v1041, 7
        %v1043 = vsub.s32 %v534, %v1042
        %v1044 = vrot.slane %v989, %v1043
        %v1045 = vlaneseq
        %v1046 = vshrl.u32 %v1045, 7
        %v1047 = vsub.s32 %v534, %v1046
        %v1048 = vrot.slane %v992, %v1047
        %v1049 = vlaneseq
        %v1050 = vshrl.u32 %v1049, 7
        %v1051 = vsub.s32 %v534, %v1050
        %v1052 = vrot.slane %v995, %v1051
        %v1053 = vlaneseq
        %v1054 = vshrl.u32 %v1053, 7
        %v1055 = vsub.s32 %v534, %v1054
        %v1056 = vrot.slane %v998, %v1055
        %v1057 = vlaneseq
        %v1058 = vshrl.u32 %v1057, 7
        %v1059 = vsub.s32 %v534, %v1058
        %v1060 = vrot.slane %v1001, %v1059
        %v1061 = vlaneseq
        %v1062 = vshrl.u32 %v1061, 7
        %v1063 = vsub.s32 %v534, %v1062
        %v1064 = vrot.slane %v1004, %v1063
        %v1065 = vlaneseq
        %v1066 = vshrl.u32 %v1065, 7
        %v1067 = vsub.s32 %v534, %v1066
        %v1068 = vrot.slane %v1007, %v1067
        %v1069 = vlaneseq
        %v1070 = vshrl.u32 %v1069, 7
        %v1071 = vsub.s32 %v534, %v1070
        %v1072 = vrot.slane %v1010, %v1071
        %v1073 = vlaneseq
        %v1074 = vshrl.u32 %v1073, 7
        %v1075 = vsub.s32 %v534, %v1074
        %v1076 = vrot.slane %v1013, %v1075
        %v1077 = vlaneseq
        %v1078 = vshrl.u32 %v1077, 7
        %v1079 = vsub.s32 %v534, %v1078
        %v1080 = vrot.slane %v1016, %v1079
        %v1081 = vsel %vm555, %v1024, %v1020
        %v1082 = vsel %vm848, %v1028, %v1081
        %v1083 = vsel %vm850, %v1032, %v1082
        %v1084 = vsel %vm852, %v1036, %v1083
        %v1085 = vsel %vm854, %v1040, %v1084
        %v1086 = vsel %vm856, %v1044, %v1085
        %v1087 = vsel %vm858, %v1048, %v1086
        %v1088 = vsel %vm555, %v1056, %v1052
        %v1089 = vsel %vm848, %v1060, %v1088
        %v1090 = vsel %vm850, %v1064, %v1089
        %v1091 = vsel %vm852, %v1068, %v1090
        %v1092 = vsel %vm854, %v1072, %v1091
        %v1093 = vsel %vm856, %v1076, %v1092
        %v1094 = vsel %vm858, %v1080, %v1093
        %v1097 = vsel %vm869, %v1087, 0.0
        %1098 = vadd.xlane.f32.xlu0 %v1097
        %v1099 = vpop.xlane.xlu0 %1098
        %v1100 = vsel %vm869, %v1094, 0.0
        %1101 = vadd.xlane.f32.xlu0 %v1100
        %v1102 = vpop.xlane.xlu0 %1101
        %v1103 = vadd.f32 %v1099, %v883
        %v1104 = vadd.f32 %v1102, %v887
        %v1105 = vadd.f32 %v890, %v1103
        %v1106 = vadd.f32 %v891, %v1104
        %v1107 = vxor.u32 %v1105, 2147483648
        %v1108 = vxor.u32 %v1106, 2147483648
        %v1109 = vmul.f32 %v1107, 1.442695
        %v1110 = vpow.pop %v1109
        %v1111 = vmul.f32 %v1108, 1.442695
        %v1112 = vpow.pop %v1111
        %v1113 = vadd.f32 %v1110, 1.0
        %v1114 = vadd.f32 %v1112, 1.0
        %v1115 = vrcp.pop %v1113
        %v1116 = vmul.f32 1.0, %v1115
        %v1117 = vrcp.pop %v1114
        %v1118 = vmul.f32 1.0, %v1117
        %v1119 = vld [vmem:[%s6] sm:$0x3]
        %v1120 = vld [vmem:[%s7] sm:$0x1]
        %v1121 = vld [vmem:[%s8] sm:$0xff]
        %v1122 = vld [vmem:[%s8 + $0x8] sm:$0xff]
        %v1123 = vld [vmem:[%s9] sm:$0x1]
        %v1124 = vmax.f32 %v463, %v464
        %1125 = vmax.xlane.f32.xlu0 %v1124
        %v1126 = vpop.xlane.xlu0 %1125
        %v1127 = vmax.f32 %v465, %v466
        %1128 = vmax.xlane.f32.xlu0 %v1127
        %v1129 = vpop.xlane.xlu0 %1128
        %v1130 = vadd.f32 %v463, %v464
        %1131 = vadd.xlane.f32.xlu0 %v1130
        %v1132 = vpop.xlane.xlu0 %1131
        %v1133 = vadd.f32 %v465, %v466
        %1134 = vadd.xlane.f32.xlu0 %v1133
        %v1135 = vpop.xlane.xlu0 %1134
        %v1136 = vmul.f32 %v1132, 0.00390625
        %v1137 = vmul.f32 %v1135, 0.00390625
        %v1139 = vlaneseq
        %v1140 = vshrl.u32 %v1139, 7
        %v1141 = vsub.s32 0, %v1140
        %v1142 = vrot.slane %v1119, %v1141
        %1144 = vbcast.lane.b32.xlu0 %v1142, 256
        %v1145 = vpop.permute.xlu0 %1144
        %s1147 = sor.u32 256, 8
        %1148 = vbcast.lane.b32.xlu0 %v1142, %s1147
        %v1149 = vpop.permute.xlu0 %1148
        %v1150 = vlaneseq
        %v1151 = vshrl.u32 %v1150, 7
        %v1152 = vsub.s32 1, %v1151
        %v1153 = vrot.slane %v1119, %v1152
        %1155 = vbcast.lane.b32.xlu0 %v1153, 256
        %v1156 = vpop.permute.xlu0 %1155
        %s1158 = sor.u32 256, 8
        %1159 = vbcast.lane.b32.xlu0 %v1153, %s1158
        %v1160 = vpop.permute.xlu0 %1159
        %v1165 = vmul.f32 %v1126, %v1145
        %v1166 = vmul.f32 %v1129, %v1149
        %v1167 = vmul.f32 %v1126, %v1156
        %v1168 = vmul.f32 %v1129, %v1160
        %1173 = vset.pattern.permute.xlu0 0
        %1174 = vperm.xlu0 %1173, %v1165
        %v1175 = vpop.permute.xlu0 %1174
        %1176 = vset.pattern.permute.xlu0 0
        %1177 = vperm.xlu0 %1176, %v1166
        %v1178 = vpop.permute.xlu0 %1177
        %1179 = vset.pattern.permute.xlu0 0
        %1180 = vperm.xlu0 %1179, %v1167
        %v1181 = vpop.permute.xlu0 %1180
        %1182 = vset.pattern.permute.xlu0 0
        %1183 = vperm.xlu0 %1182, %v1168
        %v1184 = vpop.permute.xlu0 %1183
        %v1185 = vlaneseq
        %v1186 = vshrl.u32 %v1185, 7
        %v1187 = vsub.s32 %v534, %v1186
        %v1188 = vrot.slane %v1175, %v1187
        %v1189 = vlaneseq
        %v1190 = vshrl.u32 %v1189, 7
        %v1191 = vsub.s32 %v539, %v1190
        %v1192 = vrot.slane %v1178, %v1191
        %v1193 = vsel %vm544, %v1192, %v1188
        %v1194 = vlaneseq
        %v1195 = vshrl.u32 %v1194, 7
        %v1196 = vsub.s32 %v534, %v1195
        %v1197 = vrot.slane %v1181, %v1196
        %v1198 = vlaneseq
        %v1199 = vshrl.u32 %v1198, 7
        %v1200 = vsub.s32 %v539, %v1199
        %v1201 = vrot.slane %v1184, %v1200
        %v1202 = vsel %vm544, %v1201, %v1197
        %v1203 = vsel %vm555, %v1202, %v1193
        %v1205 = vsel %vm558, %v1203, 0.0
        %1206 = vadd.xlane.f32.xlu0 %v1205
        %v1207 = vpop.xlane.xlu0 %1206
        %v1209 = vlaneseq
        %v1210 = vshrl.u32 %v1209, 7
        %v1211 = vsub.s32 0, %v1210
        %v1212 = vrot.slane %v1120, %v1211
        %1214 = vbcast.lane.b32.xlu0 %v1212, 256
        %v1215 = vpop.permute.xlu0 %1214
        %v1217 = vadd.f32 %v1207, %v1215
        %v1218 = vmax.f32 %v1217, 0.0
        %v1221 = vlaneseq
        %v1222 = vshrl.u32 %v1221, 7
        %v1223 = vsub.s32 0, %v1222
        %v1224 = vrot.slane %v1121, %v1223
        %1226 = vbcast.lane.b32.xlu0 %v1224, 256
        %v1227 = vpop.permute.xlu0 %1226
        %v1228 = vlaneseq
        %v1229 = vshrl.u32 %v1228, 7
        %v1230 = vsub.s32 1, %v1229
        %v1231 = vrot.slane %v1121, %v1230
        %1233 = vbcast.lane.b32.xlu0 %v1231, 256
        %v1234 = vpop.permute.xlu0 %1233
        %v1235 = vlaneseq
        %v1236 = vshrl.u32 %v1235, 7
        %v1237 = vsub.s32 2, %v1236
        %v1238 = vrot.slane %v1121, %v1237
        %1240 = vbcast.lane.b32.xlu0 %v1238, 256
        %v1241 = vpop.permute.xlu0 %1240
        %v1242 = vlaneseq
        %v1243 = vshrl.u32 %v1242, 7
        %v1244 = vsub.s32 3, %v1243
        %v1245 = vrot.slane %v1121, %v1244
        %1247 = vbcast.lane.b32.xlu0 %v1245, 256
        %v1248 = vpop.permute.xlu0 %1247
        %v1249 = vlaneseq
        %v1250 = vshrl.u32 %v1249, 7
        %v1251 = vsub.s32 4, %v1250
        %v1252 = vrot.slane %v1121, %v1251
        %1254 = vbcast.lane.b32.xlu0 %v1252, 256
        %v1255 = vpop.permute.xlu0 %1254
        %v1256 = vlaneseq
        %v1257 = vshrl.u32 %v1256, 7
        %v1258 = vsub.s32 5, %v1257
        %v1259 = vrot.slane %v1121, %v1258
        %1261 = vbcast.lane.b32.xlu0 %v1259, 256
        %v1262 = vpop.permute.xlu0 %1261
        %v1263 = vlaneseq
        %v1264 = vshrl.u32 %v1263, 7
        %v1265 = vsub.s32 6, %v1264
        %v1266 = vrot.slane %v1121, %v1265
        %1268 = vbcast.lane.b32.xlu0 %v1266, 256
        %v1269 = vpop.permute.xlu0 %1268
        %v1270 = vlaneseq
        %v1271 = vshrl.u32 %v1270, 7
        %v1272 = vsub.s32 7, %v1271
        %v1273 = vrot.slane %v1121, %v1272
        %1275 = vbcast.lane.b32.xlu0 %v1273, 256
        %v1276 = vpop.permute.xlu0 %1275
        %v1277 = vlaneseq
        %v1278 = vshrl.u32 %v1277, 7
        %v1279 = vsub.s32 0, %v1278
        %v1280 = vrot.slane %v1122, %v1279
        %1282 = vbcast.lane.b32.xlu0 %v1280, 256
        %v1283 = vpop.permute.xlu0 %1282
        %v1284 = vlaneseq
        %v1285 = vshrl.u32 %v1284, 7
        %v1286 = vsub.s32 1, %v1285
        %v1287 = vrot.slane %v1122, %v1286
        %1289 = vbcast.lane.b32.xlu0 %v1287, 256
        %v1290 = vpop.permute.xlu0 %1289
        %v1291 = vlaneseq
        %v1292 = vshrl.u32 %v1291, 7
        %v1293 = vsub.s32 2, %v1292
        %v1294 = vrot.slane %v1122, %v1293
        %1296 = vbcast.lane.b32.xlu0 %v1294, 256
        %v1297 = vpop.permute.xlu0 %1296
        %v1298 = vlaneseq
        %v1299 = vshrl.u32 %v1298, 7
        %v1300 = vsub.s32 3, %v1299
        %v1301 = vrot.slane %v1122, %v1300
        %1303 = vbcast.lane.b32.xlu0 %v1301, 256
        %v1304 = vpop.permute.xlu0 %1303
        %v1305 = vlaneseq
        %v1306 = vshrl.u32 %v1305, 7
        %v1307 = vsub.s32 4, %v1306
        %v1308 = vrot.slane %v1122, %v1307
        %1310 = vbcast.lane.b32.xlu0 %v1308, 256
        %v1311 = vpop.permute.xlu0 %1310
        %v1312 = vlaneseq
        %v1313 = vshrl.u32 %v1312, 7
        %v1314 = vsub.s32 5, %v1313
        %v1315 = vrot.slane %v1122, %v1314
        %1317 = vbcast.lane.b32.xlu0 %v1315, 256
        %v1318 = vpop.permute.xlu0 %1317
        %v1319 = vlaneseq
        %v1320 = vshrl.u32 %v1319, 7
        %v1321 = vsub.s32 6, %v1320
        %v1322 = vrot.slane %v1122, %v1321
        %1324 = vbcast.lane.b32.xlu0 %v1322, 256
        %v1325 = vpop.permute.xlu0 %1324
        %v1326 = vlaneseq
        %v1327 = vshrl.u32 %v1326, 7
        %v1328 = vsub.s32 7, %v1327
        %v1329 = vrot.slane %v1122, %v1328
        %1331 = vbcast.lane.b32.xlu0 %v1329, 256
        %v1332 = vpop.permute.xlu0 %1331
        %v1349 = vmul.f32 %v1218, %v1227
        %v1350 = vmul.f32 %v1218, %v1234
        %v1351 = vmul.f32 %v1218, %v1241
        %v1352 = vmul.f32 %v1218, %v1248
        %v1353 = vmul.f32 %v1218, %v1255
        %v1354 = vmul.f32 %v1218, %v1262
        %v1355 = vmul.f32 %v1218, %v1269
        %v1356 = vmul.f32 %v1218, %v1276
        %v1357 = vmul.f32 %v1218, %v1283
        %v1358 = vmul.f32 %v1218, %v1290
        %v1359 = vmul.f32 %v1218, %v1297
        %v1360 = vmul.f32 %v1218, %v1304
        %v1361 = vmul.f32 %v1218, %v1311
        %v1362 = vmul.f32 %v1218, %v1318
        %v1363 = vmul.f32 %v1218, %v1325
        %v1364 = vmul.f32 %v1218, %v1332
        %1381 = vset.pattern.permute.xlu0 0
        %1382 = vperm.xlu0 %1381, %v1349
        %v1383 = vpop.permute.xlu0 %1382
        %1384 = vset.pattern.permute.xlu0 0
        %1385 = vperm.xlu0 %1384, %v1350
        %v1386 = vpop.permute.xlu0 %1385
        %1387 = vset.pattern.permute.xlu0 0
        %1388 = vperm.xlu0 %1387, %v1351
        %v1389 = vpop.permute.xlu0 %1388
        %1390 = vset.pattern.permute.xlu0 0
        %1391 = vperm.xlu0 %1390, %v1352
        %v1392 = vpop.permute.xlu0 %1391
        %1393 = vset.pattern.permute.xlu0 0
        %1394 = vperm.xlu0 %1393, %v1353
        %v1395 = vpop.permute.xlu0 %1394
        %1396 = vset.pattern.permute.xlu0 0
        %1397 = vperm.xlu0 %1396, %v1354
        %v1398 = vpop.permute.xlu0 %1397
        %1399 = vset.pattern.permute.xlu0 0
        %1400 = vperm.xlu0 %1399, %v1355
        %v1401 = vpop.permute.xlu0 %1400
        %1402 = vset.pattern.permute.xlu0 0
        %1403 = vperm.xlu0 %1402, %v1356
        %v1404 = vpop.permute.xlu0 %1403
        %1405 = vset.pattern.permute.xlu0 0
        %1406 = vperm.xlu0 %1405, %v1357
        %v1407 = vpop.permute.xlu0 %1406
        %1408 = vset.pattern.permute.xlu0 0
        %1409 = vperm.xlu0 %1408, %v1358
        %v1410 = vpop.permute.xlu0 %1409
        %1411 = vset.pattern.permute.xlu0 0
        %1412 = vperm.xlu0 %1411, %v1359
        %v1413 = vpop.permute.xlu0 %1412
        %1414 = vset.pattern.permute.xlu0 0
        %1415 = vperm.xlu0 %1414, %v1360
        %v1416 = vpop.permute.xlu0 %1415
        %1417 = vset.pattern.permute.xlu0 0
        %1418 = vperm.xlu0 %1417, %v1361
        %v1419 = vpop.permute.xlu0 %1418
        %1420 = vset.pattern.permute.xlu0 0
        %1421 = vperm.xlu0 %1420, %v1362
        %v1422 = vpop.permute.xlu0 %1421
        %1423 = vset.pattern.permute.xlu0 0
        %1424 = vperm.xlu0 %1423, %v1363
        %v1425 = vpop.permute.xlu0 %1424
        %1426 = vset.pattern.permute.xlu0 0
        %1427 = vperm.xlu0 %1426, %v1364
        %v1428 = vpop.permute.xlu0 %1427
        %v1429 = vlaneseq
        %v1430 = vshrl.u32 %v1429, 7
        %v1431 = vsub.s32 %v534, %v1430
        %v1432 = vrot.slane %v1383, %v1431
        %v1433 = vlaneseq
        %v1434 = vshrl.u32 %v1433, 7
        %v1435 = vsub.s32 %v534, %v1434
        %v1436 = vrot.slane %v1386, %v1435
        %v1437 = vlaneseq
        %v1438 = vshrl.u32 %v1437, 7
        %v1439 = vsub.s32 %v534, %v1438
        %v1440 = vrot.slane %v1389, %v1439
        %v1441 = vlaneseq
        %v1442 = vshrl.u32 %v1441, 7
        %v1443 = vsub.s32 %v534, %v1442
        %v1444 = vrot.slane %v1392, %v1443
        %v1445 = vlaneseq
        %v1446 = vshrl.u32 %v1445, 7
        %v1447 = vsub.s32 %v534, %v1446
        %v1448 = vrot.slane %v1395, %v1447
        %v1449 = vlaneseq
        %v1450 = vshrl.u32 %v1449, 7
        %v1451 = vsub.s32 %v534, %v1450
        %v1452 = vrot.slane %v1398, %v1451
        %v1453 = vlaneseq
        %v1454 = vshrl.u32 %v1453, 7
        %v1455 = vsub.s32 %v534, %v1454
        %v1456 = vrot.slane %v1401, %v1455
        %v1457 = vlaneseq
        %v1458 = vshrl.u32 %v1457, 7
        %v1459 = vsub.s32 %v534, %v1458
        %v1460 = vrot.slane %v1404, %v1459
        %v1461 = vlaneseq
        %v1462 = vshrl.u32 %v1461, 7
        %v1463 = vsub.s32 %v534, %v1462
        %v1464 = vrot.slane %v1407, %v1463
        %v1465 = vlaneseq
        %v1466 = vshrl.u32 %v1465, 7
        %v1467 = vsub.s32 %v534, %v1466
        %v1468 = vrot.slane %v1410, %v1467
        %v1469 = vlaneseq
        %v1470 = vshrl.u32 %v1469, 7
        %v1471 = vsub.s32 %v534, %v1470
        %v1472 = vrot.slane %v1413, %v1471
        %v1473 = vlaneseq
        %v1474 = vshrl.u32 %v1473, 7
        %v1475 = vsub.s32 %v534, %v1474
        %v1476 = vrot.slane %v1416, %v1475
        %v1477 = vlaneseq
        %v1478 = vshrl.u32 %v1477, 7
        %v1479 = vsub.s32 %v534, %v1478
        %v1480 = vrot.slane %v1419, %v1479
        %v1481 = vlaneseq
        %v1482 = vshrl.u32 %v1481, 7
        %v1483 = vsub.s32 %v534, %v1482
        %v1484 = vrot.slane %v1422, %v1483
        %v1485 = vlaneseq
        %v1486 = vshrl.u32 %v1485, 7
        %v1487 = vsub.s32 %v534, %v1486
        %v1488 = vrot.slane %v1425, %v1487
        %v1489 = vlaneseq
        %v1490 = vshrl.u32 %v1489, 7
        %v1491 = vsub.s32 %v534, %v1490
        %v1492 = vrot.slane %v1428, %v1491
        %v1493 = vsel %vm555, %v1436, %v1432
        %v1494 = vsel %vm848, %v1440, %v1493
        %v1495 = vsel %vm850, %v1444, %v1494
        %v1496 = vsel %vm852, %v1448, %v1495
        %v1497 = vsel %vm854, %v1452, %v1496
        %v1498 = vsel %vm856, %v1456, %v1497
        %v1499 = vsel %vm858, %v1460, %v1498
        %v1500 = vsel %vm555, %v1468, %v1464
        %v1501 = vsel %vm848, %v1472, %v1500
        %v1502 = vsel %vm850, %v1476, %v1501
        %v1503 = vsel %vm852, %v1480, %v1502
        %v1504 = vsel %vm854, %v1484, %v1503
        %v1505 = vsel %vm856, %v1488, %v1504
        %v1506 = vsel %vm858, %v1492, %v1505
        %v1509 = vsel %vm869, %v1499, 0.0
        %1510 = vadd.xlane.f32.xlu0 %v1509
        %v1511 = vpop.xlane.xlu0 %1510
        %v1512 = vsel %vm869, %v1506, 0.0
        %1513 = vadd.xlane.f32.xlu0 %v1512
        %v1514 = vpop.xlane.xlu0 %1513
        %v1516 = vlaneseq
        %v1517 = vshrl.u32 %v1516, 7
        %v1518 = vsub.s32 0, %v1517
        %v1519 = vrot.slane %v1123, %v1518
        %1521 = vbcast.lane.b32.xlu0 %v1519, 256
        %v1522 = vpop.permute.xlu0 %1521
        %s1524 = sor.u32 256, 8
        %1525 = vbcast.lane.b32.xlu0 %v1519, %s1524
        %v1526 = vpop.permute.xlu0 %1525
        %v1529 = vadd.f32 %v1511, %v1522
        %v1530 = vadd.f32 %v1514, %v1526
        %v1531 = vmul.f32 %v1136, %v1145
        %v1532 = vmul.f32 %v1137, %v1149
        %v1533 = vmul.f32 %v1136, %v1156
        %v1534 = vmul.f32 %v1137, %v1160
        %1539 = vset.pattern.permute.xlu0 0
        %1540 = vperm.xlu0 %1539, %v1531
        %v1541 = vpop.permute.xlu0 %1540
        %1542 = vset.pattern.permute.xlu0 0
        %1543 = vperm.xlu0 %1542, %v1532
        %v1544 = vpop.permute.xlu0 %1543
        %1545 = vset.pattern.permute.xlu0 0
        %1546 = vperm.xlu0 %1545, %v1533
        %v1547 = vpop.permute.xlu0 %1546
        %1548 = vset.pattern.permute.xlu0 0
        %1549 = vperm.xlu0 %1548, %v1534
        %v1550 = vpop.permute.xlu0 %1549
        %v1551 = vlaneseq
        %v1552 = vshrl.u32 %v1551, 7
        %v1553 = vsub.s32 %v534, %v1552
        %v1554 = vrot.slane %v1541, %v1553
        %v1555 = vlaneseq
        %v1556 = vshrl.u32 %v1555, 7
        %v1557 = vsub.s32 %v539, %v1556
        %v1558 = vrot.slane %v1544, %v1557
        %v1559 = vsel %vm544, %v1558, %v1554
        %v1560 = vlaneseq
        %v1561 = vshrl.u32 %v1560, 7
        %v1562 = vsub.s32 %v534, %v1561
        %v1563 = vrot.slane %v1547, %v1562
        %v1564 = vlaneseq
        %v1565 = vshrl.u32 %v1564, 7
        %v1566 = vsub.s32 %v539, %v1565
        %v1567 = vrot.slane %v1550, %v1566
        %v1568 = vsel %vm544, %v1567, %v1563
        %v1569 = vsel %vm555, %v1568, %v1559
        %v1571 = vsel %vm558, %v1569, 0.0
        %1572 = vadd.xlane.f32.xlu0 %v1571
        %v1573 = vpop.xlane.xlu0 %1572
        %v1574 = vadd.f32 %v1573, %v1215
        %v1575 = vmax.f32 %v1574, 0.0
        %v1576 = vmul.f32 %v1575, %v1227
        %v1577 = vmul.f32 %v1575, %v1234
        %v1578 = vmul.f32 %v1575, %v1241
        %v1579 = vmul.f32 %v1575, %v1248
        %v1580 = vmul.f32 %v1575, %v1255
        %v1581 = vmul.f32 %v1575, %v1262
        %v1582 = vmul.f32 %v1575, %v1269
        %v1583 = vmul.f32 %v1575, %v1276
        %v1584 = vmul.f32 %v1575, %v1283
        %v1585 = vmul.f32 %v1575, %v1290
        %v1586 = vmul.f32 %v1575, %v1297
        %v1587 = vmul.f32 %v1575, %v1304
        %v1588 = vmul.f32 %v1575, %v1311
        %v1589 = vmul.f32 %v1575, %v1318
        %v1590 = vmul.f32 %v1575, %v1325
        %v1591 = vmul.f32 %v1575, %v1332
        %1608 = vset.pattern.permute.xlu0 0
        %1609 = vperm.xlu0 %1608, %v1576
        %v1610 = vpop.permute.xlu0 %1609
        %1611 = vset.pattern.permute.xlu0 0
        %1612 = vperm.xlu0 %1611, %v1577
        %v1613 = vpop.permute.xlu0 %1612
        %1614 = vset.pattern.permute.xlu0 0
        %1615 = vperm.xlu0 %1614, %v1578
        %v1616 = vpop.permute.xlu0 %1615
        %1617 = vset.pattern.permute.xlu0 0
        %1618 = vperm.xlu0 %1617, %v1579
        %v1619 = vpop.permute.xlu0 %1618
        %1620 = vset.pattern.permute.xlu0 0
        %1621 = vperm.xlu0 %1620, %v1580
        %v1622 = vpop.permute.xlu0 %1621
        %1623 = vset.pattern.permute.xlu0 0
        %1624 = vperm.xlu0 %1623, %v1581
        %v1625 = vpop.permute.xlu0 %1624
        %1626 = vset.pattern.permute.xlu0 0
        %1627 = vperm.xlu0 %1626, %v1582
        %v1628 = vpop.permute.xlu0 %1627
        %1629 = vset.pattern.permute.xlu0 0
        %1630 = vperm.xlu0 %1629, %v1583
        %v1631 = vpop.permute.xlu0 %1630
        %1632 = vset.pattern.permute.xlu0 0
        %1633 = vperm.xlu0 %1632, %v1584
        %v1634 = vpop.permute.xlu0 %1633
        %1635 = vset.pattern.permute.xlu0 0
        %1636 = vperm.xlu0 %1635, %v1585
        %v1637 = vpop.permute.xlu0 %1636
        %1638 = vset.pattern.permute.xlu0 0
        %1639 = vperm.xlu0 %1638, %v1586
        %v1640 = vpop.permute.xlu0 %1639
        %1641 = vset.pattern.permute.xlu0 0
        %1642 = vperm.xlu0 %1641, %v1587
        %v1643 = vpop.permute.xlu0 %1642
        %1644 = vset.pattern.permute.xlu0 0
        %1645 = vperm.xlu0 %1644, %v1588
        %v1646 = vpop.permute.xlu0 %1645
        %1647 = vset.pattern.permute.xlu0 0
        %1648 = vperm.xlu0 %1647, %v1589
        %v1649 = vpop.permute.xlu0 %1648
        %1650 = vset.pattern.permute.xlu0 0
        %1651 = vperm.xlu0 %1650, %v1590
        %v1652 = vpop.permute.xlu0 %1651
        %1653 = vset.pattern.permute.xlu0 0
        %1654 = vperm.xlu0 %1653, %v1591
        %v1655 = vpop.permute.xlu0 %1654
        %v1656 = vlaneseq
        %v1657 = vshrl.u32 %v1656, 7
        %v1658 = vsub.s32 %v534, %v1657
        %v1659 = vrot.slane %v1610, %v1658
        %v1660 = vlaneseq
        %v1661 = vshrl.u32 %v1660, 7
        %v1662 = vsub.s32 %v534, %v1661
        %v1663 = vrot.slane %v1613, %v1662
        %v1664 = vlaneseq
        %v1665 = vshrl.u32 %v1664, 7
        %v1666 = vsub.s32 %v534, %v1665
        %v1667 = vrot.slane %v1616, %v1666
        %v1668 = vlaneseq
        %v1669 = vshrl.u32 %v1668, 7
        %v1670 = vsub.s32 %v534, %v1669
        %v1671 = vrot.slane %v1619, %v1670
        %v1672 = vlaneseq
        %v1673 = vshrl.u32 %v1672, 7
        %v1674 = vsub.s32 %v534, %v1673
        %v1675 = vrot.slane %v1622, %v1674
        %v1676 = vlaneseq
        %v1677 = vshrl.u32 %v1676, 7
        %v1678 = vsub.s32 %v534, %v1677
        %v1679 = vrot.slane %v1625, %v1678
        %v1680 = vlaneseq
        %v1681 = vshrl.u32 %v1680, 7
        %v1682 = vsub.s32 %v534, %v1681
        %v1683 = vrot.slane %v1628, %v1682
        %v1684 = vlaneseq
        %v1685 = vshrl.u32 %v1684, 7
        %v1686 = vsub.s32 %v534, %v1685
        %v1687 = vrot.slane %v1631, %v1686
        %v1688 = vlaneseq
        %v1689 = vshrl.u32 %v1688, 7
        %v1690 = vsub.s32 %v534, %v1689
        %v1691 = vrot.slane %v1634, %v1690
        %v1692 = vlaneseq
        %v1693 = vshrl.u32 %v1692, 7
        %v1694 = vsub.s32 %v534, %v1693
        %v1695 = vrot.slane %v1637, %v1694
        %v1696 = vlaneseq
        %v1697 = vshrl.u32 %v1696, 7
        %v1698 = vsub.s32 %v534, %v1697
        %v1699 = vrot.slane %v1640, %v1698
        %v1700 = vlaneseq
        %v1701 = vshrl.u32 %v1700, 7
        %v1702 = vsub.s32 %v534, %v1701
        %v1703 = vrot.slane %v1643, %v1702
        %v1704 = vlaneseq
        %v1705 = vshrl.u32 %v1704, 7
        %v1706 = vsub.s32 %v534, %v1705
        %v1707 = vrot.slane %v1646, %v1706
        %v1708 = vlaneseq
        %v1709 = vshrl.u32 %v1708, 7
        %v1710 = vsub.s32 %v534, %v1709
        %v1711 = vrot.slane %v1649, %v1710
        %v1712 = vlaneseq
        %v1713 = vshrl.u32 %v1712, 7
        %v1714 = vsub.s32 %v534, %v1713
        %v1715 = vrot.slane %v1652, %v1714
        %v1716 = vlaneseq
        %v1717 = vshrl.u32 %v1716, 7
        %v1718 = vsub.s32 %v534, %v1717
        %v1719 = vrot.slane %v1655, %v1718
        %v1720 = vsel %vm555, %v1663, %v1659
        %v1721 = vsel %vm848, %v1667, %v1720
        %v1722 = vsel %vm850, %v1671, %v1721
        %v1723 = vsel %vm852, %v1675, %v1722
        %v1724 = vsel %vm854, %v1679, %v1723
        %v1725 = vsel %vm856, %v1683, %v1724
        %v1726 = vsel %vm858, %v1687, %v1725
        %v1727 = vsel %vm555, %v1695, %v1691
        %v1728 = vsel %vm848, %v1699, %v1727
        %v1729 = vsel %vm850, %v1703, %v1728
        %v1730 = vsel %vm852, %v1707, %v1729
        %v1731 = vsel %vm854, %v1711, %v1730
        %v1732 = vsel %vm856, %v1715, %v1731
        %v1733 = vsel %vm858, %v1719, %v1732
        %v1736 = vsel %vm869, %v1726, 0.0
        %1737 = vadd.xlane.f32.xlu0 %v1736
        %v1738 = vpop.xlane.xlu0 %1737
        %v1739 = vsel %vm869, %v1733, 0.0
        %1740 = vadd.xlane.f32.xlu0 %v1739
        %v1741 = vpop.xlane.xlu0 %1740
        %v1742 = vadd.f32 %v1738, %v1522
        %v1743 = vadd.f32 %v1741, %v1526
        %v1744 = vadd.f32 %v1529, %v1742
        %v1745 = vadd.f32 %v1530, %v1743
        %v1746 = vxor.u32 %v1744, 2147483648
        %v1747 = vxor.u32 %v1745, 2147483648
        %v1748 = vmul.f32 %v1746, 1.442695
        %v1749 = vpow.pop %v1748
        %v1750 = vmul.f32 %v1747, 1.442695
        %v1751 = vpow.pop %v1750
        %v1752 = vadd.f32 %v1749, 1.0
        %v1753 = vadd.f32 %v1751, 1.0
        %v1754 = vrcp.pop %v1752
        %v1755 = vmul.f32 1.0, %v1754
        %v1756 = vrcp.pop %v1753
        %v1757 = vmul.f32 1.0, %v1756
        %1759 = vset.pattern.permute.xlu0 0
        %1760 = vperm.xlu0 %1759, %v1116
        %v1761 = vpop.permute.xlu0 %1760
        %1764 = vset.pattern.permute.xlu0 0
        %1765 = vperm.xlu0 %1764, %v1118
        %v1766 = vpop.permute.xlu0 %1765
        %v1768 = vmul.f32 %v459, %v1761
        %v1769 = vmul.f32 %v460, %v1761
        %v1770 = vmul.f32 %v461, %v1766
        %v1771 = vmul.f32 %v462, %v1766
        %1773 = vset.pattern.permute.xlu0 0
        %1774 = vperm.xlu0 %1773, %v1755
        %v1775 = vpop.permute.xlu0 %1774
        %1778 = vset.pattern.permute.xlu0 0
        %1779 = vperm.xlu0 %1778, %v1757
        %v1780 = vpop.permute.xlu0 %1779
        %v1782 = vmul.f32 %v463, %v1775
        %v1783 = vmul.f32 %v464, %v1775
        %v1784 = vmul.f32 %v465, %v1780
        %v1785 = vmul.f32 %v466, %v1780
        %v1786 = vmax.f32 %v1768, %v1770
        %v1787 = vrot.slane %v1786, 4
        %v1788 = vmax.f32 %v1786, %v1787
        %v1789 = vrot.slane %v1788, 2
        %v1790 = vmax.f32 %v1788, %v1789
        %v1791 = vrot.slane %v1790, 1
        %v1792 = vmax.f32 %v1790, %v1791
        %v1793 = vmax.f32 %v1769, %v1771
        %v1794 = vrot.slane %v1793, 4
        %v1795 = vmax.f32 %v1793, %v1794
        %v1796 = vrot.slane %v1795, 2
        %v1797 = vmax.f32 %v1795, %v1796
        %v1798 = vrot.slane %v1797, 1
        %v1799 = vmax.f32 %v1797, %v1798
        %v1800 = vadd.f32 %v1768, %v1770
        %v1801 = vrot.slane %v1800, 4
        %v1802 = vadd.f32 %v1800, %v1801
        %v1803 = vrot.slane %v1802, 2
        %v1804 = vadd.f32 %v1802, %v1803
        %v1805 = vrot.slane %v1804, 1
        %v1806 = vadd.f32 %v1804, %v1805
        %v1807 = vadd.f32 %v1769, %v1771
        %v1808 = vrot.slane %v1807, 4
        %v1809 = vadd.f32 %v1807, %v1808
        %v1810 = vrot.slane %v1809, 2
        %v1811 = vadd.f32 %v1809, %v1810
        %v1812 = vrot.slane %v1811, 1
        %v1813 = vadd.f32 %v1811, %v1812
        %v1814 = vmul.f32 %v1806, 0.0625
        %v1815 = vmul.f32 %v1813, 0.0625
        %v1816 = vmax.f32 %v1782, %v1784
        %v1817 = vrot.slane %v1816, 4
        %v1818 = vmax.f32 %v1816, %v1817
        %v1819 = vrot.slane %v1818, 2
        %v1820 = vmax.f32 %v1818, %v1819
        %v1821 = vrot.slane %v1820, 1
        %v1822 = vmax.f32 %v1820, %v1821
        %v1823 = vmax.f32 %v1783, %v1785
        %v1824 = vrot.slane %v1823, 4
        %v1825 = vmax.f32 %v1823, %v1824
        %v1826 = vrot.slane %v1825, 2
        %v1827 = vmax.f32 %v1825, %v1826
        %v1828 = vrot.slane %v1827, 1
        %v1829 = vmax.f32 %v1827, %v1828
        %v1830 = vadd.f32 %v1782, %v1784
        %v1831 = vrot.slane %v1830, 4
        %v1832 = vadd.f32 %v1830, %v1831
        %v1833 = vrot.slane %v1832, 2
        %v1834 = vadd.f32 %v1832, %v1833
        %v1835 = vrot.slane %v1834, 1
        %v1836 = vadd.f32 %v1834, %v1835
        %v1837 = vadd.f32 %v1783, %v1785
        %v1838 = vrot.slane %v1837, 4
        %v1839 = vadd.f32 %v1837, %v1838
        %v1840 = vrot.slane %v1839, 2
        %v1841 = vadd.f32 %v1839, %v1840
        %v1842 = vrot.slane %v1841, 1
        %v1843 = vadd.f32 %v1841, %v1842
        %v1844 = vmul.f32 %v1836, 0.0625
        %v1845 = vmul.f32 %v1843, 0.0625
        %1847 = vrot.lane.b32.xlu0 %v1792, 112
        %v1848 = vpop.permute.xlu0 %1847
        %1850 = vrot.lane.b32.xlu0 %v1792, 96
        %v1851 = vpop.permute.xlu0 %1850
        %1853 = vrot.lane.b32.xlu0 %v1792, 80
        %v1854 = vpop.permute.xlu0 %1853
        %1856 = vrot.lane.b32.xlu0 %v1792, 64
        %v1857 = vpop.permute.xlu0 %1856
        %1859 = vrot.lane.b32.xlu0 %v1792, 48
        %v1860 = vpop.permute.xlu0 %1859
        %1862 = vrot.lane.b32.xlu0 %v1792, 32
        %v1863 = vpop.permute.xlu0 %1862
        %1865 = vrot.lane.b32.xlu0 %v1792, 16
        %v1866 = vpop.permute.xlu0 %1865
        %1869 = vrot.lane.b32.xlu0 %v1799, 112
        %v1870 = vpop.permute.xlu0 %1869
        %1872 = vrot.lane.b32.xlu0 %v1799, 96
        %v1873 = vpop.permute.xlu0 %1872
        %1875 = vrot.lane.b32.xlu0 %v1799, 80
        %v1876 = vpop.permute.xlu0 %1875
        %1878 = vrot.lane.b32.xlu0 %v1799, 64
        %v1879 = vpop.permute.xlu0 %1878
        %1881 = vrot.lane.b32.xlu0 %v1799, 48
        %v1882 = vpop.permute.xlu0 %1881
        %1884 = vrot.lane.b32.xlu0 %v1799, 32
        %v1885 = vpop.permute.xlu0 %1884
        %1887 = vrot.lane.b32.xlu0 %v1799, 16
        %v1888 = vpop.permute.xlu0 %1887
        %v1890 = vcombine.low %v1792, %v1851
        %v1892 = vunpack.c.l.s4 1983009808
        %v1893 = vunpack.c.0.s8 %v1892
        %v1894 = vlaneseq
        %v1895 = vshrl.u32 %v1894, 7
        %v1896 = vsub.s32 %v1893, %v1895
        %v1897 = vrot.slane %v1890, %v1896
        %v1898 = vcombine.low %v1848, %v1854
        %v1900 = vunpack.c.l.s4 1983009808
        %v1901 = vunpack.c.0.s8 %v1900
        %v1902 = vlaneseq
        %v1903 = vshrl.u32 %v1902, 7
        %v1904 = vsub.s32 %v1901, %v1903
        %v1905 = vrot.slane %v1898, %v1904
        %v1906 = vcombine.low %v1857, %v1863
        %v1908 = vunpack.c.l.s4 1983009808
        %v1909 = vunpack.c.0.s8 %v1908
        %v1910 = vlaneseq
        %v1911 = vshrl.u32 %v1910, 7
        %v1912 = vsub.s32 %v1909, %v1911
        %v1913 = vrot.slane %v1906, %v1912
        %v1914 = vcombine.low %v1860, %v1866
        %v1916 = vunpack.c.l.s4 1983009808
        %v1917 = vunpack.c.0.s8 %v1916
        %v1918 = vlaneseq
        %v1919 = vshrl.u32 %v1918, 7
        %v1920 = vsub.s32 %v1917, %v1919
        %v1921 = vrot.slane %v1914, %v1920
        %v1922 = vcombine.low %v1897, %v1905
        %v1924 = vunpack.c.l.s4 1934713408
        %v1925 = vunpack.c.0.s8 %v1924
        %v1926 = vlaneseq
        %v1927 = vshrl.u32 %v1926, 7
        %v1928 = vsub.s32 %v1925, %v1927
        %v1929 = vrot.slane %v1922, %v1928
        %v1930 = vcombine.low %v1913, %v1921
        %v1932 = vunpack.c.l.s4 1934713408
        %v1933 = vunpack.c.0.s8 %v1932
        %v1934 = vlaneseq
        %v1935 = vshrl.u32 %v1934, 7
        %v1936 = vsub.s32 %v1933, %v1935
        %v1937 = vrot.slane %v1930, %v1936
        %v1938 = vcombine.low %v1929, %v1937
        %v1939 = vcombine.low %v1799, %v1873
        %v1941 = vunpack.c.l.s4 1983009808
        %v1942 = vunpack.c.0.s8 %v1941
        %v1943 = vlaneseq
        %v1944 = vshrl.u32 %v1943, 7
        %v1945 = vsub.s32 %v1942, %v1944
        %v1946 = vrot.slane %v1939, %v1945
        %v1947 = vcombine.low %v1870, %v1876
        %v1949 = vunpack.c.l.s4 1983009808
        %v1950 = vunpack.c.0.s8 %v1949
        %v1951 = vlaneseq
        %v1952 = vshrl.u32 %v1951, 7
        %v1953 = vsub.s32 %v1950, %v1952
        %v1954 = vrot.slane %v1947, %v1953
        %v1955 = vcombine.low %v1879, %v1885
        %v1957 = vunpack.c.l.s4 1983009808
        %v1958 = vunpack.c.0.s8 %v1957
        %v1959 = vlaneseq
        %v1960 = vshrl.u32 %v1959, 7
        %v1961 = vsub.s32 %v1958, %v1960
        %v1962 = vrot.slane %v1955, %v1961
        %v1963 = vcombine.low %v1882, %v1888
        %v1965 = vunpack.c.l.s4 1983009808
        %v1966 = vunpack.c.0.s8 %v1965
        %v1967 = vlaneseq
        %v1968 = vshrl.u32 %v1967, 7
        %v1969 = vsub.s32 %v1966, %v1968
        %v1970 = vrot.slane %v1963, %v1969
        %v1971 = vcombine.low %v1946, %v1954
        %v1973 = vunpack.c.l.s4 1934713408
        %v1974 = vunpack.c.0.s8 %v1973
        %v1975 = vlaneseq
        %v1976 = vshrl.u32 %v1975, 7
        %v1977 = vsub.s32 %v1974, %v1976
        %v1978 = vrot.slane %v1971, %v1977
        %v1979 = vcombine.low %v1962, %v1970
        %v1981 = vunpack.c.l.s4 1934713408
        %v1982 = vunpack.c.0.s8 %v1981
        %v1983 = vlaneseq
        %v1984 = vshrl.u32 %v1983, 7
        %v1985 = vsub.s32 %v1982, %v1984
        %v1986 = vrot.slane %v1979, %v1985
        %v1987 = vcombine.low %v1978, %v1986
        %vm1988 = vcmask 130048
        %v1989 = vsel %vm1988, %v1938, 0.0
        %v1990 = vsel %vm1988, %v1987, 0.0
        %1991 = vst [vmem:[#allocation2 + $0x3] sm:$0xff] %v1989
        %1992 = vst [vmem:[#allocation2 + $0xb] sm:$0xff] %v1990
        %1994 = vrot.lane.b32.xlu0 %v1814, 112
        %v1995 = vpop.permute.xlu0 %1994
        %1997 = vrot.lane.b32.xlu0 %v1814, 96
        %v1998 = vpop.permute.xlu0 %1997
        %2000 = vrot.lane.b32.xlu0 %v1814, 80
        %v2001 = vpop.permute.xlu0 %2000
        %2003 = vrot.lane.b32.xlu0 %v1814, 64
        %v2004 = vpop.permute.xlu0 %2003
        %2006 = vrot.lane.b32.xlu0 %v1814, 48
        %v2007 = vpop.permute.xlu0 %2006
        %2009 = vrot.lane.b32.xlu0 %v1814, 32
        %v2010 = vpop.permute.xlu0 %2009
        %2012 = vrot.lane.b32.xlu0 %v1814, 16
        %v2013 = vpop.permute.xlu0 %2012
        %2016 = vrot.lane.b32.xlu0 %v1815, 112
        %v2017 = vpop.permute.xlu0 %2016
        %2019 = vrot.lane.b32.xlu0 %v1815, 96
        %v2020 = vpop.permute.xlu0 %2019
        %2022 = vrot.lane.b32.xlu0 %v1815, 80
        %v2023 = vpop.permute.xlu0 %2022
        %2025 = vrot.lane.b32.xlu0 %v1815, 64
        %v2026 = vpop.permute.xlu0 %2025
        %2028 = vrot.lane.b32.xlu0 %v1815, 48
        %v2029 = vpop.permute.xlu0 %2028
        %2031 = vrot.lane.b32.xlu0 %v1815, 32
        %v2032 = vpop.permute.xlu0 %2031
        %2034 = vrot.lane.b32.xlu0 %v1815, 16
        %v2035 = vpop.permute.xlu0 %2034
        %v2037 = vcombine.low %v1814, %v1998
        %v2039 = vunpack.c.l.s4 1983009808
        %v2040 = vunpack.c.0.s8 %v2039
        %v2041 = vlaneseq
        %v2042 = vshrl.u32 %v2041, 7
        %v2043 = vsub.s32 %v2040, %v2042
        %v2044 = vrot.slane %v2037, %v2043
        %v2045 = vcombine.low %v1995, %v2001
        %v2047 = vunpack.c.l.s4 1983009808
        %v2048 = vunpack.c.0.s8 %v2047
        %v2049 = vlaneseq
        %v2050 = vshrl.u32 %v2049, 7
        %v2051 = vsub.s32 %v2048, %v2050
        %v2052 = vrot.slane %v2045, %v2051
        %v2053 = vcombine.low %v2004, %v2010
        %v2055 = vunpack.c.l.s4 1983009808
        %v2056 = vunpack.c.0.s8 %v2055
        %v2057 = vlaneseq
        %v2058 = vshrl.u32 %v2057, 7
        %v2059 = vsub.s32 %v2056, %v2058
        %v2060 = vrot.slane %v2053, %v2059
        %v2061 = vcombine.low %v2007, %v2013
        %v2063 = vunpack.c.l.s4 1983009808
        %v2064 = vunpack.c.0.s8 %v2063
        %v2065 = vlaneseq
        %v2066 = vshrl.u32 %v2065, 7
        %v2067 = vsub.s32 %v2064, %v2066
        %v2068 = vrot.slane %v2061, %v2067
        %v2069 = vcombine.low %v2044, %v2052
        %v2071 = vunpack.c.l.s4 1934713408
        %v2072 = vunpack.c.0.s8 %v2071
        %v2073 = vlaneseq
        %v2074 = vshrl.u32 %v2073, 7
        %v2075 = vsub.s32 %v2072, %v2074
        %v2076 = vrot.slane %v2069, %v2075
        %v2077 = vcombine.low %v2060, %v2068
        %v2079 = vunpack.c.l.s4 1934713408
        %v2080 = vunpack.c.0.s8 %v2079
        %v2081 = vlaneseq
        %v2082 = vshrl.u32 %v2081, 7
        %v2083 = vsub.s32 %v2080, %v2082
        %v2084 = vrot.slane %v2077, %v2083
        %v2085 = vcombine.low %v2076, %v2084
        %v2086 = vcombine.low %v1815, %v2020
        %v2088 = vunpack.c.l.s4 1983009808
        %v2089 = vunpack.c.0.s8 %v2088
        %v2090 = vlaneseq
        %v2091 = vshrl.u32 %v2090, 7
        %v2092 = vsub.s32 %v2089, %v2091
        %v2093 = vrot.slane %v2086, %v2092
        %v2094 = vcombine.low %v2017, %v2023
        %v2096 = vunpack.c.l.s4 1983009808
        %v2097 = vunpack.c.0.s8 %v2096
        %v2098 = vlaneseq
        %v2099 = vshrl.u32 %v2098, 7
        %v2100 = vsub.s32 %v2097, %v2099
        %v2101 = vrot.slane %v2094, %v2100
        %v2102 = vcombine.low %v2026, %v2032
        %v2104 = vunpack.c.l.s4 1983009808
        %v2105 = vunpack.c.0.s8 %v2104
        %v2106 = vlaneseq
        %v2107 = vshrl.u32 %v2106, 7
        %v2108 = vsub.s32 %v2105, %v2107
        %v2109 = vrot.slane %v2102, %v2108
        %v2110 = vcombine.low %v2029, %v2035
        %v2112 = vunpack.c.l.s4 1983009808
        %v2113 = vunpack.c.0.s8 %v2112
        %v2114 = vlaneseq
        %v2115 = vshrl.u32 %v2114, 7
        %v2116 = vsub.s32 %v2113, %v2115
        %v2117 = vrot.slane %v2110, %v2116
        %v2118 = vcombine.low %v2093, %v2101
        %v2120 = vunpack.c.l.s4 1934713408
        %v2121 = vunpack.c.0.s8 %v2120
        %v2122 = vlaneseq
        %v2123 = vshrl.u32 %v2122, 7
        %v2124 = vsub.s32 %v2121, %v2123
        %v2125 = vrot.slane %v2118, %v2124
        %v2126 = vcombine.low %v2109, %v2117
        %v2128 = vunpack.c.l.s4 1934713408
        %v2129 = vunpack.c.0.s8 %v2128
        %v2130 = vlaneseq
        %v2131 = vshrl.u32 %v2130, 7
        %v2132 = vsub.s32 %v2129, %v2131
        %v2133 = vrot.slane %v2126, %v2132
        %v2134 = vcombine.low %v2125, %v2133
        %v2135 = vsel %vm1988, %v2085, 0.0
        %v2136 = vsel %vm1988, %v2134, 0.0
        %s2137 = scalar_lea.vmem [#allocation2], 24
        %2138 = vst [vmem:[%s2137 + $0x3] sm:$0xff] %v2135
        %2139 = vst [vmem:[%s2137 + $0xb] sm:$0xff] %v2136
        %2141 = vrot.lane.b32.xlu0 %v1822, 112
        %v2142 = vpop.permute.xlu0 %2141
        %2144 = vrot.lane.b32.xlu0 %v1822, 96
        %v2145 = vpop.permute.xlu0 %2144
        %2147 = vrot.lane.b32.xlu0 %v1822, 80
        %v2148 = vpop.permute.xlu0 %2147
        %2150 = vrot.lane.b32.xlu0 %v1822, 64
        %v2151 = vpop.permute.xlu0 %2150
        %2153 = vrot.lane.b32.xlu0 %v1822, 48
        %v2154 = vpop.permute.xlu0 %2153
        %2156 = vrot.lane.b32.xlu0 %v1822, 32
        %v2157 = vpop.permute.xlu0 %2156
        %2159 = vrot.lane.b32.xlu0 %v1822, 16
        %v2160 = vpop.permute.xlu0 %2159
        %2163 = vrot.lane.b32.xlu0 %v1829, 112
        %v2164 = vpop.permute.xlu0 %2163
        %2166 = vrot.lane.b32.xlu0 %v1829, 96
        %v2167 = vpop.permute.xlu0 %2166
        %2169 = vrot.lane.b32.xlu0 %v1829, 80
        %v2170 = vpop.permute.xlu0 %2169
        %2172 = vrot.lane.b32.xlu0 %v1829, 64
        %v2173 = vpop.permute.xlu0 %2172
        %2175 = vrot.lane.b32.xlu0 %v1829, 48
        %v2176 = vpop.permute.xlu0 %2175
        %2178 = vrot.lane.b32.xlu0 %v1829, 32
        %v2179 = vpop.permute.xlu0 %2178
        %2181 = vrot.lane.b32.xlu0 %v1829, 16
        %v2182 = vpop.permute.xlu0 %2181
        %v2184 = vcombine.low %v1822, %v2145
        %v2186 = vunpack.c.l.s4 1983009808
        %v2187 = vunpack.c.0.s8 %v2186
        %v2188 = vlaneseq
        %v2189 = vshrl.u32 %v2188, 7
        %v2190 = vsub.s32 %v2187, %v2189
        %v2191 = vrot.slane %v2184, %v2190
        %v2192 = vcombine.low %v2142, %v2148
        %v2194 = vunpack.c.l.s4 1983009808
        %v2195 = vunpack.c.0.s8 %v2194
        %v2196 = vlaneseq
        %v2197 = vshrl.u32 %v2196, 7
        %v2198 = vsub.s32 %v2195, %v2197
        %v2199 = vrot.slane %v2192, %v2198
        %v2200 = vcombine.low %v2151, %v2157
        %v2202 = vunpack.c.l.s4 1983009808
        %v2203 = vunpack.c.0.s8 %v2202
        %v2204 = vlaneseq
        %v2205 = vshrl.u32 %v2204, 7
        %v2206 = vsub.s32 %v2203, %v2205
        %v2207 = vrot.slane %v2200, %v2206
        %v2208 = vcombine.low %v2154, %v2160
        %v2210 = vunpack.c.l.s4 1983009808
        %v2211 = vunpack.c.0.s8 %v2210
        %v2212 = vlaneseq
        %v2213 = vshrl.u32 %v2212, 7
        %v2214 = vsub.s32 %v2211, %v2213
        %v2215 = vrot.slane %v2208, %v2214
        %v2216 = vcombine.low %v2191, %v2199
        %v2218 = vunpack.c.l.s4 1934713408
        %v2219 = vunpack.c.0.s8 %v2218
        %v2220 = vlaneseq
        %v2221 = vshrl.u32 %v2220, 7
        %v2222 = vsub.s32 %v2219, %v2221
        %v2223 = vrot.slane %v2216, %v2222
        %v2224 = vcombine.low %v2207, %v2215
        %v2226 = vunpack.c.l.s4 1934713408
        %v2227 = vunpack.c.0.s8 %v2226
        %v2228 = vlaneseq
        %v2229 = vshrl.u32 %v2228, 7
        %v2230 = vsub.s32 %v2227, %v2229
        %v2231 = vrot.slane %v2224, %v2230
        %v2232 = vcombine.low %v2223, %v2231
        %v2233 = vcombine.low %v1829, %v2167
        %v2235 = vunpack.c.l.s4 1983009808
        %v2236 = vunpack.c.0.s8 %v2235
        %v2237 = vlaneseq
        %v2238 = vshrl.u32 %v2237, 7
        %v2239 = vsub.s32 %v2236, %v2238
        %v2240 = vrot.slane %v2233, %v2239
        %v2241 = vcombine.low %v2164, %v2170
        %v2243 = vunpack.c.l.s4 1983009808
        %v2244 = vunpack.c.0.s8 %v2243
        %v2245 = vlaneseq
        %v2246 = vshrl.u32 %v2245, 7
        %v2247 = vsub.s32 %v2244, %v2246
        %v2248 = vrot.slane %v2241, %v2247
        %v2249 = vcombine.low %v2173, %v2179
        %v2251 = vunpack.c.l.s4 1983009808
        %v2252 = vunpack.c.0.s8 %v2251
        %v2253 = vlaneseq
        %v2254 = vshrl.u32 %v2253, 7
        %v2255 = vsub.s32 %v2252, %v2254
        %v2256 = vrot.slane %v2249, %v2255
        %v2257 = vcombine.low %v2176, %v2182
        %v2259 = vunpack.c.l.s4 1983009808
        %v2260 = vunpack.c.0.s8 %v2259
        %v2261 = vlaneseq
        %v2262 = vshrl.u32 %v2261, 7
        %v2263 = vsub.s32 %v2260, %v2262
        %v2264 = vrot.slane %v2257, %v2263
        %v2265 = vcombine.low %v2240, %v2248
        %v2267 = vunpack.c.l.s4 1934713408
        %v2268 = vunpack.c.0.s8 %v2267
        %v2269 = vlaneseq
        %v2270 = vshrl.u32 %v2269, 7
        %v2271 = vsub.s32 %v2268, %v2270
        %v2272 = vrot.slane %v2265, %v2271
        %v2273 = vcombine.low %v2256, %v2264
        %v2275 = vunpack.c.l.s4 1934713408
        %v2276 = vunpack.c.0.s8 %v2275
        %v2277 = vlaneseq
        %v2278 = vshrl.u32 %v2277, 7
        %v2279 = vsub.s32 %v2276, %v2278
        %v2280 = vrot.slane %v2273, %v2279
        %v2281 = vcombine.low %v2272, %v2280
        %v2282 = vsel %vm1988, %v2232, 0.0
        %v2283 = vsel %vm1988, %v2281, 0.0
        %s2284 = scalar_lea.vmem [#allocation2], 48
        %2285 = vst [vmem:[%s2284 + $0x3] sm:$0xff] %v2282
        %2286 = vst [vmem:[%s2284 + $0xb] sm:$0xff] %v2283
        %2288 = vrot.lane.b32.xlu0 %v1844, 112
        %v2289 = vpop.permute.xlu0 %2288
        %2291 = vrot.lane.b32.xlu0 %v1844, 96
        %v2292 = vpop.permute.xlu0 %2291
        %2294 = vrot.lane.b32.xlu0 %v1844, 80
        %v2295 = vpop.permute.xlu0 %2294
        %2297 = vrot.lane.b32.xlu0 %v1844, 64
        %v2298 = vpop.permute.xlu0 %2297
        %2300 = vrot.lane.b32.xlu0 %v1844, 48
        %v2301 = vpop.permute.xlu0 %2300
        %2303 = vrot.lane.b32.xlu0 %v1844, 32
        %v2304 = vpop.permute.xlu0 %2303
        %2306 = vrot.lane.b32.xlu0 %v1844, 16
        %v2307 = vpop.permute.xlu0 %2306
        %2310 = vrot.lane.b32.xlu0 %v1845, 112
        %v2311 = vpop.permute.xlu0 %2310
        %2313 = vrot.lane.b32.xlu0 %v1845, 96
        %v2314 = vpop.permute.xlu0 %2313
        %2316 = vrot.lane.b32.xlu0 %v1845, 80
        %v2317 = vpop.permute.xlu0 %2316
        %2319 = vrot.lane.b32.xlu0 %v1845, 64
        %v2320 = vpop.permute.xlu0 %2319
        %2322 = vrot.lane.b32.xlu0 %v1845, 48
        %v2323 = vpop.permute.xlu0 %2322
        %2325 = vrot.lane.b32.xlu0 %v1845, 32
        %v2326 = vpop.permute.xlu0 %2325
        %2328 = vrot.lane.b32.xlu0 %v1845, 16
        %v2329 = vpop.permute.xlu0 %2328
        %v2331 = vcombine.low %v1844, %v2292
        %v2333 = vunpack.c.l.s4 1983009808
        %v2334 = vunpack.c.0.s8 %v2333
        %v2335 = vlaneseq
        %v2336 = vshrl.u32 %v2335, 7
        %v2337 = vsub.s32 %v2334, %v2336
        %v2338 = vrot.slane %v2331, %v2337
        %v2339 = vcombine.low %v2289, %v2295
        %v2341 = vunpack.c.l.s4 1983009808
        %v2342 = vunpack.c.0.s8 %v2341
        %v2343 = vlaneseq
        %v2344 = vshrl.u32 %v2343, 7
        %v2345 = vsub.s32 %v2342, %v2344
        %v2346 = vrot.slane %v2339, %v2345
        %v2347 = vcombine.low %v2298, %v2304
        %v2349 = vunpack.c.l.s4 1983009808
        %v2350 = vunpack.c.0.s8 %v2349
        %v2351 = vlaneseq
        %v2352 = vshrl.u32 %v2351, 7
        %v2353 = vsub.s32 %v2350, %v2352
        %v2354 = vrot.slane %v2347, %v2353
        %v2355 = vcombine.low %v2301, %v2307
        %v2357 = vunpack.c.l.s4 1983009808
        %v2358 = vunpack.c.0.s8 %v2357
        %v2359 = vlaneseq
        %v2360 = vshrl.u32 %v2359, 7
        %v2361 = vsub.s32 %v2358, %v2360
        %v2362 = vrot.slane %v2355, %v2361
        %v2363 = vcombine.low %v2338, %v2346
        %v2365 = vunpack.c.l.s4 1934713408
        %v2366 = vunpack.c.0.s8 %v2365
        %v2367 = vlaneseq
        %v2368 = vshrl.u32 %v2367, 7
        %v2369 = vsub.s32 %v2366, %v2368
        %v2370 = vrot.slane %v2363, %v2369
        %v2371 = vcombine.low %v2354, %v2362
        %v2373 = vunpack.c.l.s4 1934713408
        %v2374 = vunpack.c.0.s8 %v2373
        %v2375 = vlaneseq
        %v2376 = vshrl.u32 %v2375, 7
        %v2377 = vsub.s32 %v2374, %v2376
        %v2378 = vrot.slane %v2371, %v2377
        %v2379 = vcombine.low %v2370, %v2378
        %v2380 = vcombine.low %v1845, %v2314
        %v2382 = vunpack.c.l.s4 1983009808
        %v2383 = vunpack.c.0.s8 %v2382
        %v2384 = vlaneseq
        %v2385 = vshrl.u32 %v2384, 7
        %v2386 = vsub.s32 %v2383, %v2385
        %v2387 = vrot.slane %v2380, %v2386
        %v2388 = vcombine.low %v2311, %v2317
        %v2390 = vunpack.c.l.s4 1983009808
        %v2391 = vunpack.c.0.s8 %v2390
        %v2392 = vlaneseq
        %v2393 = vshrl.u32 %v2392, 7
        %v2394 = vsub.s32 %v2391, %v2393
        %v2395 = vrot.slane %v2388, %v2394
        %v2396 = vcombine.low %v2320, %v2326
        %v2398 = vunpack.c.l.s4 1983009808
        %v2399 = vunpack.c.0.s8 %v2398
        %v2400 = vlaneseq
        %v2401 = vshrl.u32 %v2400, 7
        %v2402 = vsub.s32 %v2399, %v2401
        %v2403 = vrot.slane %v2396, %v2402
        %v2404 = vcombine.low %v2323, %v2329
        %v2406 = vunpack.c.l.s4 1983009808
        %v2407 = vunpack.c.0.s8 %v2406
        %v2408 = vlaneseq
        %v2409 = vshrl.u32 %v2408, 7
        %v2410 = vsub.s32 %v2407, %v2409
        %v2411 = vrot.slane %v2404, %v2410
        %v2412 = vcombine.low %v2387, %v2395
        %v2414 = vunpack.c.l.s4 1934713408
        %v2415 = vunpack.c.0.s8 %v2414
        %v2416 = vlaneseq
        %v2417 = vshrl.u32 %v2416, 7
        %v2418 = vsub.s32 %v2415, %v2417
        %v2419 = vrot.slane %v2412, %v2418
        %v2420 = vcombine.low %v2403, %v2411
        %v2422 = vunpack.c.l.s4 1934713408
        %v2423 = vunpack.c.0.s8 %v2422
        %v2424 = vlaneseq
        %v2425 = vshrl.u32 %v2424, 7
        %v2426 = vsub.s32 %v2423, %v2425
        %v2427 = vrot.slane %v2420, %v2426
        %v2428 = vcombine.low %v2419, %v2427
        %v2429 = vsel %vm1988, %v2379, 0.0
        %v2430 = vsel %vm1988, %v2428, 0.0
        %s2431 = scalar_lea.vmem [#allocation2], 72
        %2432 = vst [vmem:[%s2431 + $0x3] sm:$0xff] %v2429
        %2433 = vst [vmem:[%s2431 + $0xb] sm:$0xff] %v2430
        %2434 = vst [vmem:[#allocation2] sm:$0x7] 0.0
        %2435 = vst [vmem:[#allocation2 + $0x18] sm:$0x7] 0.0
        %2436 = vst [vmem:[#allocation2 + $0x30] sm:$0x7] 0.0
        %2437 = vst [vmem:[#allocation2 + $0x48] sm:$0x7] 0.0
        %2438 = vst [vmem:[#allocation2 + $0x13] sm:$0x1f] 0.0
        %2439 = vst [vmem:[#allocation2 + $0x2b] sm:$0x1f] 0.0
        %2440 = vst [vmem:[#allocation2 + $0x43] sm:$0x1f] 0.0
        %2441 = vst [vmem:[#allocation2 + $0x5b] sm:$0x1f] 0.0
        %v2442 = vld [vmem:[#allocation2] sm:$0xff]
        %v2443 = vld [vmem:[#allocation2 + $0x8] sm:$0xff]
        %s2444 = sld [smem:[#allocation9]]
        %2445 = vrot.lane.b32.xlu0 %v2442, 3
        %v2446 = vpop.permute.xlu0 %2445
        %2447 = vrot.lane.b32.xlu0 %v2443, 3
        %v2448 = vpop.permute.xlu0 %2447
        %v2449 = vstv %s2444
        %v2450 = vmul.f32 %v2449, %v2446
        %v2451 = vmul.f32 %v2449, %v2448
        %v2452 = vadd.f32 %v2450, 0.0
        %v2453 = vadd.f32 %v2451, 0.0
        %s2454 = sld [smem:[#allocation9 + $0x1]]
        %2455 = vrot.lane.b32.xlu0 %v2442, 2
        %v2456 = vpop.permute.xlu0 %2455
        %2457 = vrot.lane.b32.xlu0 %v2443, 2
        %v2458 = vpop.permute.xlu0 %2457
        %v2459 = vstv %s2454
        %v2460 = vmul.f32 %v2459, %v2456
        %v2461 = vmul.f32 %v2459, %v2458
        %v2462 = vadd.f32 %v2460, 0.0
        %v2463 = vadd.f32 %v2461, 0.0
        %s2464 = sld [smem:[#allocation9 + $0x2]]
        %2465 = vrot.lane.b32.xlu0 %v2442, 1
        %v2466 = vpop.permute.xlu0 %2465
        %2467 = vrot.lane.b32.xlu0 %v2443, 1
        %v2468 = vpop.permute.xlu0 %2467
        %v2469 = vstv %s2464
        %v2470 = vmul.f32 %v2469, %v2466
        %v2471 = vmul.f32 %v2469, %v2468
        %v2472 = vadd.f32 %v2452, %v2470
        %v2473 = vadd.f32 %v2453, %v2471
        %s2474 = sld [smem:[#allocation9 + $0x3]]
        %v2475 = vstv %s2474
        %v2476 = vmul.f32 %v2475, %v2442
        %v2477 = vmul.f32 %v2475, %v2443
        %v2478 = vadd.f32 %v2462, %v2476
        %v2479 = vadd.f32 %v2463, %v2477
        %s2480 = sld [smem:[#allocation9 + $0x4]]
        %2481 = vrot.lane.b32.xlu0 %v2442, 127
        %v2482 = vpop.permute.xlu0 %2481
        %2483 = vrot.lane.b32.xlu0 %v2443, 127
        %v2484 = vpop.permute.xlu0 %2483
        %v2485 = vstv %s2480
        %v2486 = vmul.f32 %v2485, %v2482
        %v2487 = vmul.f32 %v2485, %v2484
        %v2488 = vadd.f32 %v2472, %v2486
        %v2489 = vadd.f32 %v2473, %v2487
        %s2490 = sld [smem:[#allocation9 + $0x5]]
        %2491 = vrot.lane.b32.xlu0 %v2442, 126
        %v2492 = vpop.permute.xlu0 %2491
        %2493 = vrot.lane.b32.xlu0 %v2443, 126
        %v2494 = vpop.permute.xlu0 %2493
        %v2495 = vstv %s2490
        %v2496 = vmul.f32 %v2495, %v2492
        %v2497 = vmul.f32 %v2495, %v2494
        %v2498 = vadd.f32 %v2478, %v2496
        %v2499 = vadd.f32 %v2479, %v2497
        %s2500 = sld [smem:[#allocation9 + $0x6]]
        %2501 = vrot.lane.b32.xlu0 %v2442, 125
        %v2502 = vpop.permute.xlu0 %2501
        %2503 = vrot.lane.b32.xlu0 %v2443, 125
        %v2504 = vpop.permute.xlu0 %2503
        %v2505 = vstv %s2500
        %v2506 = vmul.f32 %v2505, %v2502
        %v2507 = vmul.f32 %v2505, %v2504
        %v2508 = vadd.f32 %v2488, %v2506
        %v2509 = vadd.f32 %v2489, %v2507
        %v2510 = vld [vmem:[#allocation2 + $0x1] sm:$0xff]
        %v2511 = vld [vmem:[#allocation2 + $0x9] sm:$0xff]
        %s2512 = sld [smem:[#allocation9 + $0x7]]
        %2513 = vrot.lane.b32.xlu0 %v2510, 3
        %v2514 = vpop.permute.xlu0 %2513
        %2515 = vrot.lane.b32.xlu0 %v2511, 3
        %v2516 = vpop.permute.xlu0 %2515
        %v2517 = vstv %s2512
        %v2518 = vmul.f32 %v2517, %v2514
        %v2519 = vmul.f32 %v2517, %v2516
        %v2520 = vadd.f32 %v2498, %v2518
        %v2521 = vadd.f32 %v2499, %v2519
        %s2522 = sld [smem:[#allocation9 + $0x8]]
        %2523 = vrot.lane.b32.xlu0 %v2510, 2
        %v2524 = vpop.permute.xlu0 %2523
        %2525 = vrot.lane.b32.xlu0 %v2511, 2
        %v2526 = vpop.permute.xlu0 %2525
        %v2527 = vstv %s2522
        %v2528 = vmul.f32 %v2527, %v2524
        %v2529 = vmul.f32 %v2527, %v2526
        %v2530 = vadd.f32 %v2508, %v2528
        %v2531 = vadd.f32 %v2509, %v2529
        %s2532 = sld [smem:[#allocation9 + $0x9]]
        %2533 = vrot.lane.b32.xlu0 %v2510, 1
        %v2534 = vpop.permute.xlu0 %2533
        %2535 = vrot.lane.b32.xlu0 %v2511, 1
        %v2536 = vpop.permute.xlu0 %2535
        %v2537 = vstv %s2532
        %v2538 = vmul.f32 %v2537, %v2534
        %v2539 = vmul.f32 %v2537, %v2536
        %v2540 = vadd.f32 %v2520, %v2538
        %v2541 = vadd.f32 %v2521, %v2539
        %s2542 = sld [smem:[#allocation9 + $0xa]]
        %v2543 = vstv %s2542
        %v2544 = vmul.f32 %v2543, %v2510
        %v2545 = vmul.f32 %v2543, %v2511
        %v2546 = vadd.f32 %v2530, %v2544
        %v2547 = vadd.f32 %v2531, %v2545
        %s2548 = sld [smem:[#allocation9 + $0xb]]
        %2549 = vrot.lane.b32.xlu0 %v2510, 127
        %v2550 = vpop.permute.xlu0 %2549
        %2551 = vrot.lane.b32.xlu0 %v2511, 127
        %v2552 = vpop.permute.xlu0 %2551
        %v2553 = vstv %s2548
        %v2554 = vmul.f32 %v2553, %v2550
        %v2555 = vmul.f32 %v2553, %v2552
        %v2556 = vadd.f32 %v2540, %v2554
        %v2557 = vadd.f32 %v2541, %v2555
        %s2558 = sld [smem:[#allocation9 + $0xc]]
        %2559 = vrot.lane.b32.xlu0 %v2510, 126
        %v2560 = vpop.permute.xlu0 %2559
        %2561 = vrot.lane.b32.xlu0 %v2511, 126
        %v2562 = vpop.permute.xlu0 %2561
        %v2563 = vstv %s2558
        %v2564 = vmul.f32 %v2563, %v2560
        %v2565 = vmul.f32 %v2563, %v2562
        %v2566 = vadd.f32 %v2546, %v2564
        %v2567 = vadd.f32 %v2547, %v2565
        %s2568 = sld [smem:[#allocation9 + $0xd]]
        %2569 = vrot.lane.b32.xlu0 %v2510, 125
        %v2570 = vpop.permute.xlu0 %2569
        %2571 = vrot.lane.b32.xlu0 %v2511, 125
        %v2572 = vpop.permute.xlu0 %2571
        %v2573 = vstv %s2568
        %v2574 = vmul.f32 %v2573, %v2570
        %v2575 = vmul.f32 %v2573, %v2572
        %v2576 = vadd.f32 %v2556, %v2574
        %v2577 = vadd.f32 %v2557, %v2575
        %v2578 = vld [vmem:[#allocation2 + $0x2] sm:$0xff]
        %v2579 = vld [vmem:[#allocation2 + $0xa] sm:$0xff]
        %s2580 = sld [smem:[#allocation9 + $0xe]]
        %2581 = vrot.lane.b32.xlu0 %v2578, 3
        %v2582 = vpop.permute.xlu0 %2581
        %2583 = vrot.lane.b32.xlu0 %v2579, 3
        %v2584 = vpop.permute.xlu0 %2583
        %v2585 = vstv %s2580
        %v2586 = vmul.f32 %v2585, %v2582
        %v2587 = vmul.f32 %v2585, %v2584
        %v2588 = vadd.f32 %v2566, %v2586
        %v2589 = vadd.f32 %v2567, %v2587
        %s2590 = sld [smem:[#allocation9 + $0xf]]
        %2591 = vrot.lane.b32.xlu0 %v2578, 2
        %v2592 = vpop.permute.xlu0 %2591
        %2593 = vrot.lane.b32.xlu0 %v2579, 2
        %v2594 = vpop.permute.xlu0 %2593
        %v2595 = vstv %s2590
        %v2596 = vmul.f32 %v2595, %v2592
        %v2597 = vmul.f32 %v2595, %v2594
        %v2598 = vadd.f32 %v2576, %v2596
        %v2599 = vadd.f32 %v2577, %v2597
        %s2600 = sld [smem:[#allocation9 + $0x10]]
        %2601 = vrot.lane.b32.xlu0 %v2578, 1
        %v2602 = vpop.permute.xlu0 %2601
        %2603 = vrot.lane.b32.xlu0 %v2579, 1
        %v2604 = vpop.permute.xlu0 %2603
        %v2605 = vstv %s2600
        %v2606 = vmul.f32 %v2605, %v2602
        %v2607 = vmul.f32 %v2605, %v2604
        %v2608 = vadd.f32 %v2588, %v2606
        %v2609 = vadd.f32 %v2589, %v2607
        %s2610 = sld [smem:[#allocation9 + $0x11]]
        %v2611 = vstv %s2610
        %v2612 = vmul.f32 %v2611, %v2578
        %v2613 = vmul.f32 %v2611, %v2579
        %v2614 = vadd.f32 %v2598, %v2612
        %v2615 = vadd.f32 %v2599, %v2613
        %s2616 = sld [smem:[#allocation9 + $0x12]]
        %2617 = vrot.lane.b32.xlu0 %v2578, 127
        %v2618 = vpop.permute.xlu0 %2617
        %2619 = vrot.lane.b32.xlu0 %v2579, 127
        %v2620 = vpop.permute.xlu0 %2619
        %v2621 = vstv %s2616
        %v2622 = vmul.f32 %v2621, %v2618
        %v2623 = vmul.f32 %v2621, %v2620
        %v2624 = vadd.f32 %v2608, %v2622
        %v2625 = vadd.f32 %v2609, %v2623
        %s2626 = sld [smem:[#allocation9 + $0x13]]
        %2627 = vrot.lane.b32.xlu0 %v2578, 126
        %v2628 = vpop.permute.xlu0 %2627
        %2629 = vrot.lane.b32.xlu0 %v2579, 126
        %v2630 = vpop.permute.xlu0 %2629
        %v2631 = vstv %s2626
        %v2632 = vmul.f32 %v2631, %v2628
        %v2633 = vmul.f32 %v2631, %v2630
        %v2634 = vadd.f32 %v2614, %v2632
        %v2635 = vadd.f32 %v2615, %v2633
        %s2636 = sld [smem:[#allocation9 + $0x14]]
        %2637 = vrot.lane.b32.xlu0 %v2578, 125
        %v2638 = vpop.permute.xlu0 %2637
        %2639 = vrot.lane.b32.xlu0 %v2579, 125
        %v2640 = vpop.permute.xlu0 %2639
        %v2641 = vstv %s2636
        %v2642 = vmul.f32 %v2641, %v2638
        %v2643 = vmul.f32 %v2641, %v2640
        %v2644 = vadd.f32 %v2624, %v2642
        %v2645 = vadd.f32 %v2625, %v2643
        %v2646 = vld [vmem:[#allocation2 + $0x3] sm:$0xff]
        %v2647 = vld [vmem:[#allocation2 + $0xb] sm:$0xff]
        %s2648 = sld [smem:[#allocation9 + $0x15]]
        %2649 = vrot.lane.b32.xlu0 %v2646, 3
        %v2650 = vpop.permute.xlu0 %2649
        %2651 = vrot.lane.b32.xlu0 %v2647, 3
        %v2652 = vpop.permute.xlu0 %2651
        %v2653 = vstv %s2648
        %v2654 = vmul.f32 %v2653, %v2650
        %v2655 = vmul.f32 %v2653, %v2652
        %v2656 = vadd.f32 %v2634, %v2654
        %v2657 = vadd.f32 %v2635, %v2655
        %s2658 = sld [smem:[#allocation9 + $0x16]]
        %2659 = vrot.lane.b32.xlu0 %v2646, 2
        %v2660 = vpop.permute.xlu0 %2659
        %2661 = vrot.lane.b32.xlu0 %v2647, 2
        %v2662 = vpop.permute.xlu0 %2661
        %v2663 = vstv %s2658
        %v2664 = vmul.f32 %v2663, %v2660
        %v2665 = vmul.f32 %v2663, %v2662
        %v2666 = vadd.f32 %v2644, %v2664
        %v2667 = vadd.f32 %v2645, %v2665
        %s2668 = sld [smem:[#allocation9 + $0x17]]
        %2669 = vrot.lane.b32.xlu0 %v2646, 1
        %v2670 = vpop.permute.xlu0 %2669
        %2671 = vrot.lane.b32.xlu0 %v2647, 1
        %v2672 = vpop.permute.xlu0 %2671
        %v2673 = vstv %s2668
        %v2674 = vmul.f32 %v2673, %v2670
        %v2675 = vmul.f32 %v2673, %v2672
        %v2676 = vadd.f32 %v2656, %v2674
        %v2677 = vadd.f32 %v2657, %v2675
        %s2678 = sld [smem:[#allocation9 + $0x18]]
        %v2679 = vstv %s2678
        %v2680 = vmul.f32 %v2679, %v2646
        %v2681 = vmul.f32 %v2679, %v2647
        %v2682 = vadd.f32 %v2666, %v2680
        %v2683 = vadd.f32 %v2667, %v2681
        %s2684 = sld [smem:[#allocation9 + $0x19]]
        %2685 = vrot.lane.b32.xlu0 %v2646, 127
        %v2686 = vpop.permute.xlu0 %2685
        %2687 = vrot.lane.b32.xlu0 %v2647, 127
        %v2688 = vpop.permute.xlu0 %2687
        %v2689 = vstv %s2684
        %v2690 = vmul.f32 %v2689, %v2686
        %v2691 = vmul.f32 %v2689, %v2688
        %v2692 = vadd.f32 %v2676, %v2690
        %v2693 = vadd.f32 %v2677, %v2691
        %s2694 = sld [smem:[#allocation9 + $0x1a]]
        %2695 = vrot.lane.b32.xlu0 %v2646, 126
        %v2696 = vpop.permute.xlu0 %2695
        %2697 = vrot.lane.b32.xlu0 %v2647, 126
        %v2698 = vpop.permute.xlu0 %2697
        %v2699 = vstv %s2694
        %v2700 = vmul.f32 %v2699, %v2696
        %v2701 = vmul.f32 %v2699, %v2698
        %v2702 = vadd.f32 %v2682, %v2700
        %v2703 = vadd.f32 %v2683, %v2701
        %s2704 = sld [smem:[#allocation9 + $0x1b]]
        %2705 = vrot.lane.b32.xlu0 %v2646, 125
        %v2706 = vpop.permute.xlu0 %2705
        %2707 = vrot.lane.b32.xlu0 %v2647, 125
        %v2708 = vpop.permute.xlu0 %2707
        %v2709 = vstv %s2704
        %v2710 = vmul.f32 %v2709, %v2706
        %v2711 = vmul.f32 %v2709, %v2708
        %v2712 = vadd.f32 %v2692, %v2710
        %v2713 = vadd.f32 %v2693, %v2711
        %v2714 = vld [vmem:[#allocation2 + $0x4] sm:$0xff]
        %v2715 = vld [vmem:[#allocation2 + $0xc] sm:$0xff]
        %s2716 = sld [smem:[#allocation9 + $0x1c]]
        %2717 = vrot.lane.b32.xlu0 %v2714, 3
        %v2718 = vpop.permute.xlu0 %2717
        %2719 = vrot.lane.b32.xlu0 %v2715, 3
        %v2720 = vpop.permute.xlu0 %2719
        %v2721 = vstv %s2716
        %v2722 = vmul.f32 %v2721, %v2718
        %v2723 = vmul.f32 %v2721, %v2720
        %v2724 = vadd.f32 %v2702, %v2722
        %v2725 = vadd.f32 %v2703, %v2723
        %s2726 = sld [smem:[#allocation9 + $0x1d]]
        %2727 = vrot.lane.b32.xlu0 %v2714, 2
        %v2728 = vpop.permute.xlu0 %2727
        %2729 = vrot.lane.b32.xlu0 %v2715, 2
        %v2730 = vpop.permute.xlu0 %2729
        %v2731 = vstv %s2726
        %v2732 = vmul.f32 %v2731, %v2728
        %v2733 = vmul.f32 %v2731, %v2730
        %v2734 = vadd.f32 %v2712, %v2732
        %v2735 = vadd.f32 %v2713, %v2733
        %s2736 = sld [smem:[#allocation9 + $0x1e]]
        %2737 = vrot.lane.b32.xlu0 %v2714, 1
        %v2738 = vpop.permute.xlu0 %2737
        %2739 = vrot.lane.b32.xlu0 %v2715, 1
        %v2740 = vpop.permute.xlu0 %2739
        %v2741 = vstv %s2736
        %v2742 = vmul.f32 %v2741, %v2738
        %v2743 = vmul.f32 %v2741, %v2740
        %v2744 = vadd.f32 %v2724, %v2742
        %v2745 = vadd.f32 %v2725, %v2743
        %s2746 = sld [smem:[#allocation9 + $0x1f]]
        %v2747 = vstv %s2746
        %v2748 = vmul.f32 %v2747, %v2714
        %v2749 = vmul.f32 %v2747, %v2715
        %v2750 = vadd.f32 %v2734, %v2748
        %v2751 = vadd.f32 %v2735, %v2749
        %s2752 = sld [smem:[#allocation9 + $0x20]]
        %2753 = vrot.lane.b32.xlu0 %v2714, 127
        %v2754 = vpop.permute.xlu0 %2753
        %2755 = vrot.lane.b32.xlu0 %v2715, 127
        %v2756 = vpop.permute.xlu0 %2755
        %v2757 = vstv %s2752
        %v2758 = vmul.f32 %v2757, %v2754
        %v2759 = vmul.f32 %v2757, %v2756
        %v2760 = vadd.f32 %v2744, %v2758
        %v2761 = vadd.f32 %v2745, %v2759
        %s2762 = sld [smem:[#allocation9 + $0x21]]
        %2763 = vrot.lane.b32.xlu0 %v2714, 126
        %v2764 = vpop.permute.xlu0 %2763
        %2765 = vrot.lane.b32.xlu0 %v2715, 126
        %v2766 = vpop.permute.xlu0 %2765
        %v2767 = vstv %s2762
        %v2768 = vmul.f32 %v2767, %v2764
        %v2769 = vmul.f32 %v2767, %v2766
        %v2770 = vadd.f32 %v2750, %v2768
        %v2771 = vadd.f32 %v2751, %v2769
        %s2772 = sld [smem:[#allocation9 + $0x22]]
        %2773 = vrot.lane.b32.xlu0 %v2714, 125
        %v2774 = vpop.permute.xlu0 %2773
        %2775 = vrot.lane.b32.xlu0 %v2715, 125
        %v2776 = vpop.permute.xlu0 %2775
        %v2777 = vstv %s2772
        %v2778 = vmul.f32 %v2777, %v2774
        %v2779 = vmul.f32 %v2777, %v2776
        %v2780 = vadd.f32 %v2760, %v2778
        %v2781 = vadd.f32 %v2761, %v2779
        %v2782 = vld [vmem:[#allocation2 + $0x5] sm:$0xff]
        %v2783 = vld [vmem:[#allocation2 + $0xd] sm:$0xff]
        %s2784 = sld [smem:[#allocation9 + $0x23]]
        %2785 = vrot.lane.b32.xlu0 %v2782, 3
        %v2786 = vpop.permute.xlu0 %2785
        %2787 = vrot.lane.b32.xlu0 %v2783, 3
        %v2788 = vpop.permute.xlu0 %2787
        %v2789 = vstv %s2784
        %v2790 = vmul.f32 %v2789, %v2786
        %v2791 = vmul.f32 %v2789, %v2788
        %v2792 = vadd.f32 %v2770, %v2790
        %v2793 = vadd.f32 %v2771, %v2791
        %s2794 = sld [smem:[#allocation9 + $0x24]]
        %2795 = vrot.lane.b32.xlu0 %v2782, 2
        %v2796 = vpop.permute.xlu0 %2795
        %2797 = vrot.lane.b32.xlu0 %v2783, 2
        %v2798 = vpop.permute.xlu0 %2797
        %v2799 = vstv %s2794
        %v2800 = vmul.f32 %v2799, %v2796
        %v2801 = vmul.f32 %v2799, %v2798
        %v2802 = vadd.f32 %v2780, %v2800
        %v2803 = vadd.f32 %v2781, %v2801
        %s2804 = sld [smem:[#allocation9 + $0x25]]
        %2805 = vrot.lane.b32.xlu0 %v2782, 1
        %v2806 = vpop.permute.xlu0 %2805
        %2807 = vrot.lane.b32.xlu0 %v2783, 1
        %v2808 = vpop.permute.xlu0 %2807
        %v2809 = vstv %s2804
        %v2810 = vmul.f32 %v2809, %v2806
        %v2811 = vmul.f32 %v2809, %v2808
        %v2812 = vadd.f32 %v2792, %v2810
        %v2813 = vadd.f32 %v2793, %v2811
        %s2814 = sld [smem:[#allocation9 + $0x26]]
        %v2815 = vstv %s2814
        %v2816 = vmul.f32 %v2815, %v2782
        %v2817 = vmul.f32 %v2815, %v2783
        %v2818 = vadd.f32 %v2802, %v2816
        %v2819 = vadd.f32 %v2803, %v2817
        %s2820 = sld [smem:[#allocation9 + $0x27]]
        %2821 = vrot.lane.b32.xlu0 %v2782, 127
        %v2822 = vpop.permute.xlu0 %2821
        %2823 = vrot.lane.b32.xlu0 %v2783, 127
        %v2824 = vpop.permute.xlu0 %2823
        %v2825 = vstv %s2820
        %v2826 = vmul.f32 %v2825, %v2822
        %v2827 = vmul.f32 %v2825, %v2824
        %v2828 = vadd.f32 %v2812, %v2826
        %v2829 = vadd.f32 %v2813, %v2827
        %s2830 = sld [smem:[#allocation9 + $0x28]]
        %2831 = vrot.lane.b32.xlu0 %v2782, 126
        %v2832 = vpop.permute.xlu0 %2831
        %2833 = vrot.lane.b32.xlu0 %v2783, 126
        %v2834 = vpop.permute.xlu0 %2833
        %v2835 = vstv %s2830
        %v2836 = vmul.f32 %v2835, %v2832
        %v2837 = vmul.f32 %v2835, %v2834
        %v2838 = vadd.f32 %v2818, %v2836
        %v2839 = vadd.f32 %v2819, %v2837
        %s2840 = sld [smem:[#allocation9 + $0x29]]
        %2841 = vrot.lane.b32.xlu0 %v2782, 125
        %v2842 = vpop.permute.xlu0 %2841
        %2843 = vrot.lane.b32.xlu0 %v2783, 125
        %v2844 = vpop.permute.xlu0 %2843
        %v2845 = vstv %s2840
        %v2846 = vmul.f32 %v2845, %v2842
        %v2847 = vmul.f32 %v2845, %v2844
        %v2848 = vadd.f32 %v2828, %v2846
        %v2849 = vadd.f32 %v2829, %v2847
        %v2850 = vld [vmem:[#allocation2 + $0x6] sm:$0xff]
        %v2851 = vld [vmem:[#allocation2 + $0xe] sm:$0xff]
        %s2852 = sld [smem:[#allocation9 + $0x2a]]
        %2853 = vrot.lane.b32.xlu0 %v2850, 3
        %v2854 = vpop.permute.xlu0 %2853
        %2855 = vrot.lane.b32.xlu0 %v2851, 3
        %v2856 = vpop.permute.xlu0 %2855
        %v2857 = vstv %s2852
        %v2858 = vmul.f32 %v2857, %v2854
        %v2859 = vmul.f32 %v2857, %v2856
        %v2860 = vadd.f32 %v2838, %v2858
        %v2861 = vadd.f32 %v2839, %v2859
        %s2862 = sld [smem:[#allocation9 + $0x2b]]
        %2863 = vrot.lane.b32.xlu0 %v2850, 2
        %v2864 = vpop.permute.xlu0 %2863
        %2865 = vrot.lane.b32.xlu0 %v2851, 2
        %v2866 = vpop.permute.xlu0 %2865
        %v2867 = vstv %s2862
        %v2868 = vmul.f32 %v2867, %v2864
        %v2869 = vmul.f32 %v2867, %v2866
        %v2870 = vadd.f32 %v2848, %v2868
        %v2871 = vadd.f32 %v2849, %v2869
        %s2872 = sld [smem:[#allocation9 + $0x2c]]
        %2873 = vrot.lane.b32.xlu0 %v2850, 1
        %v2874 = vpop.permute.xlu0 %2873
        %2875 = vrot.lane.b32.xlu0 %v2851, 1
        %v2876 = vpop.permute.xlu0 %2875
        %v2877 = vstv %s2872
        %v2878 = vmul.f32 %v2877, %v2874
        %v2879 = vmul.f32 %v2877, %v2876
        %v2880 = vadd.f32 %v2860, %v2878
        %v2881 = vadd.f32 %v2861, %v2879
        %s2882 = sld [smem:[#allocation9 + $0x2d]]
        %v2883 = vstv %s2882
        %v2884 = vmul.f32 %v2883, %v2850
        %v2885 = vmul.f32 %v2883, %v2851
        %v2886 = vadd.f32 %v2870, %v2884
        %v2887 = vadd.f32 %v2871, %v2885
        %s2888 = sld [smem:[#allocation9 + $0x2e]]
        %2889 = vrot.lane.b32.xlu0 %v2850, 127
        %v2890 = vpop.permute.xlu0 %2889
        %2891 = vrot.lane.b32.xlu0 %v2851, 127
        %v2892 = vpop.permute.xlu0 %2891
        %v2893 = vstv %s2888
        %v2894 = vmul.f32 %v2893, %v2890
        %v2895 = vmul.f32 %v2893, %v2892
        %v2896 = vadd.f32 %v2880, %v2894
        %v2897 = vadd.f32 %v2881, %v2895
        %s2898 = sld [smem:[#allocation9 + $0x2f]]
        %2899 = vrot.lane.b32.xlu0 %v2850, 126
        %v2900 = vpop.permute.xlu0 %2899
        %2901 = vrot.lane.b32.xlu0 %v2851, 126
        %v2902 = vpop.permute.xlu0 %2901
        %v2903 = vstv %s2898
        %v2904 = vmul.f32 %v2903, %v2900
        %v2905 = vmul.f32 %v2903, %v2902
        %v2906 = vadd.f32 %v2886, %v2904
        %v2907 = vadd.f32 %v2887, %v2905
        %s2908 = sld [smem:[#allocation9 + $0x30]]
        %2909 = vrot.lane.b32.xlu0 %v2850, 125
        %v2910 = vpop.permute.xlu0 %2909
        %2911 = vrot.lane.b32.xlu0 %v2851, 125
        %v2912 = vpop.permute.xlu0 %2911
        %v2913 = vstv %s2908
        %v2914 = vmul.f32 %v2913, %v2910
        %v2915 = vmul.f32 %v2913, %v2912
        %v2916 = vadd.f32 %v2896, %v2914
        %v2917 = vadd.f32 %v2897, %v2915
        %v2918 = vadd.f32 %v2916, %v2906
        %v2919 = vadd.f32 %v2917, %v2907
        %v2920 = vld [vmem:[%s2137] sm:$0xff]
        %v2921 = vld [vmem:[%s2137 + $0x8] sm:$0xff]
        %s2922 = sld [smem:[#allocation9 + $0x80]]
        %2923 = vrot.lane.b32.xlu0 %v2920, 3
        %v2924 = vpop.permute.xlu0 %2923
        %2925 = vrot.lane.b32.xlu0 %v2921, 3
        %v2926 = vpop.permute.xlu0 %2925
        %v2927 = vstv %s2922
        %v2928 = vmul.f32 %v2927, %v2924
        %v2929 = vmul.f32 %v2927, %v2926
        %v2930 = vadd.f32 %v2928, 0.0
        %v2931 = vadd.f32 %v2929, 0.0
        %s2932 = sld [smem:[#allocation9 + $0x81]]
        %2933 = vrot.lane.b32.xlu0 %v2920, 2
        %v2934 = vpop.permute.xlu0 %2933
        %2935 = vrot.lane.b32.xlu0 %v2921, 2
        %v2936 = vpop.permute.xlu0 %2935
        %v2937 = vstv %s2932
        %v2938 = vmul.f32 %v2937, %v2934
        %v2939 = vmul.f32 %v2937, %v2936
        %v2940 = vadd.f32 %v2938, 0.0
        %v2941 = vadd.f32 %v2939, 0.0
        %s2942 = sld [smem:[#allocation9 + $0x82]]
        %2943 = vrot.lane.b32.xlu0 %v2920, 1
        %v2944 = vpop.permute.xlu0 %2943
        %2945 = vrot.lane.b32.xlu0 %v2921, 1
        %v2946 = vpop.permute.xlu0 %2945
        %v2947 = vstv %s2942
        %v2948 = vmul.f32 %v2947, %v2944
        %v2949 = vmul.f32 %v2947, %v2946
        %v2950 = vadd.f32 %v2930, %v2948
        %v2951 = vadd.f32 %v2931, %v2949
        %s2952 = sld [smem:[#allocation9 + $0x83]]
        %v2953 = vstv %s2952
        %v2954 = vmul.f32 %v2953, %v2920
        %v2955 = vmul.f32 %v2953, %v2921
        %v2956 = vadd.f32 %v2940, %v2954
        %v2957 = vadd.f32 %v2941, %v2955
        %s2958 = sld [smem:[#allocation9 + $0x84]]
        %2959 = vrot.lane.b32.xlu0 %v2920, 127
        %v2960 = vpop.permute.xlu0 %2959
        %2961 = vrot.lane.b32.xlu0 %v2921, 127
        %v2962 = vpop.permute.xlu0 %2961
        %v2963 = vstv %s2958
        %v2964 = vmul.f32 %v2963, %v2960
        %v2965 = vmul.f32 %v2963, %v2962
        %v2966 = vadd.f32 %v2950, %v2964
        %v2967 = vadd.f32 %v2951, %v2965
        %s2968 = sld [smem:[#allocation9 + $0x85]]
        %2969 = vrot.lane.b32.xlu0 %v2920, 126
        %v2970 = vpop.permute.xlu0 %2969
        %2971 = vrot.lane.b32.xlu0 %v2921, 126
        %v2972 = vpop.permute.xlu0 %2971
        %v2973 = vstv %s2968
        %v2974 = vmul.f32 %v2973, %v2970
        %v2975 = vmul.f32 %v2973, %v2972
        %v2976 = vadd.f32 %v2956, %v2974
        %v2977 = vadd.f32 %v2957, %v2975
        %s2978 = sld [smem:[#allocation9 + $0x86]]
        %2979 = vrot.lane.b32.xlu0 %v2920, 125
        %v2980 = vpop.permute.xlu0 %2979
        %2981 = vrot.lane.b32.xlu0 %v2921, 125
        %v2982 = vpop.permute.xlu0 %2981
        %v2983 = vstv %s2978
        %v2984 = vmul.f32 %v2983, %v2980
        %v2985 = vmul.f32 %v2983, %v2982
        %v2986 = vadd.f32 %v2966, %v2984
        %v2987 = vadd.f32 %v2967, %v2985
        %v2988 = vld [vmem:[%s2137 + $0x1] sm:$0xff]
        %v2989 = vld [vmem:[%s2137 + $0x9] sm:$0xff]
        %s2990 = sld [smem:[#allocation9 + $0x87]]
        %2991 = vrot.lane.b32.xlu0 %v2988, 3
        %v2992 = vpop.permute.xlu0 %2991
        %2993 = vrot.lane.b32.xlu0 %v2989, 3
        %v2994 = vpop.permute.xlu0 %2993
        %v2995 = vstv %s2990
        %v2996 = vmul.f32 %v2995, %v2992
        %v2997 = vmul.f32 %v2995, %v2994
        %v2998 = vadd.f32 %v2976, %v2996
        %v2999 = vadd.f32 %v2977, %v2997
        %s3000 = sld [smem:[#allocation9 + $0x88]]
        %3001 = vrot.lane.b32.xlu0 %v2988, 2
        %v3002 = vpop.permute.xlu0 %3001
        %3003 = vrot.lane.b32.xlu0 %v2989, 2
        %v3004 = vpop.permute.xlu0 %3003
        %v3005 = vstv %s3000
        %v3006 = vmul.f32 %v3005, %v3002
        %v3007 = vmul.f32 %v3005, %v3004
        %v3008 = vadd.f32 %v2986, %v3006
        %v3009 = vadd.f32 %v2987, %v3007
        %s3010 = sld [smem:[#allocation9 + $0x89]]
        %3011 = vrot.lane.b32.xlu0 %v2988, 1
        %v3012 = vpop.permute.xlu0 %3011
        %3013 = vrot.lane.b32.xlu0 %v2989, 1
        %v3014 = vpop.permute.xlu0 %3013
        %v3015 = vstv %s3010
        %v3016 = vmul.f32 %v3015, %v3012
        %v3017 = vmul.f32 %v3015, %v3014
        %v3018 = vadd.f32 %v2998, %v3016
        %v3019 = vadd.f32 %v2999, %v3017
        %s3020 = sld [smem:[#allocation9 + $0x8a]]
        %v3021 = vstv %s3020
        %v3022 = vmul.f32 %v3021, %v2988
        %v3023 = vmul.f32 %v3021, %v2989
        %v3024 = vadd.f32 %v3008, %v3022
        %v3025 = vadd.f32 %v3009, %v3023
        %s3026 = sld [smem:[#allocation9 + $0x8b]]
        %3027 = vrot.lane.b32.xlu0 %v2988, 127
        %v3028 = vpop.permute.xlu0 %3027
        %3029 = vrot.lane.b32.xlu0 %v2989, 127
        %v3030 = vpop.permute.xlu0 %3029
        %v3031 = vstv %s3026
        %v3032 = vmul.f32 %v3031, %v3028
        %v3033 = vmul.f32 %v3031, %v3030
        %v3034 = vadd.f32 %v3018, %v3032
        %v3035 = vadd.f32 %v3019, %v3033
        %s3036 = sld [smem:[#allocation9 + $0x8c]]
        %3037 = vrot.lane.b32.xlu0 %v2988, 126
        %v3038 = vpop.permute.xlu0 %3037
        %3039 = vrot.lane.b32.xlu0 %v2989, 126
        %v3040 = vpop.permute.xlu0 %3039
        %v3041 = vstv %s3036
        %v3042 = vmul.f32 %v3041, %v3038
        %v3043 = vmul.f32 %v3041, %v3040
        %v3044 = vadd.f32 %v3024, %v3042
        %v3045 = vadd.f32 %v3025, %v3043
        %s3046 = sld [smem:[#allocation9 + $0x8d]]
        %3047 = vrot.lane.b32.xlu0 %v2988, 125
        %v3048 = vpop.permute.xlu0 %3047
        %3049 = vrot.lane.b32.xlu0 %v2989, 125
        %v3050 = vpop.permute.xlu0 %3049
        %v3051 = vstv %s3046
        %v3052 = vmul.f32 %v3051, %v3048
        %v3053 = vmul.f32 %v3051, %v3050
        %v3054 = vadd.f32 %v3034, %v3052
        %v3055 = vadd.f32 %v3035, %v3053
        %v3056 = vld [vmem:[%s2137 + $0x2] sm:$0xff]
        %v3057 = vld [vmem:[%s2137 + $0xa] sm:$0xff]
        %s3058 = sld [smem:[#allocation9 + $0x8e]]
        %3059 = vrot.lane.b32.xlu0 %v3056, 3
        %v3060 = vpop.permute.xlu0 %3059
        %3061 = vrot.lane.b32.xlu0 %v3057, 3
        %v3062 = vpop.permute.xlu0 %3061
        %v3063 = vstv %s3058
        %v3064 = vmul.f32 %v3063, %v3060
        %v3065 = vmul.f32 %v3063, %v3062
        %v3066 = vadd.f32 %v3044, %v3064
        %v3067 = vadd.f32 %v3045, %v3065
        %s3068 = sld [smem:[#allocation9 + $0x8f]]
        %3069 = vrot.lane.b32.xlu0 %v3056, 2
        %v3070 = vpop.permute.xlu0 %3069
        %3071 = vrot.lane.b32.xlu0 %v3057, 2
        %v3072 = vpop.permute.xlu0 %3071
        %v3073 = vstv %s3068
        %v3074 = vmul.f32 %v3073, %v3070
        %v3075 = vmul.f32 %v3073, %v3072
        %v3076 = vadd.f32 %v3054, %v3074
        %v3077 = vadd.f32 %v3055, %v3075
        %s3078 = sld [smem:[#allocation9 + $0x90]]
        %3079 = vrot.lane.b32.xlu0 %v3056, 1
        %v3080 = vpop.permute.xlu0 %3079
        %3081 = vrot.lane.b32.xlu0 %v3057, 1
        %v3082 = vpop.permute.xlu0 %3081
        %v3083 = vstv %s3078
        %v3084 = vmul.f32 %v3083, %v3080
        %v3085 = vmul.f32 %v3083, %v3082
        %v3086 = vadd.f32 %v3066, %v3084
        %v3087 = vadd.f32 %v3067, %v3085
        %s3088 = sld [smem:[#allocation9 + $0x91]]
        %v3089 = vstv %s3088
        %v3090 = vmul.f32 %v3089, %v3056
        %v3091 = vmul.f32 %v3089, %v3057
        %v3092 = vadd.f32 %v3076, %v3090
        %v3093 = vadd.f32 %v3077, %v3091
        %s3094 = sld [smem:[#allocation9 + $0x92]]
        %3095 = vrot.lane.b32.xlu0 %v3056, 127
        %v3096 = vpop.permute.xlu0 %3095
        %3097 = vrot.lane.b32.xlu0 %v3057, 127
        %v3098 = vpop.permute.xlu0 %3097
        %v3099 = vstv %s3094
        %v3100 = vmul.f32 %v3099, %v3096
        %v3101 = vmul.f32 %v3099, %v3098
        %v3102 = vadd.f32 %v3086, %v3100
        %v3103 = vadd.f32 %v3087, %v3101
        %s3104 = sld [smem:[#allocation9 + $0x93]]
        %3105 = vrot.lane.b32.xlu0 %v3056, 126
        %v3106 = vpop.permute.xlu0 %3105
        %3107 = vrot.lane.b32.xlu0 %v3057, 126
        %v3108 = vpop.permute.xlu0 %3107
        %v3109 = vstv %s3104
        %v3110 = vmul.f32 %v3109, %v3106
        %v3111 = vmul.f32 %v3109, %v3108
        %v3112 = vadd.f32 %v3092, %v3110
        %v3113 = vadd.f32 %v3093, %v3111
        %s3114 = sld [smem:[#allocation9 + $0x94]]
        %3115 = vrot.lane.b32.xlu0 %v3056, 125
        %v3116 = vpop.permute.xlu0 %3115
        %3117 = vrot.lane.b32.xlu0 %v3057, 125
        %v3118 = vpop.permute.xlu0 %3117
        %v3119 = vstv %s3114
        %v3120 = vmul.f32 %v3119, %v3116
        %v3121 = vmul.f32 %v3119, %v3118
        %v3122 = vadd.f32 %v3102, %v3120
        %v3123 = vadd.f32 %v3103, %v3121
        %v3124 = vld [vmem:[%s2137 + $0x3] sm:$0xff]
        %v3125 = vld [vmem:[%s2137 + $0xb] sm:$0xff]
        %s3126 = sld [smem:[#allocation9 + $0x95]]
        %3127 = vrot.lane.b32.xlu0 %v3124, 3
        %v3128 = vpop.permute.xlu0 %3127
        %3129 = vrot.lane.b32.xlu0 %v3125, 3
        %v3130 = vpop.permute.xlu0 %3129
        %v3131 = vstv %s3126
        %v3132 = vmul.f32 %v3131, %v3128
        %v3133 = vmul.f32 %v3131, %v3130
        %v3134 = vadd.f32 %v3112, %v3132
        %v3135 = vadd.f32 %v3113, %v3133
        %s3136 = sld [smem:[#allocation9 + $0x96]]
        %3137 = vrot.lane.b32.xlu0 %v3124, 2
        %v3138 = vpop.permute.xlu0 %3137
        %3139 = vrot.lane.b32.xlu0 %v3125, 2
        %v3140 = vpop.permute.xlu0 %3139
        %v3141 = vstv %s3136
        %v3142 = vmul.f32 %v3141, %v3138
        %v3143 = vmul.f32 %v3141, %v3140
        %v3144 = vadd.f32 %v3122, %v3142
        %v3145 = vadd.f32 %v3123, %v3143
        %s3146 = sld [smem:[#allocation9 + $0x97]]
        %3147 = vrot.lane.b32.xlu0 %v3124, 1
        %v3148 = vpop.permute.xlu0 %3147
        %3149 = vrot.lane.b32.xlu0 %v3125, 1
        %v3150 = vpop.permute.xlu0 %3149
        %v3151 = vstv %s3146
        %v3152 = vmul.f32 %v3151, %v3148
        %v3153 = vmul.f32 %v3151, %v3150
        %v3154 = vadd.f32 %v3134, %v3152
        %v3155 = vadd.f32 %v3135, %v3153
        %s3156 = sld [smem:[#allocation9 + $0x98]]
        %v3157 = vstv %s3156
        %v3158 = vmul.f32 %v3157, %v3124
        %v3159 = vmul.f32 %v3157, %v3125
        %v3160 = vadd.f32 %v3144, %v3158
        %v3161 = vadd.f32 %v3145, %v3159
        %s3162 = sld [smem:[#allocation9 + $0x99]]
        %3163 = vrot.lane.b32.xlu0 %v3124, 127
        %v3164 = vpop.permute.xlu0 %3163
        %3165 = vrot.lane.b32.xlu0 %v3125, 127
        %v3166 = vpop.permute.xlu0 %3165
        %v3167 = vstv %s3162
        %v3168 = vmul.f32 %v3167, %v3164
        %v3169 = vmul.f32 %v3167, %v3166
        %v3170 = vadd.f32 %v3154, %v3168
        %v3171 = vadd.f32 %v3155, %v3169
        %s3172 = sld [smem:[#allocation9 + $0x9a]]
        %3173 = vrot.lane.b32.xlu0 %v3124, 126
        %v3174 = vpop.permute.xlu0 %3173
        %3175 = vrot.lane.b32.xlu0 %v3125, 126
        %v3176 = vpop.permute.xlu0 %3175
        %v3177 = vstv %s3172
        %v3178 = vmul.f32 %v3177, %v3174
        %v3179 = vmul.f32 %v3177, %v3176
        %v3180 = vadd.f32 %v3160, %v3178
        %v3181 = vadd.f32 %v3161, %v3179
        %s3182 = sld [smem:[#allocation9 + $0x9b]]
        %3183 = vrot.lane.b32.xlu0 %v3124, 125
        %v3184 = vpop.permute.xlu0 %3183
        %3185 = vrot.lane.b32.xlu0 %v3125, 125
        %v3186 = vpop.permute.xlu0 %3185
        %v3187 = vstv %s3182
        %v3188 = vmul.f32 %v3187, %v3184
        %v3189 = vmul.f32 %v3187, %v3186
        %v3190 = vadd.f32 %v3170, %v3188
        %v3191 = vadd.f32 %v3171, %v3189
        %v3192 = vld [vmem:[%s2137 + $0x4] sm:$0xff]
        %v3193 = vld [vmem:[%s2137 + $0xc] sm:$0xff]
        %s3194 = sld [smem:[#allocation9 + $0x9c]]
        %3195 = vrot.lane.b32.xlu0 %v3192, 3
        %v3196 = vpop.permute.xlu0 %3195
        %3197 = vrot.lane.b32.xlu0 %v3193, 3
        %v3198 = vpop.permute.xlu0 %3197
        %v3199 = vstv %s3194
        %v3200 = vmul.f32 %v3199, %v3196
        %v3201 = vmul.f32 %v3199, %v3198
        %v3202 = vadd.f32 %v3180, %v3200
        %v3203 = vadd.f32 %v3181, %v3201
        %s3204 = sld [smem:[#allocation9 + $0x9d]]
        %3205 = vrot.lane.b32.xlu0 %v3192, 2
        %v3206 = vpop.permute.xlu0 %3205
        %3207 = vrot.lane.b32.xlu0 %v3193, 2
        %v3208 = vpop.permute.xlu0 %3207
        %v3209 = vstv %s3204
        %v3210 = vmul.f32 %v3209, %v3206
        %v3211 = vmul.f32 %v3209, %v3208
        %v3212 = vadd.f32 %v3190, %v3210
        %v3213 = vadd.f32 %v3191, %v3211
        %s3214 = sld [smem:[#allocation9 + $0x9e]]
        %3215 = vrot.lane.b32.xlu0 %v3192, 1
        %v3216 = vpop.permute.xlu0 %3215
        %3217 = vrot.lane.b32.xlu0 %v3193, 1
        %v3218 = vpop.permute.xlu0 %3217
        %v3219 = vstv %s3214
        %v3220 = vmul.f32 %v3219, %v3216
        %v3221 = vmul.f32 %v3219, %v3218
        %v3222 = vadd.f32 %v3202, %v3220
        %v3223 = vadd.f32 %v3203, %v3221
        %s3224 = sld [smem:[#allocation9 + $0x9f]]
        %v3225 = vstv %s3224
        %v3226 = vmul.f32 %v3225, %v3192
        %v3227 = vmul.f32 %v3225, %v3193
        %v3228 = vadd.f32 %v3212, %v3226
        %v3229 = vadd.f32 %v3213, %v3227
        %s3230 = sld [smem:[#allocation9 + $0xa0]]
        %3231 = vrot.lane.b32.xlu0 %v3192, 127
        %v3232 = vpop.permute.xlu0 %3231
        %3233 = vrot.lane.b32.xlu0 %v3193, 127
        %v3234 = vpop.permute.xlu0 %3233
        %v3235 = vstv %s3230
        %v3236 = vmul.f32 %v3235, %v3232
        %v3237 = vmul.f32 %v3235, %v3234
        %v3238 = vadd.f32 %v3222, %v3236
        %v3239 = vadd.f32 %v3223, %v3237
        %s3240 = sld [smem:[#allocation9 + $0xa1]]
        %3241 = vrot.lane.b32.xlu0 %v3192, 126
        %v3242 = vpop.permute.xlu0 %3241
        %3243 = vrot.lane.b32.xlu0 %v3193, 126
        %v3244 = vpop.permute.xlu0 %3243
        %v3245 = vstv %s3240
        %v3246 = vmul.f32 %v3245, %v3242
        %v3247 = vmul.f32 %v3245, %v3244
        %v3248 = vadd.f32 %v3228, %v3246
        %v3249 = vadd.f32 %v3229, %v3247
        %s3250 = sld [smem:[#allocation9 + $0xa2]]
        %3251 = vrot.lane.b32.xlu0 %v3192, 125
        %v3252 = vpop.permute.xlu0 %3251
        %3253 = vrot.lane.b32.xlu0 %v3193, 125
        %v3254 = vpop.permute.xlu0 %3253
        %v3255 = vstv %s3250
        %v3256 = vmul.f32 %v3255, %v3252
        %v3257 = vmul.f32 %v3255, %v3254
        %v3258 = vadd.f32 %v3238, %v3256
        %v3259 = vadd.f32 %v3239, %v3257
        %v3260 = vld [vmem:[%s2137 + $0x5] sm:$0xff]
        %v3261 = vld [vmem:[%s2137 + $0xd] sm:$0xff]
        %s3262 = sld [smem:[#allocation9 + $0xa3]]
        %3263 = vrot.lane.b32.xlu0 %v3260, 3
        %v3264 = vpop.permute.xlu0 %3263
        %3265 = vrot.lane.b32.xlu0 %v3261, 3
        %v3266 = vpop.permute.xlu0 %3265
        %v3267 = vstv %s3262
        %v3268 = vmul.f32 %v3267, %v3264
        %v3269 = vmul.f32 %v3267, %v3266
        %v3270 = vadd.f32 %v3248, %v3268
        %v3271 = vadd.f32 %v3249, %v3269
        %s3272 = sld [smem:[#allocation9 + $0xa4]]
        %3273 = vrot.lane.b32.xlu0 %v3260, 2
        %v3274 = vpop.permute.xlu0 %3273
        %3275 = vrot.lane.b32.xlu0 %v3261, 2
        %v3276 = vpop.permute.xlu0 %3275
        %v3277 = vstv %s3272
        %v3278 = vmul.f32 %v3277, %v3274
        %v3279 = vmul.f32 %v3277, %v3276
        %v3280 = vadd.f32 %v3258, %v3278
        %v3281 = vadd.f32 %v3259, %v3279
        %s3282 = sld [smem:[#allocation9 + $0xa5]]
        %3283 = vrot.lane.b32.xlu0 %v3260, 1
        %v3284 = vpop.permute.xlu0 %3283
        %3285 = vrot.lane.b32.xlu0 %v3261, 1
        %v3286 = vpop.permute.xlu0 %3285
        %v3287 = vstv %s3282
        %v3288 = vmul.f32 %v3287, %v3284
        %v3289 = vmul.f32 %v3287, %v3286
        %v3290 = vadd.f32 %v3270, %v3288
        %v3291 = vadd.f32 %v3271, %v3289
        %s3292 = sld [smem:[#allocation9 + $0xa6]]
        %v3293 = vstv %s3292
        %v3294 = vmul.f32 %v3293, %v3260
        %v3295 = vmul.f32 %v3293, %v3261
        %v3296 = vadd.f32 %v3280, %v3294
        %v3297 = vadd.f32 %v3281, %v3295
        %s3298 = sld [smem:[#allocation9 + $0xa7]]
        %3299 = vrot.lane.b32.xlu0 %v3260, 127
        %v3300 = vpop.permute.xlu0 %3299
        %3301 = vrot.lane.b32.xlu0 %v3261, 127
        %v3302 = vpop.permute.xlu0 %3301
        %v3303 = vstv %s3298
        %v3304 = vmul.f32 %v3303, %v3300
        %v3305 = vmul.f32 %v3303, %v3302
        %v3306 = vadd.f32 %v3290, %v3304
        %v3307 = vadd.f32 %v3291, %v3305
        %s3308 = sld [smem:[#allocation9 + $0xa8]]
        %3309 = vrot.lane.b32.xlu0 %v3260, 126
        %v3310 = vpop.permute.xlu0 %3309
        %3311 = vrot.lane.b32.xlu0 %v3261, 126
        %v3312 = vpop.permute.xlu0 %3311
        %v3313 = vstv %s3308
        %v3314 = vmul.f32 %v3313, %v3310
        %v3315 = vmul.f32 %v3313, %v3312
        %v3316 = vadd.f32 %v3296, %v3314
        %v3317 = vadd.f32 %v3297, %v3315
        %s3318 = sld [smem:[#allocation9 + $0xa9]]
        %3319 = vrot.lane.b32.xlu0 %v3260, 125
        %v3320 = vpop.permute.xlu0 %3319
        %3321 = vrot.lane.b32.xlu0 %v3261, 125
        %v3322 = vpop.permute.xlu0 %3321
        %v3323 = vstv %s3318
        %v3324 = vmul.f32 %v3323, %v3320
        %v3325 = vmul.f32 %v3323, %v3322
        %v3326 = vadd.f32 %v3306, %v3324
        %v3327 = vadd.f32 %v3307, %v3325
        %v3328 = vld [vmem:[%s2137 + $0x6] sm:$0xff]
        %v3329 = vld [vmem:[%s2137 + $0xe] sm:$0xff]
        %s3330 = sld [smem:[#allocation9 + $0xaa]]
        %3331 = vrot.lane.b32.xlu0 %v3328, 3
        %v3332 = vpop.permute.xlu0 %3331
        %3333 = vrot.lane.b32.xlu0 %v3329, 3
        %v3334 = vpop.permute.xlu0 %3333
        %v3335 = vstv %s3330
        %v3336 = vmul.f32 %v3335, %v3332
        %v3337 = vmul.f32 %v3335, %v3334
        %v3338 = vadd.f32 %v3316, %v3336
        %v3339 = vadd.f32 %v3317, %v3337
        %s3340 = sld [smem:[#allocation9 + $0xab]]
        %3341 = vrot.lane.b32.xlu0 %v3328, 2
        %v3342 = vpop.permute.xlu0 %3341
        %3343 = vrot.lane.b32.xlu0 %v3329, 2
        %v3344 = vpop.permute.xlu0 %3343
        %v3345 = vstv %s3340
        %v3346 = vmul.f32 %v3345, %v3342
        %v3347 = vmul.f32 %v3345, %v3344
        %v3348 = vadd.f32 %v3326, %v3346
        %v3349 = vadd.f32 %v3327, %v3347
        %s3350 = sld [smem:[#allocation9 + $0xac]]
        %3351 = vrot.lane.b32.xlu0 %v3328, 1
        %v3352 = vpop.permute.xlu0 %3351
        %3353 = vrot.lane.b32.xlu0 %v3329, 1
        %v3354 = vpop.permute.xlu0 %3353
        %v3355 = vstv %s3350
        %v3356 = vmul.f32 %v3355, %v3352
        %v3357 = vmul.f32 %v3355, %v3354
        %v3358 = vadd.f32 %v3338, %v3356
        %v3359 = vadd.f32 %v3339, %v3357
        %s3360 = sld [smem:[#allocation9 + $0xad]]
        %v3361 = vstv %s3360
        %v3362 = vmul.f32 %v3361, %v3328
        %v3363 = vmul.f32 %v3361, %v3329
        %v3364 = vadd.f32 %v3348, %v3362
        %v3365 = vadd.f32 %v3349, %v3363
        %s3366 = sld [smem:[#allocation9 + $0xae]]
        %3367 = vrot.lane.b32.xlu0 %v3328, 127
        %v3368 = vpop.permute.xlu0 %3367
        %3369 = vrot.lane.b32.xlu0 %v3329, 127
        %v3370 = vpop.permute.xlu0 %3369
        %v3371 = vstv %s3366
        %v3372 = vmul.f32 %v3371, %v3368
        %v3373 = vmul.f32 %v3371, %v3370
        %v3374 = vadd.f32 %v3358, %v3372
        %v3375 = vadd.f32 %v3359, %v3373
        %s3376 = sld [smem:[#allocation9 + $0xaf]]
        %3377 = vrot.lane.b32.xlu0 %v3328, 126
        %v3378 = vpop.permute.xlu0 %3377
        %3379 = vrot.lane.b32.xlu0 %v3329, 126
        %v3380 = vpop.permute.xlu0 %3379
        %v3381 = vstv %s3376
        %v3382 = vmul.f32 %v3381, %v3378
        %v3383 = vmul.f32 %v3381, %v3380
        %v3384 = vadd.f32 %v3364, %v3382
        %v3385 = vadd.f32 %v3365, %v3383
        %s3386 = sld [smem:[#allocation9 + $0xb0]]
        %3387 = vrot.lane.b32.xlu0 %v3328, 125
        %v3388 = vpop.permute.xlu0 %3387
        %3389 = vrot.lane.b32.xlu0 %v3329, 125
        %v3390 = vpop.permute.xlu0 %3389
        %v3391 = vstv %s3386
        %v3392 = vmul.f32 %v3391, %v3388
        %v3393 = vmul.f32 %v3391, %v3390
        %v3394 = vadd.f32 %v3374, %v3392
        %v3395 = vadd.f32 %v3375, %v3393
        %v3396 = vadd.f32 %v3394, %v3384
        %v3397 = vadd.f32 %v3395, %v3385
        %v3398 = vadd.f32 %v2918, %v3396
        %v3399 = vadd.f32 %v2919, %v3397
        %v3400 = vld [vmem:[%s2284] sm:$0xff]
        %v3401 = vld [vmem:[%s2284 + $0x8] sm:$0xff]
        %s3402 = sld [smem:[#allocation9 + $0x100]]
        %3403 = vrot.lane.b32.xlu0 %v3400, 3
        %v3404 = vpop.permute.xlu0 %3403
        %3405 = vrot.lane.b32.xlu0 %v3401, 3
        %v3406 = vpop.permute.xlu0 %3405
        %v3407 = vstv %s3402
        %v3408 = vmul.f32 %v3407, %v3404
        %v3409 = vmul.f32 %v3407, %v3406
        %v3410 = vadd.f32 %v3408, 0.0
        %v3411 = vadd.f32 %v3409, 0.0
        %s3412 = sld [smem:[#allocation9 + $0x101]]
        %3413 = vrot.lane.b32.xlu0 %v3400, 2
        %v3414 = vpop.permute.xlu0 %3413
        %3415 = vrot.lane.b32.xlu0 %v3401, 2
        %v3416 = vpop.permute.xlu0 %3415
        %v3417 = vstv %s3412
        %v3418 = vmul.f32 %v3417, %v3414
        %v3419 = vmul.f32 %v3417, %v3416
        %v3420 = vadd.f32 %v3418, 0.0
        %v3421 = vadd.f32 %v3419, 0.0
        %s3422 = sld [smem:[#allocation9 + $0x102]]
        %3423 = vrot.lane.b32.xlu0 %v3400, 1
        %v3424 = vpop.permute.xlu0 %3423
        %3425 = vrot.lane.b32.xlu0 %v3401, 1
        %v3426 = vpop.permute.xlu0 %3425
        %v3427 = vstv %s3422
        %v3428 = vmul.f32 %v3427, %v3424
        %v3429 = vmul.f32 %v3427, %v3426
        %v3430 = vadd.f32 %v3410, %v3428
        %v3431 = vadd.f32 %v3411, %v3429
        %s3432 = sld [smem:[#allocation9 + $0x103]]
        %v3433 = vstv %s3432
        %v3434 = vmul.f32 %v3433, %v3400
        %v3435 = vmul.f32 %v3433, %v3401
        %v3436 = vadd.f32 %v3420, %v3434
        %v3437 = vadd.f32 %v3421, %v3435
        %s3438 = sld [smem:[#allocation9 + $0x104]]
        %3439 = vrot.lane.b32.xlu0 %v3400, 127
        %v3440 = vpop.permute.xlu0 %3439
        %3441 = vrot.lane.b32.xlu0 %v3401, 127
        %v3442 = vpop.permute.xlu0 %3441
        %v3443 = vstv %s3438
        %v3444 = vmul.f32 %v3443, %v3440
        %v3445 = vmul.f32 %v3443, %v3442
        %v3446 = vadd.f32 %v3430, %v3444
        %v3447 = vadd.f32 %v3431, %v3445
        %s3448 = sld [smem:[#allocation9 + $0x105]]
        %3449 = vrot.lane.b32.xlu0 %v3400, 126
        %v3450 = vpop.permute.xlu0 %3449
        %3451 = vrot.lane.b32.xlu0 %v3401, 126
        %v3452 = vpop.permute.xlu0 %3451
        %v3453 = vstv %s3448
        %v3454 = vmul.f32 %v3453, %v3450
        %v3455 = vmul.f32 %v3453, %v3452
        %v3456 = vadd.f32 %v3436, %v3454
        %v3457 = vadd.f32 %v3437, %v3455
        %s3458 = sld [smem:[#allocation9 + $0x106]]
        %3459 = vrot.lane.b32.xlu0 %v3400, 125
        %v3460 = vpop.permute.xlu0 %3459
        %3461 = vrot.lane.b32.xlu0 %v3401, 125
        %v3462 = vpop.permute.xlu0 %3461
        %v3463 = vstv %s3458
        %v3464 = vmul.f32 %v3463, %v3460
        %v3465 = vmul.f32 %v3463, %v3462
        %v3466 = vadd.f32 %v3446, %v3464
        %v3467 = vadd.f32 %v3447, %v3465
        %v3468 = vld [vmem:[%s2284 + $0x1] sm:$0xff]
        %v3469 = vld [vmem:[%s2284 + $0x9] sm:$0xff]
        %s3470 = sld [smem:[#allocation9 + $0x107]]
        %3471 = vrot.lane.b32.xlu0 %v3468, 3
        %v3472 = vpop.permute.xlu0 %3471
        %3473 = vrot.lane.b32.xlu0 %v3469, 3
        %v3474 = vpop.permute.xlu0 %3473
        %v3475 = vstv %s3470
        %v3476 = vmul.f32 %v3475, %v3472
        %v3477 = vmul.f32 %v3475, %v3474
        %v3478 = vadd.f32 %v3456, %v3476
        %v3479 = vadd.f32 %v3457, %v3477
        %s3480 = sld [smem:[#allocation9 + $0x108]]
        %3481 = vrot.lane.b32.xlu0 %v3468, 2
        %v3482 = vpop.permute.xlu0 %3481
        %3483 = vrot.lane.b32.xlu0 %v3469, 2
        %v3484 = vpop.permute.xlu0 %3483
        %v3485 = vstv %s3480
        %v3486 = vmul.f32 %v3485, %v3482
        %v3487 = vmul.f32 %v3485, %v3484
        %v3488 = vadd.f32 %v3466, %v3486
        %v3489 = vadd.f32 %v3467, %v3487
        %s3490 = sld [smem:[#allocation9 + $0x109]]
        %3491 = vrot.lane.b32.xlu0 %v3468, 1
        %v3492 = vpop.permute.xlu0 %3491
        %3493 = vrot.lane.b32.xlu0 %v3469, 1
        %v3494 = vpop.permute.xlu0 %3493
        %v3495 = vstv %s3490
        %v3496 = vmul.f32 %v3495, %v3492
        %v3497 = vmul.f32 %v3495, %v3494
        %v3498 = vadd.f32 %v3478, %v3496
        %v3499 = vadd.f32 %v3479, %v3497
        %s3500 = sld [smem:[#allocation9 + $0x10a]]
        %v3501 = vstv %s3500
        %v3502 = vmul.f32 %v3501, %v3468
        %v3503 = vmul.f32 %v3501, %v3469
        %v3504 = vadd.f32 %v3488, %v3502
        %v3505 = vadd.f32 %v3489, %v3503
        %s3506 = sld [smem:[#allocation9 + $0x10b]]
        %3507 = vrot.lane.b32.xlu0 %v3468, 127
        %v3508 = vpop.permute.xlu0 %3507
        %3509 = vrot.lane.b32.xlu0 %v3469, 127
        %v3510 = vpop.permute.xlu0 %3509
        %v3511 = vstv %s3506
        %v3512 = vmul.f32 %v3511, %v3508
        %v3513 = vmul.f32 %v3511, %v3510
        %v3514 = vadd.f32 %v3498, %v3512
        %v3515 = vadd.f32 %v3499, %v3513
        %s3516 = sld [smem:[#allocation9 + $0x10c]]
        %3517 = vrot.lane.b32.xlu0 %v3468, 126
        %v3518 = vpop.permute.xlu0 %3517
        %3519 = vrot.lane.b32.xlu0 %v3469, 126
        %v3520 = vpop.permute.xlu0 %3519
        %v3521 = vstv %s3516
        %v3522 = vmul.f32 %v3521, %v3518
        %v3523 = vmul.f32 %v3521, %v3520
        %v3524 = vadd.f32 %v3504, %v3522
        %v3525 = vadd.f32 %v3505, %v3523
        %s3526 = sld [smem:[#allocation9 + $0x10d]]
        %3527 = vrot.lane.b32.xlu0 %v3468, 125
        %v3528 = vpop.permute.xlu0 %3527
        %3529 = vrot.lane.b32.xlu0 %v3469, 125
        %v3530 = vpop.permute.xlu0 %3529
        %v3531 = vstv %s3526
        %v3532 = vmul.f32 %v3531, %v3528
        %v3533 = vmul.f32 %v3531, %v3530
        %v3534 = vadd.f32 %v3514, %v3532
        %v3535 = vadd.f32 %v3515, %v3533
        %v3536 = vld [vmem:[%s2284 + $0x2] sm:$0xff]
        %v3537 = vld [vmem:[%s2284 + $0xa] sm:$0xff]
        %s3538 = sld [smem:[#allocation9 + $0x10e]]
        %3539 = vrot.lane.b32.xlu0 %v3536, 3
        %v3540 = vpop.permute.xlu0 %3539
        %3541 = vrot.lane.b32.xlu0 %v3537, 3
        %v3542 = vpop.permute.xlu0 %3541
        %v3543 = vstv %s3538
        %v3544 = vmul.f32 %v3543, %v3540
        %v3545 = vmul.f32 %v3543, %v3542
        %v3546 = vadd.f32 %v3524, %v3544
        %v3547 = vadd.f32 %v3525, %v3545
        %s3548 = sld [smem:[#allocation9 + $0x10f]]
        %3549 = vrot.lane.b32.xlu0 %v3536, 2
        %v3550 = vpop.permute.xlu0 %3549
        %3551 = vrot.lane.b32.xlu0 %v3537, 2
        %v3552 = vpop.permute.xlu0 %3551
        %v3553 = vstv %s3548
        %v3554 = vmul.f32 %v3553, %v3550
        %v3555 = vmul.f32 %v3553, %v3552
        %v3556 = vadd.f32 %v3534, %v3554
        %v3557 = vadd.f32 %v3535, %v3555
        %s3558 = sld [smem:[#allocation9 + $0x110]]
        %3559 = vrot.lane.b32.xlu0 %v3536, 1
        %v3560 = vpop.permute.xlu0 %3559
        %3561 = vrot.lane.b32.xlu0 %v3537, 1
        %v3562 = vpop.permute.xlu0 %3561
        %v3563 = vstv %s3558
        %v3564 = vmul.f32 %v3563, %v3560
        %v3565 = vmul.f32 %v3563, %v3562
        %v3566 = vadd.f32 %v3546, %v3564
        %v3567 = vadd.f32 %v3547, %v3565
        %s3568 = sld [smem:[#allocation9 + $0x111]]
        %v3569 = vstv %s3568
        %v3570 = vmul.f32 %v3569, %v3536
        %v3571 = vmul.f32 %v3569, %v3537
        %v3572 = vadd.f32 %v3556, %v3570
        %v3573 = vadd.f32 %v3557, %v3571
        %s3574 = sld [smem:[#allocation9 + $0x112]]
        %3575 = vrot.lane.b32.xlu0 %v3536, 127
        %v3576 = vpop.permute.xlu0 %3575
        %3577 = vrot.lane.b32.xlu0 %v3537, 127
        %v3578 = vpop.permute.xlu0 %3577
        %v3579 = vstv %s3574
        %v3580 = vmul.f32 %v3579, %v3576
        %v3581 = vmul.f32 %v3579, %v3578
        %v3582 = vadd.f32 %v3566, %v3580
        %v3583 = vadd.f32 %v3567, %v3581
        %s3584 = sld [smem:[#allocation9 + $0x113]]
        %3585 = vrot.lane.b32.xlu0 %v3536, 126
        %v3586 = vpop.permute.xlu0 %3585
        %3587 = vrot.lane.b32.xlu0 %v3537, 126
        %v3588 = vpop.permute.xlu0 %3587
        %v3589 = vstv %s3584
        %v3590 = vmul.f32 %v3589, %v3586
        %v3591 = vmul.f32 %v3589, %v3588
        %v3592 = vadd.f32 %v3572, %v3590
        %v3593 = vadd.f32 %v3573, %v3591
        %s3594 = sld [smem:[#allocation9 + $0x114]]
        %3595 = vrot.lane.b32.xlu0 %v3536, 125
        %v3596 = vpop.permute.xlu0 %3595
        %3597 = vrot.lane.b32.xlu0 %v3537, 125
        %v3598 = vpop.permute.xlu0 %3597
        %v3599 = vstv %s3594
        %v3600 = vmul.f32 %v3599, %v3596
        %v3601 = vmul.f32 %v3599, %v3598
        %v3602 = vadd.f32 %v3582, %v3600
        %v3603 = vadd.f32 %v3583, %v3601
        %v3604 = vld [vmem:[%s2284 + $0x3] sm:$0xff]
        %v3605 = vld [vmem:[%s2284 + $0xb] sm:$0xff]
        %s3606 = sld [smem:[#allocation9 + $0x115]]
        %3607 = vrot.lane.b32.xlu0 %v3604, 3
        %v3608 = vpop.permute.xlu0 %3607
        %3609 = vrot.lane.b32.xlu0 %v3605, 3
        %v3610 = vpop.permute.xlu0 %3609
        %v3611 = vstv %s3606
        %v3612 = vmul.f32 %v3611, %v3608
        %v3613 = vmul.f32 %v3611, %v3610
        %v3614 = vadd.f32 %v3592, %v3612
        %v3615 = vadd.f32 %v3593, %v3613
        %s3616 = sld [smem:[#allocation9 + $0x116]]
        %3617 = vrot.lane.b32.xlu0 %v3604, 2
        %v3618 = vpop.permute.xlu0 %3617
        %3619 = vrot.lane.b32.xlu0 %v3605, 2
        %v3620 = vpop.permute.xlu0 %3619
        %v3621 = vstv %s3616
        %v3622 = vmul.f32 %v3621, %v3618
        %v3623 = vmul.f32 %v3621, %v3620
        %v3624 = vadd.f32 %v3602, %v3622
        %v3625 = vadd.f32 %v3603, %v3623
        %s3626 = sld [smem:[#allocation9 + $0x117]]
        %3627 = vrot.lane.b32.xlu0 %v3604, 1
        %v3628 = vpop.permute.xlu0 %3627
        %3629 = vrot.lane.b32.xlu0 %v3605, 1
        %v3630 = vpop.permute.xlu0 %3629
        %v3631 = vstv %s3626
        %v3632 = vmul.f32 %v3631, %v3628
        %v3633 = vmul.f32 %v3631, %v3630
        %v3634 = vadd.f32 %v3614, %v3632
        %v3635 = vadd.f32 %v3615, %v3633
        %s3636 = sld [smem:[#allocation9 + $0x118]]
        %v3637 = vstv %s3636
        %v3638 = vmul.f32 %v3637, %v3604
        %v3639 = vmul.f32 %v3637, %v3605
        %v3640 = vadd.f32 %v3624, %v3638
        %v3641 = vadd.f32 %v3625, %v3639
        %s3642 = sld [smem:[#allocation9 + $0x119]]
        %3643 = vrot.lane.b32.xlu0 %v3604, 127
        %v3644 = vpop.permute.xlu0 %3643
        %3645 = vrot.lane.b32.xlu0 %v3605, 127
        %v3646 = vpop.permute.xlu0 %3645
        %v3647 = vstv %s3642
        %v3648 = vmul.f32 %v3647, %v3644
        %v3649 = vmul.f32 %v3647, %v3646
        %v3650 = vadd.f32 %v3634, %v3648
        %v3651 = vadd.f32 %v3635, %v3649
        %s3652 = sld [smem:[#allocation9 + $0x11a]]
        %3653 = vrot.lane.b32.xlu0 %v3604, 126
        %v3654 = vpop.permute.xlu0 %3653
        %3655 = vrot.lane.b32.xlu0 %v3605, 126
        %v3656 = vpop.permute.xlu0 %3655
        %v3657 = vstv %s3652
        %v3658 = vmul.f32 %v3657, %v3654
        %v3659 = vmul.f32 %v3657, %v3656
        %v3660 = vadd.f32 %v3640, %v3658
        %v3661 = vadd.f32 %v3641, %v3659
        %s3662 = sld [smem:[#allocation9 + $0x11b]]
        %3663 = vrot.lane.b32.xlu0 %v3604, 125
        %v3664 = vpop.permute.xlu0 %3663
        %3665 = vrot.lane.b32.xlu0 %v3605, 125
        %v3666 = vpop.permute.xlu0 %3665
        %v3667 = vstv %s3662
        %v3668 = vmul.f32 %v3667, %v3664
        %v3669 = vmul.f32 %v3667, %v3666
        %v3670 = vadd.f32 %v3650, %v3668
        %v3671 = vadd.f32 %v3651, %v3669
        %v3672 = vld [vmem:[%s2284 + $0x4] sm:$0xff]
        %v3673 = vld [vmem:[%s2284 + $0xc] sm:$0xff]
        %s3674 = sld [smem:[#allocation9 + $0x11c]]
        %3675 = vrot.lane.b32.xlu0 %v3672, 3
        %v3676 = vpop.permute.xlu0 %3675
        %3677 = vrot.lane.b32.xlu0 %v3673, 3
        %v3678 = vpop.permute.xlu0 %3677
        %v3679 = vstv %s3674
        %v3680 = vmul.f32 %v3679, %v3676
        %v3681 = vmul.f32 %v3679, %v3678
        %v3682 = vadd.f32 %v3660, %v3680
        %v3683 = vadd.f32 %v3661, %v3681
        %s3684 = sld [smem:[#allocation9 + $0x11d]]
        %3685 = vrot.lane.b32.xlu0 %v3672, 2
        %v3686 = vpop.permute.xlu0 %3685
        %3687 = vrot.lane.b32.xlu0 %v3673, 2
        %v3688 = vpop.permute.xlu0 %3687
        %v3689 = vstv %s3684
        %v3690 = vmul.f32 %v3689, %v3686
        %v3691 = vmul.f32 %v3689, %v3688
        %v3692 = vadd.f32 %v3670, %v3690
        %v3693 = vadd.f32 %v3671, %v3691
        %s3694 = sld [smem:[#allocation9 + $0x11e]]
        %3695 = vrot.lane.b32.xlu0 %v3672, 1
        %v3696 = vpop.permute.xlu0 %3695
        %3697 = vrot.lane.b32.xlu0 %v3673, 1
        %v3698 = vpop.permute.xlu0 %3697
        %v3699 = vstv %s3694
        %v3700 = vmul.f32 %v3699, %v3696
        %v3701 = vmul.f32 %v3699, %v3698
        %v3702 = vadd.f32 %v3682, %v3700
        %v3703 = vadd.f32 %v3683, %v3701
        %s3704 = sld [smem:[#allocation9 + $0x11f]]
        %v3705 = vstv %s3704
        %v3706 = vmul.f32 %v3705, %v3672
        %v3707 = vmul.f32 %v3705, %v3673
        %v3708 = vadd.f32 %v3692, %v3706
        %v3709 = vadd.f32 %v3693, %v3707
        %s3710 = sld [smem:[#allocation9 + $0x120]]
        %3711 = vrot.lane.b32.xlu0 %v3672, 127
        %v3712 = vpop.permute.xlu0 %3711
        %3713 = vrot.lane.b32.xlu0 %v3673, 127
        %v3714 = vpop.permute.xlu0 %3713
        %v3715 = vstv %s3710
        %v3716 = vmul.f32 %v3715, %v3712
        %v3717 = vmul.f32 %v3715, %v3714
        %v3718 = vadd.f32 %v3702, %v3716
        %v3719 = vadd.f32 %v3703, %v3717
        %s3720 = sld [smem:[#allocation9 + $0x121]]
        %3721 = vrot.lane.b32.xlu0 %v3672, 126
        %v3722 = vpop.permute.xlu0 %3721
        %3723 = vrot.lane.b32.xlu0 %v3673, 126
        %v3724 = vpop.permute.xlu0 %3723
        %v3725 = vstv %s3720
        %v3726 = vmul.f32 %v3725, %v3722
        %v3727 = vmul.f32 %v3725, %v3724
        %v3728 = vadd.f32 %v3708, %v3726
        %v3729 = vadd.f32 %v3709, %v3727
        %s3730 = sld [smem:[#allocation9 + $0x122]]
        %3731 = vrot.lane.b32.xlu0 %v3672, 125
        %v3732 = vpop.permute.xlu0 %3731
        %3733 = vrot.lane.b32.xlu0 %v3673, 125
        %v3734 = vpop.permute.xlu0 %3733
        %v3735 = vstv %s3730
        %v3736 = vmul.f32 %v3735, %v3732
        %v3737 = vmul.f32 %v3735, %v3734
        %v3738 = vadd.f32 %v3718, %v3736
        %v3739 = vadd.f32 %v3719, %v3737
        %v3740 = vld [vmem:[%s2284 + $0x5] sm:$0xff]
        %v3741 = vld [vmem:[%s2284 + $0xd] sm:$0xff]
        %s3742 = sld [smem:[#allocation9 + $0x123]]
        %3743 = vrot.lane.b32.xlu0 %v3740, 3
        %v3744 = vpop.permute.xlu0 %3743
        %3745 = vrot.lane.b32.xlu0 %v3741, 3
        %v3746 = vpop.permute.xlu0 %3745
        %v3747 = vstv %s3742
        %v3748 = vmul.f32 %v3747, %v3744
        %v3749 = vmul.f32 %v3747, %v3746
        %v3750 = vadd.f32 %v3728, %v3748
        %v3751 = vadd.f32 %v3729, %v3749
        %s3752 = sld [smem:[#allocation9 + $0x124]]
        %3753 = vrot.lane.b32.xlu0 %v3740, 2
        %v3754 = vpop.permute.xlu0 %3753
        %3755 = vrot.lane.b32.xlu0 %v3741, 2
        %v3756 = vpop.permute.xlu0 %3755
        %v3757 = vstv %s3752
        %v3758 = vmul.f32 %v3757, %v3754
        %v3759 = vmul.f32 %v3757, %v3756
        %v3760 = vadd.f32 %v3738, %v3758
        %v3761 = vadd.f32 %v3739, %v3759
        %s3762 = sld [smem:[#allocation9 + $0x125]]
        %3763 = vrot.lane.b32.xlu0 %v3740, 1
        %v3764 = vpop.permute.xlu0 %3763
        %3765 = vrot.lane.b32.xlu0 %v3741, 1
        %v3766 = vpop.permute.xlu0 %3765
        %v3767 = vstv %s3762
        %v3768 = vmul.f32 %v3767, %v3764
        %v3769 = vmul.f32 %v3767, %v3766
        %v3770 = vadd.f32 %v3750, %v3768
        %v3771 = vadd.f32 %v3751, %v3769
        %s3772 = sld [smem:[#allocation9 + $0x126]]
        %v3773 = vstv %s3772
        %v3774 = vmul.f32 %v3773, %v3740
        %v3775 = vmul.f32 %v3773, %v3741
        %v3776 = vadd.f32 %v3760, %v3774
        %v3777 = vadd.f32 %v3761, %v3775
        %s3778 = sld [smem:[#allocation9 + $0x127]]
        %3779 = vrot.lane.b32.xlu0 %v3740, 127
        %v3780 = vpop.permute.xlu0 %3779
        %3781 = vrot.lane.b32.xlu0 %v3741, 127
        %v3782 = vpop.permute.xlu0 %3781
        %v3783 = vstv %s3778
        %v3784 = vmul.f32 %v3783, %v3780
        %v3785 = vmul.f32 %v3783, %v3782
        %v3786 = vadd.f32 %v3770, %v3784
        %v3787 = vadd.f32 %v3771, %v3785
        %s3788 = sld [smem:[#allocation9 + $0x128]]
        %3789 = vrot.lane.b32.xlu0 %v3740, 126
        %v3790 = vpop.permute.xlu0 %3789
        %3791 = vrot.lane.b32.xlu0 %v3741, 126
        %v3792 = vpop.permute.xlu0 %3791
        %v3793 = vstv %s3788
        %v3794 = vmul.f32 %v3793, %v3790
        %v3795 = vmul.f32 %v3793, %v3792
        %v3796 = vadd.f32 %v3776, %v3794
        %v3797 = vadd.f32 %v3777, %v3795
        %s3798 = sld [smem:[#allocation9 + $0x129]]
        %3799 = vrot.lane.b32.xlu0 %v3740, 125
        %v3800 = vpop.permute.xlu0 %3799
        %3801 = vrot.lane.b32.xlu0 %v3741, 125
        %v3802 = vpop.permute.xlu0 %3801
        %v3803 = vstv %s3798
        %v3804 = vmul.f32 %v3803, %v3800
        %v3805 = vmul.f32 %v3803, %v3802
        %v3806 = vadd.f32 %v3786, %v3804
        %v3807 = vadd.f32 %v3787, %v3805
        %v3808 = vld [vmem:[%s2284 + $0x6] sm:$0xff]
        %v3809 = vld [vmem:[%s2284 + $0xe] sm:$0xff]
        %s3810 = sld [smem:[#allocation9 + $0x12a]]
        %3811 = vrot.lane.b32.xlu0 %v3808, 3
        %v3812 = vpop.permute.xlu0 %3811
        %3813 = vrot.lane.b32.xlu0 %v3809, 3
        %v3814 = vpop.permute.xlu0 %3813
        %v3815 = vstv %s3810
        %v3816 = vmul.f32 %v3815, %v3812
        %v3817 = vmul.f32 %v3815, %v3814
        %v3818 = vadd.f32 %v3796, %v3816
        %v3819 = vadd.f32 %v3797, %v3817
        %s3820 = sld [smem:[#allocation9 + $0x12b]]
        %3821 = vrot.lane.b32.xlu0 %v3808, 2
        %v3822 = vpop.permute.xlu0 %3821
        %3823 = vrot.lane.b32.xlu0 %v3809, 2
        %v3824 = vpop.permute.xlu0 %3823
        %v3825 = vstv %s3820
        %v3826 = vmul.f32 %v3825, %v3822
        %v3827 = vmul.f32 %v3825, %v3824
        %v3828 = vadd.f32 %v3806, %v3826
        %v3829 = vadd.f32 %v3807, %v3827
        %s3830 = sld [smem:[#allocation9 + $0x12c]]
        %3831 = vrot.lane.b32.xlu0 %v3808, 1
        %v3832 = vpop.permute.xlu0 %3831
        %3833 = vrot.lane.b32.xlu0 %v3809, 1
        %v3834 = vpop.permute.xlu0 %3833
        %v3835 = vstv %s3830
        %v3836 = vmul.f32 %v3835, %v3832
        %v3837 = vmul.f32 %v3835, %v3834
        %v3838 = vadd.f32 %v3818, %v3836
        %v3839 = vadd.f32 %v3819, %v3837
        %s3840 = sld [smem:[#allocation9 + $0x12d]]
        %v3841 = vstv %s3840
        %v3842 = vmul.f32 %v3841, %v3808
        %v3843 = vmul.f32 %v3841, %v3809
        %v3844 = vadd.f32 %v3828, %v3842
        %v3845 = vadd.f32 %v3829, %v3843
        %s3846 = sld [smem:[#allocation9 + $0x12e]]
        %3847 = vrot.lane.b32.xlu0 %v3808, 127
        %v3848 = vpop.permute.xlu0 %3847
        %3849 = vrot.lane.b32.xlu0 %v3809, 127
        %v3850 = vpop.permute.xlu0 %3849
        %v3851 = vstv %s3846
        %v3852 = vmul.f32 %v3851, %v3848
        %v3853 = vmul.f32 %v3851, %v3850
        %v3854 = vadd.f32 %v3838, %v3852
        %v3855 = vadd.f32 %v3839, %v3853
        %s3856 = sld [smem:[#allocation9 + $0x12f]]
        %3857 = vrot.lane.b32.xlu0 %v3808, 126
        %v3858 = vpop.permute.xlu0 %3857
        %3859 = vrot.lane.b32.xlu0 %v3809, 126
        %v3860 = vpop.permute.xlu0 %3859
        %v3861 = vstv %s3856
        %v3862 = vmul.f32 %v3861, %v3858
        %v3863 = vmul.f32 %v3861, %v3860
        %v3864 = vadd.f32 %v3844, %v3862
        %v3865 = vadd.f32 %v3845, %v3863
        %s3866 = sld [smem:[#allocation9 + $0x130]]
        %3867 = vrot.lane.b32.xlu0 %v3808, 125
        %v3868 = vpop.permute.xlu0 %3867
        %3869 = vrot.lane.b32.xlu0 %v3809, 125
        %v3870 = vpop.permute.xlu0 %3869
        %v3871 = vstv %s3866
        %v3872 = vmul.f32 %v3871, %v3868
        %v3873 = vmul.f32 %v3871, %v3870
        %v3874 = vadd.f32 %v3854, %v3872
        %v3875 = vadd.f32 %v3855, %v3873
        %v3876 = vadd.f32 %v3874, %v3864
        %v3877 = vadd.f32 %v3875, %v3865
        %v3878 = vld [vmem:[%s2431] sm:$0xff]
        %v3879 = vld [vmem:[%s2431 + $0x8] sm:$0xff]
        %s3880 = sld [smem:[#allocation9 + $0x180]]
        %3881 = vrot.lane.b32.xlu0 %v3878, 3
        %v3882 = vpop.permute.xlu0 %3881
        %3883 = vrot.lane.b32.xlu0 %v3879, 3
        %v3884 = vpop.permute.xlu0 %3883
        %v3885 = vstv %s3880
        %v3886 = vmul.f32 %v3885, %v3882
        %v3887 = vmul.f32 %v3885, %v3884
        %v3888 = vadd.f32 %v3886, 0.0
        %v3889 = vadd.f32 %v3887, 0.0
        %s3890 = sld [smem:[#allocation9 + $0x181]]
        %3891 = vrot.lane.b32.xlu0 %v3878, 2
        %v3892 = vpop.permute.xlu0 %3891
        %3893 = vrot.lane.b32.xlu0 %v3879, 2
        %v3894 = vpop.permute.xlu0 %3893
        %v3895 = vstv %s3890
        %v3896 = vmul.f32 %v3895, %v3892
        %v3897 = vmul.f32 %v3895, %v3894
        %v3898 = vadd.f32 %v3896, 0.0
        %v3899 = vadd.f32 %v3897, 0.0
        %s3900 = sld [smem:[#allocation9 + $0x182]]
        %3901 = vrot.lane.b32.xlu0 %v3878, 1
        %v3902 = vpop.permute.xlu0 %3901
        %3903 = vrot.lane.b32.xlu0 %v3879, 1
        %v3904 = vpop.permute.xlu0 %3903
        %v3905 = vstv %s3900
        %v3906 = vmul.f32 %v3905, %v3902
        %v3907 = vmul.f32 %v3905, %v3904
        %v3908 = vadd.f32 %v3888, %v3906
        %v3909 = vadd.f32 %v3889, %v3907
        %s3910 = sld [smem:[#allocation9 + $0x183]]
        %v3911 = vstv %s3910
        %v3912 = vmul.f32 %v3911, %v3878
        %v3913 = vmul.f32 %v3911, %v3879
        %v3914 = vadd.f32 %v3898, %v3912
        %v3915 = vadd.f32 %v3899, %v3913
        %s3916 = sld [smem:[#allocation9 + $0x184]]
        %3917 = vrot.lane.b32.xlu0 %v3878, 127
        %v3918 = vpop.permute.xlu0 %3917
        %3919 = vrot.lane.b32.xlu0 %v3879, 127
        %v3920 = vpop.permute.xlu0 %3919
        %v3921 = vstv %s3916
        %v3922 = vmul.f32 %v3921, %v3918
        %v3923 = vmul.f32 %v3921, %v3920
        %v3924 = vadd.f32 %v3908, %v3922
        %v3925 = vadd.f32 %v3909, %v3923
        %s3926 = sld [smem:[#allocation9 + $0x185]]
        %3927 = vrot.lane.b32.xlu0 %v3878, 126
        %v3928 = vpop.permute.xlu0 %3927
        %3929 = vrot.lane.b32.xlu0 %v3879, 126
        %v3930 = vpop.permute.xlu0 %3929
        %v3931 = vstv %s3926
        %v3932 = vmul.f32 %v3931, %v3928
        %v3933 = vmul.f32 %v3931, %v3930
        %v3934 = vadd.f32 %v3914, %v3932
        %v3935 = vadd.f32 %v3915, %v3933
        %s3936 = sld [smem:[#allocation9 + $0x186]]
        %3937 = vrot.lane.b32.xlu0 %v3878, 125
        %v3938 = vpop.permute.xlu0 %3937
        %3939 = vrot.lane.b32.xlu0 %v3879, 125
        %v3940 = vpop.permute.xlu0 %3939
        %v3941 = vstv %s3936
        %v3942 = vmul.f32 %v3941, %v3938
        %v3943 = vmul.f32 %v3941, %v3940
        %v3944 = vadd.f32 %v3924, %v3942
        %v3945 = vadd.f32 %v3925, %v3943
        %v3946 = vld [vmem:[%s2431 + $0x1] sm:$0xff]
        %v3947 = vld [vmem:[%s2431 + $0x9] sm:$0xff]
        %s3948 = sld [smem:[#allocation9 + $0x187]]
        %3949 = vrot.lane.b32.xlu0 %v3946, 3
        %v3950 = vpop.permute.xlu0 %3949
        %3951 = vrot.lane.b32.xlu0 %v3947, 3
        %v3952 = vpop.permute.xlu0 %3951
        %v3953 = vstv %s3948
        %v3954 = vmul.f32 %v3953, %v3950
        %v3955 = vmul.f32 %v3953, %v3952
        %v3956 = vadd.f32 %v3934, %v3954
        %v3957 = vadd.f32 %v3935, %v3955
        %s3958 = sld [smem:[#allocation9 + $0x188]]
        %3959 = vrot.lane.b32.xlu0 %v3946, 2
        %v3960 = vpop.permute.xlu0 %3959
        %3961 = vrot.lane.b32.xlu0 %v3947, 2
        %v3962 = vpop.permute.xlu0 %3961
        %v3963 = vstv %s3958
        %v3964 = vmul.f32 %v3963, %v3960
        %v3965 = vmul.f32 %v3963, %v3962
        %v3966 = vadd.f32 %v3944, %v3964
        %v3967 = vadd.f32 %v3945, %v3965
        %s3968 = sld [smem:[#allocation9 + $0x189]]
        %3969 = vrot.lane.b32.xlu0 %v3946, 1
        %v3970 = vpop.permute.xlu0 %3969
        %3971 = vrot.lane.b32.xlu0 %v3947, 1
        %v3972 = vpop.permute.xlu0 %3971
        %v3973 = vstv %s3968
        %v3974 = vmul.f32 %v3973, %v3970
        %v3975 = vmul.f32 %v3973, %v3972
        %v3976 = vadd.f32 %v3956, %v3974
        %v3977 = vadd.f32 %v3957, %v3975
        %s3978 = sld [smem:[#allocation9 + $0x18a]]
        %v3979 = vstv %s3978
        %v3980 = vmul.f32 %v3979, %v3946
        %v3981 = vmul.f32 %v3979, %v3947
        %v3982 = vadd.f32 %v3966, %v3980
        %v3983 = vadd.f32 %v3967, %v3981
        %s3984 = sld [smem:[#allocation9 + $0x18b]]
        %3985 = vrot.lane.b32.xlu0 %v3946, 127
        %v3986 = vpop.permute.xlu0 %3985
        %3987 = vrot.lane.b32.xlu0 %v3947, 127
        %v3988 = vpop.permute.xlu0 %3987
        %v3989 = vstv %s3984
        %v3990 = vmul.f32 %v3989, %v3986
        %v3991 = vmul.f32 %v3989, %v3988
        %v3992 = vadd.f32 %v3976, %v3990
        %v3993 = vadd.f32 %v3977, %v3991
        %s3994 = sld [smem:[#allocation9 + $0x18c]]
        %3995 = vrot.lane.b32.xlu0 %v3946, 126
        %v3996 = vpop.permute.xlu0 %3995
        %3997 = vrot.lane.b32.xlu0 %v3947, 126
        %v3998 = vpop.permute.xlu0 %3997
        %v3999 = vstv %s3994
        %v4000 = vmul.f32 %v3999, %v3996
        %v4001 = vmul.f32 %v3999, %v3998
        %v4002 = vadd.f32 %v3982, %v4000
        %v4003 = vadd.f32 %v3983, %v4001
        %s4004 = sld [smem:[#allocation9 + $0x18d]]
        %4005 = vrot.lane.b32.xlu0 %v3946, 125
        %v4006 = vpop.permute.xlu0 %4005
        %4007 = vrot.lane.b32.xlu0 %v3947, 125
        %v4008 = vpop.permute.xlu0 %4007
        %v4009 = vstv %s4004
        %v4010 = vmul.f32 %v4009, %v4006
        %v4011 = vmul.f32 %v4009, %v4008
        %v4012 = vadd.f32 %v3992, %v4010
        %v4013 = vadd.f32 %v3993, %v4011
        %v4014 = vld [vmem:[%s2431 + $0x2] sm:$0xff]
        %v4015 = vld [vmem:[%s2431 + $0xa] sm:$0xff]
        %s4016 = sld [smem:[#allocation9 + $0x18e]]
        %4017 = vrot.lane.b32.xlu0 %v4014, 3
        %v4018 = vpop.permute.xlu0 %4017
        %4019 = vrot.lane.b32.xlu0 %v4015, 3
        %v4020 = vpop.permute.xlu0 %4019
        %v4021 = vstv %s4016
        %v4022 = vmul.f32 %v4021, %v4018
        %v4023 = vmul.f32 %v4021, %v4020
        %v4024 = vadd.f32 %v4002, %v4022
        %v4025 = vadd.f32 %v4003, %v4023
        %s4026 = sld [smem:[#allocation9 + $0x18f]]
        %4027 = vrot.lane.b32.xlu0 %v4014, 2
        %v4028 = vpop.permute.xlu0 %4027
        %4029 = vrot.lane.b32.xlu0 %v4015, 2
        %v4030 = vpop.permute.xlu0 %4029
        %v4031 = vstv %s4026
        %v4032 = vmul.f32 %v4031, %v4028
        %v4033 = vmul.f32 %v4031, %v4030
        %v4034 = vadd.f32 %v4012, %v4032
        %v4035 = vadd.f32 %v4013, %v4033
        %s4036 = sld [smem:[#allocation9 + $0x190]]
        %4037 = vrot.lane.b32.xlu0 %v4014, 1
        %v4038 = vpop.permute.xlu0 %4037
        %4039 = vrot.lane.b32.xlu0 %v4015, 1
        %v4040 = vpop.permute.xlu0 %4039
        %v4041 = vstv %s4036
        %v4042 = vmul.f32 %v4041, %v4038
        %v4043 = vmul.f32 %v4041, %v4040
        %v4044 = vadd.f32 %v4024, %v4042
        %v4045 = vadd.f32 %v4025, %v4043
        %s4046 = sld [smem:[#allocation9 + $0x191]]
        %v4047 = vstv %s4046
        %v4048 = vmul.f32 %v4047, %v4014
        %v4049 = vmul.f32 %v4047, %v4015
        %v4050 = vadd.f32 %v4034, %v4048
        %v4051 = vadd.f32 %v4035, %v4049
        %s4052 = sld [smem:[#allocation9 + $0x192]]
        %4053 = vrot.lane.b32.xlu0 %v4014, 127
        %v4054 = vpop.permute.xlu0 %4053
        %4055 = vrot.lane.b32.xlu0 %v4015, 127
        %v4056 = vpop.permute.xlu0 %4055
        %v4057 = vstv %s4052
        %v4058 = vmul.f32 %v4057, %v4054
        %v4059 = vmul.f32 %v4057, %v4056
        %v4060 = vadd.f32 %v4044, %v4058
        %v4061 = vadd.f32 %v4045, %v4059
        %s4062 = sld [smem:[#allocation9 + $0x193]]
        %4063 = vrot.lane.b32.xlu0 %v4014, 126
        %v4064 = vpop.permute.xlu0 %4063
        %4065 = vrot.lane.b32.xlu0 %v4015, 126
        %v4066 = vpop.permute.xlu0 %4065
        %v4067 = vstv %s4062
        %v4068 = vmul.f32 %v4067, %v4064
        %v4069 = vmul.f32 %v4067, %v4066
        %v4070 = vadd.f32 %v4050, %v4068
        %v4071 = vadd.f32 %v4051, %v4069
        %s4072 = sld [smem:[#allocation9 + $0x194]]
        %4073 = vrot.lane.b32.xlu0 %v4014, 125
        %v4074 = vpop.permute.xlu0 %4073
        %4075 = vrot.lane.b32.xlu0 %v4015, 125
        %v4076 = vpop.permute.xlu0 %4075
        %v4077 = vstv %s4072
        %v4078 = vmul.f32 %v4077, %v4074
        %v4079 = vmul.f32 %v4077, %v4076
        %v4080 = vadd.f32 %v4060, %v4078
        %v4081 = vadd.f32 %v4061, %v4079
        %v4082 = vld [vmem:[%s2431 + $0x3] sm:$0xff]
        %v4083 = vld [vmem:[%s2431 + $0xb] sm:$0xff]
        %s4084 = sld [smem:[#allocation9 + $0x195]]
        %4085 = vrot.lane.b32.xlu0 %v4082, 3
        %v4086 = vpop.permute.xlu0 %4085
        %4087 = vrot.lane.b32.xlu0 %v4083, 3
        %v4088 = vpop.permute.xlu0 %4087
        %v4089 = vstv %s4084
        %v4090 = vmul.f32 %v4089, %v4086
        %v4091 = vmul.f32 %v4089, %v4088
        %v4092 = vadd.f32 %v4070, %v4090
        %v4093 = vadd.f32 %v4071, %v4091
        %s4094 = sld [smem:[#allocation9 + $0x196]]
        %4095 = vrot.lane.b32.xlu0 %v4082, 2
        %v4096 = vpop.permute.xlu0 %4095
        %4097 = vrot.lane.b32.xlu0 %v4083, 2
        %v4098 = vpop.permute.xlu0 %4097
        %v4099 = vstv %s4094
        %v4100 = vmul.f32 %v4099, %v4096
        %v4101 = vmul.f32 %v4099, %v4098
        %v4102 = vadd.f32 %v4080, %v4100
        %v4103 = vadd.f32 %v4081, %v4101
        %s4104 = sld [smem:[#allocation9 + $0x197]]
        %4105 = vrot.lane.b32.xlu0 %v4082, 1
        %v4106 = vpop.permute.xlu0 %4105
        %4107 = vrot.lane.b32.xlu0 %v4083, 1
        %v4108 = vpop.permute.xlu0 %4107
        %v4109 = vstv %s4104
        %v4110 = vmul.f32 %v4109, %v4106
        %v4111 = vmul.f32 %v4109, %v4108
        %v4112 = vadd.f32 %v4092, %v4110
        %v4113 = vadd.f32 %v4093, %v4111
        %s4114 = sld [smem:[#allocation9 + $0x198]]
        %v4115 = vstv %s4114
        %v4116 = vmul.f32 %v4115, %v4082
        %v4117 = vmul.f32 %v4115, %v4083
        %v4118 = vadd.f32 %v4102, %v4116
        %v4119 = vadd.f32 %v4103, %v4117
        %s4120 = sld [smem:[#allocation9 + $0x199]]
        %4121 = vrot.lane.b32.xlu0 %v4082, 127
        %v4122 = vpop.permute.xlu0 %4121
        %4123 = vrot.lane.b32.xlu0 %v4083, 127
        %v4124 = vpop.permute.xlu0 %4123
        %v4125 = vstv %s4120
        %v4126 = vmul.f32 %v4125, %v4122
        %v4127 = vmul.f32 %v4125, %v4124
        %v4128 = vadd.f32 %v4112, %v4126
        %v4129 = vadd.f32 %v4113, %v4127
        %s4130 = sld [smem:[#allocation9 + $0x19a]]
        %4131 = vrot.lane.b32.xlu0 %v4082, 126
        %v4132 = vpop.permute.xlu0 %4131
        %4133 = vrot.lane.b32.xlu0 %v4083, 126
        %v4134 = vpop.permute.xlu0 %4133
        %v4135 = vstv %s4130
        %v4136 = vmul.f32 %v4135, %v4132
        %v4137 = vmul.f32 %v4135, %v4134
        %v4138 = vadd.f32 %v4118, %v4136
        %v4139 = vadd.f32 %v4119, %v4137
        %s4140 = sld [smem:[#allocation9 + $0x19b]]
        %4141 = vrot.lane.b32.xlu0 %v4082, 125
        %v4142 = vpop.permute.xlu0 %4141
        %4143 = vrot.lane.b32.xlu0 %v4083, 125
        %v4144 = vpop.permute.xlu0 %4143
        %v4145 = vstv %s4140
        %v4146 = vmul.f32 %v4145, %v4142
        %v4147 = vmul.f32 %v4145, %v4144
        %v4148 = vadd.f32 %v4128, %v4146
        %v4149 = vadd.f32 %v4129, %v4147
        %v4150 = vld [vmem:[%s2431 + $0x4] sm:$0xff]
        %v4151 = vld [vmem:[%s2431 + $0xc] sm:$0xff]
        %s4152 = sld [smem:[#allocation9 + $0x19c]]
        %4153 = vrot.lane.b32.xlu0 %v4150, 3
        %v4154 = vpop.permute.xlu0 %4153
        %4155 = vrot.lane.b32.xlu0 %v4151, 3
        %v4156 = vpop.permute.xlu0 %4155
        %v4157 = vstv %s4152
        %v4158 = vmul.f32 %v4157, %v4154
        %v4159 = vmul.f32 %v4157, %v4156
        %v4160 = vadd.f32 %v4138, %v4158
        %v4161 = vadd.f32 %v4139, %v4159
        %s4162 = sld [smem:[#allocation9 + $0x19d]]
        %4163 = vrot.lane.b32.xlu0 %v4150, 2
        %v4164 = vpop.permute.xlu0 %4163
        %4165 = vrot.lane.b32.xlu0 %v4151, 2
        %v4166 = vpop.permute.xlu0 %4165
        %v4167 = vstv %s4162
        %v4168 = vmul.f32 %v4167, %v4164
        %v4169 = vmul.f32 %v4167, %v4166
        %v4170 = vadd.f32 %v4148, %v4168
        %v4171 = vadd.f32 %v4149, %v4169
        %s4172 = sld [smem:[#allocation9 + $0x19e]]
        %4173 = vrot.lane.b32.xlu0 %v4150, 1
        %v4174 = vpop.permute.xlu0 %4173
        %4175 = vrot.lane.b32.xlu0 %v4151, 1
        %v4176 = vpop.permute.xlu0 %4175
        %v4177 = vstv %s4172
        %v4178 = vmul.f32 %v4177, %v4174
        %v4179 = vmul.f32 %v4177, %v4176
        %v4180 = vadd.f32 %v4160, %v4178
        %v4181 = vadd.f32 %v4161, %v4179
        %s4182 = sld [smem:[#allocation9 + $0x19f]]
        %v4183 = vstv %s4182
        %v4184 = vmul.f32 %v4183, %v4150
        %v4185 = vmul.f32 %v4183, %v4151
        %v4186 = vadd.f32 %v4170, %v4184
        %v4187 = vadd.f32 %v4171, %v4185
        %s4188 = sld [smem:[#allocation9 + $0x1a0]]
        %4189 = vrot.lane.b32.xlu0 %v4150, 127
        %v4190 = vpop.permute.xlu0 %4189
        %4191 = vrot.lane.b32.xlu0 %v4151, 127
        %v4192 = vpop.permute.xlu0 %4191
        %v4193 = vstv %s4188
        %v4194 = vmul.f32 %v4193, %v4190
        %v4195 = vmul.f32 %v4193, %v4192
        %v4196 = vadd.f32 %v4180, %v4194
        %v4197 = vadd.f32 %v4181, %v4195
        %s4198 = sld [smem:[#allocation9 + $0x1a1]]
        %4199 = vrot.lane.b32.xlu0 %v4150, 126
        %v4200 = vpop.permute.xlu0 %4199
        %4201 = vrot.lane.b32.xlu0 %v4151, 126
        %v4202 = vpop.permute.xlu0 %4201
        %v4203 = vstv %s4198
        %v4204 = vmul.f32 %v4203, %v4200
        %v4205 = vmul.f32 %v4203, %v4202
        %v4206 = vadd.f32 %v4186, %v4204
        %v4207 = vadd.f32 %v4187, %v4205
        %s4208 = sld [smem:[#allocation9 + $0x1a2]]
        %4209 = vrot.lane.b32.xlu0 %v4150, 125
        %v4210 = vpop.permute.xlu0 %4209
        %4211 = vrot.lane.b32.xlu0 %v4151, 125
        %v4212 = vpop.permute.xlu0 %4211
        %v4213 = vstv %s4208
        %v4214 = vmul.f32 %v4213, %v4210
        %v4215 = vmul.f32 %v4213, %v4212
        %v4216 = vadd.f32 %v4196, %v4214
        %v4217 = vadd.f32 %v4197, %v4215
        %v4218 = vld [vmem:[%s2431 + $0x5] sm:$0xff]
        %v4219 = vld [vmem:[%s2431 + $0xd] sm:$0xff]
        %s4220 = sld [smem:[#allocation9 + $0x1a3]]
        %4221 = vrot.lane.b32.xlu0 %v4218, 3
        %v4222 = vpop.permute.xlu0 %4221
        %4223 = vrot.lane.b32.xlu0 %v4219, 3
        %v4224 = vpop.permute.xlu0 %4223
        %v4225 = vstv %s4220
        %v4226 = vmul.f32 %v4225, %v4222
        %v4227 = vmul.f32 %v4225, %v4224
        %v4228 = vadd.f32 %v4206, %v4226
        %v4229 = vadd.f32 %v4207, %v4227
        %s4230 = sld [smem:[#allocation9 + $0x1a4]]
        %4231 = vrot.lane.b32.xlu0 %v4218, 2
        %v4232 = vpop.permute.xlu0 %4231
        %4233 = vrot.lane.b32.xlu0 %v4219, 2
        %v4234 = vpop.permute.xlu0 %4233
        %v4235 = vstv %s4230
        %v4236 = vmul.f32 %v4235, %v4232
        %v4237 = vmul.f32 %v4235, %v4234
        %v4238 = vadd.f32 %v4216, %v4236
        %v4239 = vadd.f32 %v4217, %v4237
        %s4240 = sld [smem:[#allocation9 + $0x1a5]]
        %4241 = vrot.lane.b32.xlu0 %v4218, 1
        %v4242 = vpop.permute.xlu0 %4241
        %4243 = vrot.lane.b32.xlu0 %v4219, 1
        %v4244 = vpop.permute.xlu0 %4243
        %v4245 = vstv %s4240
        %v4246 = vmul.f32 %v4245, %v4242
        %v4247 = vmul.f32 %v4245, %v4244
        %v4248 = vadd.f32 %v4228, %v4246
        %v4249 = vadd.f32 %v4229, %v4247
        %s4250 = sld [smem:[#allocation9 + $0x1a6]]
        %v4251 = vstv %s4250
        %v4252 = vmul.f32 %v4251, %v4218
        %v4253 = vmul.f32 %v4251, %v4219
        %v4254 = vadd.f32 %v4238, %v4252
        %v4255 = vadd.f32 %v4239, %v4253
        %s4256 = sld [smem:[#allocation9 + $0x1a7]]
        %4257 = vrot.lane.b32.xlu0 %v4218, 127
        %v4258 = vpop.permute.xlu0 %4257
        %4259 = vrot.lane.b32.xlu0 %v4219, 127
        %v4260 = vpop.permute.xlu0 %4259
        %v4261 = vstv %s4256
        %v4262 = vmul.f32 %v4261, %v4258
        %v4263 = vmul.f32 %v4261, %v4260
        %v4264 = vadd.f32 %v4248, %v4262
        %v4265 = vadd.f32 %v4249, %v4263
        %s4266 = sld [smem:[#allocation9 + $0x1a8]]
        %4267 = vrot.lane.b32.xlu0 %v4218, 126
        %v4268 = vpop.permute.xlu0 %4267
        %4269 = vrot.lane.b32.xlu0 %v4219, 126
        %v4270 = vpop.permute.xlu0 %4269
        %v4271 = vstv %s4266
        %v4272 = vmul.f32 %v4271, %v4268
        %v4273 = vmul.f32 %v4271, %v4270
        %v4274 = vadd.f32 %v4254, %v4272
        %v4275 = vadd.f32 %v4255, %v4273
        %s4276 = sld [smem:[#allocation9 + $0x1a9]]
        %4277 = vrot.lane.b32.xlu0 %v4218, 125
        %v4278 = vpop.permute.xlu0 %4277
        %4279 = vrot.lane.b32.xlu0 %v4219, 125
        %v4280 = vpop.permute.xlu0 %4279
        %v4281 = vstv %s4276
        %v4282 = vmul.f32 %v4281, %v4278
        %v4283 = vmul.f32 %v4281, %v4280
        %v4284 = vadd.f32 %v4264, %v4282
        %v4285 = vadd.f32 %v4265, %v4283
        %v4286 = vld [vmem:[%s2431 + $0x6] sm:$0xff]
        %v4287 = vld [vmem:[%s2431 + $0xe] sm:$0xff]
        %s4288 = sld [smem:[#allocation9 + $0x1aa]]
        %4289 = vrot.lane.b32.xlu0 %v4286, 3
        %v4290 = vpop.permute.xlu0 %4289
        %4291 = vrot.lane.b32.xlu0 %v4287, 3
        %v4292 = vpop.permute.xlu0 %4291
        %v4293 = vstv %s4288
        %v4294 = vmul.f32 %v4293, %v4290
        %v4295 = vmul.f32 %v4293, %v4292
        %v4296 = vadd.f32 %v4274, %v4294
        %v4297 = vadd.f32 %v4275, %v4295
        %s4298 = sld [smem:[#allocation9 + $0x1ab]]
        %4299 = vrot.lane.b32.xlu0 %v4286, 2
        %v4300 = vpop.permute.xlu0 %4299
        %4301 = vrot.lane.b32.xlu0 %v4287, 2
        %v4302 = vpop.permute.xlu0 %4301
        %v4303 = vstv %s4298
        %v4304 = vmul.f32 %v4303, %v4300
        %v4305 = vmul.f32 %v4303, %v4302
        %v4306 = vadd.f32 %v4284, %v4304
        %v4307 = vadd.f32 %v4285, %v4305
        %s4308 = sld [smem:[#allocation9 + $0x1ac]]
        %4309 = vrot.lane.b32.xlu0 %v4286, 1
        %v4310 = vpop.permute.xlu0 %4309
        %4311 = vrot.lane.b32.xlu0 %v4287, 1
        %v4312 = vpop.permute.xlu0 %4311
        %v4313 = vstv %s4308
        %v4314 = vmul.f32 %v4313, %v4310
        %v4315 = vmul.f32 %v4313, %v4312
        %v4316 = vadd.f32 %v4296, %v4314
        %v4317 = vadd.f32 %v4297, %v4315
        %s4318 = sld [smem:[#allocation9 + $0x1ad]]
        %v4319 = vstv %s4318
        %v4320 = vmul.f32 %v4319, %v4286
        %v4321 = vmul.f32 %v4319, %v4287
        %v4322 = vadd.f32 %v4306, %v4320
        %v4323 = vadd.f32 %v4307, %v4321
        %s4324 = sld [smem:[#allocation9 + $0x1ae]]
        %4325 = vrot.lane.b32.xlu0 %v4286, 127
        %v4326 = vpop.permute.xlu0 %4325
        %4327 = vrot.lane.b32.xlu0 %v4287, 127
        %v4328 = vpop.permute.xlu0 %4327
        %v4329 = vstv %s4324
        %v4330 = vmul.f32 %v4329, %v4326
        %v4331 = vmul.f32 %v4329, %v4328
        %v4332 = vadd.f32 %v4316, %v4330
        %v4333 = vadd.f32 %v4317, %v4331
        %s4334 = sld [smem:[#allocation9 + $0x1af]]
        %4335 = vrot.lane.b32.xlu0 %v4286, 126
        %v4336 = vpop.permute.xlu0 %4335
        %4337 = vrot.lane.b32.xlu0 %v4287, 126
        %v4338 = vpop.permute.xlu0 %4337
        %v4339 = vstv %s4334
        %v4340 = vmul.f32 %v4339, %v4336
        %v4341 = vmul.f32 %v4339, %v4338
        %v4342 = vadd.f32 %v4322, %v4340
        %v4343 = vadd.f32 %v4323, %v4341
        %s4344 = sld [smem:[#allocation9 + $0x1b0]]
        %4345 = vrot.lane.b32.xlu0 %v4286, 125
        %v4346 = vpop.permute.xlu0 %4345
        %4347 = vrot.lane.b32.xlu0 %v4287, 125
        %v4348 = vpop.permute.xlu0 %4347
        %v4349 = vstv %s4344
        %v4350 = vmul.f32 %v4349, %v4346
        %v4351 = vmul.f32 %v4349, %v4348
        %v4352 = vadd.f32 %v4332, %v4350
        %v4353 = vadd.f32 %v4333, %v4351
        %v4354 = vadd.f32 %v4352, %v4342
        %v4355 = vadd.f32 %v4353, %v4343
        %v4356 = vadd.f32 %v3876, %v4354
        %v4357 = vadd.f32 %v3877, %v4355
        %v4358 = vxor.u32 %v3398, 2147483648
        %v4359 = vxor.u32 %v3399, 2147483648
        %v4360 = vmul.f32 %v4358, 1.442695
        %v4361 = vpow.pop %v4360
        %v4362 = vmul.f32 %v4359, 1.442695
        %v4363 = vpow.pop %v4362
        %v4364 = vadd.f32 %v4361, 1.0
        %v4365 = vadd.f32 %v4363, 1.0
        %v4366 = vrcp.pop %v4364
        %v4367 = vmul.f32 1.0, %v4366
        %v4368 = vrcp.pop %v4365
        %v4369 = vmul.f32 1.0, %v4368
        %v4370 = vcombine.high %v4367, 0.0
        %v4372 = vunpack.c.l.s4 1983009808
        %v4373 = vunpack.c.0.s8 %v4372
        %v4374 = vlaneseq
        %v4375 = vshrl.u32 %v4374, 7
        %v4376 = vsub.s32 %v4373, %v4375
        %v4377 = vrot.slane %v4367, %v4376
        %v4379 = vunpack.c.l.s4 1983009808
        %v4380 = vunpack.c.0.s8 %v4379
        %v4381 = vlaneseq
        %v4382 = vshrl.u32 %v4381, 7
        %v4383 = vsub.s32 %v4380, %v4382
        %v4384 = vrot.slane %v4370, %v4383
        %v4385 = vcombine.high %v4377, 0.0
        %v4387 = vunpack.c.l.s4 1934713408
        %v4388 = vunpack.c.0.s8 %v4387
        %v4389 = vlaneseq
        %v4390 = vshrl.u32 %v4389, 7
        %v4391 = vsub.s32 %v4388, %v4390
        %v4392 = vrot.slane %v4377, %v4391
        %v4394 = vunpack.c.l.s4 1934713408
        %v4395 = vunpack.c.0.s8 %v4394
        %v4396 = vlaneseq
        %v4397 = vshrl.u32 %v4396, 7
        %v4398 = vsub.s32 %v4395, %v4397
        %v4399 = vrot.slane %v4385, %v4398
        %v4400 = vcombine.high %v4384, 0.0
        %v4402 = vunpack.c.l.s4 1934713408
        %v4403 = vunpack.c.0.s8 %v4402
        %v4404 = vlaneseq
        %v4405 = vshrl.u32 %v4404, 7
        %v4406 = vsub.s32 %v4403, %v4405
        %v4407 = vrot.slane %v4384, %v4406
        %v4409 = vunpack.c.l.s4 1934713408
        %v4410 = vunpack.c.0.s8 %v4409
        %v4411 = vlaneseq
        %v4412 = vshrl.u32 %v4411, 7
        %v4413 = vsub.s32 %v4410, %v4412
        %v4414 = vrot.slane %v4400, %v4413
        %v4415 = vcombine.high %v4392, 0.0
        %v4416 = vcombine.high %v4399, 0.0
        %v4417 = vcombine.high %v4407, 0.0
        %v4418 = vcombine.high %v4414, 0.0
        %v4419 = vcombine.high %v4369, 0.0
        %v4421 = vunpack.c.l.s4 1983009808
        %v4422 = vunpack.c.0.s8 %v4421
        %v4423 = vlaneseq
        %v4424 = vshrl.u32 %v4423, 7
        %v4425 = vsub.s32 %v4422, %v4424
        %v4426 = vrot.slane %v4369, %v4425
        %v4428 = vunpack.c.l.s4 1983009808
        %v4429 = vunpack.c.0.s8 %v4428
        %v4430 = vlaneseq
        %v4431 = vshrl.u32 %v4430, 7
        %v4432 = vsub.s32 %v4429, %v4431
        %v4433 = vrot.slane %v4419, %v4432
        %v4434 = vcombine.high %v4426, 0.0
        %v4436 = vunpack.c.l.s4 1934713408
        %v4437 = vunpack.c.0.s8 %v4436
        %v4438 = vlaneseq
        %v4439 = vshrl.u32 %v4438, 7
        %v4440 = vsub.s32 %v4437, %v4439
        %v4441 = vrot.slane %v4426, %v4440
        %v4443 = vunpack.c.l.s4 1934713408
        %v4444 = vunpack.c.0.s8 %v4443
        %v4445 = vlaneseq
        %v4446 = vshrl.u32 %v4445, 7
        %v4447 = vsub.s32 %v4444, %v4446
        %v4448 = vrot.slane %v4434, %v4447
        %v4449 = vcombine.high %v4433, 0.0
        %v4451 = vunpack.c.l.s4 1934713408
        %v4452 = vunpack.c.0.s8 %v4451
        %v4453 = vlaneseq
        %v4454 = vshrl.u32 %v4453, 7
        %v4455 = vsub.s32 %v4452, %v4454
        %v4456 = vrot.slane %v4433, %v4455
        %v4458 = vunpack.c.l.s4 1934713408
        %v4459 = vunpack.c.0.s8 %v4458
        %v4460 = vlaneseq
        %v4461 = vshrl.u32 %v4460, 7
        %v4462 = vsub.s32 %v4459, %v4461
        %v4463 = vrot.slane %v4449, %v4462
        %v4464 = vcombine.high %v4441, 0.0
        %v4465 = vcombine.high %v4448, 0.0
        %v4466 = vcombine.high %v4456, 0.0
        %v4467 = vcombine.high %v4463, 0.0
        %4469 = vrot.lane.b32.xlu0 %v4415, 16
        %v4470 = vpop.permute.xlu0 %4469
        %4473 = vrot.lane.b32.xlu0 %v4399, 32
        %v4474 = vpop.permute.xlu0 %4473
        %4477 = vrot.lane.b32.xlu0 %v4416, 48
        %v4478 = vpop.permute.xlu0 %4477
        %4481 = vrot.lane.b32.xlu0 %v4407, 64
        %v4482 = vpop.permute.xlu0 %4481
        %4485 = vrot.lane.b32.xlu0 %v4417, 80
        %v4486 = vpop.permute.xlu0 %4485
        %4489 = vrot.lane.b32.xlu0 %v4414, 96
        %v4490 = vpop.permute.xlu0 %4489
        %4493 = vrot.lane.b32.xlu0 %v4418, 112
        %v4494 = vpop.permute.xlu0 %4493
        %4497 = vrot.lane.b32.xlu0 %v4464, 16
        %v4498 = vpop.permute.xlu0 %4497
        %4501 = vrot.lane.b32.xlu0 %v4448, 32
        %v4502 = vpop.permute.xlu0 %4501
        %4505 = vrot.lane.b32.xlu0 %v4465, 48
        %v4506 = vpop.permute.xlu0 %4505
        %4509 = vrot.lane.b32.xlu0 %v4456, 64
        %v4510 = vpop.permute.xlu0 %4509
        %4513 = vrot.lane.b32.xlu0 %v4466, 80
        %v4514 = vpop.permute.xlu0 %4513
        %4517 = vrot.lane.b32.xlu0 %v4463, 96
        %v4518 = vpop.permute.xlu0 %4517
        %4521 = vrot.lane.b32.xlu0 %v4467, 112
        %v4522 = vpop.permute.xlu0 %4521
        %v4524 = vsel %vm1988, %v4392, %v4470
        %vm4525 = vcmask 261120
        %v4526 = vsel %vm4525, %v4524, %v4474
        %vm4527 = vcmask 392192
        %v4528 = vsel %vm4527, %v4526, %v4478
        %vm4529 = vcmask 523264
        %v4530 = vsel %vm4529, %v4528, %v4482
        %vm4531 = vcmask 654336
        %v4532 = vsel %vm4531, %v4530, %v4486
        %vm4533 = vcmask 785408
        %v4534 = vsel %vm4533, %v4532, %v4490
        %vm4535 = vcmask 916480
        %v4536 = vsel %vm4535, %v4534, %v4494
        %v4537 = vsel %vm1988, %v4441, %v4498
        %v4538 = vsel %vm4525, %v4537, %v4502
        %v4539 = vsel %vm4527, %v4538, %v4506
        %v4540 = vsel %vm4529, %v4539, %v4510
        %v4541 = vsel %vm4531, %v4540, %v4514
        %v4542 = vsel %vm4533, %v4541, %v4518
        %v4543 = vsel %vm4535, %v4542, %v4522
        %v4544 = vxor.u32 %v4356, 2147483648
        %v4545 = vxor.u32 %v4357, 2147483648
        %v4546 = vmul.f32 %v4544, 1.442695
        %v4547 = vpow.pop %v4546
        %v4548 = vmul.f32 %v4545, 1.442695
        %v4549 = vpow.pop %v4548
        %v4550 = vadd.f32 %v4547, 1.0
        %v4551 = vadd.f32 %v4549, 1.0
        %v4552 = vrcp.pop %v4550
        %v4553 = vmul.f32 1.0, %v4552
        %v4554 = vrcp.pop %v4551
        %v4555 = vmul.f32 1.0, %v4554
        %v4556 = vcombine.high %v4553, 0.0
        %v4558 = vunpack.c.l.s4 1983009808
        %v4559 = vunpack.c.0.s8 %v4558
        %v4560 = vlaneseq
        %v4561 = vshrl.u32 %v4560, 7
        %v4562 = vsub.s32 %v4559, %v4561
        %v4563 = vrot.slane %v4553, %v4562
        %v4565 = vunpack.c.l.s4 1983009808
        %v4566 = vunpack.c.0.s8 %v4565
        %v4567 = vlaneseq
        %v4568 = vshrl.u32 %v4567, 7
        %v4569 = vsub.s32 %v4566, %v4568
        %v4570 = vrot.slane %v4556, %v4569
        %v4571 = vcombine.high %v4563, 0.0
        %v4573 = vunpack.c.l.s4 1934713408
        %v4574 = vunpack.c.0.s8 %v4573
        %v4575 = vlaneseq
        %v4576 = vshrl.u32 %v4575, 7
        %v4577 = vsub.s32 %v4574, %v4576
        %v4578 = vrot.slane %v4563, %v4577
        %v4580 = vunpack.c.l.s4 1934713408
        %v4581 = vunpack.c.0.s8 %v4580
        %v4582 = vlaneseq
        %v4583 = vshrl.u32 %v4582, 7
        %v4584 = vsub.s32 %v4581, %v4583
        %v4585 = vrot.slane %v4571, %v4584
        %v4586 = vcombine.high %v4570, 0.0
        %v4588 = vunpack.c.l.s4 1934713408
        %v4589 = vunpack.c.0.s8 %v4588
        %v4590 = vlaneseq
        %v4591 = vshrl.u32 %v4590, 7
        %v4592 = vsub.s32 %v4589, %v4591
        %v4593 = vrot.slane %v4570, %v4592
        %v4595 = vunpack.c.l.s4 1934713408
        %v4596 = vunpack.c.0.s8 %v4595
        %v4597 = vlaneseq
        %v4598 = vshrl.u32 %v4597, 7
        %v4599 = vsub.s32 %v4596, %v4598
        %v4600 = vrot.slane %v4586, %v4599
        %v4601 = vcombine.high %v4578, 0.0
        %v4602 = vcombine.high %v4585, 0.0
        %v4603 = vcombine.high %v4593, 0.0
        %v4604 = vcombine.high %v4600, 0.0
        %v4605 = vcombine.high %v4555, 0.0
        %v4607 = vunpack.c.l.s4 1983009808
        %v4608 = vunpack.c.0.s8 %v4607
        %v4609 = vlaneseq
        %v4610 = vshrl.u32 %v4609, 7
        %v4611 = vsub.s32 %v4608, %v4610
        %v4612 = vrot.slane %v4555, %v4611
        %v4614 = vunpack.c.l.s4 1983009808
        %v4615 = vunpack.c.0.s8 %v4614
        %v4616 = vlaneseq
        %v4617 = vshrl.u32 %v4616, 7
        %v4618 = vsub.s32 %v4615, %v4617
        %v4619 = vrot.slane %v4605, %v4618
        %v4620 = vcombine.high %v4612, 0.0
        %v4622 = vunpack.c.l.s4 1934713408
        %v4623 = vunpack.c.0.s8 %v4622
        %v4624 = vlaneseq
        %v4625 = vshrl.u32 %v4624, 7
        %v4626 = vsub.s32 %v4623, %v4625
        %v4627 = vrot.slane %v4612, %v4626
        %v4629 = vunpack.c.l.s4 1934713408
        %v4630 = vunpack.c.0.s8 %v4629
        %v4631 = vlaneseq
        %v4632 = vshrl.u32 %v4631, 7
        %v4633 = vsub.s32 %v4630, %v4632
        %v4634 = vrot.slane %v4620, %v4633
        %v4635 = vcombine.high %v4619, 0.0
        %v4637 = vunpack.c.l.s4 1934713408
        %v4638 = vunpack.c.0.s8 %v4637
        %v4639 = vlaneseq
        %v4640 = vshrl.u32 %v4639, 7
        %v4641 = vsub.s32 %v4638, %v4640
        %v4642 = vrot.slane %v4619, %v4641
        %v4644 = vunpack.c.l.s4 1934713408
        %v4645 = vunpack.c.0.s8 %v4644
        %v4646 = vlaneseq
        %v4647 = vshrl.u32 %v4646, 7
        %v4648 = vsub.s32 %v4645, %v4647
        %v4649 = vrot.slane %v4635, %v4648
        %v4650 = vcombine.high %v4627, 0.0
        %v4651 = vcombine.high %v4634, 0.0
        %v4652 = vcombine.high %v4642, 0.0
        %v4653 = vcombine.high %v4649, 0.0
        %4655 = vrot.lane.b32.xlu0 %v4601, 16
        %v4656 = vpop.permute.xlu0 %4655
        %4659 = vrot.lane.b32.xlu0 %v4585, 32
        %v4660 = vpop.permute.xlu0 %4659
        %4663 = vrot.lane.b32.xlu0 %v4602, 48
        %v4664 = vpop.permute.xlu0 %4663
        %4667 = vrot.lane.b32.xlu0 %v4593, 64
        %v4668 = vpop.permute.xlu0 %4667
        %4671 = vrot.lane.b32.xlu0 %v4603, 80
        %v4672 = vpop.permute.xlu0 %4671
        %4675 = vrot.lane.b32.xlu0 %v4600, 96
        %v4676 = vpop.permute.xlu0 %4675
        %4679 = vrot.lane.b32.xlu0 %v4604, 112
        %v4680 = vpop.permute.xlu0 %4679
        %4683 = vrot.lane.b32.xlu0 %v4650, 16
        %v4684 = vpop.permute.xlu0 %4683
        %4687 = vrot.lane.b32.xlu0 %v4634, 32
        %v4688 = vpop.permute.xlu0 %4687
        %4691 = vrot.lane.b32.xlu0 %v4651, 48
        %v4692 = vpop.permute.xlu0 %4691
        %4695 = vrot.lane.b32.xlu0 %v4642, 64
        %v4696 = vpop.permute.xlu0 %4695
        %4699 = vrot.lane.b32.xlu0 %v4652, 80
        %v4700 = vpop.permute.xlu0 %4699
        %4703 = vrot.lane.b32.xlu0 %v4649, 96
        %v4704 = vpop.permute.xlu0 %4703
        %4707 = vrot.lane.b32.xlu0 %v4653, 112
        %v4708 = vpop.permute.xlu0 %4707
        %v4710 = vsel %vm1988, %v4578, %v4656
        %v4711 = vsel %vm4525, %v4710, %v4660
        %v4712 = vsel %vm4527, %v4711, %v4664
        %v4713 = vsel %vm4529, %v4712, %v4668
        %v4714 = vsel %vm4531, %v4713, %v4672
        %v4715 = vsel %vm4533, %v4714, %v4676
        %v4716 = vsel %vm4535, %v4715, %v4680
        %v4717 = vsel %vm1988, %v4627, %v4684
        %v4718 = vsel %vm4525, %v4717, %v4688
        %v4719 = vsel %vm4527, %v4718, %v4692
        %v4720 = vsel %vm4529, %v4719, %v4696
        %v4721 = vsel %vm4531, %v4720, %v4700
        %v4722 = vsel %vm4533, %v4721, %v4704
        %v4723 = vsel %vm4535, %v4722, %v4708
        %v4724 = vlaneseq
        %v4725 = vshrl.u32 %v4724, 7
        %v4726 = vsub.s32 0, %v4725
        %v4727 = vrot.slane %v4536, %v4726
        %v4728 = vlaneseq
        %v4729 = vshrl.u32 %v4728, 7
        %v4730 = vsub.s32 0, %v4729
        %v4731 = vrot.slane %v4543, %v4730
        %v4732 = vmul.f32 %v4727, %v1768
        %v4733 = vmul.f32 %v4731, %v1769
        %v4734 = vmul.f32 %v4727, %v1770
        %v4735 = vmul.f32 %v4731, %v1771
        %v4736 = vlaneseq
        %v4737 = vshrl.u32 %v4736, 7
        %v4738 = vsub.s32 0, %v4737
        %v4739 = vrot.slane %v4716, %v4738
        %v4740 = vlaneseq
        %v4741 = vshrl.u32 %v4740, 7
        %v4742 = vsub.s32 0, %v4741
        %v4743 = vrot.slane %v4723, %v4742
        %v4744 = vmul.f32 %v4739, %v1782
        %v4745 = vmul.f32 %v4743, %v1783
        %v4746 = vmul.f32 %v4739, %v1784
        %v4747 = vmul.f32 %v4743, %v1785
        %v4748 = vadd.f32 %v4732, %v4744
        %v4749 = vadd.f32 %v4733, %v4745
        %v4750 = vadd.f32 %v4734, %v4746
        %v4751 = vadd.f32 %v4735, %v4747
        %4752 = vst [vmem:[%s458] sm:$0xff] %v4748
        %4753 = vst [vmem:[%s458 + $0x8] sm:$0xff] %v4749
        %4754 = vst [vmem:[%s458 + $0x10] sm:$0xff] %v4750
        %4755 = vst [vmem:[%s458 + $0x18] sm:$0xff] %v4751
        %s4756 = sand.u32 %s281, 1
        %s4757 = scalar_lea.sflag [#allocation5], %s4756
        %s4758 = sand.u32 %s281, 1
        %s4759 = smul.addr %s4758, 32
        %s4760 = scalar_lea.vmem [#allocation10], %s4759
        // Predicated region
        $region77: #{tpu_custom_call.1} parent=63 // pred_check
          %p4761 = pneg %p291
        $region78: #{tpu_custom_call.1} parent=63 // pred_check_branch
          %4763 = sbr.rel (%p4761) target = $region80
        $region79: #{tpu_custom_call.1} parent=63 // pred_region
          %s4765 = ssub.s32 512, 512
          %4766 = vsyncadd %s4757, %s4765
          %s4767 = smul.addr %s32, 4
          %s4768 = smul.addr %s4767, 128
          %s4769 = scalar_lea.hbm %s11, %s4768
          %s4770 = sshll.u32 %s4760, 4
          %s4771 = int_to_ptr.vmem [resolvable:$true] %s4770
          %4776 = dma.vmem_to_hbm [thread:$0]  %s4771, 512, %s4769, %s4757, 256, 256, 16
        $region80: #{tpu_custom_call.1} parent=63 // pred_fallthru
          _
      $region64: #{tpu_custom_call.1} parent=5 // pred_fallthru
        _
      %p4777 = scmp.le.s32.totalorder 2, %s27
      // Predicated region
      $region81: #{tpu_custom_call.1} parent=5 // pred_check
        %p4778 = pneg %p4777
      $region82: #{tpu_custom_call.1} parent=5 // pred_check_branch
        %4780 = sbr.rel (%p4778) target = $region84
      $region83: #{tpu_custom_call.1} parent=5 // pred_region
        %s4781 = ssub.s32 %s27, 2
        // Predicated region
        $region85: #{tpu_custom_call.1} parent=83 // pred_check
          %p4782 = pneg %p297
        $region86: #{tpu_custom_call.1} parent=83 // pred_check_branch
          %4784 = sbr.rel (%p4782) target = $region88
        $region87: #{tpu_custom_call.1} parent=83 // pred_region
          %s4785 = sand.u32 %s282, 1
          %s4786 = scalar_lea.sflag [#allocation5], %s4785
          %s4787 = sand.u32 %s282, 1
          %s4788 = smul.addr %s4787, 32
          %s4789 = scalar_lea.vmem [#allocation10], %s4788
          %4790 = dma.done %s4786, 512
        $region88: #{tpu_custom_call.1} parent=83 // pred_fallthru
          _
      $region84: #{tpu_custom_call.1} parent=5 // pred_fallthru
        _
    $region6: #{tpu_custom_call.1} parent=1 // loop_footer
      %s31 = sadd.s32 1, %s27
    $region7: #{tpu_custom_call.1} parent=1 // loop_footer_branch
      %26 = sbr.rel target = $region3
    $region8: #{tpu_custom_call.1} parent=1 // loop_exit
      _
    %4791 = vsyncpa [#allocation4], 1
    %s4792 = scalar_lea.sflag [#allocation4], 1
    %4793 = vsyncpa %s4792, 1
    %4794 = vsyncpa [#allocation8], 1
    %s4795 = scalar_lea.sflag [#allocation8], 1
    %4796 = vsyncpa %s4795, 1
    %4797 = vsyncpa [#allocation5], 1
    %s4798 = scalar_lea.sflag [#allocation5], 1
    %4799 = vsyncpa %s4798, 1
    %4800 = vsyncpa [#allocation6], 1
    %s4801 = scalar_lea.sflag [#allocation6], 1
    %4802 = vsyncpa %s4801, 1

</llo_original>
